<compile_context>
chip_gen: v6e
topology: v6e:2x2x1
jax: 0.10.0
libtpu: 0.0.40
codegen_flags: <defaults>
</compile_context>

<pallas_src>
import functools

import jax
import jax.numpy as jnp
from jax import lax
from jax.experimental import pallas as pl
from jax.experimental.pallas import tpu as pltpu

EPS = 1e-5
VMEM = pl.BlockSpec(memory_space=pltpu.MemorySpace.VMEM)


# ----------------------------------------------------------------------------
# Pallas kernel 1: fused 3x3 conv (in-kernel 9-tap gather) + train-mode BN
#                  + optional ReLU.
# ----------------------------------------------------------------------------
def _conv3x3_bn_act_kernel(xp_ref, w_ref, gamma_ref, beta_ref, out_ref, *,
                           H, W, act):
    """xp_ref: (B, H+2, W+2, Cin) bf16 padded activation.
       w_ref : (9, Cin, Cout)     bf16 conv weights (kh*3+kw major).
       out   : (B*H*W, Cout)      f32  = ReLU(BN(conv3x3(x)))."""
    B = xp_ref.shape[0]
    Cin = xp_ref.shape[-1]
    Cout = w_ref.shape[-1]
    M = B * H * W

    acc = jnp.zeros((M, Cout), jnp.float32)
    for kh in range(3):
        for kw in range(3):
            tap = xp_ref[:, kh:kh + H, kw:kw + W, :]          # (B,H,W,Cin) bf16
            acc += jnp.dot(tap.reshape(M, Cin), w_ref[kh * 3 + kw],
                           preferred_element_type=jnp.float32)

    # train-mode BatchNorm over (B,H,W) == rows of the flat slab, f32 math.
    mean = jnp.mean(acc, axis=0, keepdims=True)
    var = jnp.mean((acc - mean) ** 2, axis=0, keepdims=True)
    y = (acc - mean) * lax.rsqrt(var + EPS) * gamma_ref[...] + beta_ref[...]
    if act:
        y = jnp.maximum(y, 0.0)
    out_ref[...] = y


def conv3x3_bn(x, w9, gamma, beta, *, act=True):
    """3x3 conv (pad=1, bias-free) + BatchNorm + optional ReLU.  x: NHWC f32."""
    B, H, W, Cin = x.shape
    Cout = w9.shape[-1]
    xp = jnp.pad(x, ((0, 0), (1, 1), (1, 1), (0, 0))).astype(jnp.bfloat16)
    kernel = functools.partial(_conv3x3_bn_act_kernel, H=H, W=W, act=act)
    y = pl.pallas_call(
        kernel,
        out_shape=jax.ShapeDtypeStruct((B * H * W, Cout), jnp.float32),
        in_specs=[VMEM] * 4,
        out_specs=VMEM,
    )(xp, w9.astype(jnp.bfloat16), gamma, beta)
    return y.reshape(B, H, W, Cout)


# ----------------------------------------------------------------------------
# Pallas kernel 2: AFNO block-diagonal complex MLP in Fourier space.
#   The 8 per-block (bs x bs) weights are expanded (wrapper side) into dense
#   block-diagonal (C x C) matrices, so each complex layer is 4 MXU matmuls.
#   ReLU and softshrink are fused.
# ----------------------------------------------------------------------------
def _afno_block_mlp_kernel(xr_ref, xi_ref, w1r_ref, w1i_ref, w2r_ref, w2i_ref,
                           b1r_ref, b1i_ref, b2r_ref, b2i_ref,
                           or_ref, oi_ref, *, lam):
    xr = xr_ref[...]                                           # (Mf, C) bf16
    xi = xi_ref[...]

    def mm(a, w_ref):
        return jnp.dot(a, w_ref[...], preferred_element_type=jnp.float32)

    o1r = jnp.maximum(mm(xr, w1r_ref) - mm(xi, w1i_ref) + b1r_ref[...], 0.0)
    o1i = jnp.maximum(mm(xi, w1r_ref) + mm(xr, w1i_ref) + b1i_ref[...], 0.0)
    o1r = o1r.astype(xr.dtype)
    o1i = o1i.astype(xr.dtype)
    o2r = mm(o1r, w2r_ref) - mm(o1i, w2i_ref) + b2r_ref[...]
    o2i = mm(o1i, w2r_ref) + mm(o1r, w2i_ref) + b2i_ref[...]

    def softshrink(v):                                         # VPU min/max only
        return jnp.maximum(v - lam, 0.0) + jnp.minimum(v + lam, 0.0)

    or_ref[...] = softshrink(o2r)
    oi_ref[...] = softshrink(o2i)


def _block_diag_expand(w):
    """(num_blocks, bs_in, bs_out) -> dense block-diagonal (nb*bs_in, nb*bs_out)."""
    k, i, o = w.shape
    eye = jnp.eye(k, dtype=w.dtype)
    return jnp.einsum("kio,kl->kilo", w, eye).reshape(k * i, k * o)


# ----------------------------------------------------------------------------
# AFNO2D core (channel-first AFNO, here kept NHWC end-to-end).
# TODO(synk): FFT has no Pallas primitive -> rfft2/irfft2 stay as XLA ops; the
# residual add (+x) is NOT done here, it is fused into the final Pallas kernel.
# ----------------------------------------------------------------------------
def afno2d_core_nhwc(x, p, *, sparsity_threshold=0.01):
    B, H, W, C = x.shape
    xf = jnp.fft.rfft2(x, axes=(1, 2), norm="ortho")           # (B,H,Wf,C) c64
    Wf = xf.shape[2]
    Mf = B * H * Wf

    xr = jnp.real(xf).reshape(Mf, C).astype(jnp.bfloat16)
    xi = jnp.imag(xf).reshape(Mf, C).astype(jnp.bfloat16)

    w1r = _block_diag_expand(p["w1"][0]).astype(jnp.bfloat16)
    w1i = _block_diag_expand(p["w1"][1]).astype(jnp.bfloat16)
    w2r = _block_diag_expand(p["w2"][0]).astype(jnp.bfloat16)
    w2i = _block_diag_expand(p["w2"][1]).astype(jnp.bfloat16)
    b1r = p["b1"][0].reshape(1, C)
    b1i = p["b1"][1].reshape(1, C)
    b2r = p["b2"][0].reshape(1, C)
    b2i = p["b2"][1].reshape(1, C)

    out_r, out_i = pl.pallas_call(
        functools.partial(_afno_block_mlp_kernel, lam=sparsity_threshold),
        out_shape=(jax.ShapeDtypeStruct((Mf, C), jnp.float32),
                   jax.ShapeDtypeStruct((Mf, C), jnp.float32)),
        in_specs=[VMEM] * 10,
        out_specs=(VMEM, VMEM),
    )(xr, xi, w1r, w1i, w2r, w2i, b1r, b1i, b2r, b2i)

    of = (out_r + 1j * out_i).reshape(B, H, Wf, C)
    return jnp.fft.irfft2(of, s=(H, W), axes=(1, 2), norm="ortho")


# ----------------------------------------------------------------------------
# Pallas kernel 3: fused (AFNO residual add) + BatchNorm + residual + ReLU
#   fo  = f + x                (AFNO's internal residual, fused here)
#   out = relu(x + BN(fo))
# All inputs are flat (M, C) f32 slabs; BN over rows == over (B,H,W).
# ----------------------------------------------------------------------------
def _res_bn_add_relu_kernel(x_ref, f_ref, gamma_ref, beta_ref, out_ref):
    x = x_ref[...]
    fo = f_ref[...] + x
    mean = jnp.mean(fo, axis=0, keepdims=True)
    var = jnp.mean((fo - mean) ** 2, axis=0, keepdims=True)
    fo = (fo - mean) * lax.rsqrt(var + EPS) * gamma_ref[...] + beta_ref[...]
    out_ref[...] = jnp.maximum(x + fo, 0.0)


def res_bn_add_relu(x, f, gamma, beta):
    B, H, W, C = x.shape
    M = B * H * W
    out = pl.pallas_call(
        _res_bn_add_relu_kernel,
        out_shape=jax.ShapeDtypeStruct((M, C), jnp.float32),
        in_specs=[VMEM] * 4,
        out_specs=VMEM,
    )(x.reshape(M, C), f.reshape(M, C).astype(jnp.float32), gamma, beta)
    return out.reshape(B, H, W, C)


# ----------------------------------------------------------------------------
# SimpleResBlocksub1F1 forward (PyTorch NCHW convention at the boundary).
# Note: self.conv2 exists in __init__ but is never used in forward -> omitted.
# ----------------------------------------------------------------------------
def simple_resblock_sub1f1(x_nchw, params):
    x = jnp.transpose(x_nchw, (0, 2, 3, 1))                     # NCHW -> NHWC
    x = conv3x3_bn(x, params["c1_w"], params["c1_g"], params["c1_b"], act=True)
    f = afno2d_core_nhwc(x, params["afno"])                     # NHWC, no transposes
    out = res_bn_add_relu(x, f, params["n_g"], params["n_b"])
    return jnp.transpose(out, (0, 3, 1, 2))                     # NHWC -> NCHW


# ----------------------------------------------------------------------------
# Deterministic parameter init (shapes follow __init__: out_ch = hidden = 32).
# ----------------------------------------------------------------------------
def init_params(key, in_ch=4, out_ch=32, num_blocks=8):
    bs = out_ch // num_blocks
    kit = iter(jax.random.split(key, 8))

    def w(shape, scale=0.05):
        return (scale * jax.random.normal(next(kit), shape)).astype(jnp.float32)

    def bn(c):
        return jnp.ones((1, c), jnp.float32), jnp.zeros((1, c), jnp.float32)

    c1_g, c1_b = bn(out_ch)
    n_g, n_b = bn(out_ch)
    return {
        "c1_w": w((9, in_ch, out_ch)),           # 3x3 conv, (kh*3+kw, Cin, Cout)
        "c1_g": c1_g, "c1_b": c1_b,
        "afno": {
            "w1": w((2, num_blocks, bs, bs), 0.02),
            "b1": w((2, num_blocks, bs), 0.02),
            "w2": w((2, num_blocks, bs, bs), 0.02),
            "b2": w((2, num_blocks, bs), 0.02),
        },
        "n_g": n_g, "n_b": n_b,                  # BatchNorm2d(32)
    }


if __name__ == "__main__":
    key = jax.random.PRNGKey(0)
    pkey, dkey = jax.random.split(key)
    params = init_params(pkey, in_ch=4, out_ch=32)

    B, C, H, W = 2, 4, 16, 16
    x = jax.random.normal(dkey, (B, C, H, W), jnp.float32)

    fwd = jax.jit(simple_resblock_sub1f1)
    out = fwd(x, params)
    jax.block_until_ready(out)
    assert out.shape == (B, 32, H, W)
    print("KERNEL_OK")
</pallas_src>

<mosaic_0001>
module attributes {stable_mosaic.version = 11 : i64} {
  func.func @_conv3x3_bn_act_kernel(%arg0: memref<2x18x18x4xbf16, #tpu.memory_space<vmem>>, %arg1: memref<9x4x32xbf16, #tpu.memory_space<vmem>>, %arg2: memref<1x32xf32, #tpu.memory_space<vmem>>, %arg3: memref<1x32xf32, #tpu.memory_space<vmem>>, %arg4: memref<512x32xf32, #tpu.memory_space<vmem>>) attributes {dimension_semantics = [], scalar_prefetch = 0 : i64, scratch_operands = 0 : i64, tpu.core_type = #tpu.core_type<tc>} {
    %cst = arith.constant 0.000000e+00 : f32
    %0 = vector.broadcast %cst : f32 to vector<512x32xf32>
    %c0 = arith.constant 0 : index
    %c0_0 = arith.constant 0 : index
    %c0_1 = arith.constant 0 : index
    %c0_2 = arith.constant 0 : index
    %1 = vector.load %arg0[%c0, %c0_0, %c0_1, %c0_2] : memref<2x18x18x4xbf16, #tpu.memory_space<vmem>>, vector<2x16x16x4xbf16>
    %2 = vector.shape_cast %1 : vector<2x16x16x4xbf16> to vector<512x4xbf16>
    %c0_3 = arith.constant 0 : index
    %c0_4 = arith.constant 0 : index
    %c0_5 = arith.constant 0 : index
    %3 = vector.load %arg1[%c0_3, %c0_4, %c0_5] : memref<9x4x32xbf16, #tpu.memory_space<vmem>>, vector<1x4x32xbf16>
    %4 = vector.shape_cast %3 : vector<1x4x32xbf16> to vector<4x32xbf16>
    %cst_6 = arith.constant dense<0.000000e+00> : vector<512x32xf32>
    %5 = tpu.matmul %2, %4, %cst_6 {dimension_numbers = #tpu.dot_dimension_numbers<[1], [0], [0], [1], [0, 0, 1, 1], [], []>} : vector<512x4xbf16>, vector<4x32xbf16>, vector<512x32xf32> -> vector<512x32xf32>
    %6 = arith.addf %0, %5 : vector<512x32xf32>
    %c0_7 = arith.constant 0 : index
    %c0_8 = arith.constant 0 : index
    %c1 = arith.constant 1 : index
    %c0_9 = arith.constant 0 : index
    %7 = vector.load %arg0[%c0_7, %c0_8, %c1, %c0_9] : memref<2x18x18x4xbf16, #tpu.memory_space<vmem>>, vector<2x16x16x4xbf16>
    %8 = vector.shape_cast %7 : vector<2x16x16x4xbf16> to vector<512x4xbf16>
    %c1_10 = arith.constant 1 : index
    %c0_11 = arith.constant 0 : index
    %c0_12 = arith.constant 0 : index
    %9 = vector.load %arg1[%c1_10, %c0_11, %c0_12] : memref<9x4x32xbf16, #tpu.memory_space<vmem>>, vector<1x4x32xbf16>
    %10 = vector.shape_cast %9 : vector<1x4x32xbf16> to vector<4x32xbf16>
    %cst_13 = arith.constant dense<0.000000e+00> : vector<512x32xf32>
    %11 = tpu.matmul %8, %10, %cst_13 {dimension_numbers = #tpu.dot_dimension_numbers<[1], [0], [0], [1], [0, 0, 1, 1], [], []>} : vector<512x4xbf16>, vector<4x32xbf16>, vector<512x32xf32> -> vector<512x32xf32>
    %12 = arith.addf %6, %11 : vector<512x32xf32>
    %c0_14 = arith.constant 0 : index
    %c0_15 = arith.constant 0 : index
    %c2 = arith.constant 2 : index
    %c0_16 = arith.constant 0 : index
    %13 = vector.load %arg0[%c0_14, %c0_15, %c2, %c0_16] : memref<2x18x18x4xbf16, #tpu.memory_space<vmem>>, vector<2x16x16x4xbf16>
    %14 = vector.shape_cast %13 : vector<2x16x16x4xbf16> to vector<512x4xbf16>
    %c2_17 = arith.constant 2 : index
    %c0_18 = arith.constant 0 : index
    %c0_19 = arith.constant 0 : index
    %15 = vector.load %arg1[%c2_17, %c0_18, %c0_19] : memref<9x4x32xbf16, #tpu.memory_space<vmem>>, vector<1x4x32xbf16>
    %16 = vector.shape_cast %15 : vector<1x4x32xbf16> to vector<4x32xbf16>
    %cst_20 = arith.constant dense<0.000000e+00> : vector<512x32xf32>
    %17 = tpu.matmul %14, %16, %cst_20 {dimension_numbers = #tpu.dot_dimension_numbers<[1], [0], [0], [1], [0, 0, 1, 1], [], []>} : vector<512x4xbf16>, vector<4x32xbf16>, vector<512x32xf32> -> vector<512x32xf32>
    %18 = arith.addf %12, %17 : vector<512x32xf32>
    %c0_21 = arith.constant 0 : index
    %c1_22 = arith.constant 1 : index
    %c0_23 = arith.constant 0 : index
    %c0_24 = arith.constant 0 : index
    %19 = vector.load %arg0[%c0_21, %c1_22, %c0_23, %c0_24] : memref<2x18x18x4xbf16, #tpu.memory_space<vmem>>, vector<2x16x16x4xbf16>
    %20 = vector.shape_cast %19 : vector<2x16x16x4xbf16> to vector<512x4xbf16>
    %c3 = arith.constant 3 : index
    %c0_25 = arith.constant 0 : index
    %c0_26 = arith.constant 0 : index
    %21 = vector.load %arg1[%c3, %c0_25, %c0_26] : memref<9x4x32xbf16, #tpu.memory_space<vmem>>, vector<1x4x32xbf16>
    %22 = vector.shape_cast %21 : vector<1x4x32xbf16> to vector<4x32xbf16>
    %cst_27 = arith.constant dense<0.000000e+00> : vector<512x32xf32>
    %23 = tpu.matmul %20, %22, %cst_27 {dimension_numbers = #tpu.dot_dimension_numbers<[1], [0], [0], [1], [0, 0, 1, 1], [], []>} : vector<512x4xbf16>, vector<4x32xbf16>, vector<512x32xf32> -> vector<512x32xf32>
    %24 = arith.addf %18, %23 : vector<512x32xf32>
    %c0_28 = arith.constant 0 : index
    %c1_29 = arith.constant 1 : index
    %c1_30 = arith.constant 1 : index
    %c0_31 = arith.constant 0 : index
    %25 = vector.load %arg0[%c0_28, %c1_29, %c1_30, %c0_31] : memref<2x18x18x4xbf16, #tpu.memory_space<vmem>>, vector<2x16x16x4xbf16>
    %26 = vector.shape_cast %25 : vector<2x16x16x4xbf16> to vector<512x4xbf16>
    %c4 = arith.constant 4 : index
    %c0_32 = arith.constant 0 : index
    %c0_33 = arith.constant 0 : index
    %27 = vector.load %arg1[%c4, %c0_32, %c0_33] : memref<9x4x32xbf16, #tpu.memory_space<vmem>>, vector<1x4x32xbf16>
    %28 = vector.shape_cast %27 : vector<1x4x32xbf16> to vector<4x32xbf16>
    %cst_34 = arith.constant dense<0.000000e+00> : vector<512x32xf32>
    %29 = tpu.matmul %26, %28, %cst_34 {dimension_numbers = #tpu.dot_dimension_numbers<[1], [0], [0], [1], [0, 0, 1, 1], [], []>} : vector<512x4xbf16>, vector<4x32xbf16>, vector<512x32xf32> -> vector<512x32xf32>
    %30 = arith.addf %24, %29 : vector<512x32xf32>
    %c0_35 = arith.constant 0 : index
    %c1_36 = arith.constant 1 : index
    %c2_37 = arith.constant 2 : index
    %c0_38 = arith.constant 0 : index
    %31 = vector.load %arg0[%c0_35, %c1_36, %c2_37, %c0_38] : memref<2x18x18x4xbf16, #tpu.memory_space<vmem>>, vector<2x16x16x4xbf16>
    %32 = vector.shape_cast %31 : vector<2x16x16x4xbf16> to vector<512x4xbf16>
    %c5 = arith.constant 5 : index
    %c0_39 = arith.constant 0 : index
    %c0_40 = arith.constant 0 : index
    %33 = vector.load %arg1[%c5, %c0_39, %c0_40] : memref<9x4x32xbf16, #tpu.memory_space<vmem>>, vector<1x4x32xbf16>
    %34 = vector.shape_cast %33 : vector<1x4x32xbf16> to vector<4x32xbf16>
    %cst_41 = arith.constant dense<0.000000e+00> : vector<512x32xf32>
    %35 = tpu.matmul %32, %34, %cst_41 {dimension_numbers = #tpu.dot_dimension_numbers<[1], [0], [0], [1], [0, 0, 1, 1], [], []>} : vector<512x4xbf16>, vector<4x32xbf16>, vector<512x32xf32> -> vector<512x32xf32>
    %36 = arith.addf %30, %35 : vector<512x32xf32>
    %c0_42 = arith.constant 0 : index
    %c2_43 = arith.constant 2 : index
    %c0_44 = arith.constant 0 : index
    %c0_45 = arith.constant 0 : index
    %37 = vector.load %arg0[%c0_42, %c2_43, %c0_44, %c0_45] : memref<2x18x18x4xbf16, #tpu.memory_space<vmem>>, vector<2x16x16x4xbf16>
    %38 = vector.shape_cast %37 : vector<2x16x16x4xbf16> to vector<512x4xbf16>
    %c6 = arith.constant 6 : index
    %c0_46 = arith.constant 0 : index
    %c0_47 = arith.constant 0 : index
    %39 = vector.load %arg1[%c6, %c0_46, %c0_47] : memref<9x4x32xbf16, #tpu.memory_space<vmem>>, vector<1x4x32xbf16>
    %40 = vector.shape_cast %39 : vector<1x4x32xbf16> to vector<4x32xbf16>
    %cst_48 = arith.constant dense<0.000000e+00> : vector<512x32xf32>
    %41 = tpu.matmul %38, %40, %cst_48 {dimension_numbers = #tpu.dot_dimension_numbers<[1], [0], [0], [1], [0, 0, 1, 1], [], []>} : vector<512x4xbf16>, vector<4x32xbf16>, vector<512x32xf32> -> vector<512x32xf32>
    %42 = arith.addf %36, %41 : vector<512x32xf32>
    %c0_49 = arith.constant 0 : index
    %c2_50 = arith.constant 2 : index
    %c1_51 = arith.constant 1 : index
    %c0_52 = arith.constant 0 : index
    %43 = vector.load %arg0[%c0_49, %c2_50, %c1_51, %c0_52] : memref<2x18x18x4xbf16, #tpu.memory_space<vmem>>, vector<2x16x16x4xbf16>
    %44 = vector.shape_cast %43 : vector<2x16x16x4xbf16> to vector<512x4xbf16>
    %c7 = arith.constant 7 : index
    %c0_53 = arith.constant 0 : index
    %c0_54 = arith.constant 0 : index
    %45 = vector.load %arg1[%c7, %c0_53, %c0_54] : memref<9x4x32xbf16, #tpu.memory_space<vmem>>, vector<1x4x32xbf16>
    %46 = vector.shape_cast %45 : vector<1x4x32xbf16> to vector<4x32xbf16>
    %cst_55 = arith.constant dense<0.000000e+00> : vector<512x32xf32>
    %47 = tpu.matmul %44, %46, %cst_55 {dimension_numbers = #tpu.dot_dimension_numbers<[1], [0], [0], [1], [0, 0, 1, 1], [], []>} : vector<512x4xbf16>, vector<4x32xbf16>, vector<512x32xf32> -> vector<512x32xf32>
    %48 = arith.addf %42, %47 : vector<512x32xf32>
    %c0_56 = arith.constant 0 : index
    %c2_57 = arith.constant 2 : index
    %c2_58 = arith.constant 2 : index
    %c0_59 = arith.constant 0 : index
    %49 = vector.load %arg0[%c0_56, %c2_57, %c2_58, %c0_59] : memref<2x18x18x4xbf16, #tpu.memory_space<vmem>>, vector<2x16x16x4xbf16>
    %50 = vector.shape_cast %49 : vector<2x16x16x4xbf16> to vector<512x4xbf16>
    %c8 = arith.constant 8 : index
    %c0_60 = arith.constant 0 : index
    %c0_61 = arith.constant 0 : index
    %51 = vector.load %arg1[%c8, %c0_60, %c0_61] : memref<9x4x32xbf16, #tpu.memory_space<vmem>>, vector<1x4x32xbf16>
    %52 = vector.shape_cast %51 : vector<1x4x32xbf16> to vector<4x32xbf16>
    %cst_62 = arith.constant dense<0.000000e+00> : vector<512x32xf32>
    %53 = tpu.matmul %50, %52, %cst_62 {dimension_numbers = #tpu.dot_dimension_numbers<[1], [0], [0], [1], [0, 0, 1, 1], [], []>} : vector<512x4xbf16>, vector<4x32xbf16>, vector<512x32xf32> -> vector<512x32xf32>
    %54 = arith.addf %48, %53 : vector<512x32xf32>
    %cst_63 = arith.constant dense<0.000000e+00> : vector<32xf32>
    %55 = vector.multi_reduction <add>, %54, %cst_63 [0] : vector<512x32xf32> to vector<32xf32>
    %56 = vector.shape_cast %55 : vector<32xf32> to vector<1x32xf32>
    %cst_64 = arith.constant 5.120000e+02 : f32
    %57 = vector.broadcast %cst_64 : f32 to vector<1x32xf32>
    %58 = arith.divf %56, %57 : vector<1x32xf32>
    %59 = vector.broadcast %58 : vector<1x32xf32> to vector<512x32xf32>
    %60 = arith.subf %54, %59 : vector<512x32xf32>
    %61 = arith.mulf %60, %60 : vector<512x32xf32>
    %cst_65 = arith.constant dense<0.000000e+00> : vector<32xf32>
    %62 = vector.multi_reduction <add>, %61, %cst_65 [0] : vector<512x32xf32> to vector<32xf32>
    %63 = vector.shape_cast %62 : vector<32xf32> to vector<1x32xf32>
    %cst_66 = arith.constant 5.120000e+02 : f32
    %64 = vector.broadcast %cst_66 : f32 to vector<1x32xf32>
    %65 = arith.divf %63, %64 : vector<1x32xf32>
    %66 = vector.broadcast %58 : vector<1x32xf32> to vector<512x32xf32>
    %67 = arith.subf %54, %66 : vector<512x32xf32>
    %cst_67 = arith.constant 9.99999974E-6 : f32
    %68 = vector.broadcast %cst_67 : f32 to vector<1x32xf32>
    %69 = arith.addf %65, %68 : vector<1x32xf32>
    %70 = math.rsqrt %69 : vector<1x32xf32>
    %71 = vector.broadcast %70 : vector<1x32xf32> to vector<512x32xf32>
    %72 = arith.mulf %67, %71 : vector<512x32xf32>
    %c0_68 = arith.constant 0 : index
    %c0_69 = arith.constant 0 : index
    %73 = vector.load %arg2[%c0_68, %c0_69] : memref<1x32xf32, #tpu.memory_space<vmem>>, vector<1x32xf32>
    %74 = vector.broadcast %73 : vector<1x32xf32> to vector<512x32xf32>
    %75 = arith.mulf %72, %74 : vector<512x32xf32>
    %c0_70 = arith.constant 0 : index
    %c0_71 = arith.constant 0 : index
    %76 = vector.load %arg3[%c0_70, %c0_71] : memref<1x32xf32, #tpu.memory_space<vmem>>, vector<1x32xf32>
    %77 = vector.broadcast %76 : vector<1x32xf32> to vector<512x32xf32>
    %78 = arith.addf %75, %77 : vector<512x32xf32>
    %cst_72 = arith.constant 0.000000e+00 : f32
    %79 = vector.broadcast %cst_72 : f32 to vector<512x32xf32>
    %80 = arith.maximumf %78, %79 : vector<512x32xf32>
    %c0_73 = arith.constant 0 : index
    %c0_74 = arith.constant 0 : index
    %81 = vector.load %arg4[%c0_73, %c0_74] : memref<512x32xf32, #tpu.memory_space<vmem>>, vector<512x32xf32>
    tpu.vector_store %arg4[%c0_73, %c0_74], %80 {strides = array<i32>} : memref<512x32xf32, #tpu.memory_space<vmem>>, vector<512x32xf32>,
    return
  }
}

module attributes {stable_mosaic.version = 11 : i64} {
  func.func @_afno_block_mlp_kernel(%arg0: memref<288x32xbf16, #tpu.memory_space<vmem>>, %arg1: memref<288x32xbf16, #tpu.memory_space<vmem>>, %arg2: memref<32x32xbf16, #tpu.memory_space<vmem>>, %arg3: memref<32x32xbf16, #tpu.memory_space<vmem>>, %arg4: memref<32x32xbf16, #tpu.memory_space<vmem>>, %arg5: memref<32x32xbf16, #tpu.memory_space<vmem>>, %arg6: memref<1x32xf32, #tpu.memory_space<vmem>>, %arg7: memref<1x32xf32, #tpu.memory_space<vmem>>, %arg8: memref<1x32xf32, #tpu.memory_space<vmem>>, %arg9: memref<1x32xf32, #tpu.memory_space<vmem>>, %arg10: memref<288x32xf32, #tpu.memory_space<vmem>>, %arg11: memref<288x32xf32, #tpu.memory_space<vmem>>) attributes {dimension_semantics = [], scalar_prefetch = 0 : i64, scratch_operands = 0 : i64, tpu.core_type = #tpu.core_type<tc>} {
    %c0 = arith.constant 0 : index
    %c0_0 = arith.constant 0 : index
    %0 = vector.load %arg0[%c0, %c0_0] : memref<288x32xbf16, #tpu.memory_space<vmem>>, vector<288x32xbf16>
    %c0_1 = arith.constant 0 : index
    %c0_2 = arith.constant 0 : index
    %1 = vector.load %arg1[%c0_1, %c0_2] : memref<288x32xbf16, #tpu.memory_space<vmem>>, vector<288x32xbf16>
    %c0_3 = arith.constant 0 : index
    %c0_4 = arith.constant 0 : index
    %2 = vector.load %arg2[%c0_3, %c0_4] : memref<32x32xbf16, #tpu.memory_space<vmem>>, vector<32x32xbf16>
    %cst = arith.constant dense<0.000000e+00> : vector<288x32xf32>
    %3 = tpu.matmul %0, %2, %cst {dimension_numbers = #tpu.dot_dimension_numbers<[1], [0], [0], [1], [0, 0, 1, 1], [], []>} : vector<288x32xbf16>, vector<32x32xbf16>, vector<288x32xf32> -> vector<288x32xf32>
    %c0_5 = arith.constant 0 : index
    %c0_6 = arith.constant 0 : index
    %4 = vector.load %arg3[%c0_5, %c0_6] : memref<32x32xbf16, #tpu.memory_space<vmem>>, vector<32x32xbf16>
    %cst_7 = arith.constant dense<0.000000e+00> : vector<288x32xf32>
    %5 = tpu.matmul %1, %4, %cst_7 {dimension_numbers = #tpu.dot_dimension_numbers<[1], [0], [0], [1], [0, 0, 1, 1], [], []>} : vector<288x32xbf16>, vector<32x32xbf16>, vector<288x32xf32> -> vector<288x32xf32>
    %6 = arith.subf %3, %5 : vector<288x32xf32>
    %c0_8 = arith.constant 0 : index
    %c0_9 = arith.constant 0 : index
    %7 = vector.load %arg6[%c0_8, %c0_9] : memref<1x32xf32, #tpu.memory_space<vmem>>, vector<1x32xf32>
    %8 = vector.broadcast %7 : vector<1x32xf32> to vector<288x32xf32>
    %9 = arith.addf %6, %8 : vector<288x32xf32>
    %cst_10 = arith.constant 0.000000e+00 : f32
    %10 = vector.broadcast %cst_10 : f32 to vector<288x32xf32>
    %11 = arith.maximumf %9, %10 : vector<288x32xf32>
    %c0_11 = arith.constant 0 : index
    %c0_12 = arith.constant 0 : index
    %12 = vector.load %arg2[%c0_11, %c0_12] : memref<32x32xbf16, #tpu.memory_space<vmem>>, vector<32x32xbf16>
    %cst_13 = arith.constant dense<0.000000e+00> : vector<288x32xf32>
    %13 = tpu.matmul %1, %12, %cst_13 {dimension_numbers = #tpu.dot_dimension_numbers<[1], [0], [0], [1], [0, 0, 1, 1], [], []>} : vector<288x32xbf16>, vector<32x32xbf16>, vector<288x32xf32> -> vector<288x32xf32>
    %c0_14 = arith.constant 0 : index
    %c0_15 = arith.constant 0 : index
    %14 = vector.load %arg3[%c0_14, %c0_15] : memref<32x32xbf16, #tpu.memory_space<vmem>>, vector<32x32xbf16>
    %cst_16 = arith.constant dense<0.000000e+00> : vector<288x32xf32>
    %15 = tpu.matmul %0, %14, %cst_16 {dimension_numbers = #tpu.dot_dimension_numbers<[1], [0], [0], [1], [0, 0, 1, 1], [], []>} : vector<288x32xbf16>, vector<32x32xbf16>, vector<288x32xf32> -> vector<288x32xf32>
    %16 = arith.addf %13, %15 : vector<288x32xf32>
    %c0_17 = arith.constant 0 : index
    %c0_18 = arith.constant 0 : index
    %17 = vector.load %arg7[%c0_17, %c0_18] : memref<1x32xf32, #tpu.memory_space<vmem>>, vector<1x32xf32>
    %18 = vector.broadcast %17 : vector<1x32xf32> to vector<288x32xf32>
    %19 = arith.addf %16, %18 : vector<288x32xf32>
    %cst_19 = arith.constant 0.000000e+00 : f32
    %20 = vector.broadcast %cst_19 : f32 to vector<288x32xf32>
    %21 = arith.maximumf %19, %20 : vector<288x32xf32>
    %22 = arith.truncf %11 : vector<288x32xf32> to vector<288x32xbf16>
    %23 = arith.truncf %21 : vector<288x32xf32> to vector<288x32xbf16>
    %c0_20 = arith.constant 0 : index
    %c0_21 = arith.constant 0 : index
    %24 = vector.load %arg4[%c0_20, %c0_21] : memref<32x32xbf16, #tpu.memory_space<vmem>>, vector<32x32xbf16>
    %cst_22 = arith.constant dense<0.000000e+00> : vector<288x32xf32>
    %25 = tpu.matmul %22, %24, %cst_22 {dimension_numbers = #tpu.dot_dimension_numbers<[1], [0], [0], [1], [0, 0, 1, 1], [], []>} : vector<288x32xbf16>, vector<32x32xbf16>, vector<288x32xf32> -> vector<288x32xf32>
    %c0_23 = arith.constant 0 : index
    %c0_24 = arith.constant 0 : index
    %26 = vector.load %arg5[%c0_23, %c0_24] : memref<32x32xbf16, #tpu.memory_space<vmem>>, vector<32x32xbf16>
    %cst_25 = arith.constant dense<0.000000e+00> : vector<288x32xf32>
    %27 = tpu.matmul %23, %26, %cst_25 {dimension_numbers = #tpu.dot_dimension_numbers<[1], [0], [0], [1], [0, 0, 1, 1], [], []>} : vector<288x32xbf16>, vector<32x32xbf16>, vector<288x32xf32> -> vector<288x32xf32>
    %28 = arith.subf %25, %27 : vector<288x32xf32>
    %c0_26 = arith.constant 0 : index
    %c0_27 = arith.constant 0 : index
    %29 = vector.load %arg8[%c0_26, %c0_27] : memref<1x32xf32, #tpu.memory_space<vmem>>, vector<1x32xf32>
    %30 = vector.broadcast %29 : vector<1x32xf32> to vector<288x32xf32>
    %31 = arith.addf %28, %30 : vector<288x32xf32>
    %c0_28 = arith.constant 0 : index
    %c0_29 = arith.constant 0 : index
    %32 = vector.load %arg4[%c0_28, %c0_29] : memref<32x32xbf16, #tpu.memory_space<vmem>>, vector<32x32xbf16>
    %cst_30 = arith.constant dense<0.000000e+00> : vector<288x32xf32>
    %33 = tpu.matmul %23, %32, %cst_30 {dimension_numbers = #tpu.dot_dimension_numbers<[1], [0], [0], [1], [0, 0, 1, 1], [], []>} : vector<288x32xbf16>, vector<32x32xbf16>, vector<288x32xf32> -> vector<288x32xf32>
    %c0_31 = arith.constant 0 : index
    %c0_32 = arith.constant 0 : index
    %34 = vector.load %arg5[%c0_31, %c0_32] : memref<32x32xbf16, #tpu.memory_space<vmem>>, vector<32x32xbf16>
    %cst_33 = arith.constant dense<0.000000e+00> : vector<288x32xf32>
    %35 = tpu.matmul %22, %34, %cst_33 {dimension_numbers = #tpu.dot_dimension_numbers<[1], [0], [0], [1], [0, 0, 1, 1], [], []>} : vector<288x32xbf16>, vector<32x32xbf16>, vector<288x32xf32> -> vector<288x32xf32>
    %36 = arith.addf %33, %35 : vector<288x32xf32>
    %c0_34 = arith.constant 0 : index
    %c0_35 = arith.constant 0 : index
    %37 = vector.load %arg9[%c0_34, %c0_35] : memref<1x32xf32, #tpu.memory_space<vmem>>, vector<1x32xf32>
    %38 = vector.broadcast %37 : vector<1x32xf32> to vector<288x32xf32>
    %39 = arith.addf %36, %38 : vector<288x32xf32>
    %cst_36 = arith.constant 0.00999999977 : f32
    %40 = vector.broadcast %cst_36 : f32 to vector<288x32xf32>
    %41 = arith.subf %31, %40 : vector<288x32xf32>
    %cst_37 = arith.constant 0.000000e+00 : f32
    %42 = vector.broadcast %cst_37 : f32 to vector<288x32xf32>
    %43 = arith.maximumf %41, %42 : vector<288x32xf32>
    %cst_38 = arith.constant 0.00999999977 : f32
    %44 = vector.broadcast %cst_38 : f32 to vector<288x32xf32>
    %45 = arith.addf %31, %44 : vector<288x32xf32>
    %cst_39 = arith.constant 0.000000e+00 : f32
    %46 = vector.broadcast %cst_39 : f32 to vector<288x32xf32>
    %47 = arith.minimumf %45, %46 : vector<288x32xf32>
    %48 = arith.addf %43, %47 : vector<288x32xf32>
    %c0_40 = arith.constant 0 : index
    %c0_41 = arith.constant 0 : index
    %49 = vector.load %arg10[%c0_40, %c0_41] : memref<288x32xf32, #tpu.memory_space<vmem>>, vector<288x32xf32>
    tpu.vector_store %arg10[%c0_40, %c0_41], %48 {strides = array<i32>} : memref<288x32xf32, #tpu.memory_space<vmem>>, vector<288x32xf32>,
    %cst_42 = arith.constant 0.00999999977 : f32
    %50 = vector.broadcast %cst_42 : f32 to vector<288x32xf32>
    %51 = arith.subf %39, %50 : vector<288x32xf32>
    %cst_43 = arith.constant 0.000000e+00 : f32
    %52 = vector.broadcast %cst_43 : f32 to vector<288x32xf32>
    %53 = arith.maximumf %51, %52 : vector<288x32xf32>
    %cst_44 = arith.constant 0.00999999977 : f32
    %54 = vector.broadcast %cst_44 : f32 to vector<288x32xf32>
    %55 = arith.addf %39, %54 : vector<288x32xf32>
    %cst_45 = arith.constant 0.000000e+00 : f32
    %56 = vector.broadcast %cst_45 : f32 to vector<288x32xf32>
    %57 = arith.minimumf %55, %56 : vector<288x32xf32>
    %58 = arith.addf %53, %57 : vector<288x32xf32>
    %c0_46 = arith.constant 0 : index
    %c0_47 = arith.constant 0 : index
    %59 = vector.load %arg11[%c0_46, %c0_47] : memref<288x32xf32, #tpu.memory_space<vmem>>, vector<288x32xf32>
    tpu.vector_store %arg11[%c0_46, %c0_47], %58 {strides = array<i32>} : memref<288x32xf32, #tpu.memory_space<vmem>>, vector<288x32xf32>,
    return
  }
}

module attributes {stable_mosaic.version = 11 : i64} {
  func.func @_res_bn_add_relu_kernel(%arg0: memref<512x32xf32, #tpu.memory_space<vmem>>, %arg1: memref<512x32xf32, #tpu.memory_space<vmem>>, %arg2: memref<1x32xf32, #tpu.memory_space<vmem>>, %arg3: memref<1x32xf32, #tpu.memory_space<vmem>>, %arg4: memref<512x32xf32, #tpu.memory_space<vmem>>) attributes {dimension_semantics = [], scalar_prefetch = 0 : i64, scratch_operands = 0 : i64, tpu.core_type = #tpu.core_type<tc>} {
    %c0 = arith.constant 0 : index
    %c0_0 = arith.constant 0 : index
    %0 = vector.load %arg0[%c0, %c0_0] : memref<512x32xf32, #tpu.memory_space<vmem>>, vector<512x32xf32>
    %c0_1 = arith.constant 0 : index
    %c0_2 = arith.constant 0 : index
    %1 = vector.load %arg1[%c0_1, %c0_2] : memref<512x32xf32, #tpu.memory_space<vmem>>, vector<512x32xf32>
    %2 = arith.addf %1, %0 : vector<512x32xf32>
    %cst = arith.constant dense<0.000000e+00> : vector<32xf32>
    %3 = vector.multi_reduction <add>, %2, %cst [0] : vector<512x32xf32> to vector<32xf32>
    %4 = vector.shape_cast %3 : vector<32xf32> to vector<1x32xf32>
    %cst_3 = arith.constant 5.120000e+02 : f32
    %5 = vector.broadcast %cst_3 : f32 to vector<1x32xf32>
    %6 = arith.divf %4, %5 : vector<1x32xf32>
    %7 = vector.broadcast %6 : vector<1x32xf32> to vector<512x32xf32>
    %8 = arith.subf %2, %7 : vector<512x32xf32>
    %9 = arith.mulf %8, %8 : vector<512x32xf32>
    %cst_4 = arith.constant dense<0.000000e+00> : vector<32xf32>
    %10 = vector.multi_reduction <add>, %9, %cst_4 [0] : vector<512x32xf32> to vector<32xf32>
    %11 = vector.shape_cast %10 : vector<32xf32> to vector<1x32xf32>
    %cst_5 = arith.constant 5.120000e+02 : f32
    %12 = vector.broadcast %cst_5 : f32 to vector<1x32xf32>
    %13 = arith.divf %11, %12 : vector<1x32xf32>
    %14 = vector.broadcast %6 : vector<1x32xf32> to vector<512x32xf32>
    %15 = arith.subf %2, %14 : vector<512x32xf32>
    %cst_6 = arith.constant 9.99999974E-6 : f32
    %16 = vector.broadcast %cst_6 : f32 to vector<1x32xf32>
    %17 = arith.addf %13, %16 : vector<1x32xf32>
    %18 = math.rsqrt %17 : vector<1x32xf32>
    %19 = vector.broadcast %18 : vector<1x32xf32> to vector<512x32xf32>
    %20 = arith.mulf %15, %19 : vector<512x32xf32>
    %c0_7 = arith.constant 0 : index
    %c0_8 = arith.constant 0 : index
    %21 = vector.load %arg2[%c0_7, %c0_8] : memref<1x32xf32, #tpu.memory_space<vmem>>, vector<1x32xf32>
    %22 = vector.broadcast %21 : vector<1x32xf32> to vector<512x32xf32>
    %23 = arith.mulf %20, %22 : vector<512x32xf32>
    %c0_9 = arith.constant 0 : index
    %c0_10 = arith.constant 0 : index
    %24 = vector.load %arg3[%c0_9, %c0_10] : memref<1x32xf32, #tpu.memory_space<vmem>>, vector<1x32xf32>
    %25 = vector.broadcast %24 : vector<1x32xf32> to vector<512x32xf32>
    %26 = arith.addf %23, %25 : vector<512x32xf32>
    %27 = arith.addf %0, %26 : vector<512x32xf32>
    %cst_11 = arith.constant 0.000000e+00 : f32
    %28 = vector.broadcast %cst_11 : f32 to vector<512x32xf32>
    %29 = arith.maximumf %27, %28 : vector<512x32xf32>
    %c0_12 = arith.constant 0 : index
    %c0_13 = arith.constant 0 : index
    %30 = vector.load %arg4[%c0_12, %c0_13] : memref<512x32xf32, #tpu.memory_space<vmem>>, vector<512x32xf32>
    tpu.vector_store %arg4[%c0_12, %c0_13], %29 {strides = array<i32>} : memref<512x32xf32, #tpu.memory_space<vmem>>, vector<512x32xf32>,
    return
  }
}

</mosaic_0001>

<llo_original>
// kernel: squeeze.12
$region0: #{squeeze.12}
  %s0 = inlined_call_operand.vmem [shape: f32[1,8,4], index: 0, kind: input, shape index: {}]
  %s1 = inlined_call_operand.vmem [shape: f32[1,32], index: 1, kind: output, shape index: {}]
  $region1: #{squeeze.12} parent=0
    #allocation0 [shape = 'u8[4096]{0}', space=vmem, size = 0x1000, scoped, tag = 'scoped mem for output reshape']
    %v2 = vld [vmem:[%s0] sm:$0x1]
    %vm3 = vcmask 31744
    %4 = vst.msk [vmem:[#allocation0] sm:$0x1] %vm3, %v2
    %s5 = scalar_lea.vmem %s0, 7
    %v6 = vld [vmem:[%s5] sm:$0x1]
    %7 = vrot.lane.b32.xlu0 %v6, 28
    %v8 = vpop.permute.xlu0 %7
    %vm9 = vcmask 261344
    %10 = vst.msk [vmem:[#allocation0] sm:$0x1] %vm9, %v8
    %s11 = scalar_lea.vmem %s0, 6
    %v12 = vld [vmem:[%s11] sm:$0x1]
    %13 = vrot.lane.b32.xlu0 %v12, 24
    %v14 = vpop.permute.xlu0 %13
    %vm15 = vcmask 228544
    %16 = vst.msk [vmem:[#allocation0] sm:$0x1] %vm15, %v14
    %s17 = scalar_lea.vmem %s0, 5
    %v18 = vld [vmem:[%s17] sm:$0x1]
    %19 = vrot.lane.b32.xlu0 %v18, 20
    %v20 = vpop.permute.xlu0 %19
    %vm21 = vcmask 195744
    %22 = vst.msk [vmem:[#allocation0] sm:$0x1] %vm21, %v20
    %s23 = scalar_lea.vmem %s0, 4
    %v24 = vld [vmem:[%s23] sm:$0x1]
    %25 = vrot.lane.b32.xlu0 %v24, 16
    %v26 = vpop.permute.xlu0 %25
    %vm27 = vcmask 162944
    %28 = vst.msk [vmem:[#allocation0] sm:$0x1] %vm27, %v26
    %s29 = scalar_lea.vmem %s0, 3
    %v30 = vld [vmem:[%s29] sm:$0x1]
    %31 = vrot.lane.b32.xlu0 %v30, 12
    %v32 = vpop.permute.xlu0 %31
    %vm33 = vcmask 130144
    %34 = vst.msk [vmem:[#allocation0] sm:$0x1] %vm33, %v32
    %s35 = scalar_lea.vmem %s0, 2
    %v36 = vld [vmem:[%s35] sm:$0x1]
    %37 = vrot.lane.b32.xlu0 %v36, 8
    %v38 = vpop.permute.xlu0 %37
    %vm39 = vcmask 97344
    %40 = vst.msk [vmem:[#allocation0] sm:$0x1] %vm39, %v38
    %s41 = scalar_lea.vmem %s0, 1
    %v42 = vld [vmem:[%s41] sm:$0x1]
    %43 = vrot.lane.b32.xlu0 %v42, 4
    %v44 = vpop.permute.xlu0 %43
    %vm45 = vcmask 64544
    %46 = vst.msk [vmem:[#allocation0] sm:$0x1] %vm45, %v44
    %s48 = sshll.u32 1, 1
    %s49 = ssub.s32 %s48, 1
    %v51 = vld [vmem:[#allocation0] sm:%s49]
    %s52 = sshll.u32 1, 1
    %s53 = ssub.s32 %s52, 1
    %54 = vst [vmem:[%s1] sm:%s53] %v51

// kernel: simple_resblock_sub1f1.4
$region0: #{simple_resblock_sub1f1.4}
  #allocation0 [shape = 'u32[]', space=smem, size = 0x4, offset = 0x4, fixed_abs, tag = 'smem constant byte address 0x4 - core index']
  #allocation1 [shape = 'u32[144,128]{1,0:T(1,128)}', space=vmem, size = 0x12000, scoped, tag = 'internal scratch']
  %s0 = inlined_call_operand.vmem [shape: bf16[288,32], index: 0, kind: input, shape index: {}]
  %s1 = inlined_call_operand.vmem [shape: bf16[288,32], index: 1, kind: input, shape index: {}]
  %s2 = inlined_call_operand.vmem [shape: bf16[32,32], index: 2, kind: input, shape index: {}]
  %s3 = inlined_call_operand.vmem [shape: bf16[32,32], index: 3, kind: input, shape index: {}]
  %s4 = inlined_call_operand.vmem [shape: bf16[32,32], index: 4, kind: input, shape index: {}]
  %s5 = inlined_call_operand.vmem [shape: bf16[32,32], index: 5, kind: input, shape index: {}]
  %s6 = inlined_call_operand.vmem [shape: f32[1,32], index: 6, kind: input, shape index: {}]
  %s7 = inlined_call_operand.vmem [shape: f32[1,32], index: 7, kind: input, shape index: {}]
  %s8 = inlined_call_operand.vmem [shape: f32[1,32], index: 8, kind: input, shape index: {}]
  %s9 = inlined_call_operand.vmem [shape: f32[1,32], index: 9, kind: input, shape index: {}]
  %s10 = inlined_call_operand.vmem [shape: f32[288,32], index: 10, kind: output, shape index: {0}]
  %s11 = inlined_call_operand.vmem [shape: f32[288,32], index: 11, kind: output, shape index: {1}]
  %12 = xla_tuple %s10, %s11
  %s13 = sld [smem:[#allocation0]]
  $region58: #{simple_resblock_sub1f1.4} parent=0
    _
  %s15 = ssub.s32 1, %s13
  %s16 = scalar_select 0, %s15, %s13
  // Predicated region
  $region2: #{simple_resblock_sub1f1.4} parent=0 // pred_check
    _
  $region3: #{simple_resblock_sub1f1.4} parent=0 // pred_check_branch
    %18 = sbr.rel (0) target = $region5
  $region4: #{simple_resblock_sub1f1.4} parent=0 // pred_region
    _
  $region5: #{simple_resblock_sub1f1.4} parent=0 // pred_fallthru
    _
  // Predicated region
  $region6: #{simple_resblock_sub1f1.4} parent=0 // pred_check
    _
  $region7: #{simple_resblock_sub1f1.4} parent=0 // pred_check_branch
    %20 = sbr.rel (0) target = $region9
  $region8: #{simple_resblock_sub1f1.4} parent=0 // pred_region
    _
  $region9: #{simple_resblock_sub1f1.4} parent=0 // pred_fallthru
    _
  // Predicated region
  $region10: #{simple_resblock_sub1f1.4} parent=0 // pred_check
    _
  $region11: #{simple_resblock_sub1f1.4} parent=0 // pred_check_branch
    %22 = sbr.rel (0) target = $region13
  $region12: #{simple_resblock_sub1f1.4} parent=0 // pred_region
    _
  $region13: #{simple_resblock_sub1f1.4} parent=0 // pred_fallthru
    _
  // Predicated region
  $region14: #{simple_resblock_sub1f1.4} parent=0 // pred_check
    _
  $region15: #{simple_resblock_sub1f1.4} parent=0 // pred_check_branch
    %24 = sbr.rel (0) target = $region17
  $region16: #{simple_resblock_sub1f1.4} parent=0 // pred_region
    _
  $region17: #{simple_resblock_sub1f1.4} parent=0 // pred_fallthru
    _
  // Predicated region
  $region18: #{simple_resblock_sub1f1.4} parent=0 // pred_check
    _
  $region19: #{simple_resblock_sub1f1.4} parent=0 // pred_check_branch
    %26 = sbr.rel (0) target = $region21
  $region20: #{simple_resblock_sub1f1.4} parent=0 // pred_region
    _
  $region21: #{simple_resblock_sub1f1.4} parent=0 // pred_fallthru
    _
  // Predicated region
  $region22: #{simple_resblock_sub1f1.4} parent=0 // pred_check
    _
  $region23: #{simple_resblock_sub1f1.4} parent=0 // pred_check_branch
    %28 = sbr.rel (0) target = $region25
  $region24: #{simple_resblock_sub1f1.4} parent=0 // pred_region
    _
  $region25: #{simple_resblock_sub1f1.4} parent=0 // pred_fallthru
    _
  // Predicated region
  $region26: #{simple_resblock_sub1f1.4} parent=0 // pred_check
    _
  $region27: #{simple_resblock_sub1f1.4} parent=0 // pred_check_branch
    %30 = sbr.rel (0) target = $region29
  $region28: #{simple_resblock_sub1f1.4} parent=0 // pred_region
    _
  $region29: #{simple_resblock_sub1f1.4} parent=0 // pred_fallthru
    _
  // Predicated region
  $region30: #{simple_resblock_sub1f1.4} parent=0 // pred_check
    _
  $region31: #{simple_resblock_sub1f1.4} parent=0 // pred_check_branch
    %32 = sbr.rel (0) target = $region33
  $region32: #{simple_resblock_sub1f1.4} parent=0 // pred_region
    _
  $region33: #{simple_resblock_sub1f1.4} parent=0 // pred_fallthru
    _
  // Predicated region
  $region34: #{simple_resblock_sub1f1.4} parent=0 // pred_check
    _
  $region35: #{simple_resblock_sub1f1.4} parent=0 // pred_check_branch
    %34 = sbr.rel (0) target = $region37
  $region36: #{simple_resblock_sub1f1.4} parent=0 // pred_region
    _
  $region37: #{simple_resblock_sub1f1.4} parent=0 // pred_fallthru
    _
  // Predicated region
  $region38: #{simple_resblock_sub1f1.4} parent=0 // pred_check
    _
  $region39: #{simple_resblock_sub1f1.4} parent=0 // pred_check_branch
    %36 = sbr.rel (0) target = $region41
  $region40: #{simple_resblock_sub1f1.4} parent=0 // pred_region
    _
  $region41: #{simple_resblock_sub1f1.4} parent=0 // pred_fallthru
    _
  %v38 = vld [vmem:[%s0] sm:$0xf]
  %v39 = vld [vmem:[%s0 + $0x4] sm:$0xf]
  %v40 = vld [vmem:[%s0 + $0x8] sm:$0xf]
  %v41 = vld [vmem:[%s0 + $0xc] sm:$0xf]
  %v42 = vld [vmem:[%s0 + $0x10] sm:$0xf]
  %v43 = vld [vmem:[%s0 + $0x14] sm:$0xf]
  %v44 = vld [vmem:[%s0 + $0x18] sm:$0xf]
  %v45 = vld [vmem:[%s0 + $0x1c] sm:$0xf]
  %v46 = vld [vmem:[%s0 + $0x20] sm:$0xf]
  %v47 = vld [vmem:[%s0 + $0x24] sm:$0xf]
  %v48 = vld [vmem:[%s0 + $0x28] sm:$0xf]
  %v49 = vld [vmem:[%s0 + $0x2c] sm:$0xf]
  %v50 = vld [vmem:[%s0 + $0x30] sm:$0xf]
  %v51 = vld [vmem:[%s0 + $0x34] sm:$0xf]
  %v52 = vld [vmem:[%s0 + $0x38] sm:$0xf]
  %v53 = vld [vmem:[%s0 + $0x3c] sm:$0xf]
  %v54 = vld [vmem:[%s0 + $0x40] sm:$0xf]
  %v55 = vld [vmem:[%s0 + $0x44] sm:$0xf]
  %v56 = vld [vmem:[%s0 + $0x48] sm:$0xf]
  %v57 = vld [vmem:[%s0 + $0x4c] sm:$0xf]
  %v58 = vld [vmem:[%s0 + $0x50] sm:$0xf]
  %v59 = vld [vmem:[%s0 + $0x54] sm:$0xf]
  %v60 = vld [vmem:[%s0 + $0x58] sm:$0xf]
  %v61 = vld [vmem:[%s0 + $0x5c] sm:$0xf]
  %v62 = vld [vmem:[%s0 + $0x60] sm:$0xf]
  %v63 = vld [vmem:[%s0 + $0x64] sm:$0xf]
  %v64 = vld [vmem:[%s0 + $0x68] sm:$0xf]
  %v65 = vld [vmem:[%s0 + $0x6c] sm:$0xf]
  %v66 = vld [vmem:[%s0 + $0x70] sm:$0xf]
  %v67 = vld [vmem:[%s0 + $0x74] sm:$0xf]
  %v68 = vld [vmem:[%s0 + $0x78] sm:$0xf]
  %v69 = vld [vmem:[%s0 + $0x7c] sm:$0xf]
  %v70 = vld [vmem:[%s0 + $0x80] sm:$0xf]
  %v71 = vld [vmem:[%s0 + $0x84] sm:$0xf]
  %v72 = vld [vmem:[%s0 + $0x88] sm:$0xf]
  %v73 = vld [vmem:[%s0 + $0x8c] sm:$0xf]
  %v74 = vld [vmem:[%s1] sm:$0xf]
  %v75 = vld [vmem:[%s1 + $0x4] sm:$0xf]
  %v76 = vld [vmem:[%s1 + $0x8] sm:$0xf]
  %v77 = vld [vmem:[%s1 + $0xc] sm:$0xf]
  %v78 = vld [vmem:[%s1 + $0x10] sm:$0xf]
  %v79 = vld [vmem:[%s1 + $0x14] sm:$0xf]
  %v80 = vld [vmem:[%s1 + $0x18] sm:$0xf]
  %v81 = vld [vmem:[%s1 + $0x1c] sm:$0xf]
  %v82 = vld [vmem:[%s1 + $0x20] sm:$0xf]
  %v83 = vld [vmem:[%s1 + $0x24] sm:$0xf]
  %v84 = vld [vmem:[%s1 + $0x28] sm:$0xf]
  %v85 = vld [vmem:[%s1 + $0x2c] sm:$0xf]
  %v86 = vld [vmem:[%s1 + $0x30] sm:$0xf]
  %v87 = vld [vmem:[%s1 + $0x34] sm:$0xf]
  %v88 = vld [vmem:[%s1 + $0x38] sm:$0xf]
  %v89 = vld [vmem:[%s1 + $0x3c] sm:$0xf]
  %v90 = vld [vmem:[%s1 + $0x40] sm:$0xf]
  %v91 = vld [vmem:[%s1 + $0x44] sm:$0xf]
  %v92 = vld [vmem:[%s1 + $0x48] sm:$0xf]
  %v93 = vld [vmem:[%s1 + $0x4c] sm:$0xf]
  %v94 = vld [vmem:[%s1 + $0x50] sm:$0xf]
  %v95 = vld [vmem:[%s1 + $0x54] sm:$0xf]
  %v96 = vld [vmem:[%s1 + $0x58] sm:$0xf]
  %v97 = vld [vmem:[%s1 + $0x5c] sm:$0xf]
  %v98 = vld [vmem:[%s1 + $0x60] sm:$0xf]
  %v99 = vld [vmem:[%s1 + $0x64] sm:$0xf]
  %v100 = vld [vmem:[%s1 + $0x68] sm:$0xf]
  %v101 = vld [vmem:[%s1 + $0x6c] sm:$0xf]
  %v102 = vld [vmem:[%s1 + $0x70] sm:$0xf]
  %v103 = vld [vmem:[%s1 + $0x74] sm:$0xf]
  %v104 = vld [vmem:[%s1 + $0x78] sm:$0xf]
  %v105 = vld [vmem:[%s1 + $0x7c] sm:$0xf]
  %v106 = vld [vmem:[%s1 + $0x80] sm:$0xf]
  %v107 = vld [vmem:[%s1 + $0x84] sm:$0xf]
  %v108 = vld [vmem:[%s1 + $0x88] sm:$0xf]
  %v109 = vld [vmem:[%s1 + $0x8c] sm:$0xf]
  %v110 = vld [vmem:[%s2] sm:$0xf]
  %v111 = vld [vmem:[%s2 + $0x4] sm:$0xf]
  %v112 = vld [vmem:[%s2 + $0x8] sm:$0xf]
  %v113 = vld [vmem:[%s2 + $0xc] sm:$0xf]
  %v150 = vunpack.c.l.b16 %v38
  %v151 = vunpack.c.l.b16 %v39
  %v152 = vunpack.c.l.b16 %v40
  %v153 = vunpack.c.l.b16 %v41
  %v154 = vunpack.c.l.b16 %v42
  %v155 = vunpack.c.l.b16 %v43
  %v156 = vunpack.c.l.b16 %v44
  %v157 = vunpack.c.l.b16 %v45
  %v158 = vunpack.c.l.b16 %v46
  %v159 = vunpack.c.l.b16 %v47
  %v160 = vunpack.c.l.b16 %v48
  %v161 = vunpack.c.l.b16 %v49
  %v162 = vunpack.c.l.b16 %v50
  %v163 = vunpack.c.l.b16 %v51
  %v164 = vunpack.c.l.b16 %v52
  %v165 = vunpack.c.l.b16 %v53
  %v166 = vunpack.c.l.b16 %v54
  %v167 = vunpack.c.l.b16 %v55
  %v168 = vunpack.c.l.b16 %v56
  %v169 = vunpack.c.l.b16 %v57
  %v170 = vunpack.c.l.b16 %v58
  %v171 = vunpack.c.l.b16 %v59
  %v172 = vunpack.c.l.b16 %v60
  %v173 = vunpack.c.l.b16 %v61
  %v174 = vunpack.c.l.b16 %v62
  %v175 = vunpack.c.l.b16 %v63
  %v176 = vunpack.c.l.b16 %v64
  %v177 = vunpack.c.l.b16 %v65
  %v178 = vunpack.c.l.b16 %v66
  %v179 = vunpack.c.l.b16 %v67
  %v180 = vunpack.c.l.b16 %v68
  %v181 = vunpack.c.l.b16 %v69
  %v182 = vunpack.c.l.b16 %v70
  %v183 = vunpack.c.l.b16 %v71
  %v184 = vunpack.c.l.b16 %v72
  %v185 = vunpack.c.l.b16 %v73
  %v186 = vpack.c.b16 %v151, %v150
  %v187 = vpack.c.b16 %v153, %v152
  %v188 = vpack.c.b16 %v155, %v154
  %v189 = vpack.c.b16 %v157, %v156
  %v190 = vpack.c.b16 %v159, %v158
  %v191 = vpack.c.b16 %v161, %v160
  %v192 = vpack.c.b16 %v163, %v162
  %v193 = vpack.c.b16 %v165, %v164
  %v194 = vpack.c.b16 %v167, %v166
  %v195 = vpack.c.b16 %v169, %v168
  %v196 = vpack.c.b16 %v171, %v170
  %v197 = vpack.c.b16 %v173, %v172
  %v198 = vpack.c.b16 %v175, %v174
  %v199 = vpack.c.b16 %v177, %v176
  %v200 = vpack.c.b16 %v179, %v178
  %v201 = vpack.c.b16 %v181, %v180
  %v202 = vpack.c.b16 %v183, %v182
  %v203 = vpack.c.b16 %v185, %v184
  %v208 = vunpack.c.l.b16 %v110
  %v209 = vunpack.c.l.b16 %v111
  %v210 = vunpack.c.l.b16 %v112
  %v211 = vunpack.c.l.b16 %v113
  %v212 = vpack.c.b16 %v209, %v208
  %v213 = vpack.c.b16 %v211, %v210
  %vm216 = vcmask 261120
  %v218 = vsel %vm216, %v186, 0
  %v221 = vsel %vm216, %v187, 0
  %v224 = vsel %vm216, %v188, 0
  %v227 = vsel %vm216, %v189, 0
  %v230 = vsel %vm216, %v190, 0
  %v233 = vsel %vm216, %v191, 0
  %v236 = vsel %vm216, %v192, 0
  %v239 = vsel %vm216, %v193, 0
  %v242 = vsel %vm216, %v194, 0
  %v245 = vsel %vm216, %v195, 0
  %v248 = vsel %vm216, %v196, 0
  %v251 = vsel %vm216, %v197, 0
  %v254 = vsel %vm216, %v198, 0
  %v257 = vsel %vm216, %v199, 0
  %v260 = vsel %vm216, %v200, 0
  %v263 = vsel %vm216, %v201, 0
  %v266 = vsel %vm216, %v202, 0
  %v269 = vsel %vm216, %v203, 0
  %271 = vmatprep.subr.bf16.mxu0 0
  %272 = vmatpush1.bf16.msra.mxu0 0
  %273 = vmatprep.subr.bf16.mxu0 0
  %274 = vmatpush1.bf16.msra.mxu0 0
  %275 = vmatprep.subr.bf16.mxu0 0
  %276 = vmatpush1.bf16.msra.mxu0 0
  %277 = vmatprep.subr.bf16.mxu0 0
  %278 = vmatpush1.bf16.msra.mxu0 0
  %279 = vmatprep.subr.bf16.mxu0 0
  %280 = vmatpush1.bf16.msra.mxu0 0
  %281 = vmatprep.subr.bf16.mxu0 0
  %282 = vmatpush1.bf16.msra.mxu0 0
  %283 = vmatprep.subr.bf16.mxu0 0
  %284 = vmatpush1.bf16.msra.mxu0 %v213
  %285 = vmatprep.subr.bf16.mxu0 0
  %286 = vmatpush1.bf16.msra.mxu0 %v212
  %287 = vmatprep.subr.bf16.mxu0 0
  %288 = vmatpush2.bf16.msra.mxu0 0
  %289 = vmatprep.subr.bf16.mxu0 0
  %290 = vmatpush2.bf16.msra.mxu0 0
  %291 = vmatprep.subr.bf16.mxu0 0
  %292 = vmatpush2.bf16.msra.mxu0 0
  %293 = vmatprep.subr.bf16.mxu0 0
  %294 = vmatpush2.bf16.msra.mxu0 0
  %295 = vmatprep.subr.bf16.mxu0 0
  %296 = vmatpush2.bf16.msra.mxu0 0
  %297 = vmatprep.subr.bf16.mxu0 0
  %298 = vmatpush2.bf16.msra.mxu0 0
  %299 = vmatprep.subr.bf16.mxu0 0
  %300 = vmatpush2.bf16.msra.mxu0 0
  %301 = vmatprep.subr.bf16.mxu0 0
  %302 = vmatpush2.bf16.msra.mxu0 0
  %303 = vmatprep.mubr.bf16.mxu0 0
  %304 = vmatmul.mubr.bf16.gmra.mxu0 %v218
  %v305 = vpop.f32.mrf.mxu0
  %v306 = vadd.f32 0.0, %v305
  %v307 = vpop.f32.mrf.mxu0
  %v308 = vpop.f32.mrf.mxu0
  %v309 = vadd.f32 0.0, %v308
  %v310 = vpop.f32.mrf.mxu0
  %311 = vmatprep.mubr.bf16.mxu0 0
  %312 = vmatmul.mubr.bf16.gmra.mxu0 %v221
  %v313 = vpop.f32.mrf.mxu0
  %v314 = vadd.f32 0.0, %v313
  %v315 = vpop.f32.mrf.mxu0
  %v316 = vpop.f32.mrf.mxu0
  %v317 = vadd.f32 0.0, %v316
  %v318 = vpop.f32.mrf.mxu0
  %319 = vmatprep.mubr.bf16.mxu0 0
  %320 = vmatmul.mubr.bf16.gmra.mxu0 %v224
  %v321 = vpop.f32.mrf.mxu0
  %v322 = vadd.f32 0.0, %v321
  %v323 = vpop.f32.mrf.mxu0
  %v324 = vpop.f32.mrf.mxu0
  %v325 = vadd.f32 0.0, %v324
  %v326 = vpop.f32.mrf.mxu0
  %327 = vmatprep.mubr.bf16.mxu0 0
  %328 = vmatmul.mubr.bf16.gmra.mxu0 %v227
  %v329 = vpop.f32.mrf.mxu0
  %v330 = vadd.f32 0.0, %v329
  %v331 = vpop.f32.mrf.mxu0
  %v332 = vpop.f32.mrf.mxu0
  %v333 = vadd.f32 0.0, %v332
  %v334 = vpop.f32.mrf.mxu0
  %335 = vmatprep.mubr.bf16.mxu0 0
  %336 = vmatmul.mubr.bf16.gmra.mxu0 %v230
  %v337 = vpop.f32.mrf.mxu0
  %v338 = vadd.f32 0.0, %v337
  %v339 = vpop.f32.mrf.mxu0
  %v340 = vpop.f32.mrf.mxu0
  %v341 = vadd.f32 0.0, %v340
  %v342 = vpop.f32.mrf.mxu0
  %343 = vmatprep.mubr.bf16.mxu0 0
  %344 = vmatmul.mubr.bf16.gmra.mxu0 %v233
  %v345 = vpop.f32.mrf.mxu0
  %v346 = vadd.f32 0.0, %v345
  %v347 = vpop.f32.mrf.mxu0
  %v348 = vpop.f32.mrf.mxu0
  %v349 = vadd.f32 0.0, %v348
  %v350 = vpop.f32.mrf.mxu0
  %351 = vmatprep.mubr.bf16.mxu0 0
  %352 = vmatmul.mubr.bf16.gmra.mxu0 %v236
  %v353 = vpop.f32.mrf.mxu0
  %v354 = vadd.f32 0.0, %v353
  %v355 = vpop.f32.mrf.mxu0
  %v356 = vpop.f32.mrf.mxu0
  %v357 = vadd.f32 0.0, %v356
  %v358 = vpop.f32.mrf.mxu0
  %359 = vmatprep.mubr.bf16.mxu0 0
  %360 = vmatmul.mubr.bf16.gmra.mxu0 %v239
  %v361 = vpop.f32.mrf.mxu0
  %v362 = vadd.f32 0.0, %v361
  %v363 = vpop.f32.mrf.mxu0
  %v364 = vpop.f32.mrf.mxu0
  %v365 = vadd.f32 0.0, %v364
  %v366 = vpop.f32.mrf.mxu0
  %367 = vmatprep.mubr.bf16.mxu0 0
  %368 = vmatmul.mubr.bf16.gmra.mxu0 %v242
  %v369 = vpop.f32.mrf.mxu0
  %v370 = vadd.f32 0.0, %v369
  %v371 = vpop.f32.mrf.mxu0
  %v372 = vpop.f32.mrf.mxu0
  %v373 = vadd.f32 0.0, %v372
  %v374 = vpop.f32.mrf.mxu0
  %375 = vmatprep.mubr.bf16.mxu0 0
  %376 = vmatmul.mubr.bf16.gmra.mxu0 %v245
  %v377 = vpop.f32.mrf.mxu0
  %v378 = vadd.f32 0.0, %v377
  %v379 = vpop.f32.mrf.mxu0
  %v380 = vpop.f32.mrf.mxu0
  %v381 = vadd.f32 0.0, %v380
  %v382 = vpop.f32.mrf.mxu0
  %383 = vmatprep.mubr.bf16.mxu0 0
  %384 = vmatmul.mubr.bf16.gmra.mxu0 %v248
  %v385 = vpop.f32.mrf.mxu0
  %v386 = vadd.f32 0.0, %v385
  %v387 = vpop.f32.mrf.mxu0
  %v388 = vpop.f32.mrf.mxu0
  %v389 = vadd.f32 0.0, %v388
  %v390 = vpop.f32.mrf.mxu0
  %391 = vmatprep.mubr.bf16.mxu0 0
  %392 = vmatmul.mubr.bf16.gmra.mxu0 %v251
  %v393 = vpop.f32.mrf.mxu0
  %v394 = vadd.f32 0.0, %v393
  %v395 = vpop.f32.mrf.mxu0
  %v396 = vpop.f32.mrf.mxu0
  %v397 = vadd.f32 0.0, %v396
  %v398 = vpop.f32.mrf.mxu0
  %399 = vmatprep.mubr.bf16.mxu0 0
  %400 = vmatmul.mubr.bf16.gmra.mxu0 %v254
  %v401 = vpop.f32.mrf.mxu0
  %v402 = vadd.f32 0.0, %v401
  %v403 = vpop.f32.mrf.mxu0
  %v404 = vpop.f32.mrf.mxu0
  %v405 = vadd.f32 0.0, %v404
  %v406 = vpop.f32.mrf.mxu0
  %407 = vmatprep.mubr.bf16.mxu0 0
  %408 = vmatmul.mubr.bf16.gmra.mxu0 %v257
  %v409 = vpop.f32.mrf.mxu0
  %v410 = vadd.f32 0.0, %v409
  %v411 = vpop.f32.mrf.mxu0
  %v412 = vpop.f32.mrf.mxu0
  %v413 = vadd.f32 0.0, %v412
  %v414 = vpop.f32.mrf.mxu0
  %415 = vmatprep.mubr.bf16.mxu0 0
  %416 = vmatmul.mubr.bf16.gmra.mxu0 %v260
  %v417 = vpop.f32.mrf.mxu0
  %v418 = vadd.f32 0.0, %v417
  %v419 = vpop.f32.mrf.mxu0
  %v420 = vpop.f32.mrf.mxu0
  %v421 = vadd.f32 0.0, %v420
  %v422 = vpop.f32.mrf.mxu0
  %423 = vmatprep.mubr.bf16.mxu0 0
  %424 = vmatmul.mubr.bf16.gmra.mxu0 %v263
  %v425 = vpop.f32.mrf.mxu0
  %v426 = vadd.f32 0.0, %v425
  %v427 = vpop.f32.mrf.mxu0
  %v428 = vpop.f32.mrf.mxu0
  %v429 = vadd.f32 0.0, %v428
  %v430 = vpop.f32.mrf.mxu0
  %431 = vmatprep.mubr.bf16.mxu0 0
  %432 = vmatmul.mubr.bf16.gmra.mxu0 %v266
  %v433 = vpop.f32.mrf.mxu0
  %v434 = vadd.f32 0.0, %v433
  %v435 = vpop.f32.mrf.mxu0
  %v436 = vpop.f32.mrf.mxu0
  %v437 = vadd.f32 0.0, %v436
  %v438 = vpop.f32.mrf.mxu0
  %439 = vmatprep.mubr.bf16.mxu0 0
  %440 = vmatmul.mubr.bf16.gmra.mxu0 %v269
  %v441 = vpop.f32.mrf.mxu0
  %v442 = vadd.f32 0.0, %v441
  %v443 = vpop.f32.mrf.mxu0
  %v444 = vpop.f32.mrf.mxu0
  %v445 = vadd.f32 0.0, %v444
  %v446 = vpop.f32.mrf.mxu0
  %447 = vdwg.mxu0
  %v448 = vld [vmem:[%s3] sm:$0xf]
  %v449 = vld [vmem:[%s3 + $0x4] sm:$0xf]
  %v450 = vld [vmem:[%s3 + $0x8] sm:$0xf]
  %v451 = vld [vmem:[%s3 + $0xc] sm:$0xf]
  %v488 = vunpack.c.l.b16 %v74
  %v489 = vunpack.c.l.b16 %v75
  %v490 = vunpack.c.l.b16 %v76
  %v491 = vunpack.c.l.b16 %v77
  %v492 = vunpack.c.l.b16 %v78
  %v493 = vunpack.c.l.b16 %v79
  %v494 = vunpack.c.l.b16 %v80
  %v495 = vunpack.c.l.b16 %v81
  %v496 = vunpack.c.l.b16 %v82
  %v497 = vunpack.c.l.b16 %v83
  %v498 = vunpack.c.l.b16 %v84
  %v499 = vunpack.c.l.b16 %v85
  %v500 = vunpack.c.l.b16 %v86
  %v501 = vunpack.c.l.b16 %v87
  %v502 = vunpack.c.l.b16 %v88
  %v503 = vunpack.c.l.b16 %v89
  %v504 = vunpack.c.l.b16 %v90
  %v505 = vunpack.c.l.b16 %v91
  %v506 = vunpack.c.l.b16 %v92
  %v507 = vunpack.c.l.b16 %v93
  %v508 = vunpack.c.l.b16 %v94
  %v509 = vunpack.c.l.b16 %v95
  %v510 = vunpack.c.l.b16 %v96
  %v511 = vunpack.c.l.b16 %v97
  %v512 = vunpack.c.l.b16 %v98
  %v513 = vunpack.c.l.b16 %v99
  %v514 = vunpack.c.l.b16 %v100
  %v515 = vunpack.c.l.b16 %v101
  %v516 = vunpack.c.l.b16 %v102
  %v517 = vunpack.c.l.b16 %v103
  %v518 = vunpack.c.l.b16 %v104
  %v519 = vunpack.c.l.b16 %v105
  %v520 = vunpack.c.l.b16 %v106
  %v521 = vunpack.c.l.b16 %v107
  %v522 = vunpack.c.l.b16 %v108
  %v523 = vunpack.c.l.b16 %v109
  %v524 = vpack.c.b16 %v489, %v488
  %v525 = vpack.c.b16 %v491, %v490
  %v526 = vpack.c.b16 %v493, %v492
  %v527 = vpack.c.b16 %v495, %v494
  %v528 = vpack.c.b16 %v497, %v496
  %v529 = vpack.c.b16 %v499, %v498
  %v530 = vpack.c.b16 %v501, %v500
  %v531 = vpack.c.b16 %v503, %v502
  %v532 = vpack.c.b16 %v505, %v504
  %v533 = vpack.c.b16 %v507, %v506
  %v534 = vpack.c.b16 %v509, %v508
  %v535 = vpack.c.b16 %v511, %v510
  %v536 = vpack.c.b16 %v513, %v512
  %v537 = vpack.c.b16 %v515, %v514
  %v538 = vpack.c.b16 %v517, %v516
  %v539 = vpack.c.b16 %v519, %v518
  %v540 = vpack.c.b16 %v521, %v520
  %v541 = vpack.c.b16 %v523, %v522
  %v546 = vunpack.c.l.b16 %v448
  %v547 = vunpack.c.l.b16 %v449
  %v548 = vunpack.c.l.b16 %v450
  %v549 = vunpack.c.l.b16 %v451
  %v550 = vpack.c.b16 %v547, %v546
  %v551 = vpack.c.b16 %v549, %v548
  %v555 = vsel %vm216, %v524, 0
  %v558 = vsel %vm216, %v525, 0
  %v561 = vsel %vm216, %v526, 0
  %v564 = vsel %vm216, %v527, 0
  %v567 = vsel %vm216, %v528, 0
  %v570 = vsel %vm216, %v529, 0
  %v573 = vsel %vm216, %v530, 0
  %v576 = vsel %vm216, %v531, 0
  %v579 = vsel %vm216, %v532, 0
  %v582 = vsel %vm216, %v533, 0
  %v585 = vsel %vm216, %v534, 0
  %v588 = vsel %vm216, %v535, 0
  %v591 = vsel %vm216, %v536, 0
  %v594 = vsel %vm216, %v537, 0
  %v597 = vsel %vm216, %v538, 0
  %v600 = vsel %vm216, %v539, 0
  %v603 = vsel %vm216, %v540, 0
  %v606 = vsel %vm216, %v541, 0
  %608 = vmatprep.subr.bf16.mxu0 0
  %609 = vmatpush1.bf16.msra.mxu0 0
  %610 = vmatprep.subr.bf16.mxu0 0
  %611 = vmatpush1.bf16.msra.mxu0 0
  %612 = vmatprep.subr.bf16.mxu0 0
  %613 = vmatpush1.bf16.msra.mxu0 0
  %614 = vmatprep.subr.bf16.mxu0 0
  %615 = vmatpush1.bf16.msra.mxu0 0
  %616 = vmatprep.subr.bf16.mxu0 0
  %617 = vmatpush1.bf16.msra.mxu0 0
  %618 = vmatprep.subr.bf16.mxu0 0
  %619 = vmatpush1.bf16.msra.mxu0 0
  %620 = vmatprep.subr.bf16.mxu0 0
  %621 = vmatpush1.bf16.msra.mxu0 %v551
  %622 = vmatprep.subr.bf16.mxu0 0
  %623 = vmatpush1.bf16.msra.mxu0 %v550
  %624 = vmatprep.subr.bf16.mxu0 0
  %625 = vmatpush2.bf16.msra.mxu0 0
  %626 = vmatprep.subr.bf16.mxu0 0
  %627 = vmatpush2.bf16.msra.mxu0 0
  %628 = vmatprep.subr.bf16.mxu0 0
  %629 = vmatpush2.bf16.msra.mxu0 0
  %630 = vmatprep.subr.bf16.mxu0 0
  %631 = vmatpush2.bf16.msra.mxu0 0
  %632 = vmatprep.subr.bf16.mxu0 0
  %633 = vmatpush2.bf16.msra.mxu0 0
  %634 = vmatprep.subr.bf16.mxu0 0
  %635 = vmatpush2.bf16.msra.mxu0 0
  %636 = vmatprep.subr.bf16.mxu0 0
  %637 = vmatpush2.bf16.msra.mxu0 0
  %638 = vmatprep.subr.bf16.mxu0 0
  %639 = vmatpush2.bf16.msra.mxu0 0
  %640 = vmatprep.mubr.bf16.mxu0 0
  %641 = vmatmul.mubr.bf16.gmra.mxu0 %v555
  %v642 = vpop.f32.mrf.mxu0
  %v643 = vadd.f32 0.0, %v642
  %v644 = vpop.f32.mrf.mxu0
  %v645 = vpop.f32.mrf.mxu0
  %v646 = vadd.f32 0.0, %v645
  %v647 = vpop.f32.mrf.mxu0
  %648 = vmatprep.mubr.bf16.mxu0 0
  %649 = vmatmul.mubr.bf16.gmra.mxu0 %v558
  %v650 = vpop.f32.mrf.mxu0
  %v651 = vadd.f32 0.0, %v650
  %v652 = vpop.f32.mrf.mxu0
  %v653 = vpop.f32.mrf.mxu0
  %v654 = vadd.f32 0.0, %v653
  %v655 = vpop.f32.mrf.mxu0
  %656 = vmatprep.mubr.bf16.mxu0 0
  %657 = vmatmul.mubr.bf16.gmra.mxu0 %v561
  %v658 = vpop.f32.mrf.mxu0
  %v659 = vadd.f32 0.0, %v658
  %v660 = vpop.f32.mrf.mxu0
  %v661 = vpop.f32.mrf.mxu0
  %v662 = vadd.f32 0.0, %v661
  %v663 = vpop.f32.mrf.mxu0
  %664 = vmatprep.mubr.bf16.mxu0 0
  %665 = vmatmul.mubr.bf16.gmra.mxu0 %v564
  %v666 = vpop.f32.mrf.mxu0
  %v667 = vadd.f32 0.0, %v666
  %v668 = vpop.f32.mrf.mxu0
  %v669 = vpop.f32.mrf.mxu0
  %v670 = vadd.f32 0.0, %v669
  %v671 = vpop.f32.mrf.mxu0
  %672 = vmatprep.mubr.bf16.mxu0 0
  %673 = vmatmul.mubr.bf16.gmra.mxu0 %v567
  %v674 = vpop.f32.mrf.mxu0
  %v675 = vadd.f32 0.0, %v674
  %v676 = vpop.f32.mrf.mxu0
  %v677 = vpop.f32.mrf.mxu0
  %v678 = vadd.f32 0.0, %v677
  %v679 = vpop.f32.mrf.mxu0
  %680 = vmatprep.mubr.bf16.mxu0 0
  %681 = vmatmul.mubr.bf16.gmra.mxu0 %v570
  %v682 = vpop.f32.mrf.mxu0
  %v683 = vadd.f32 0.0, %v682
  %v684 = vpop.f32.mrf.mxu0
  %v685 = vpop.f32.mrf.mxu0
  %v686 = vadd.f32 0.0, %v685
  %v687 = vpop.f32.mrf.mxu0
  %688 = vmatprep.mubr.bf16.mxu0 0
  %689 = vmatmul.mubr.bf16.gmra.mxu0 %v573
  %v690 = vpop.f32.mrf.mxu0
  %v691 = vadd.f32 0.0, %v690
  %v692 = vpop.f32.mrf.mxu0
  %v693 = vpop.f32.mrf.mxu0
  %v694 = vadd.f32 0.0, %v693
  %v695 = vpop.f32.mrf.mxu0
  %696 = vmatprep.mubr.bf16.mxu0 0
  %697 = vmatmul.mubr.bf16.gmra.mxu0 %v576
  %v698 = vpop.f32.mrf.mxu0
  %v699 = vadd.f32 0.0, %v698
  %v700 = vpop.f32.mrf.mxu0
  %v701 = vpop.f32.mrf.mxu0
  %v702 = vadd.f32 0.0, %v701
  %v703 = vpop.f32.mrf.mxu0
  %704 = vmatprep.mubr.bf16.mxu0 0
  %705 = vmatmul.mubr.bf16.gmra.mxu0 %v579
  %v706 = vpop.f32.mrf.mxu0
  %v707 = vadd.f32 0.0, %v706
  %v708 = vpop.f32.mrf.mxu0
  %v709 = vpop.f32.mrf.mxu0
  %v710 = vadd.f32 0.0, %v709
  %v711 = vpop.f32.mrf.mxu0
  %712 = vmatprep.mubr.bf16.mxu0 0
  %713 = vmatmul.mubr.bf16.gmra.mxu0 %v582
  %v714 = vpop.f32.mrf.mxu0
  %v715 = vadd.f32 0.0, %v714
  %v716 = vpop.f32.mrf.mxu0
  %v717 = vpop.f32.mrf.mxu0
  %v718 = vadd.f32 0.0, %v717
  %v719 = vpop.f32.mrf.mxu0
  %720 = vmatprep.mubr.bf16.mxu0 0
  %721 = vmatmul.mubr.bf16.gmra.mxu0 %v585
  %v722 = vpop.f32.mrf.mxu0
  %v723 = vadd.f32 0.0, %v722
  %v724 = vpop.f32.mrf.mxu0
  %v725 = vpop.f32.mrf.mxu0
  %v726 = vadd.f32 0.0, %v725
  %v727 = vpop.f32.mrf.mxu0
  %728 = vmatprep.mubr.bf16.mxu0 0
  %729 = vmatmul.mubr.bf16.gmra.mxu0 %v588
  %v730 = vpop.f32.mrf.mxu0
  %v731 = vadd.f32 0.0, %v730
  %v732 = vpop.f32.mrf.mxu0
  %v733 = vpop.f32.mrf.mxu0
  %v734 = vadd.f32 0.0, %v733
  %v735 = vpop.f32.mrf.mxu0
  %736 = vmatprep.mubr.bf16.mxu0 0
  %737 = vmatmul.mubr.bf16.gmra.mxu0 %v591
  %v738 = vpop.f32.mrf.mxu0
  %v739 = vadd.f32 0.0, %v738
  %v740 = vpop.f32.mrf.mxu0
  %v741 = vpop.f32.mrf.mxu0
  %v742 = vadd.f32 0.0, %v741
  %v743 = vpop.f32.mrf.mxu0
  %744 = vmatprep.mubr.bf16.mxu0 0
  %745 = vmatmul.mubr.bf16.gmra.mxu0 %v594
  %v746 = vpop.f32.mrf.mxu0
  %v747 = vadd.f32 0.0, %v746
  %v748 = vpop.f32.mrf.mxu0
  %v749 = vpop.f32.mrf.mxu0
  %v750 = vadd.f32 0.0, %v749
  %v751 = vpop.f32.mrf.mxu0
  %752 = vmatprep.mubr.bf16.mxu0 0
  %753 = vmatmul.mubr.bf16.gmra.mxu0 %v597
  %v754 = vpop.f32.mrf.mxu0
  %v755 = vadd.f32 0.0, %v754
  %v756 = vpop.f32.mrf.mxu0
  %v757 = vpop.f32.mrf.mxu0
  %v758 = vadd.f32 0.0, %v757
  %v759 = vpop.f32.mrf.mxu0
  %760 = vmatprep.mubr.bf16.mxu0 0
  %761 = vmatmul.mubr.bf16.gmra.mxu0 %v600
  %v762 = vpop.f32.mrf.mxu0
  %v763 = vadd.f32 0.0, %v762
  %v764 = vpop.f32.mrf.mxu0
  %v765 = vpop.f32.mrf.mxu0
  %v766 = vadd.f32 0.0, %v765
  %v767 = vpop.f32.mrf.mxu0
  %768 = vmatprep.mubr.bf16.mxu0 0
  %769 = vmatmul.mubr.bf16.gmra.mxu0 %v603
  %v770 = vpop.f32.mrf.mxu0
  %v771 = vadd.f32 0.0, %v770
  %v772 = vpop.f32.mrf.mxu0
  %v773 = vpop.f32.mrf.mxu0
  %v774 = vadd.f32 0.0, %v773
  %v775 = vpop.f32.mrf.mxu0
  %776 = vmatprep.mubr.bf16.mxu0 0
  %777 = vmatmul.mubr.bf16.gmra.mxu0 %v606
  %v778 = vpop.f32.mrf.mxu0
  %v779 = vadd.f32 0.0, %v778
  %v780 = vpop.f32.mrf.mxu0
  %v781 = vpop.f32.mrf.mxu0
  %v782 = vadd.f32 0.0, %v781
  %v783 = vpop.f32.mrf.mxu0
  %784 = vdwg.mxu0
  %v785 = vsub.f32 %v306, %v643
  %v786 = vsub.f32 %v309, %v646
  %v787 = vsub.f32 %v314, %v651
  %v788 = vsub.f32 %v317, %v654
  %v789 = vsub.f32 %v322, %v659
  %v790 = vsub.f32 %v325, %v662
  %v791 = vsub.f32 %v330, %v667
  %v792 = vsub.f32 %v333, %v670
  %v793 = vsub.f32 %v338, %v675
  %v794 = vsub.f32 %v341, %v678
  %v795 = vsub.f32 %v346, %v683
  %v796 = vsub.f32 %v349, %v686
  %v797 = vsub.f32 %v354, %v691
  %v798 = vsub.f32 %v357, %v694
  %v799 = vsub.f32 %v362, %v699
  %v800 = vsub.f32 %v365, %v702
  %v801 = vsub.f32 %v370, %v707
  %v802 = vsub.f32 %v373, %v710
  %v803 = vsub.f32 %v378, %v715
  %v804 = vsub.f32 %v381, %v718
  %v805 = vsub.f32 %v386, %v723
  %v806 = vsub.f32 %v389, %v726
  %v807 = vsub.f32 %v394, %v731
  %v808 = vsub.f32 %v397, %v734
  %v809 = vsub.f32 %v402, %v739
  %v810 = vsub.f32 %v405, %v742
  %v811 = vsub.f32 %v410, %v747
  %v812 = vsub.f32 %v413, %v750
  %v813 = vsub.f32 %v418, %v755
  %v814 = vsub.f32 %v421, %v758
  %v815 = vsub.f32 %v426, %v763
  %v816 = vsub.f32 %v429, %v766
  %v817 = vsub.f32 %v434, %v771
  %v818 = vsub.f32 %v437, %v774
  %v819 = vsub.f32 %v442, %v779
  %v820 = vsub.f32 %v445, %v782
  %v821 = vld [vmem:[%s6] sm:$0x1]
  %v823 = vlaneseq
  %v824 = vshrl.u32 %v823, 7
  %v825 = vsub.s32 0, %v824
  %v826 = vrot.slane %v821, %v825
  %v828 = vadd.f32 %v785, %v826
  %v829 = vadd.f32 %v786, %v826
  %v830 = vadd.f32 %v787, %v826
  %v831 = vadd.f32 %v788, %v826
  %v832 = vadd.f32 %v789, %v826
  %v833 = vadd.f32 %v790, %v826
  %v834 = vadd.f32 %v791, %v826
  %v835 = vadd.f32 %v792, %v826
  %v836 = vadd.f32 %v793, %v826
  %v837 = vadd.f32 %v794, %v826
  %v838 = vadd.f32 %v795, %v826
  %v839 = vadd.f32 %v796, %v826
  %v840 = vadd.f32 %v797, %v826
  %v841 = vadd.f32 %v798, %v826
  %v842 = vadd.f32 %v799, %v826
  %v843 = vadd.f32 %v800, %v826
  %v844 = vadd.f32 %v801, %v826
  %v845 = vadd.f32 %v802, %v826
  %v846 = vadd.f32 %v803, %v826
  %v847 = vadd.f32 %v804, %v826
  %v848 = vadd.f32 %v805, %v826
  %v849 = vadd.f32 %v806, %v826
  %v850 = vadd.f32 %v807, %v826
  %v851 = vadd.f32 %v808, %v826
  %v852 = vadd.f32 %v809, %v826
  %v853 = vadd.f32 %v810, %v826
  %v854 = vadd.f32 %v811, %v826
  %v855 = vadd.f32 %v812, %v826
  %v856 = vadd.f32 %v813, %v826
  %v857 = vadd.f32 %v814, %v826
  %v858 = vadd.f32 %v815, %v826
  %v859 = vadd.f32 %v816, %v826
  %v860 = vadd.f32 %v817, %v826
  %v861 = vadd.f32 %v818, %v826
  %v862 = vadd.f32 %v819, %v826
  %v863 = vadd.f32 %v820, %v826
  %v864 = vmax.f32 %v828, 0.0
  %v865 = vmax.f32 %v829, 0.0
  %v866 = vmax.f32 %v830, 0.0
  %v867 = vmax.f32 %v831, 0.0
  %v868 = vmax.f32 %v832, 0.0
  %v869 = vmax.f32 %v833, 0.0
  %v870 = vmax.f32 %v834, 0.0
  %v871 = vmax.f32 %v835, 0.0
  %v872 = vmax.f32 %v836, 0.0
  %v873 = vmax.f32 %v837, 0.0
  %v874 = vmax.f32 %v838, 0.0
  %v875 = vmax.f32 %v839, 0.0
  %v876 = vmax.f32 %v840, 0.0
  %v877 = vmax.f32 %v841, 0.0
  %v878 = vmax.f32 %v842, 0.0
  %v879 = vmax.f32 %v843, 0.0
  %v880 = vmax.f32 %v844, 0.0
  %v881 = vmax.f32 %v845, 0.0
  %v882 = vmax.f32 %v846, 0.0
  %v883 = vmax.f32 %v847, 0.0
  %v884 = vmax.f32 %v848, 0.0
  %v885 = vmax.f32 %v849, 0.0
  %v886 = vmax.f32 %v850, 0.0
  %v887 = vmax.f32 %v851, 0.0
  %v888 = vmax.f32 %v852, 0.0
  %v889 = vmax.f32 %v853, 0.0
  %v890 = vmax.f32 %v854, 0.0
  %v891 = vmax.f32 %v855, 0.0
  %v892 = vmax.f32 %v856, 0.0
  %v893 = vmax.f32 %v857, 0.0
  %v894 = vmax.f32 %v858, 0.0
  %v895 = vmax.f32 %v859, 0.0
  %v896 = vmax.f32 %v860, 0.0
  %v897 = vmax.f32 %v861, 0.0
  %v898 = vmax.f32 %v862, 0.0
  %v899 = vmax.f32 %v863, 0.0
  %900 = vmatprep.subr.bf16.mxu0 0
  %901 = vmatpush1.bf16.msra.mxu0 0
  %902 = vmatprep.subr.bf16.mxu0 0
  %903 = vmatpush1.bf16.msra.mxu0 0
  %904 = vmatprep.subr.bf16.mxu0 0
  %905 = vmatpush1.bf16.msra.mxu0 0
  %906 = vmatprep.subr.bf16.mxu0 0
  %907 = vmatpush1.bf16.msra.mxu0 0
  %908 = vmatprep.subr.bf16.mxu0 0
  %909 = vmatpush1.bf16.msra.mxu0 0
  %910 = vmatprep.subr.bf16.mxu0 0
  %911 = vmatpush1.bf16.msra.mxu0 0
  %912 = vmatprep.subr.bf16.mxu0 0
  %913 = vmatpush1.bf16.msra.mxu0 %v551
  %914 = vmatprep.subr.bf16.mxu0 0
  %915 = vmatpush1.bf16.msra.mxu0 %v550
  %916 = vmatprep.subr.bf16.mxu0 0
  %917 = vmatpush2.bf16.msra.mxu0 0
  %918 = vmatprep.subr.bf16.mxu0 0
  %919 = vmatpush2.bf16.msra.mxu0 0
  %920 = vmatprep.subr.bf16.mxu0 0
  %921 = vmatpush2.bf16.msra.mxu0 0
  %922 = vmatprep.subr.bf16.mxu0 0
  %923 = vmatpush2.bf16.msra.mxu0 0
  %924 = vmatprep.subr.bf16.mxu0 0
  %925 = vmatpush2.bf16.msra.mxu0 0
  %926 = vmatprep.subr.bf16.mxu0 0
  %927 = vmatpush2.bf16.msra.mxu0 0
  %928 = vmatprep.subr.bf16.mxu0 0
  %929 = vmatpush2.bf16.msra.mxu0 0
  %930 = vmatprep.subr.bf16.mxu0 0
  %931 = vmatpush2.bf16.msra.mxu0 0
  %932 = vmatprep.mubr.bf16.mxu0 0
  %933 = vmatmul.mubr.bf16.gmra.mxu0 %v218
  %v934 = vpop.f32.mrf.mxu0
  %v935 = vadd.f32 0.0, %v934
  %v936 = vpop.f32.mrf.mxu0
  %v937 = vpop.f32.mrf.mxu0
  %v938 = vadd.f32 0.0, %v937
  %v939 = vpop.f32.mrf.mxu0
  %940 = vmatprep.mubr.bf16.mxu0 0
  %941 = vmatmul.mubr.bf16.gmra.mxu0 %v221
  %v942 = vpop.f32.mrf.mxu0
  %v943 = vadd.f32 0.0, %v942
  %v944 = vpop.f32.mrf.mxu0
  %v945 = vpop.f32.mrf.mxu0
  %v946 = vadd.f32 0.0, %v945
  %v947 = vpop.f32.mrf.mxu0
  %948 = vmatprep.mubr.bf16.mxu0 0
  %949 = vmatmul.mubr.bf16.gmra.mxu0 %v224
  %v950 = vpop.f32.mrf.mxu0
  %v951 = vadd.f32 0.0, %v950
  %v952 = vpop.f32.mrf.mxu0
  %v953 = vpop.f32.mrf.mxu0
  %v954 = vadd.f32 0.0, %v953
  %v955 = vpop.f32.mrf.mxu0
  %956 = vmatprep.mubr.bf16.mxu0 0
  %957 = vmatmul.mubr.bf16.gmra.mxu0 %v227
  %v958 = vpop.f32.mrf.mxu0
  %v959 = vadd.f32 0.0, %v958
  %v960 = vpop.f32.mrf.mxu0
  %v961 = vpop.f32.mrf.mxu0
  %v962 = vadd.f32 0.0, %v961
  %v963 = vpop.f32.mrf.mxu0
  %964 = vmatprep.mubr.bf16.mxu0 0
  %965 = vmatmul.mubr.bf16.gmra.mxu0 %v230
  %v966 = vpop.f32.mrf.mxu0
  %v967 = vadd.f32 0.0, %v966
  %v968 = vpop.f32.mrf.mxu0
  %v969 = vpop.f32.mrf.mxu0
  %v970 = vadd.f32 0.0, %v969
  %v971 = vpop.f32.mrf.mxu0
  %972 = vmatprep.mubr.bf16.mxu0 0
  %973 = vmatmul.mubr.bf16.gmra.mxu0 %v233
  %v974 = vpop.f32.mrf.mxu0
  %v975 = vadd.f32 0.0, %v974
  %v976 = vpop.f32.mrf.mxu0
  %v977 = vpop.f32.mrf.mxu0
  %v978 = vadd.f32 0.0, %v977
  %v979 = vpop.f32.mrf.mxu0
  %980 = vmatprep.mubr.bf16.mxu0 0
  %981 = vmatmul.mubr.bf16.gmra.mxu0 %v236
  %v982 = vpop.f32.mrf.mxu0
  %v983 = vadd.f32 0.0, %v982
  %v984 = vpop.f32.mrf.mxu0
  %v985 = vpop.f32.mrf.mxu0
  %v986 = vadd.f32 0.0, %v985
  %v987 = vpop.f32.mrf.mxu0
  %988 = vmatprep.mubr.bf16.mxu0 0
  %989 = vmatmul.mubr.bf16.gmra.mxu0 %v239
  %v990 = vpop.f32.mrf.mxu0
  %v991 = vadd.f32 0.0, %v990
  %v992 = vpop.f32.mrf.mxu0
  %v993 = vpop.f32.mrf.mxu0
  %v994 = vadd.f32 0.0, %v993
  %v995 = vpop.f32.mrf.mxu0
  %996 = vmatprep.mubr.bf16.mxu0 0
  %997 = vmatmul.mubr.bf16.gmra.mxu0 %v242
  %v998 = vpop.f32.mrf.mxu0
  %v999 = vadd.f32 0.0, %v998
  %v1000 = vpop.f32.mrf.mxu0
  %v1001 = vpop.f32.mrf.mxu0
  %v1002 = vadd.f32 0.0, %v1001
  %v1003 = vpop.f32.mrf.mxu0
  %1004 = vmatprep.mubr.bf16.mxu0 0
  %1005 = vmatmul.mubr.bf16.gmra.mxu0 %v245
  %v1006 = vpop.f32.mrf.mxu0
  %v1007 = vadd.f32 0.0, %v1006
  %v1008 = vpop.f32.mrf.mxu0
  %v1009 = vpop.f32.mrf.mxu0
  %v1010 = vadd.f32 0.0, %v1009
  %v1011 = vpop.f32.mrf.mxu0
  %1012 = vmatprep.mubr.bf16.mxu0 0
  %1013 = vmatmul.mubr.bf16.gmra.mxu0 %v248
  %v1014 = vpop.f32.mrf.mxu0
  %v1015 = vadd.f32 0.0, %v1014
  %v1016 = vpop.f32.mrf.mxu0
  %v1017 = vpop.f32.mrf.mxu0
  %v1018 = vadd.f32 0.0, %v1017
  %v1019 = vpop.f32.mrf.mxu0
  %1020 = vmatprep.mubr.bf16.mxu0 0
  %1021 = vmatmul.mubr.bf16.gmra.mxu0 %v251
  %v1022 = vpop.f32.mrf.mxu0
  %v1023 = vadd.f32 0.0, %v1022
  %v1024 = vpop.f32.mrf.mxu0
  %v1025 = vpop.f32.mrf.mxu0
  %v1026 = vadd.f32 0.0, %v1025
  %v1027 = vpop.f32.mrf.mxu0
  %1028 = vmatprep.mubr.bf16.mxu0 0
  %1029 = vmatmul.mubr.bf16.gmra.mxu0 %v254
  %v1030 = vpop.f32.mrf.mxu0
  %v1031 = vadd.f32 0.0, %v1030
  %v1032 = vpop.f32.mrf.mxu0
  %v1033 = vpop.f32.mrf.mxu0
  %v1034 = vadd.f32 0.0, %v1033
  %v1035 = vpop.f32.mrf.mxu0
  %1036 = vmatprep.mubr.bf16.mxu0 0
  %1037 = vmatmul.mubr.bf16.gmra.mxu0 %v257
  %v1038 = vpop.f32.mrf.mxu0
  %v1039 = vadd.f32 0.0, %v1038
  %v1040 = vpop.f32.mrf.mxu0
  %v1041 = vpop.f32.mrf.mxu0
  %v1042 = vadd.f32 0.0, %v1041
  %v1043 = vpop.f32.mrf.mxu0
  %1044 = vmatprep.mubr.bf16.mxu0 0
  %1045 = vmatmul.mubr.bf16.gmra.mxu0 %v260
  %v1046 = vpop.f32.mrf.mxu0
  %v1047 = vadd.f32 0.0, %v1046
  %v1048 = vpop.f32.mrf.mxu0
  %v1049 = vpop.f32.mrf.mxu0
  %v1050 = vadd.f32 0.0, %v1049
  %v1051 = vpop.f32.mrf.mxu0
  %1052 = vmatprep.mubr.bf16.mxu0 0
  %1053 = vmatmul.mubr.bf16.gmra.mxu0 %v263
  %v1054 = vpop.f32.mrf.mxu0
  %v1055 = vadd.f32 0.0, %v1054
  %v1056 = vpop.f32.mrf.mxu0
  %v1057 = vpop.f32.mrf.mxu0
  %v1058 = vadd.f32 0.0, %v1057
  %v1059 = vpop.f32.mrf.mxu0
  %1060 = vmatprep.mubr.bf16.mxu0 0
  %1061 = vmatmul.mubr.bf16.gmra.mxu0 %v266
  %v1062 = vpop.f32.mrf.mxu0
  %v1063 = vadd.f32 0.0, %v1062
  %v1064 = vpop.f32.mrf.mxu0
  %v1065 = vpop.f32.mrf.mxu0
  %v1066 = vadd.f32 0.0, %v1065
  %v1067 = vpop.f32.mrf.mxu0
  %1068 = vmatprep.mubr.bf16.mxu0 0
  %1069 = vmatmul.mubr.bf16.gmra.mxu0 %v269
  %v1070 = vpop.f32.mrf.mxu0
  %v1071 = vadd.f32 0.0, %v1070
  %v1072 = vpop.f32.mrf.mxu0
  %v1073 = vpop.f32.mrf.mxu0
  %v1074 = vadd.f32 0.0, %v1073
  %v1075 = vpop.f32.mrf.mxu0
  %1076 = vdwg.mxu0
  %1077 = vmatprep.subr.bf16.mxu0 0
  %1078 = vmatpush1.bf16.msra.mxu0 0
  %1079 = vmatprep.subr.bf16.mxu0 0
  %1080 = vmatpush1.bf16.msra.mxu0 0
  %1081 = vmatprep.subr.bf16.mxu0 0
  %1082 = vmatpush1.bf16.msra.mxu0 0
  %1083 = vmatprep.subr.bf16.mxu0 0
  %1084 = vmatpush1.bf16.msra.mxu0 0
  %1085 = vmatprep.subr.bf16.mxu0 0
  %1086 = vmatpush1.bf16.msra.mxu0 0
  %1087 = vmatprep.subr.bf16.mxu0 0
  %1088 = vmatpush1.bf16.msra.mxu0 0
  %1089 = vmatprep.subr.bf16.mxu0 0
  %1090 = vmatpush1.bf16.msra.mxu0 %v213
  %1091 = vmatprep.subr.bf16.mxu0 0
  %1092 = vmatpush1.bf16.msra.mxu0 %v212
  %1093 = vmatprep.subr.bf16.mxu0 0
  %1094 = vmatpush2.bf16.msra.mxu0 0
  %1095 = vmatprep.subr.bf16.mxu0 0
  %1096 = vmatpush2.bf16.msra.mxu0 0
  %1097 = vmatprep.subr.bf16.mxu0 0
  %1098 = vmatpush2.bf16.msra.mxu0 0
  %1099 = vmatprep.subr.bf16.mxu0 0
  %1100 = vmatpush2.bf16.msra.mxu0 0
  %1101 = vmatprep.subr.bf16.mxu0 0
  %1102 = vmatpush2.bf16.msra.mxu0 0
  %1103 = vmatprep.subr.bf16.mxu0 0
  %1104 = vmatpush2.bf16.msra.mxu0 0
  %1105 = vmatprep.subr.bf16.mxu0 0
  %1106 = vmatpush2.bf16.msra.mxu0 0
  %1107 = vmatprep.subr.bf16.mxu0 0
  %1108 = vmatpush2.bf16.msra.mxu0 0
  %1109 = vmatprep.mubr.bf16.mxu0 0
  %1110 = vmatmul.mubr.bf16.gmra.mxu0 %v555
  %v1111 = vpop.f32.mrf.mxu0
  %v1112 = vadd.f32 %v935, %v1111
  %v1113 = vpop.f32.mrf.mxu0
  %v1114 = vpop.f32.mrf.mxu0
  %v1115 = vadd.f32 %v938, %v1114
  %v1116 = vpop.f32.mrf.mxu0
  %1117 = vmatprep.mubr.bf16.mxu0 0
  %1118 = vmatmul.mubr.bf16.gmra.mxu0 %v558
  %v1119 = vpop.f32.mrf.mxu0
  %v1120 = vadd.f32 %v943, %v1119
  %v1121 = vpop.f32.mrf.mxu0
  %v1122 = vpop.f32.mrf.mxu0
  %v1123 = vadd.f32 %v946, %v1122
  %v1124 = vpop.f32.mrf.mxu0
  %1125 = vmatprep.mubr.bf16.mxu0 0
  %1126 = vmatmul.mubr.bf16.gmra.mxu0 %v561
  %v1127 = vpop.f32.mrf.mxu0
  %v1128 = vadd.f32 %v951, %v1127
  %v1129 = vpop.f32.mrf.mxu0
  %v1130 = vpop.f32.mrf.mxu0
  %v1131 = vadd.f32 %v954, %v1130
  %v1132 = vpop.f32.mrf.mxu0
  %1133 = vmatprep.mubr.bf16.mxu0 0
  %1134 = vmatmul.mubr.bf16.gmra.mxu0 %v564
  %v1135 = vpop.f32.mrf.mxu0
  %v1136 = vadd.f32 %v959, %v1135
  %v1137 = vpop.f32.mrf.mxu0
  %v1138 = vpop.f32.mrf.mxu0
  %v1139 = vadd.f32 %v962, %v1138
  %v1140 = vpop.f32.mrf.mxu0
  %1141 = vmatprep.mubr.bf16.mxu0 0
  %1142 = vmatmul.mubr.bf16.gmra.mxu0 %v567
  %v1143 = vpop.f32.mrf.mxu0
  %v1144 = vadd.f32 %v967, %v1143
  %v1145 = vpop.f32.mrf.mxu0
  %v1146 = vpop.f32.mrf.mxu0
  %v1147 = vadd.f32 %v970, %v1146
  %v1148 = vpop.f32.mrf.mxu0
  %1149 = vmatprep.mubr.bf16.mxu0 0
  %1150 = vmatmul.mubr.bf16.gmra.mxu0 %v570
  %v1151 = vpop.f32.mrf.mxu0
  %v1152 = vadd.f32 %v975, %v1151
  %v1153 = vpop.f32.mrf.mxu0
  %v1154 = vpop.f32.mrf.mxu0
  %v1155 = vadd.f32 %v978, %v1154
  %v1156 = vpop.f32.mrf.mxu0
  %1157 = vmatprep.mubr.bf16.mxu0 0
  %1158 = vmatmul.mubr.bf16.gmra.mxu0 %v573
  %v1159 = vpop.f32.mrf.mxu0
  %v1160 = vadd.f32 %v983, %v1159
  %v1161 = vpop.f32.mrf.mxu0
  %v1162 = vpop.f32.mrf.mxu0
  %v1163 = vadd.f32 %v986, %v1162
  %v1164 = vpop.f32.mrf.mxu0
  %1165 = vmatprep.mubr.bf16.mxu0 0
  %1166 = vmatmul.mubr.bf16.gmra.mxu0 %v576
  %v1167 = vpop.f32.mrf.mxu0
  %v1168 = vadd.f32 %v991, %v1167
  %v1169 = vpop.f32.mrf.mxu0
  %v1170 = vpop.f32.mrf.mxu0
  %v1171 = vadd.f32 %v994, %v1170
  %v1172 = vpop.f32.mrf.mxu0
  %1173 = vmatprep.mubr.bf16.mxu0 0
  %1174 = vmatmul.mubr.bf16.gmra.mxu0 %v579
  %v1175 = vpop.f32.mrf.mxu0
  %v1176 = vadd.f32 %v999, %v1175
  %v1177 = vpop.f32.mrf.mxu0
  %v1178 = vpop.f32.mrf.mxu0
  %v1179 = vadd.f32 %v1002, %v1178
  %v1180 = vpop.f32.mrf.mxu0
  %1181 = vmatprep.mubr.bf16.mxu0 0
  %1182 = vmatmul.mubr.bf16.gmra.mxu0 %v582
  %v1183 = vpop.f32.mrf.mxu0
  %v1184 = vadd.f32 %v1007, %v1183
  %v1185 = vpop.f32.mrf.mxu0
  %v1186 = vpop.f32.mrf.mxu0
  %v1187 = vadd.f32 %v1010, %v1186
  %v1188 = vpop.f32.mrf.mxu0
  %1189 = vmatprep.mubr.bf16.mxu0 0
  %1190 = vmatmul.mubr.bf16.gmra.mxu0 %v585
  %v1191 = vpop.f32.mrf.mxu0
  %v1192 = vadd.f32 %v1015, %v1191
  %v1193 = vpop.f32.mrf.mxu0
  %v1194 = vpop.f32.mrf.mxu0
  %v1195 = vadd.f32 %v1018, %v1194
  %v1196 = vpop.f32.mrf.mxu0
  %1197 = vmatprep.mubr.bf16.mxu0 0
  %1198 = vmatmul.mubr.bf16.gmra.mxu0 %v588
  %v1199 = vpop.f32.mrf.mxu0
  %v1200 = vadd.f32 %v1023, %v1199
  %v1201 = vpop.f32.mrf.mxu0
  %v1202 = vpop.f32.mrf.mxu0
  %v1203 = vadd.f32 %v1026, %v1202
  %v1204 = vpop.f32.mrf.mxu0
  %1205 = vmatprep.mubr.bf16.mxu0 0
  %1206 = vmatmul.mubr.bf16.gmra.mxu0 %v591
  %v1207 = vpop.f32.mrf.mxu0
  %v1208 = vadd.f32 %v1031, %v1207
  %v1209 = vpop.f32.mrf.mxu0
  %v1210 = vpop.f32.mrf.mxu0
  %v1211 = vadd.f32 %v1034, %v1210
  %v1212 = vpop.f32.mrf.mxu0
  %1213 = vmatprep.mubr.bf16.mxu0 0
  %1214 = vmatmul.mubr.bf16.gmra.mxu0 %v594
  %v1215 = vpop.f32.mrf.mxu0
  %v1216 = vadd.f32 %v1039, %v1215
  %v1217 = vpop.f32.mrf.mxu0
  %v1218 = vpop.f32.mrf.mxu0
  %v1219 = vadd.f32 %v1042, %v1218
  %v1220 = vpop.f32.mrf.mxu0
  %1221 = vmatprep.mubr.bf16.mxu0 0
  %1222 = vmatmul.mubr.bf16.gmra.mxu0 %v597
  %v1223 = vpop.f32.mrf.mxu0
  %v1224 = vadd.f32 %v1047, %v1223
  %v1225 = vpop.f32.mrf.mxu0
  %v1226 = vpop.f32.mrf.mxu0
  %v1227 = vadd.f32 %v1050, %v1226
  %v1228 = vpop.f32.mrf.mxu0
  %1229 = vmatprep.mubr.bf16.mxu0 0
  %1230 = vmatmul.mubr.bf16.gmra.mxu0 %v600
  %v1231 = vpop.f32.mrf.mxu0
  %v1232 = vadd.f32 %v1055, %v1231
  %v1233 = vpop.f32.mrf.mxu0
  %v1234 = vpop.f32.mrf.mxu0
  %v1235 = vadd.f32 %v1058, %v1234
  %v1236 = vpop.f32.mrf.mxu0
  %1237 = vmatprep.mubr.bf16.mxu0 0
  %1238 = vmatmul.mubr.bf16.gmra.mxu0 %v603
  %v1239 = vpop.f32.mrf.mxu0
  %v1240 = vadd.f32 %v1063, %v1239
  %v1241 = vpop.f32.mrf.mxu0
  %v1242 = vpop.f32.mrf.mxu0
  %v1243 = vadd.f32 %v1066, %v1242
  %v1244 = vpop.f32.mrf.mxu0
  %1245 = vmatprep.mubr.bf16.mxu0 0
  %1246 = vmatmul.mubr.bf16.gmra.mxu0 %v606
  %v1247 = vpop.f32.mrf.mxu0
  %v1248 = vadd.f32 %v1071, %v1247
  %v1249 = vpop.f32.mrf.mxu0
  %v1250 = vpop.f32.mrf.mxu0
  %v1251 = vadd.f32 %v1074, %v1250
  %v1252 = vpop.f32.mrf.mxu0
  %1253 = vdwg.mxu0
  %v1254 = vld [vmem:[%s7] sm:$0x1]
  %v1256 = vlaneseq
  %v1257 = vshrl.u32 %v1256, 7
  %v1258 = vsub.s32 0, %v1257
  %v1259 = vrot.slane %v1254, %v1258
  %v1261 = vadd.f32 %v1112, %v1259
  %v1262 = vadd.f32 %v1115, %v1259
  %v1263 = vadd.f32 %v1120, %v1259
  %v1264 = vadd.f32 %v1123, %v1259
  %v1265 = vadd.f32 %v1128, %v1259
  %v1266 = vadd.f32 %v1131, %v1259
  %v1267 = vadd.f32 %v1136, %v1259
  %v1268 = vadd.f32 %v1139, %v1259
  %v1269 = vadd.f32 %v1144, %v1259
  %v1270 = vadd.f32 %v1147, %v1259
  %v1271 = vadd.f32 %v1152, %v1259
  %v1272 = vadd.f32 %v1155, %v1259
  %v1273 = vadd.f32 %v1160, %v1259
  %v1274 = vadd.f32 %v1163, %v1259
  %v1275 = vadd.f32 %v1168, %v1259
  %v1276 = vadd.f32 %v1171, %v1259
  %v1277 = vadd.f32 %v1176, %v1259
  %v1278 = vadd.f32 %v1179, %v1259
  %v1279 = vadd.f32 %v1184, %v1259
  %v1280 = vadd.f32 %v1187, %v1259
  %v1281 = vadd.f32 %v1192, %v1259
  %v1282 = vadd.f32 %v1195, %v1259
  %v1283 = vadd.f32 %v1200, %v1259
  %v1284 = vadd.f32 %v1203, %v1259
  %v1285 = vadd.f32 %v1208, %v1259
  %v1286 = vadd.f32 %v1211, %v1259
  %v1287 = vadd.f32 %v1216, %v1259
  %v1288 = vadd.f32 %v1219, %v1259
  %v1289 = vadd.f32 %v1224, %v1259
  %v1290 = vadd.f32 %v1227, %v1259
  %v1291 = vadd.f32 %v1232, %v1259
  %v1292 = vadd.f32 %v1235, %v1259
  %v1293 = vadd.f32 %v1240, %v1259
  %v1294 = vadd.f32 %v1243, %v1259
  %v1295 = vadd.f32 %v1248, %v1259
  %v1296 = vadd.f32 %v1251, %v1259
  %v1297 = vmax.f32 %v1261, 0.0
  %v1298 = vmax.f32 %v1262, 0.0
  %v1299 = vmax.f32 %v1263, 0.0
  %v1300 = vmax.f32 %v1264, 0.0
  %v1301 = vmax.f32 %v1265, 0.0
  %v1302 = vmax.f32 %v1266, 0.0
  %v1303 = vmax.f32 %v1267, 0.0
  %v1304 = vmax.f32 %v1268, 0.0
  %v1305 = vmax.f32 %v1269, 0.0
  %v1306 = vmax.f32 %v1270, 0.0
  %v1307 = vmax.f32 %v1271, 0.0
  %v1308 = vmax.f32 %v1272, 0.0
  %v1309 = vmax.f32 %v1273, 0.0
  %v1310 = vmax.f32 %v1274, 0.0
  %v1311 = vmax.f32 %v1275, 0.0
  %v1312 = vmax.f32 %v1276, 0.0
  %v1313 = vmax.f32 %v1277, 0.0
  %v1314 = vmax.f32 %v1278, 0.0
  %v1315 = vmax.f32 %v1279, 0.0
  %v1316 = vmax.f32 %v1280, 0.0
  %v1317 = vmax.f32 %v1281, 0.0
  %v1318 = vmax.f32 %v1282, 0.0
  %v1319 = vmax.f32 %v1283, 0.0
  %v1320 = vmax.f32 %v1284, 0.0
  %v1321 = vmax.f32 %v1285, 0.0
  %v1322 = vmax.f32 %v1286, 0.0
  %v1323 = vmax.f32 %v1287, 0.0
  %v1324 = vmax.f32 %v1288, 0.0
  %v1325 = vmax.f32 %v1289, 0.0
  %v1326 = vmax.f32 %v1290, 0.0
  %v1327 = vmax.f32 %v1291, 0.0
  %v1328 = vmax.f32 %v1292, 0.0
  %v1329 = vmax.f32 %v1293, 0.0
  %v1330 = vmax.f32 %v1294, 0.0
  %v1331 = vmax.f32 %v1295, 0.0
  %v1332 = vmax.f32 %v1296, 0.0
  %v1333 = vpack.c.bf16 %v865, %v864
  %v1334 = vpack.c.bf16 %v867, %v866
  %v1335 = vpack.c.bf16 %v869, %v868
  %v1336 = vpack.c.bf16 %v871, %v870
  %v1337 = vpack.c.bf16 %v873, %v872
  %v1338 = vpack.c.bf16 %v875, %v874
  %v1339 = vpack.c.bf16 %v877, %v876
  %v1340 = vpack.c.bf16 %v879, %v878
  %v1341 = vpack.c.bf16 %v881, %v880
  %v1342 = vpack.c.bf16 %v883, %v882
  %v1343 = vpack.c.bf16 %v885, %v884
  %v1344 = vpack.c.bf16 %v887, %v886
  %v1345 = vpack.c.bf16 %v889, %v888
  %v1346 = vpack.c.bf16 %v891, %v890
  %v1347 = vpack.c.bf16 %v893, %v892
  %v1348 = vpack.c.bf16 %v895, %v894
  %v1349 = vpack.c.bf16 %v897, %v896
  %v1350 = vpack.c.bf16 %v899, %v898
  %v1351 = vpack.c.bf16 %v1298, %v1297
  %v1352 = vpack.c.bf16 %v1300, %v1299
  %v1353 = vpack.c.bf16 %v1302, %v1301
  %v1354 = vpack.c.bf16 %v1304, %v1303
  %v1355 = vpack.c.bf16 %v1306, %v1305
  %v1356 = vpack.c.bf16 %v1308, %v1307
  %v1357 = vpack.c.bf16 %v1310, %v1309
  %v1358 = vpack.c.bf16 %v1312, %v1311
  %v1359 = vpack.c.bf16 %v1314, %v1313
  %v1360 = vpack.c.bf16 %v1316, %v1315
  %v1361 = vpack.c.bf16 %v1318, %v1317
  %v1362 = vpack.c.bf16 %v1320, %v1319
  %v1363 = vpack.c.bf16 %v1322, %v1321
  %v1364 = vpack.c.bf16 %v1324, %v1323
  %v1365 = vpack.c.bf16 %v1326, %v1325
  %v1366 = vpack.c.bf16 %v1328, %v1327
  %v1367 = vpack.c.bf16 %v1330, %v1329
  %v1368 = vpack.c.bf16 %v1332, %v1331
  %v1369 = vld [vmem:[%s4] sm:$0xf]
  %v1370 = vld [vmem:[%s4 + $0x4] sm:$0xf]
  %v1371 = vld [vmem:[%s4 + $0x8] sm:$0xf]
  %v1372 = vld [vmem:[%s4 + $0xc] sm:$0xf]
  %v1377 = vunpack.c.l.b16 %v1369
  %v1378 = vunpack.c.l.b16 %v1370
  %v1379 = vunpack.c.l.b16 %v1371
  %v1380 = vunpack.c.l.b16 %v1372
  %v1381 = vpack.c.b16 %v1378, %v1377
  %v1382 = vpack.c.b16 %v1380, %v1379
  %v1386 = vsel %vm216, %v1333, 0
  %v1389 = vsel %vm216, %v1334, 0
  %v1392 = vsel %vm216, %v1335, 0
  %v1395 = vsel %vm216, %v1336, 0
  %v1398 = vsel %vm216, %v1337, 0
  %v1401 = vsel %vm216, %v1338, 0
  %v1404 = vsel %vm216, %v1339, 0
  %v1407 = vsel %vm216, %v1340, 0
  %v1410 = vsel %vm216, %v1341, 0
  %v1413 = vsel %vm216, %v1342, 0
  %v1416 = vsel %vm216, %v1343, 0
  %v1419 = vsel %vm216, %v1344, 0
  %v1422 = vsel %vm216, %v1345, 0
  %v1425 = vsel %vm216, %v1346, 0
  %v1428 = vsel %vm216, %v1347, 0
  %v1431 = vsel %vm216, %v1348, 0
  %v1434 = vsel %vm216, %v1349, 0
  %v1437 = vsel %vm216, %v1350, 0
  %1439 = vmatprep.subr.bf16.mxu0 0
  %1440 = vmatpush1.bf16.msra.mxu0 0
  %1441 = vmatprep.subr.bf16.mxu0 0
  %1442 = vmatpush1.bf16.msra.mxu0 0
  %1443 = vmatprep.subr.bf16.mxu0 0
  %1444 = vmatpush1.bf16.msra.mxu0 0
  %1445 = vmatprep.subr.bf16.mxu0 0
  %1446 = vmatpush1.bf16.msra.mxu0 0
  %1447 = vmatprep.subr.bf16.mxu0 0
  %1448 = vmatpush1.bf16.msra.mxu0 0
  %1449 = vmatprep.subr.bf16.mxu0 0
  %1450 = vmatpush1.bf16.msra.mxu0 0
  %1451 = vmatprep.subr.bf16.mxu0 0
  %1452 = vmatpush1.bf16.msra.mxu0 %v1382
  %1453 = vmatprep.subr.bf16.mxu0 0
  %1454 = vmatpush1.bf16.msra.mxu0 %v1381
  %1455 = vmatprep.subr.bf16.mxu0 0
  %1456 = vmatpush2.bf16.msra.mxu0 0
  %1457 = vmatprep.subr.bf16.mxu0 0
  %1458 = vmatpush2.bf16.msra.mxu0 0
  %1459 = vmatprep.subr.bf16.mxu0 0
  %1460 = vmatpush2.bf16.msra.mxu0 0
  %1461 = vmatprep.subr.bf16.mxu0 0
  %1462 = vmatpush2.bf16.msra.mxu0 0
  %1463 = vmatprep.subr.bf16.mxu0 0
  %1464 = vmatpush2.bf16.msra.mxu0 0
  %1465 = vmatprep.subr.bf16.mxu0 0
  %1466 = vmatpush2.bf16.msra.mxu0 0
  %1467 = vmatprep.subr.bf16.mxu0 0
  %1468 = vmatpush2.bf16.msra.mxu0 0
  %1469 = vmatprep.subr.bf16.mxu0 0
  %1470 = vmatpush2.bf16.msra.mxu0 0
  %1471 = vmatprep.mubr.bf16.mxu0 0
  %1472 = vmatmul.mubr.bf16.gmra.mxu0 %v1386
  %v1473 = vpop.f32.mrf.mxu0
  %v1474 = vadd.f32 0.0, %v1473
  %v1475 = vpop.f32.mrf.mxu0
  %v1476 = vpop.f32.mrf.mxu0
  %v1477 = vadd.f32 0.0, %v1476
  %v1478 = vpop.f32.mrf.mxu0
  %1479 = vmatprep.mubr.bf16.mxu0 0
  %1480 = vmatmul.mubr.bf16.gmra.mxu0 %v1389
  %v1481 = vpop.f32.mrf.mxu0
  %v1482 = vadd.f32 0.0, %v1481
  %v1483 = vpop.f32.mrf.mxu0
  %v1484 = vpop.f32.mrf.mxu0
  %v1485 = vadd.f32 0.0, %v1484
  %v1486 = vpop.f32.mrf.mxu0
  %1487 = vmatprep.mubr.bf16.mxu0 0
  %1488 = vmatmul.mubr.bf16.gmra.mxu0 %v1392
  %v1489 = vpop.f32.mrf.mxu0
  %v1490 = vadd.f32 0.0, %v1489
  %v1491 = vpop.f32.mrf.mxu0
  %v1492 = vpop.f32.mrf.mxu0
  %v1493 = vadd.f32 0.0, %v1492
  %v1494 = vpop.f32.mrf.mxu0
  %1495 = vmatprep.mubr.bf16.mxu0 0
  %1496 = vmatmul.mubr.bf16.gmra.mxu0 %v1395
  %v1497 = vpop.f32.mrf.mxu0
  %v1498 = vadd.f32 0.0, %v1497
  %v1499 = vpop.f32.mrf.mxu0
  %v1500 = vpop.f32.mrf.mxu0
  %v1501 = vadd.f32 0.0, %v1500
  %v1502 = vpop.f32.mrf.mxu0
  %1503 = vmatprep.mubr.bf16.mxu0 0
  %1504 = vmatmul.mubr.bf16.gmra.mxu0 %v1398
  %v1505 = vpop.f32.mrf.mxu0
  %v1506 = vadd.f32 0.0, %v1505
  %v1507 = vpop.f32.mrf.mxu0
  %v1508 = vpop.f32.mrf.mxu0
  %v1509 = vadd.f32 0.0, %v1508
  %v1510 = vpop.f32.mrf.mxu0
  %1511 = vmatprep.mubr.bf16.mxu0 0
  %1512 = vmatmul.mubr.bf16.gmra.mxu0 %v1401
  %v1513 = vpop.f32.mrf.mxu0
  %v1514 = vadd.f32 0.0, %v1513
  %v1515 = vpop.f32.mrf.mxu0
  %v1516 = vpop.f32.mrf.mxu0
  %v1517 = vadd.f32 0.0, %v1516
  %v1518 = vpop.f32.mrf.mxu0
  %1519 = vmatprep.mubr.bf16.mxu0 0
  %1520 = vmatmul.mubr.bf16.gmra.mxu0 %v1404
  %v1521 = vpop.f32.mrf.mxu0
  %v1522 = vadd.f32 0.0, %v1521
  %v1523 = vpop.f32.mrf.mxu0
  %v1524 = vpop.f32.mrf.mxu0
  %v1525 = vadd.f32 0.0, %v1524
  %v1526 = vpop.f32.mrf.mxu0
  %1527 = vmatprep.mubr.bf16.mxu0 0
  %1528 = vmatmul.mubr.bf16.gmra.mxu0 %v1407
  %v1529 = vpop.f32.mrf.mxu0
  %v1530 = vadd.f32 0.0, %v1529
  %v1531 = vpop.f32.mrf.mxu0
  %v1532 = vpop.f32.mrf.mxu0
  %v1533 = vadd.f32 0.0, %v1532
  %v1534 = vpop.f32.mrf.mxu0
  %1535 = vmatprep.mubr.bf16.mxu0 0
  %1536 = vmatmul.mubr.bf16.gmra.mxu0 %v1410
  %v1537 = vpop.f32.mrf.mxu0
  %v1538 = vadd.f32 0.0, %v1537
  %v1539 = vpop.f32.mrf.mxu0
  %v1540 = vpop.f32.mrf.mxu0
  %v1541 = vadd.f32 0.0, %v1540
  %v1542 = vpop.f32.mrf.mxu0
  %1543 = vmatprep.mubr.bf16.mxu0 0
  %1544 = vmatmul.mubr.bf16.gmra.mxu0 %v1413
  %v1545 = vpop.f32.mrf.mxu0
  %v1546 = vadd.f32 0.0, %v1545
  %v1547 = vpop.f32.mrf.mxu0
  %v1548 = vpop.f32.mrf.mxu0
  %v1549 = vadd.f32 0.0, %v1548
  %v1550 = vpop.f32.mrf.mxu0
  %1551 = vmatprep.mubr.bf16.mxu0 0
  %1552 = vmatmul.mubr.bf16.gmra.mxu0 %v1416
  %v1553 = vpop.f32.mrf.mxu0
  %v1554 = vadd.f32 0.0, %v1553
  %v1555 = vpop.f32.mrf.mxu0
  %v1556 = vpop.f32.mrf.mxu0
  %v1557 = vadd.f32 0.0, %v1556
  %v1558 = vpop.f32.mrf.mxu0
  %1559 = vmatprep.mubr.bf16.mxu0 0
  %1560 = vmatmul.mubr.bf16.gmra.mxu0 %v1419
  %v1561 = vpop.f32.mrf.mxu0
  %v1562 = vadd.f32 0.0, %v1561
  %v1563 = vpop.f32.mrf.mxu0
  %v1564 = vpop.f32.mrf.mxu0
  %v1565 = vadd.f32 0.0, %v1564
  %v1566 = vpop.f32.mrf.mxu0
  %1567 = vmatprep.mubr.bf16.mxu0 0
  %1568 = vmatmul.mubr.bf16.gmra.mxu0 %v1422
  %v1569 = vpop.f32.mrf.mxu0
  %v1570 = vadd.f32 0.0, %v1569
  %v1571 = vpop.f32.mrf.mxu0
  %v1572 = vpop.f32.mrf.mxu0
  %v1573 = vadd.f32 0.0, %v1572
  %v1574 = vpop.f32.mrf.mxu0
  %1575 = vmatprep.mubr.bf16.mxu0 0
  %1576 = vmatmul.mubr.bf16.gmra.mxu0 %v1425
  %v1577 = vpop.f32.mrf.mxu0
  %v1578 = vadd.f32 0.0, %v1577
  %v1579 = vpop.f32.mrf.mxu0
  %v1580 = vpop.f32.mrf.mxu0
  %v1581 = vadd.f32 0.0, %v1580
  %v1582 = vpop.f32.mrf.mxu0
  %1583 = vmatprep.mubr.bf16.mxu0 0
  %1584 = vmatmul.mubr.bf16.gmra.mxu0 %v1428
  %v1585 = vpop.f32.mrf.mxu0
  %v1586 = vadd.f32 0.0, %v1585
  %v1587 = vpop.f32.mrf.mxu0
  %v1588 = vpop.f32.mrf.mxu0
  %v1589 = vadd.f32 0.0, %v1588
  %v1590 = vpop.f32.mrf.mxu0
  %1591 = vmatprep.mubr.bf16.mxu0 0
  %1592 = vmatmul.mubr.bf16.gmra.mxu0 %v1431
  %v1593 = vpop.f32.mrf.mxu0
  %v1594 = vadd.f32 0.0, %v1593
  %v1595 = vpop.f32.mrf.mxu0
  %v1596 = vpop.f32.mrf.mxu0
  %v1597 = vadd.f32 0.0, %v1596
  %v1598 = vpop.f32.mrf.mxu0
  %1599 = vmatprep.mubr.bf16.mxu0 0
  %1600 = vmatmul.mubr.bf16.gmra.mxu0 %v1434
  %v1601 = vpop.f32.mrf.mxu0
  %v1602 = vadd.f32 0.0, %v1601
  %v1603 = vpop.f32.mrf.mxu0
  %v1604 = vpop.f32.mrf.mxu0
  %v1605 = vadd.f32 0.0, %v1604
  %v1606 = vpop.f32.mrf.mxu0
  %1607 = vmatprep.mubr.bf16.mxu0 0
  %1608 = vmatmul.mubr.bf16.gmra.mxu0 %v1437
  %v1609 = vpop.f32.mrf.mxu0
  %v1610 = vadd.f32 0.0, %v1609
  %v1611 = vpop.f32.mrf.mxu0
  %v1612 = vpop.f32.mrf.mxu0
  %v1613 = vadd.f32 0.0, %v1612
  %v1614 = vpop.f32.mrf.mxu0
  %1615 = vdwg.mxu0
  %v1616 = vld [vmem:[%s5] sm:$0xf]
  %v1617 = vld [vmem:[%s5 + $0x4] sm:$0xf]
  %v1618 = vld [vmem:[%s5 + $0x8] sm:$0xf]
  %v1619 = vld [vmem:[%s5 + $0xc] sm:$0xf]
  %v1624 = vunpack.c.l.b16 %v1616
  %v1625 = vunpack.c.l.b16 %v1617
  %v1626 = vunpack.c.l.b16 %v1618
  %v1627 = vunpack.c.l.b16 %v1619
  %v1628 = vpack.c.b16 %v1625, %v1624
  %v1629 = vpack.c.b16 %v1627, %v1626
  %v1633 = vsel %vm216, %v1351, 0
  %v1636 = vsel %vm216, %v1352, 0
  %v1639 = vsel %vm216, %v1353, 0
  %v1642 = vsel %vm216, %v1354, 0
  %v1645 = vsel %vm216, %v1355, 0
  %v1648 = vsel %vm216, %v1356, 0
  %v1651 = vsel %vm216, %v1357, 0
  %v1654 = vsel %vm216, %v1358, 0
  %v1657 = vsel %vm216, %v1359, 0
  %v1660 = vsel %vm216, %v1360, 0
  %v1663 = vsel %vm216, %v1361, 0
  %v1666 = vsel %vm216, %v1362, 0
  %v1669 = vsel %vm216, %v1363, 0
  %v1672 = vsel %vm216, %v1364, 0
  %v1675 = vsel %vm216, %v1365, 0
  %v1678 = vsel %vm216, %v1366, 0
  %v1681 = vsel %vm216, %v1367, 0
  %v1684 = vsel %vm216, %v1368, 0
  %1686 = vmatprep.subr.bf16.mxu0 0
  %1687 = vmatpush1.bf16.msra.mxu0 0
  %1688 = vmatprep.subr.bf16.mxu0 0
  %1689 = vmatpush1.bf16.msra.mxu0 0
  %1690 = vmatprep.subr.bf16.mxu0 0
  %1691 = vmatpush1.bf16.msra.mxu0 0
  %1692 = vmatprep.subr.bf16.mxu0 0
  %1693 = vmatpush1.bf16.msra.mxu0 0
  %1694 = vmatprep.subr.bf16.mxu0 0
  %1695 = vmatpush1.bf16.msra.mxu0 0
  %1696 = vmatprep.subr.bf16.mxu0 0
  %1697 = vmatpush1.bf16.msra.mxu0 0
  %1698 = vmatprep.subr.bf16.mxu0 0
  %1699 = vmatpush1.bf16.msra.mxu0 %v1629
  %1700 = vmatprep.subr.bf16.mxu0 0
  %1701 = vmatpush1.bf16.msra.mxu0 %v1628
  %1702 = vmatprep.subr.bf16.mxu0 0
  %1703 = vmatpush2.bf16.msra.mxu0 0
  %1704 = vmatprep.subr.bf16.mxu0 0
  %1705 = vmatpush2.bf16.msra.mxu0 0
  %1706 = vmatprep.subr.bf16.mxu0 0
  %1707 = vmatpush2.bf16.msra.mxu0 0
  %1708 = vmatprep.subr.bf16.mxu0 0
  %1709 = vmatpush2.bf16.msra.mxu0 0
  %1710 = vmatprep.subr.bf16.mxu0 0
  %1711 = vmatpush2.bf16.msra.mxu0 0
  %1712 = vmatprep.subr.bf16.mxu0 0
  %1713 = vmatpush2.bf16.msra.mxu0 0
  %1714 = vmatprep.subr.bf16.mxu0 0
  %1715 = vmatpush2.bf16.msra.mxu0 0
  %1716 = vmatprep.subr.bf16.mxu0 0
  %1717 = vmatpush2.bf16.msra.mxu0 0
  %1718 = vmatprep.mubr.bf16.mxu0 0
  %1719 = vmatmul.mubr.bf16.gmra.mxu0 %v1633
  %v1720 = vpop.f32.mrf.mxu0
  %v1721 = vadd.f32 0.0, %v1720
  %v1722 = vpop.f32.mrf.mxu0
  %v1723 = vpop.f32.mrf.mxu0
  %v1724 = vadd.f32 0.0, %v1723
  %v1725 = vpop.f32.mrf.mxu0
  %1726 = vmatprep.mubr.bf16.mxu0 0
  %1727 = vmatmul.mubr.bf16.gmra.mxu0 %v1636
  %v1728 = vpop.f32.mrf.mxu0
  %v1729 = vadd.f32 0.0, %v1728
  %v1730 = vpop.f32.mrf.mxu0
  %v1731 = vpop.f32.mrf.mxu0
  %v1732 = vadd.f32 0.0, %v1731
  %v1733 = vpop.f32.mrf.mxu0
  %1734 = vmatprep.mubr.bf16.mxu0 0
  %1735 = vmatmul.mubr.bf16.gmra.mxu0 %v1639
  %v1736 = vpop.f32.mrf.mxu0
  %v1737 = vadd.f32 0.0, %v1736
  %v1738 = vpop.f32.mrf.mxu0
  %v1739 = vpop.f32.mrf.mxu0
  %v1740 = vadd.f32 0.0, %v1739
  %v1741 = vpop.f32.mrf.mxu0
  %1742 = vmatprep.mubr.bf16.mxu0 0
  %1743 = vmatmul.mubr.bf16.gmra.mxu0 %v1642
  %v1744 = vpop.f32.mrf.mxu0
  %v1745 = vadd.f32 0.0, %v1744
  %v1746 = vpop.f32.mrf.mxu0
  %v1747 = vpop.f32.mrf.mxu0
  %v1748 = vadd.f32 0.0, %v1747
  %v1749 = vpop.f32.mrf.mxu0
  %1750 = vmatprep.mubr.bf16.mxu0 0
  %1751 = vmatmul.mubr.bf16.gmra.mxu0 %v1645
  %v1752 = vpop.f32.mrf.mxu0
  %v1753 = vadd.f32 0.0, %v1752
  %v1754 = vpop.f32.mrf.mxu0
  %v1755 = vpop.f32.mrf.mxu0
  %v1756 = vadd.f32 0.0, %v1755
  %v1757 = vpop.f32.mrf.mxu0
  %1758 = vmatprep.mubr.bf16.mxu0 0
  %1759 = vmatmul.mubr.bf16.gmra.mxu0 %v1648
  %v1760 = vpop.f32.mrf.mxu0
  %v1761 = vadd.f32 0.0, %v1760
  %v1762 = vpop.f32.mrf.mxu0
  %v1763 = vpop.f32.mrf.mxu0
  %v1764 = vadd.f32 0.0, %v1763
  %v1765 = vpop.f32.mrf.mxu0
  %1766 = vmatprep.mubr.bf16.mxu0 0
  %1767 = vmatmul.mubr.bf16.gmra.mxu0 %v1651
  %v1768 = vpop.f32.mrf.mxu0
  %v1769 = vadd.f32 0.0, %v1768
  %v1770 = vpop.f32.mrf.mxu0
  %v1771 = vpop.f32.mrf.mxu0
  %v1772 = vadd.f32 0.0, %v1771
  %v1773 = vpop.f32.mrf.mxu0
  %1774 = vmatprep.mubr.bf16.mxu0 0
  %1775 = vmatmul.mubr.bf16.gmra.mxu0 %v1654
  %v1776 = vpop.f32.mrf.mxu0
  %v1777 = vadd.f32 0.0, %v1776
  %v1778 = vpop.f32.mrf.mxu0
  %v1779 = vpop.f32.mrf.mxu0
  %v1780 = vadd.f32 0.0, %v1779
  %v1781 = vpop.f32.mrf.mxu0
  %1782 = vmatprep.mubr.bf16.mxu0 0
  %1783 = vmatmul.mubr.bf16.gmra.mxu0 %v1657
  %v1784 = vpop.f32.mrf.mxu0
  %v1785 = vadd.f32 0.0, %v1784
  %v1786 = vpop.f32.mrf.mxu0
  %v1787 = vpop.f32.mrf.mxu0
  %v1788 = vadd.f32 0.0, %v1787
  %v1789 = vpop.f32.mrf.mxu0
  %1790 = vmatprep.mubr.bf16.mxu0 0
  %1791 = vmatmul.mubr.bf16.gmra.mxu0 %v1660
  %v1792 = vpop.f32.mrf.mxu0
  %v1793 = vadd.f32 0.0, %v1792
  %v1794 = vpop.f32.mrf.mxu0
  %v1795 = vpop.f32.mrf.mxu0
  %v1796 = vadd.f32 0.0, %v1795
  %v1797 = vpop.f32.mrf.mxu0
  %1798 = vmatprep.mubr.bf16.mxu0 0
  %1799 = vmatmul.mubr.bf16.gmra.mxu0 %v1663
  %v1800 = vpop.f32.mrf.mxu0
  %v1801 = vadd.f32 0.0, %v1800
  %v1802 = vpop.f32.mrf.mxu0
  %v1803 = vpop.f32.mrf.mxu0
  %v1804 = vadd.f32 0.0, %v1803
  %v1805 = vpop.f32.mrf.mxu0
  %1806 = vmatprep.mubr.bf16.mxu0 0
  %1807 = vmatmul.mubr.bf16.gmra.mxu0 %v1666
  %v1808 = vpop.f32.mrf.mxu0
  %v1809 = vadd.f32 0.0, %v1808
  %v1810 = vpop.f32.mrf.mxu0
  %v1811 = vpop.f32.mrf.mxu0
  %v1812 = vadd.f32 0.0, %v1811
  %v1813 = vpop.f32.mrf.mxu0
  %1814 = vmatprep.mubr.bf16.mxu0 0
  %1815 = vmatmul.mubr.bf16.gmra.mxu0 %v1669
  %v1816 = vpop.f32.mrf.mxu0
  %v1817 = vadd.f32 0.0, %v1816
  %v1818 = vpop.f32.mrf.mxu0
  %v1819 = vpop.f32.mrf.mxu0
  %v1820 = vadd.f32 0.0, %v1819
  %v1821 = vpop.f32.mrf.mxu0
  %1822 = vmatprep.mubr.bf16.mxu0 0
  %1823 = vmatmul.mubr.bf16.gmra.mxu0 %v1672
  %v1824 = vpop.f32.mrf.mxu0
  %v1825 = vadd.f32 0.0, %v1824
  %v1826 = vpop.f32.mrf.mxu0
  %v1827 = vpop.f32.mrf.mxu0
  %v1828 = vadd.f32 0.0, %v1827
  %v1829 = vpop.f32.mrf.mxu0
  %1830 = vmatprep.mubr.bf16.mxu0 0
  %1831 = vmatmul.mubr.bf16.gmra.mxu0 %v1675
  %v1832 = vpop.f32.mrf.mxu0
  %v1833 = vadd.f32 0.0, %v1832
  %v1834 = vpop.f32.mrf.mxu0
  %v1835 = vpop.f32.mrf.mxu0
  %v1836 = vadd.f32 0.0, %v1835
  %v1837 = vpop.f32.mrf.mxu0
  %1838 = vmatprep.mubr.bf16.mxu0 0
  %1839 = vmatmul.mubr.bf16.gmra.mxu0 %v1678
  %v1840 = vpop.f32.mrf.mxu0
  %v1841 = vadd.f32 0.0, %v1840
  %v1842 = vpop.f32.mrf.mxu0
  %v1843 = vpop.f32.mrf.mxu0
  %v1844 = vadd.f32 0.0, %v1843
  %v1845 = vpop.f32.mrf.mxu0
  %1846 = vmatprep.mubr.bf16.mxu0 0
  %1847 = vmatmul.mubr.bf16.gmra.mxu0 %v1681
  %v1848 = vpop.f32.mrf.mxu0
  %v1849 = vadd.f32 0.0, %v1848
  %v1850 = vpop.f32.mrf.mxu0
  %v1851 = vpop.f32.mrf.mxu0
  %v1852 = vadd.f32 0.0, %v1851
  %v1853 = vpop.f32.mrf.mxu0
  %1854 = vmatprep.mubr.bf16.mxu0 0
  %1855 = vmatmul.mubr.bf16.gmra.mxu0 %v1684
  %v1856 = vpop.f32.mrf.mxu0
  %v1857 = vadd.f32 0.0, %v1856
  %v1858 = vpop.f32.mrf.mxu0
  %v1859 = vpop.f32.mrf.mxu0
  %v1860 = vadd.f32 0.0, %v1859
  %v1861 = vpop.f32.mrf.mxu0
  %1862 = vdwg.mxu0
  %v1863 = vsub.f32 %v1474, %v1721
  %v1864 = vsub.f32 %v1477, %v1724
  %v1865 = vsub.f32 %v1482, %v1729
  %v1866 = vsub.f32 %v1485, %v1732
  %v1867 = vsub.f32 %v1490, %v1737
  %v1868 = vsub.f32 %v1493, %v1740
  %v1869 = vsub.f32 %v1498, %v1745
  %v1870 = vsub.f32 %v1501, %v1748
  %v1871 = vsub.f32 %v1506, %v1753
  %v1872 = vsub.f32 %v1509, %v1756
  %v1873 = vsub.f32 %v1514, %v1761
  %v1874 = vsub.f32 %v1517, %v1764
  %v1875 = vsub.f32 %v1522, %v1769
  %v1876 = vsub.f32 %v1525, %v1772
  %v1877 = vsub.f32 %v1530, %v1777
  %v1878 = vsub.f32 %v1533, %v1780
  %v1879 = vsub.f32 %v1538, %v1785
  %v1880 = vsub.f32 %v1541, %v1788
  %v1881 = vsub.f32 %v1546, %v1793
  %v1882 = vsub.f32 %v1549, %v1796
  %v1883 = vsub.f32 %v1554, %v1801
  %v1884 = vsub.f32 %v1557, %v1804
  %v1885 = vsub.f32 %v1562, %v1809
  %v1886 = vsub.f32 %v1565, %v1812
  %v1887 = vsub.f32 %v1570, %v1817
  %v1888 = vsub.f32 %v1573, %v1820
  %v1889 = vsub.f32 %v1578, %v1825
  %v1890 = vsub.f32 %v1581, %v1828
  %v1891 = vsub.f32 %v1586, %v1833
  %v1892 = vsub.f32 %v1589, %v1836
  %v1893 = vsub.f32 %v1594, %v1841
  %v1894 = vsub.f32 %v1597, %v1844
  %v1895 = vsub.f32 %v1602, %v1849
  %v1896 = vsub.f32 %v1605, %v1852
  %v1897 = vsub.f32 %v1610, %v1857
  %v1898 = vsub.f32 %v1613, %v1860
  %v1899 = vld [vmem:[%s8] sm:$0x1]
  %v1901 = vlaneseq
  %v1902 = vshrl.u32 %v1901, 7
  %v1903 = vsub.s32 0, %v1902
  %v1904 = vrot.slane %v1899, %v1903
  %v1906 = vadd.f32 %v1863, %v1904
  %v1907 = vadd.f32 %v1864, %v1904
  %v1908 = vadd.f32 %v1865, %v1904
  %v1909 = vadd.f32 %v1866, %v1904
  %v1910 = vadd.f32 %v1867, %v1904
  %v1911 = vadd.f32 %v1868, %v1904
  %v1912 = vadd.f32 %v1869, %v1904
  %v1913 = vadd.f32 %v1870, %v1904
  %v1914 = vadd.f32 %v1871, %v1904
  %v1915 = vadd.f32 %v1872, %v1904
  %v1916 = vadd.f32 %v1873, %v1904
  %v1917 = vadd.f32 %v1874, %v1904
  %v1918 = vadd.f32 %v1875, %v1904
  %v1919 = vadd.f32 %v1876, %v1904
  %v1920 = vadd.f32 %v1877, %v1904
  %v1921 = vadd.f32 %v1878, %v1904
  %v1922 = vadd.f32 %v1879, %v1904
  %v1923 = vadd.f32 %v1880, %v1904
  %v1924 = vadd.f32 %v1881, %v1904
  %v1925 = vadd.f32 %v1882, %v1904
  %v1926 = vadd.f32 %v1883, %v1904
  %v1927 = vadd.f32 %v1884, %v1904
  %v1928 = vadd.f32 %v1885, %v1904
  %v1929 = vadd.f32 %v1886, %v1904
  %v1930 = vadd.f32 %v1887, %v1904
  %v1931 = vadd.f32 %v1888, %v1904
  %v1932 = vadd.f32 %v1889, %v1904
  %v1933 = vadd.f32 %v1890, %v1904
  %v1934 = vadd.f32 %v1891, %v1904
  %v1935 = vadd.f32 %v1892, %v1904
  %v1936 = vadd.f32 %v1893, %v1904
  %v1937 = vadd.f32 %v1894, %v1904
  %v1938 = vadd.f32 %v1895, %v1904
  %v1939 = vadd.f32 %v1896, %v1904
  %v1940 = vadd.f32 %v1897, %v1904
  %v1941 = vadd.f32 %v1898, %v1904
  %1942 = vmatprep.subr.bf16.mxu0 0
  %1943 = vmatpush1.bf16.msra.mxu0 0
  %1944 = vmatprep.subr.bf16.mxu0 0
  %1945 = vmatpush1.bf16.msra.mxu0 0
  %1946 = vmatprep.subr.bf16.mxu0 0
  %1947 = vmatpush1.bf16.msra.mxu0 0
  %1948 = vmatprep.subr.bf16.mxu0 0
  %1949 = vmatpush1.bf16.msra.mxu0 0
  %1950 = vmatprep.subr.bf16.mxu0 0
  %1951 = vmatpush1.bf16.msra.mxu0 0
  %1952 = vmatprep.subr.bf16.mxu0 0
  %1953 = vmatpush1.bf16.msra.mxu0 0
  %1954 = vmatprep.subr.bf16.mxu0 0
  %1955 = vmatpush1.bf16.msra.mxu0 %v1629
  %1956 = vmatprep.subr.bf16.mxu0 0
  %1957 = vmatpush1.bf16.msra.mxu0 %v1628
  %1958 = vmatprep.subr.bf16.mxu0 0
  %1959 = vmatpush2.bf16.msra.mxu0 0
  %1960 = vmatprep.subr.bf16.mxu0 0
  %1961 = vmatpush2.bf16.msra.mxu0 0
  %1962 = vmatprep.subr.bf16.mxu0 0
  %1963 = vmatpush2.bf16.msra.mxu0 0
  %1964 = vmatprep.subr.bf16.mxu0 0
  %1965 = vmatpush2.bf16.msra.mxu0 0
  %1966 = vmatprep.subr.bf16.mxu0 0
  %1967 = vmatpush2.bf16.msra.mxu0 0
  %1968 = vmatprep.subr.bf16.mxu0 0
  %1969 = vmatpush2.bf16.msra.mxu0 0
  %1970 = vmatprep.subr.bf16.mxu0 0
  %1971 = vmatpush2.bf16.msra.mxu0 0
  %1972 = vmatprep.subr.bf16.mxu0 0
  %1973 = vmatpush2.bf16.msra.mxu0 0
  %1974 = vmatprep.mubr.bf16.mxu0 0
  %1975 = vmatmul.mubr.bf16.gmra.mxu0 %v1386
  %v1976 = vpop.f32.mrf.mxu0
  %v1977 = vadd.f32 0.0, %v1976
  %v1978 = vpop.f32.mrf.mxu0
  %v1979 = vpop.f32.mrf.mxu0
  %v1980 = vadd.f32 0.0, %v1979
  %v1981 = vpop.f32.mrf.mxu0
  %1982 = vmatprep.mubr.bf16.mxu0 0
  %1983 = vmatmul.mubr.bf16.gmra.mxu0 %v1389
  %v1984 = vpop.f32.mrf.mxu0
  %v1985 = vadd.f32 0.0, %v1984
  %v1986 = vpop.f32.mrf.mxu0
  %v1987 = vpop.f32.mrf.mxu0
  %v1988 = vadd.f32 0.0, %v1987
  %v1989 = vpop.f32.mrf.mxu0
  %1990 = vmatprep.mubr.bf16.mxu0 0
  %1991 = vmatmul.mubr.bf16.gmra.mxu0 %v1392
  %v1992 = vpop.f32.mrf.mxu0
  %v1993 = vadd.f32 0.0, %v1992
  %v1994 = vpop.f32.mrf.mxu0
  %v1995 = vpop.f32.mrf.mxu0
  %v1996 = vadd.f32 0.0, %v1995
  %v1997 = vpop.f32.mrf.mxu0
  %1998 = vmatprep.mubr.bf16.mxu0 0
  %1999 = vmatmul.mubr.bf16.gmra.mxu0 %v1395
  %v2000 = vpop.f32.mrf.mxu0
  %v2001 = vadd.f32 0.0, %v2000
  %v2002 = vpop.f32.mrf.mxu0
  %v2003 = vpop.f32.mrf.mxu0
  %v2004 = vadd.f32 0.0, %v2003
  %v2005 = vpop.f32.mrf.mxu0
  %2006 = vmatprep.mubr.bf16.mxu0 0
  %2007 = vmatmul.mubr.bf16.gmra.mxu0 %v1398
  %v2008 = vpop.f32.mrf.mxu0
  %v2009 = vadd.f32 0.0, %v2008
  %v2010 = vpop.f32.mrf.mxu0
  %v2011 = vpop.f32.mrf.mxu0
  %v2012 = vadd.f32 0.0, %v2011
  %v2013 = vpop.f32.mrf.mxu0
  %2014 = vmatprep.mubr.bf16.mxu0 0
  %2015 = vmatmul.mubr.bf16.gmra.mxu0 %v1401
  %v2016 = vpop.f32.mrf.mxu0
  %v2017 = vadd.f32 0.0, %v2016
  %v2018 = vpop.f32.mrf.mxu0
  %v2019 = vpop.f32.mrf.mxu0
  %v2020 = vadd.f32 0.0, %v2019
  %v2021 = vpop.f32.mrf.mxu0
  %2022 = vmatprep.mubr.bf16.mxu0 0
  %2023 = vmatmul.mubr.bf16.gmra.mxu0 %v1404
  %v2024 = vpop.f32.mrf.mxu0
  %v2025 = vadd.f32 0.0, %v2024
  %v2026 = vpop.f32.mrf.mxu0
  %v2027 = vpop.f32.mrf.mxu0
  %v2028 = vadd.f32 0.0, %v2027
  %v2029 = vpop.f32.mrf.mxu0
  %2030 = vmatprep.mubr.bf16.mxu0 0
  %2031 = vmatmul.mubr.bf16.gmra.mxu0 %v1407
  %v2032 = vpop.f32.mrf.mxu0
  %v2033 = vadd.f32 0.0, %v2032
  %v2034 = vpop.f32.mrf.mxu0
  %v2035 = vpop.f32.mrf.mxu0
  %v2036 = vadd.f32 0.0, %v2035
  %v2037 = vpop.f32.mrf.mxu0
  %2038 = vmatprep.mubr.bf16.mxu0 0
  %2039 = vmatmul.mubr.bf16.gmra.mxu0 %v1410
  %v2040 = vpop.f32.mrf.mxu0
  %v2041 = vadd.f32 0.0, %v2040
  %v2042 = vpop.f32.mrf.mxu0
  %v2043 = vpop.f32.mrf.mxu0
  %v2044 = vadd.f32 0.0, %v2043
  %v2045 = vpop.f32.mrf.mxu0
  %2046 = vmatprep.mubr.bf16.mxu0 0
  %2047 = vmatmul.mubr.bf16.gmra.mxu0 %v1413
  %v2048 = vpop.f32.mrf.mxu0
  %v2049 = vadd.f32 0.0, %v2048
  %v2050 = vpop.f32.mrf.mxu0
  %v2051 = vpop.f32.mrf.mxu0
  %v2052 = vadd.f32 0.0, %v2051
  %v2053 = vpop.f32.mrf.mxu0
  %2054 = vmatprep.mubr.bf16.mxu0 0
  %2055 = vmatmul.mubr.bf16.gmra.mxu0 %v1416
  %v2056 = vpop.f32.mrf.mxu0
  %v2057 = vadd.f32 0.0, %v2056
  %v2058 = vpop.f32.mrf.mxu0
  %v2059 = vpop.f32.mrf.mxu0
  %v2060 = vadd.f32 0.0, %v2059
  %v2061 = vpop.f32.mrf.mxu0
  %2062 = vmatprep.mubr.bf16.mxu0 0
  %2063 = vmatmul.mubr.bf16.gmra.mxu0 %v1419
  %v2064 = vpop.f32.mrf.mxu0
  %v2065 = vadd.f32 0.0, %v2064
  %v2066 = vpop.f32.mrf.mxu0
  %v2067 = vpop.f32.mrf.mxu0
  %v2068 = vadd.f32 0.0, %v2067
  %v2069 = vpop.f32.mrf.mxu0
  %2070 = vmatprep.mubr.bf16.mxu0 0
  %2071 = vmatmul.mubr.bf16.gmra.mxu0 %v1422
  %v2072 = vpop.f32.mrf.mxu0
  %v2073 = vadd.f32 0.0, %v2072
  %v2074 = vpop.f32.mrf.mxu0
  %v2075 = vpop.f32.mrf.mxu0
  %v2076 = vadd.f32 0.0, %v2075
  %v2077 = vpop.f32.mrf.mxu0
  %2078 = vmatprep.mubr.bf16.mxu0 0
  %2079 = vmatmul.mubr.bf16.gmra.mxu0 %v1425
  %v2080 = vpop.f32.mrf.mxu0
  %v2081 = vadd.f32 0.0, %v2080
  %v2082 = vpop.f32.mrf.mxu0
  %v2083 = vpop.f32.mrf.mxu0
  %v2084 = vadd.f32 0.0, %v2083
  %v2085 = vpop.f32.mrf.mxu0
  %2086 = vmatprep.mubr.bf16.mxu0 0
  %2087 = vmatmul.mubr.bf16.gmra.mxu0 %v1428
  %v2088 = vpop.f32.mrf.mxu0
  %v2089 = vadd.f32 0.0, %v2088
  %v2090 = vpop.f32.mrf.mxu0
  %v2091 = vpop.f32.mrf.mxu0
  %v2092 = vadd.f32 0.0, %v2091
  %v2093 = vpop.f32.mrf.mxu0
  %2094 = vmatprep.mubr.bf16.mxu0 0
  %2095 = vmatmul.mubr.bf16.gmra.mxu0 %v1431
  %v2096 = vpop.f32.mrf.mxu0
  %v2097 = vadd.f32 0.0, %v2096
  %v2098 = vpop.f32.mrf.mxu0
  %v2099 = vpop.f32.mrf.mxu0
  %v2100 = vadd.f32 0.0, %v2099
  %v2101 = vpop.f32.mrf.mxu0
  %2102 = vmatprep.mubr.bf16.mxu0 0
  %2103 = vmatmul.mubr.bf16.gmra.mxu0 %v1434
  %v2104 = vpop.f32.mrf.mxu0
  %v2105 = vadd.f32 0.0, %v2104
  %v2106 = vpop.f32.mrf.mxu0
  %v2107 = vpop.f32.mrf.mxu0
  %v2108 = vadd.f32 0.0, %v2107
  %v2109 = vpop.f32.mrf.mxu0
  %2110 = vmatprep.mubr.bf16.mxu0 0
  %2111 = vmatmul.mubr.bf16.gmra.mxu0 %v1437
  %v2112 = vpop.f32.mrf.mxu0
  %v2113 = vadd.f32 0.0, %v2112
  %v2114 = vpop.f32.mrf.mxu0
  %v2115 = vpop.f32.mrf.mxu0
  %v2116 = vadd.f32 0.0, %v2115
  %v2117 = vpop.f32.mrf.mxu0
  %2118 = vdwg.mxu0
  %2119 = vmatprep.subr.bf16.mxu0 0
  %2120 = vmatpush1.bf16.msra.mxu0 0
  %2121 = vmatprep.subr.bf16.mxu0 0
  %2122 = vmatpush1.bf16.msra.mxu0 0
  %2123 = vmatprep.subr.bf16.mxu0 0
  %2124 = vmatpush1.bf16.msra.mxu0 0
  %2125 = vmatprep.subr.bf16.mxu0 0
  %2126 = vmatpush1.bf16.msra.mxu0 0
  %2127 = vmatprep.subr.bf16.mxu0 0
  %2128 = vmatpush1.bf16.msra.mxu0 0
  %2129 = vmatprep.subr.bf16.mxu0 0
  %2130 = vmatpush1.bf16.msra.mxu0 0
  %2131 = vmatprep.subr.bf16.mxu0 0
  %2132 = vmatpush1.bf16.msra.mxu0 %v1382
  %2133 = vmatprep.subr.bf16.mxu0 0
  %2134 = vmatpush1.bf16.msra.mxu0 %v1381
  %2135 = vmatprep.subr.bf16.mxu0 0
  %2136 = vmatpush2.bf16.msra.mxu0 0
  %2137 = vmatprep.subr.bf16.mxu0 0
  %2138 = vmatpush2.bf16.msra.mxu0 0
  %2139 = vmatprep.subr.bf16.mxu0 0
  %2140 = vmatpush2.bf16.msra.mxu0 0
  %2141 = vmatprep.subr.bf16.mxu0 0
  %2142 = vmatpush2.bf16.msra.mxu0 0
  %2143 = vmatprep.subr.bf16.mxu0 0
  %2144 = vmatpush2.bf16.msra.mxu0 0
  %2145 = vmatprep.subr.bf16.mxu0 0
  %2146 = vmatpush2.bf16.msra.mxu0 0
  %2147 = vmatprep.subr.bf16.mxu0 0
  %2148 = vmatpush2.bf16.msra.mxu0 0
  %2149 = vmatprep.subr.bf16.mxu0 0
  %2150 = vmatpush2.bf16.msra.mxu0 0
  %2151 = vmatprep.mubr.bf16.mxu0 0
  %2152 = vmatmul.mubr.bf16.gmra.mxu0 %v1633
  %v2153 = vpop.f32.mrf.mxu0
  %v2154 = vadd.f32 %v1977, %v2153
  %v2155 = vpop.f32.mrf.mxu0
  %v2156 = vpop.f32.mrf.mxu0
  %v2157 = vadd.f32 %v1980, %v2156
  %v2158 = vpop.f32.mrf.mxu0
  %2159 = vmatprep.mubr.bf16.mxu0 0
  %2160 = vmatmul.mubr.bf16.gmra.mxu0 %v1636
  %v2161 = vpop.f32.mrf.mxu0
  %v2162 = vadd.f32 %v1985, %v2161
  %v2163 = vpop.f32.mrf.mxu0
  %v2164 = vpop.f32.mrf.mxu0
  %v2165 = vadd.f32 %v1988, %v2164
  %v2166 = vpop.f32.mrf.mxu0
  %2167 = vmatprep.mubr.bf16.mxu0 0
  %2168 = vmatmul.mubr.bf16.gmra.mxu0 %v1639
  %v2169 = vpop.f32.mrf.mxu0
  %v2170 = vadd.f32 %v1993, %v2169
  %v2171 = vpop.f32.mrf.mxu0
  %v2172 = vpop.f32.mrf.mxu0
  %v2173 = vadd.f32 %v1996, %v2172
  %v2174 = vpop.f32.mrf.mxu0
  %2175 = vmatprep.mubr.bf16.mxu0 0
  %2176 = vmatmul.mubr.bf16.gmra.mxu0 %v1642
  %v2177 = vpop.f32.mrf.mxu0
  %v2178 = vadd.f32 %v2001, %v2177
  %v2179 = vpop.f32.mrf.mxu0
  %v2180 = vpop.f32.mrf.mxu0
  %v2181 = vadd.f32 %v2004, %v2180
  %v2182 = vpop.f32.mrf.mxu0
  %2183 = vmatprep.mubr.bf16.mxu0 0
  %2184 = vmatmul.mubr.bf16.gmra.mxu0 %v1645
  %v2185 = vpop.f32.mrf.mxu0
  %v2186 = vadd.f32 %v2009, %v2185
  %v2187 = vpop.f32.mrf.mxu0
  %v2188 = vpop.f32.mrf.mxu0
  %v2189 = vadd.f32 %v2012, %v2188
  %v2190 = vpop.f32.mrf.mxu0
  %2191 = vmatprep.mubr.bf16.mxu0 0
  %2192 = vmatmul.mubr.bf16.gmra.mxu0 %v1648
  %v2193 = vpop.f32.mrf.mxu0
  %v2194 = vadd.f32 %v2017, %v2193
  %v2195 = vpop.f32.mrf.mxu0
  %v2196 = vpop.f32.mrf.mxu0
  %v2197 = vadd.f32 %v2020, %v2196
  %v2198 = vpop.f32.mrf.mxu0
  %2199 = vmatprep.mubr.bf16.mxu0 0
  %2200 = vmatmul.mubr.bf16.gmra.mxu0 %v1651
  %v2201 = vpop.f32.mrf.mxu0
  %v2202 = vadd.f32 %v2025, %v2201
  %v2203 = vpop.f32.mrf.mxu0
  %v2204 = vpop.f32.mrf.mxu0
  %v2205 = vadd.f32 %v2028, %v2204
  %v2206 = vpop.f32.mrf.mxu0
  %2207 = vmatprep.mubr.bf16.mxu0 0
  %2208 = vmatmul.mubr.bf16.gmra.mxu0 %v1654
  %v2209 = vpop.f32.mrf.mxu0
  %v2210 = vadd.f32 %v2033, %v2209
  %v2211 = vpop.f32.mrf.mxu0
  %v2212 = vpop.f32.mrf.mxu0
  %v2213 = vadd.f32 %v2036, %v2212
  %v2214 = vpop.f32.mrf.mxu0
  %2215 = vmatprep.mubr.bf16.mxu0 0
  %2216 = vmatmul.mubr.bf16.gmra.mxu0 %v1657
  %v2217 = vpop.f32.mrf.mxu0
  %v2218 = vadd.f32 %v2041, %v2217
  %v2219 = vpop.f32.mrf.mxu0
  %v2220 = vpop.f32.mrf.mxu0
  %v2221 = vadd.f32 %v2044, %v2220
  %v2222 = vpop.f32.mrf.mxu0
  %2223 = vmatprep.mubr.bf16.mxu0 0
  %2224 = vmatmul.mubr.bf16.gmra.mxu0 %v1660
  %v2225 = vpop.f32.mrf.mxu0
  %v2226 = vadd.f32 %v2049, %v2225
  %v2227 = vpop.f32.mrf.mxu0
  %v2228 = vpop.f32.mrf.mxu0
  %v2229 = vadd.f32 %v2052, %v2228
  %v2230 = vpop.f32.mrf.mxu0
  %2231 = vmatprep.mubr.bf16.mxu0 0
  %2232 = vmatmul.mubr.bf16.gmra.mxu0 %v1663
  %v2233 = vpop.f32.mrf.mxu0
  %v2234 = vadd.f32 %v2057, %v2233
  %v2235 = vpop.f32.mrf.mxu0
  %v2236 = vpop.f32.mrf.mxu0
  %v2237 = vadd.f32 %v2060, %v2236
  %v2238 = vpop.f32.mrf.mxu0
  %2239 = vmatprep.mubr.bf16.mxu0 0
  %2240 = vmatmul.mubr.bf16.gmra.mxu0 %v1666
  %v2241 = vpop.f32.mrf.mxu0
  %v2242 = vadd.f32 %v2065, %v2241
  %v2243 = vpop.f32.mrf.mxu0
  %v2244 = vpop.f32.mrf.mxu0
  %v2245 = vadd.f32 %v2068, %v2244
  %v2246 = vpop.f32.mrf.mxu0
  %2247 = vmatprep.mubr.bf16.mxu0 0
  %2248 = vmatmul.mubr.bf16.gmra.mxu0 %v1669
  %v2249 = vpop.f32.mrf.mxu0
  %v2250 = vadd.f32 %v2073, %v2249
  %v2251 = vpop.f32.mrf.mxu0
  %v2252 = vpop.f32.mrf.mxu0
  %v2253 = vadd.f32 %v2076, %v2252
  %v2254 = vpop.f32.mrf.mxu0
  %2255 = vmatprep.mubr.bf16.mxu0 0
  %2256 = vmatmul.mubr.bf16.gmra.mxu0 %v1672
  %v2257 = vpop.f32.mrf.mxu0
  %v2258 = vadd.f32 %v2081, %v2257
  %v2259 = vpop.f32.mrf.mxu0
  %v2260 = vpop.f32.mrf.mxu0
  %v2261 = vadd.f32 %v2084, %v2260
  %v2262 = vpop.f32.mrf.mxu0
  %2263 = vmatprep.mubr.bf16.mxu0 0
  %2264 = vmatmul.mubr.bf16.gmra.mxu0 %v1675
  %v2265 = vpop.f32.mrf.mxu0
  %v2266 = vadd.f32 %v2089, %v2265
  %v2267 = vpop.f32.mrf.mxu0
  %v2268 = vpop.f32.mrf.mxu0
  %v2269 = vadd.f32 %v2092, %v2268
  %v2270 = vpop.f32.mrf.mxu0
  %2271 = vmatprep.mubr.bf16.mxu0 0
  %2272 = vmatmul.mubr.bf16.gmra.mxu0 %v1678
  %v2273 = vpop.f32.mrf.mxu0
  %v2274 = vadd.f32 %v2097, %v2273
  %v2275 = vpop.f32.mrf.mxu0
  %v2276 = vpop.f32.mrf.mxu0
  %v2277 = vadd.f32 %v2100, %v2276
  %v2278 = vpop.f32.mrf.mxu0
  %2279 = vmatprep.mubr.bf16.mxu0 0
  %2280 = vmatmul.mubr.bf16.gmra.mxu0 %v1681
  %v2281 = vpop.f32.mrf.mxu0
  %v2282 = vadd.f32 %v2105, %v2281
  %v2283 = vpop.f32.mrf.mxu0
  %v2284 = vpop.f32.mrf.mxu0
  %v2285 = vadd.f32 %v2108, %v2284
  %v2286 = vpop.f32.mrf.mxu0
  %2287 = vmatprep.mubr.bf16.mxu0 0
  %2288 = vmatmul.mubr.bf16.gmra.mxu0 %v1684
  %v2289 = vpop.f32.mrf.mxu0
  %v2290 = vadd.f32 %v2113, %v2289
  %v2291 = vpop.f32.mrf.mxu0
  %v2292 = vpop.f32.mrf.mxu0
  %v2293 = vadd.f32 %v2116, %v2292
  %v2294 = vpop.f32.mrf.mxu0
  %2295 = vdwg.mxu0
  %v2296 = vld [vmem:[%s9] sm:$0x1]
  %v2298 = vlaneseq
  %v2299 = vshrl.u32 %v2298, 7
  %v2300 = vsub.s32 0, %v2299
  %v2301 = vrot.slane %v2296, %v2300
  %v2303 = vadd.f32 %v2154, %v2301
  %v2304 = vadd.f32 %v2157, %v2301
  %v2305 = vadd.f32 %v2162, %v2301
  %v2306 = vadd.f32 %v2165, %v2301
  %v2307 = vadd.f32 %v2170, %v2301
  %v2308 = vadd.f32 %v2173, %v2301
  %v2309 = vadd.f32 %v2178, %v2301
  %v2310 = vadd.f32 %v2181, %v2301
  %v2311 = vadd.f32 %v2186, %v2301
  %v2312 = vadd.f32 %v2189, %v2301
  %v2313 = vadd.f32 %v2194, %v2301
  %v2314 = vadd.f32 %v2197, %v2301
  %v2315 = vadd.f32 %v2202, %v2301
  %v2316 = vadd.f32 %v2205, %v2301
  %v2317 = vadd.f32 %v2210, %v2301
  %v2318 = vadd.f32 %v2213, %v2301
  %v2319 = vadd.f32 %v2218, %v2301
  %v2320 = vadd.f32 %v2221, %v2301
  %v2321 = vadd.f32 %v2226, %v2301
  %v2322 = vadd.f32 %v2229, %v2301
  %v2323 = vadd.f32 %v2234, %v2301
  %v2324 = vadd.f32 %v2237, %v2301
  %v2325 = vadd.f32 %v2242, %v2301
  %v2326 = vadd.f32 %v2245, %v2301
  %v2327 = vadd.f32 %v2250, %v2301
  %v2328 = vadd.f32 %v2253, %v2301
  %v2329 = vadd.f32 %v2258, %v2301
  %v2330 = vadd.f32 %v2261, %v2301
  %v2331 = vadd.f32 %v2266, %v2301
  %v2332 = vadd.f32 %v2269, %v2301
  %v2333 = vadd.f32 %v2274, %v2301
  %v2334 = vadd.f32 %v2277, %v2301
  %v2335 = vadd.f32 %v2282, %v2301
  %v2336 = vadd.f32 %v2285, %v2301
  %v2337 = vadd.f32 %v2290, %v2301
  %v2338 = vadd.f32 %v2293, %v2301
  %v2339 = vsub.f32 %v1906, 0.01
  %v2340 = vsub.f32 %v1907, 0.01
  %v2341 = vsub.f32 %v1908, 0.01
  %v2342 = vsub.f32 %v1909, 0.01
  %v2343 = vsub.f32 %v1910, 0.01
  %v2344 = vsub.f32 %v1911, 0.01
  %v2345 = vsub.f32 %v1912, 0.01
  %v2346 = vsub.f32 %v1913, 0.01
  %v2347 = vsub.f32 %v1914, 0.01
  %v2348 = vsub.f32 %v1915, 0.01
  %v2349 = vsub.f32 %v1916, 0.01
  %v2350 = vsub.f32 %v1917, 0.01
  %v2351 = vsub.f32 %v1918, 0.01
  %v2352 = vsub.f32 %v1919, 0.01
  %v2353 = vsub.f32 %v1920, 0.01
  %v2354 = vsub.f32 %v1921, 0.01
  %v2355 = vsub.f32 %v1922, 0.01
  %v2356 = vsub.f32 %v1923, 0.01
  %v2357 = vsub.f32 %v1924, 0.01
  %v2358 = vsub.f32 %v1925, 0.01
  %v2359 = vsub.f32 %v1926, 0.01
  %v2360 = vsub.f32 %v1927, 0.01
  %v2361 = vsub.f32 %v1928, 0.01
  %v2362 = vsub.f32 %v1929, 0.01
  %v2363 = vsub.f32 %v1930, 0.01
  %v2364 = vsub.f32 %v1931, 0.01
  %v2365 = vsub.f32 %v1932, 0.01
  %v2366 = vsub.f32 %v1933, 0.01
  %v2367 = vsub.f32 %v1934, 0.01
  %v2368 = vsub.f32 %v1935, 0.01
  %v2369 = vsub.f32 %v1936, 0.01
  %v2370 = vsub.f32 %v1937, 0.01
  %v2371 = vsub.f32 %v1938, 0.01
  %v2372 = vsub.f32 %v1939, 0.01
  %v2373 = vsub.f32 %v1940, 0.01
  %v2374 = vsub.f32 %v1941, 0.01
  %v2375 = vmax.f32 %v2339, 0.0
  %v2376 = vmax.f32 %v2340, 0.0
  %v2377 = vmax.f32 %v2341, 0.0
  %v2378 = vmax.f32 %v2342, 0.0
  %v2379 = vmax.f32 %v2343, 0.0
  %v2380 = vmax.f32 %v2344, 0.0
  %v2381 = vmax.f32 %v2345, 0.0
  %v2382 = vmax.f32 %v2346, 0.0
  %v2383 = vmax.f32 %v2347, 0.0
  %v2384 = vmax.f32 %v2348, 0.0
  %v2385 = vmax.f32 %v2349, 0.0
  %v2386 = vmax.f32 %v2350, 0.0
  %v2387 = vmax.f32 %v2351, 0.0
  %v2388 = vmax.f32 %v2352, 0.0
  %v2389 = vmax.f32 %v2353, 0.0
  %v2390 = vmax.f32 %v2354, 0.0
  %v2391 = vmax.f32 %v2355, 0.0
  %v2392 = vmax.f32 %v2356, 0.0
  %v2393 = vmax.f32 %v2357, 0.0
  %v2394 = vmax.f32 %v2358, 0.0
  %v2395 = vmax.f32 %v2359, 0.0
  %v2396 = vmax.f32 %v2360, 0.0
  %v2397 = vmax.f32 %v2361, 0.0
  %v2398 = vmax.f32 %v2362, 0.0
  %v2399 = vmax.f32 %v2363, 0.0
  %v2400 = vmax.f32 %v2364, 0.0
  %v2401 = vmax.f32 %v2365, 0.0
  %v2402 = vmax.f32 %v2366, 0.0
  %v2403 = vmax.f32 %v2367, 0.0
  %v2404 = vmax.f32 %v2368, 0.0
  %v2405 = vmax.f32 %v2369, 0.0
  %v2406 = vmax.f32 %v2370, 0.0
  %v2407 = vmax.f32 %v2371, 0.0
  %v2408 = vmax.f32 %v2372, 0.0
  %v2409 = vmax.f32 %v2373, 0.0
  %v2410 = vmax.f32 %v2374, 0.0
  %v2411 = vadd.f32 %v1906, 0.01
  %v2412 = vadd.f32 %v1907, 0.01
  %v2413 = vadd.f32 %v1908, 0.01
  %v2414 = vadd.f32 %v1909, 0.01
  %v2415 = vadd.f32 %v1910, 0.01
  %v2416 = vadd.f32 %v1911, 0.01
  %v2417 = vadd.f32 %v1912, 0.01
  %v2418 = vadd.f32 %v1913, 0.01
  %v2419 = vadd.f32 %v1914, 0.01
  %v2420 = vadd.f32 %v1915, 0.01
  %v2421 = vadd.f32 %v1916, 0.01
  %v2422 = vadd.f32 %v1917, 0.01
  %v2423 = vadd.f32 %v1918, 0.01
  %v2424 = vadd.f32 %v1919, 0.01
  %v2425 = vadd.f32 %v1920, 0.01
  %v2426 = vadd.f32 %v1921, 0.01
  %v2427 = vadd.f32 %v1922, 0.01
  %v2428 = vadd.f32 %v1923, 0.01
  %v2429 = vadd.f32 %v1924, 0.01
  %v2430 = vadd.f32 %v1925, 0.01
  %v2431 = vadd.f32 %v1926, 0.01
  %v2432 = vadd.f32 %v1927, 0.01
  %v2433 = vadd.f32 %v1928, 0.01
  %v2434 = vadd.f32 %v1929, 0.01
  %v2435 = vadd.f32 %v1930, 0.01
  %v2436 = vadd.f32 %v1931, 0.01
  %v2437 = vadd.f32 %v1932, 0.01
  %v2438 = vadd.f32 %v1933, 0.01
  %v2439 = vadd.f32 %v1934, 0.01
  %v2440 = vadd.f32 %v1935, 0.01
  %v2441 = vadd.f32 %v1936, 0.01
  %v2442 = vadd.f32 %v1937, 0.01
  %v2443 = vadd.f32 %v1938, 0.01
  %v2444 = vadd.f32 %v1939, 0.01
  %v2445 = vadd.f32 %v1940, 0.01
  %v2446 = vadd.f32 %v1941, 0.01
  %v2447 = vmin.f32 %v2411, 0.0
  %v2448 = vmin.f32 %v2412, 0.0
  %v2449 = vmin.f32 %v2413, 0.0
  %v2450 = vmin.f32 %v2414, 0.0
  %v2451 = vmin.f32 %v2415, 0.0
  %v2452 = vmin.f32 %v2416, 0.0
  %v2453 = vmin.f32 %v2417, 0.0
  %v2454 = vmin.f32 %v2418, 0.0
  %v2455 = vmin.f32 %v2419, 0.0
  %v2456 = vmin.f32 %v2420, 0.0
  %v2457 = vmin.f32 %v2421, 0.0
  %v2458 = vmin.f32 %v2422, 0.0
  %v2459 = vmin.f32 %v2423, 0.0
  %v2460 = vmin.f32 %v2424, 0.0
  %v2461 = vmin.f32 %v2425, 0.0
  %v2462 = vmin.f32 %v2426, 0.0
  %v2463 = vmin.f32 %v2427, 0.0
  %v2464 = vmin.f32 %v2428, 0.0
  %v2465 = vmin.f32 %v2429, 0.0
  %v2466 = vmin.f32 %v2430, 0.0
  %v2467 = vmin.f32 %v2431, 0.0
  %v2468 = vmin.f32 %v2432, 0.0
  %v2469 = vmin.f32 %v2433, 0.0
  %v2470 = vmin.f32 %v2434, 0.0
  %v2471 = vmin.f32 %v2435, 0.0
  %v2472 = vmin.f32 %v2436, 0.0
  %v2473 = vmin.f32 %v2437, 0.0
  %v2474 = vmin.f32 %v2438, 0.0
  %v2475 = vmin.f32 %v2439, 0.0
  %v2476 = vmin.f32 %v2440, 0.0
  %v2477 = vmin.f32 %v2441, 0.0
  %v2478 = vmin.f32 %v2442, 0.0
  %v2479 = vmin.f32 %v2443, 0.0
  %v2480 = vmin.f32 %v2444, 0.0
  %v2481 = vmin.f32 %v2445, 0.0
  %v2482 = vmin.f32 %v2446, 0.0
  %v2483 = vadd.f32 %v2375, %v2447
  %v2484 = vadd.f32 %v2376, %v2448
  %v2485 = vadd.f32 %v2377, %v2449
  %v2486 = vadd.f32 %v2378, %v2450
  %v2487 = vadd.f32 %v2379, %v2451
  %v2488 = vadd.f32 %v2380, %v2452
  %v2489 = vadd.f32 %v2381, %v2453
  %v2490 = vadd.f32 %v2382, %v2454
  %v2491 = vadd.f32 %v2383, %v2455
  %v2492 = vadd.f32 %v2384, %v2456
  %v2493 = vadd.f32 %v2385, %v2457
  %v2494 = vadd.f32 %v2386, %v2458
  %v2495 = vadd.f32 %v2387, %v2459
  %v2496 = vadd.f32 %v2388, %v2460
  %v2497 = vadd.f32 %v2389, %v2461
  %v2498 = vadd.f32 %v2390, %v2462
  %v2499 = vadd.f32 %v2391, %v2463
  %v2500 = vadd.f32 %v2392, %v2464
  %v2501 = vadd.f32 %v2393, %v2465
  %v2502 = vadd.f32 %v2394, %v2466
  %v2503 = vadd.f32 %v2395, %v2467
  %v2504 = vadd.f32 %v2396, %v2468
  %v2505 = vadd.f32 %v2397, %v2469
  %v2506 = vadd.f32 %v2398, %v2470
  %v2507 = vadd.f32 %v2399, %v2471
  %v2508 = vadd.f32 %v2400, %v2472
  %v2509 = vadd.f32 %v2401, %v2473
  %v2510 = vadd.f32 %v2402, %v2474
  %v2511 = vadd.f32 %v2403, %v2475
  %v2512 = vadd.f32 %v2404, %v2476
  %v2513 = vadd.f32 %v2405, %v2477
  %v2514 = vadd.f32 %v2406, %v2478
  %v2515 = vadd.f32 %v2407, %v2479
  %v2516 = vadd.f32 %v2408, %v2480
  %v2517 = vadd.f32 %v2409, %v2481
  %v2518 = vadd.f32 %v2410, %v2482
  %2519 = vst.msk [vmem:[%s10] sm:$0xff] %vm216, %v2483
  %2520 = vst.msk [vmem:[%s10 + $0x8] sm:$0xff] %vm216, %v2484
  %2521 = vst.msk [vmem:[%s10 + $0x10] sm:$0xff] %vm216, %v2485
  %2522 = vst.msk [vmem:[%s10 + $0x18] sm:$0xff] %vm216, %v2486
  %2523 = vst.msk [vmem:[%s10 + $0x20] sm:$0xff] %vm216, %v2487
  %2524 = vst.msk [vmem:[%s10 + $0x28] sm:$0xff] %vm216, %v2488
  %2525 = vst.msk [vmem:[%s10 + $0x30] sm:$0xff] %vm216, %v2489
  %2526 = vst.msk [vmem:[%s10 + $0x38] sm:$0xff] %vm216, %v2490
  %2527 = vst.msk [vmem:[%s10 + $0x40] sm:$0xff] %vm216, %v2491
  %2528 = vst.msk [vmem:[%s10 + $0x48] sm:$0xff] %vm216, %v2492
  %2529 = vst.msk [vmem:[%s10 + $0x50] sm:$0xff] %vm216, %v2493
  %2530 = vst.msk [vmem:[%s10 + $0x58] sm:$0xff] %vm216, %v2494
  %2531 = vst.msk [vmem:[%s10 + $0x60] sm:$0xff] %vm216, %v2495
  %2532 = vst.msk [vmem:[%s10 + $0x68] sm:$0xff] %vm216, %v2496
  %2533 = vst.msk [vmem:[%s10 + $0x70] sm:$0xff] %vm216, %v2497
  %2534 = vst.msk [vmem:[%s10 + $0x78] sm:$0xff] %vm216, %v2498
  %2535 = vst.msk [vmem:[%s10 + $0x80] sm:$0xff] %vm216, %v2499
  %2536 = vst.msk [vmem:[%s10 + $0x88] sm:$0xff] %vm216, %v2500
  %2537 = vst.msk [vmem:[%s10 + $0x90] sm:$0xff] %vm216, %v2501
  %2538 = vst.msk [vmem:[%s10 + $0x98] sm:$0xff] %vm216, %v2502
  %2539 = vst.msk [vmem:[%s10 + $0xa0] sm:$0xff] %vm216, %v2503
  %2540 = vst.msk [vmem:[%s10 + $0xa8] sm:$0xff] %vm216, %v2504
  %2541 = vst.msk [vmem:[%s10 + $0xb0] sm:$0xff] %vm216, %v2505
  %2542 = vst.msk [vmem:[%s10 + $0xb8] sm:$0xff] %vm216, %v2506
  %2543 = vst.msk [vmem:[%s10 + $0xc0] sm:$0xff] %vm216, %v2507
  %2544 = vst.msk [vmem:[%s10 + $0xc8] sm:$0xff] %vm216, %v2508
  %2545 = vst.msk [vmem:[%s10 + $0xd0] sm:$0xff] %vm216, %v2509
  %2546 = vst.msk [vmem:[%s10 + $0xd8] sm:$0xff] %vm216, %v2510
  %2547 = vst.msk [vmem:[%s10 + $0xe0] sm:$0xff] %vm216, %v2511
  %2548 = vst.msk [vmem:[%s10 + $0xe8] sm:$0xff] %vm216, %v2512
  %2549 = vst.msk [vmem:[%s10 + $0xf0] sm:$0xff] %vm216, %v2513
  %2550 = vst.msk [vmem:[%s10 + $0xf8] sm:$0xff] %vm216, %v2514
  %2551 = vst.msk [vmem:[%s10 + $0x100] sm:$0xff] %vm216, %v2515
  %2552 = vst.msk [vmem:[%s10 + $0x108] sm:$0xff] %vm216, %v2516
  %2553 = vst.msk [vmem:[%s10 + $0x110] sm:$0xff] %vm216, %v2517
  %2554 = vst.msk [vmem:[%s10 + $0x118] sm:$0xff] %vm216, %v2518
  %v2555 = vsub.f32 %v2303, 0.01
  %v2556 = vsub.f32 %v2304, 0.01
  %v2557 = vsub.f32 %v2305, 0.01
  %v2558 = vsub.f32 %v2306, 0.01
  %v2559 = vsub.f32 %v2307, 0.01
  %v2560 = vsub.f32 %v2308, 0.01
  %v2561 = vsub.f32 %v2309, 0.01
  %v2562 = vsub.f32 %v2310, 0.01
  %v2563 = vsub.f32 %v2311, 0.01
  %v2564 = vsub.f32 %v2312, 0.01
  %v2565 = vsub.f32 %v2313, 0.01
  %v2566 = vsub.f32 %v2314, 0.01
  %v2567 = vsub.f32 %v2315, 0.01
  %v2568 = vsub.f32 %v2316, 0.01
  %v2569 = vsub.f32 %v2317, 0.01
  %v2570 = vsub.f32 %v2318, 0.01
  %v2571 = vsub.f32 %v2319, 0.01
  %v2572 = vsub.f32 %v2320, 0.01
  %v2573 = vsub.f32 %v2321, 0.01
  %v2574 = vsub.f32 %v2322, 0.01
  %v2575 = vsub.f32 %v2323, 0.01
  %v2576 = vsub.f32 %v2324, 0.01
  %v2577 = vsub.f32 %v2325, 0.01
  %v2578 = vsub.f32 %v2326, 0.01
  %v2579 = vsub.f32 %v2327, 0.01
  %v2580 = vsub.f32 %v2328, 0.01
  %v2581 = vsub.f32 %v2329, 0.01
  %v2582 = vsub.f32 %v2330, 0.01
  %v2583 = vsub.f32 %v2331, 0.01
  %v2584 = vsub.f32 %v2332, 0.01
  %v2585 = vsub.f32 %v2333, 0.01
  %v2586 = vsub.f32 %v2334, 0.01
  %v2587 = vsub.f32 %v2335, 0.01
  %v2588 = vsub.f32 %v2336, 0.01
  %v2589 = vsub.f32 %v2337, 0.01
  %v2590 = vsub.f32 %v2338, 0.01
  %v2591 = vmax.f32 %v2555, 0.0
  %v2592 = vmax.f32 %v2556, 0.0
  %v2593 = vmax.f32 %v2557, 0.0
  %v2594 = vmax.f32 %v2558, 0.0
  %v2595 = vmax.f32 %v2559, 0.0
  %v2596 = vmax.f32 %v2560, 0.0
  %v2597 = vmax.f32 %v2561, 0.0
  %v2598 = vmax.f32 %v2562, 0.0
  %v2599 = vmax.f32 %v2563, 0.0
  %v2600 = vmax.f32 %v2564, 0.0
  %v2601 = vmax.f32 %v2565, 0.0
  %v2602 = vmax.f32 %v2566, 0.0
  %v2603 = vmax.f32 %v2567, 0.0
  %v2604 = vmax.f32 %v2568, 0.0
  %v2605 = vmax.f32 %v2569, 0.0
  %v2606 = vmax.f32 %v2570, 0.0
  %v2607 = vmax.f32 %v2571, 0.0
  %v2608 = vmax.f32 %v2572, 0.0
  %v2609 = vmax.f32 %v2573, 0.0
  %v2610 = vmax.f32 %v2574, 0.0
  %v2611 = vmax.f32 %v2575, 0.0
  %v2612 = vmax.f32 %v2576, 0.0
  %v2613 = vmax.f32 %v2577, 0.0
  %v2614 = vmax.f32 %v2578, 0.0
  %v2615 = vmax.f32 %v2579, 0.0
  %v2616 = vmax.f32 %v2580, 0.0
  %v2617 = vmax.f32 %v2581, 0.0
  %v2618 = vmax.f32 %v2582, 0.0
  %v2619 = vmax.f32 %v2583, 0.0
  %v2620 = vmax.f32 %v2584, 0.0
  %v2621 = vmax.f32 %v2585, 0.0
  %v2622 = vmax.f32 %v2586, 0.0
  %v2623 = vmax.f32 %v2587, 0.0
  %v2624 = vmax.f32 %v2588, 0.0
  %v2625 = vmax.f32 %v2589, 0.0
  %v2626 = vmax.f32 %v2590, 0.0
  %v2627 = vadd.f32 %v2303, 0.01
  %v2628 = vadd.f32 %v2304, 0.01
  %v2629 = vadd.f32 %v2305, 0.01
  %v2630 = vadd.f32 %v2306, 0.01
  %v2631 = vadd.f32 %v2307, 0.01
  %v2632 = vadd.f32 %v2308, 0.01
  %v2633 = vadd.f32 %v2309, 0.01
  %v2634 = vadd.f32 %v2310, 0.01
  %v2635 = vadd.f32 %v2311, 0.01
  %v2636 = vadd.f32 %v2312, 0.01
  %v2637 = vadd.f32 %v2313, 0.01
  %v2638 = vadd.f32 %v2314, 0.01
  %v2639 = vadd.f32 %v2315, 0.01
  %v2640 = vadd.f32 %v2316, 0.01
  %v2641 = vadd.f32 %v2317, 0.01
  %v2642 = vadd.f32 %v2318, 0.01
  %v2643 = vadd.f32 %v2319, 0.01
  %v2644 = vadd.f32 %v2320, 0.01
  %v2645 = vadd.f32 %v2321, 0.01
  %v2646 = vadd.f32 %v2322, 0.01
  %v2647 = vadd.f32 %v2323, 0.01
  %v2648 = vadd.f32 %v2324, 0.01
  %v2649 = vadd.f32 %v2325, 0.01
  %v2650 = vadd.f32 %v2326, 0.01
  %v2651 = vadd.f32 %v2327, 0.01
  %v2652 = vadd.f32 %v2328, 0.01
  %v2653 = vadd.f32 %v2329, 0.01
  %v2654 = vadd.f32 %v2330, 0.01
  %v2655 = vadd.f32 %v2331, 0.01
  %v2656 = vadd.f32 %v2332, 0.01
  %v2657 = vadd.f32 %v2333, 0.01
  %v2658 = vadd.f32 %v2334, 0.01
  %v2659 = vadd.f32 %v2335, 0.01
  %v2660 = vadd.f32 %v2336, 0.01
  %v2661 = vadd.f32 %v2337, 0.01
  %v2662 = vadd.f32 %v2338, 0.01
  %v2663 = vmin.f32 %v2627, 0.0
  %v2664 = vmin.f32 %v2628, 0.0
  %v2665 = vmin.f32 %v2629, 0.0
  %v2666 = vmin.f32 %v2630, 0.0
  %v2667 = vmin.f32 %v2631, 0.0
  %v2668 = vmin.f32 %v2632, 0.0
  %v2669 = vmin.f32 %v2633, 0.0
  %v2670 = vmin.f32 %v2634, 0.0
  %v2671 = vmin.f32 %v2635, 0.0
  %v2672 = vmin.f32 %v2636, 0.0
  %v2673 = vmin.f32 %v2637, 0.0
  %v2674 = vmin.f32 %v2638, 0.0
  %v2675 = vmin.f32 %v2639, 0.0
  %v2676 = vmin.f32 %v2640, 0.0
  %v2677 = vmin.f32 %v2641, 0.0
  %v2678 = vmin.f32 %v2642, 0.0
  %v2679 = vmin.f32 %v2643, 0.0
  %v2680 = vmin.f32 %v2644, 0.0
  %v2681 = vmin.f32 %v2645, 0.0
  %v2682 = vmin.f32 %v2646, 0.0
  %v2683 = vmin.f32 %v2647, 0.0
  %v2684 = vmin.f32 %v2648, 0.0
  %v2685 = vmin.f32 %v2649, 0.0
  %v2686 = vmin.f32 %v2650, 0.0
  %v2687 = vmin.f32 %v2651, 0.0
  %v2688 = vmin.f32 %v2652, 0.0
  %v2689 = vmin.f32 %v2653, 0.0
  %v2690 = vmin.f32 %v2654, 0.0
  %v2691 = vmin.f32 %v2655, 0.0
  %v2692 = vmin.f32 %v2656, 0.0
  %v2693 = vmin.f32 %v2657, 0.0
  %v2694 = vmin.f32 %v2658, 0.0
  %v2695 = vmin.f32 %v2659, 0.0
  %v2696 = vmin.f32 %v2660, 0.0
  %v2697 = vmin.f32 %v2661, 0.0
  %v2698 = vmin.f32 %v2662, 0.0
  %v2699 = vadd.f32 %v2591, %v2663
  %v2700 = vadd.f32 %v2592, %v2664
  %v2701 = vadd.f32 %v2593, %v2665
  %v2702 = vadd.f32 %v2594, %v2666
  %v2703 = vadd.f32 %v2595, %v2667
  %v2704 = vadd.f32 %v2596, %v2668
  %v2705 = vadd.f32 %v2597, %v2669
  %v2706 = vadd.f32 %v2598, %v2670
  %v2707 = vadd.f32 %v2599, %v2671
  %v2708 = vadd.f32 %v2600, %v2672
  %v2709 = vadd.f32 %v2601, %v2673
  %v2710 = vadd.f32 %v2602, %v2674
  %v2711 = vadd.f32 %v2603, %v2675
  %v2712 = vadd.f32 %v2604, %v2676
  %v2713 = vadd.f32 %v2605, %v2677
  %v2714 = vadd.f32 %v2606, %v2678
  %v2715 = vadd.f32 %v2607, %v2679
  %v2716 = vadd.f32 %v2608, %v2680
  %v2717 = vadd.f32 %v2609, %v2681
  %v2718 = vadd.f32 %v2610, %v2682
  %v2719 = vadd.f32 %v2611, %v2683
  %v2720 = vadd.f32 %v2612, %v2684
  %v2721 = vadd.f32 %v2613, %v2685
  %v2722 = vadd.f32 %v2614, %v2686
  %v2723 = vadd.f32 %v2615, %v2687
  %v2724 = vadd.f32 %v2616, %v2688
  %v2725 = vadd.f32 %v2617, %v2689
  %v2726 = vadd.f32 %v2618, %v2690
  %v2727 = vadd.f32 %v2619, %v2691
  %v2728 = vadd.f32 %v2620, %v2692
  %v2729 = vadd.f32 %v2621, %v2693
  %v2730 = vadd.f32 %v2622, %v2694
  %v2731 = vadd.f32 %v2623, %v2695
  %v2732 = vadd.f32 %v2624, %v2696
  %v2733 = vadd.f32 %v2625, %v2697
  %v2734 = vadd.f32 %v2626, %v2698
  %2735 = vst.msk [vmem:[%s11] sm:$0xff] %vm216, %v2699
  %2736 = vst.msk [vmem:[%s11 + $0x8] sm:$0xff] %vm216, %v2700
  %2737 = vst.msk [vmem:[%s11 + $0x10] sm:$0xff] %vm216, %v2701
  %2738 = vst.msk [vmem:[%s11 + $0x18] sm:$0xff] %vm216, %v2702
  %2739 = vst.msk [vmem:[%s11 + $0x20] sm:$0xff] %vm216, %v2703
  %2740 = vst.msk [vmem:[%s11 + $0x28] sm:$0xff] %vm216, %v2704
  %2741 = vst.msk [vmem:[%s11 + $0x30] sm:$0xff] %vm216, %v2705
  %2742 = vst.msk [vmem:[%s11 + $0x38] sm:$0xff] %vm216, %v2706
  %2743 = vst.msk [vmem:[%s11 + $0x40] sm:$0xff] %vm216, %v2707
  %2744 = vst.msk [vmem:[%s11 + $0x48] sm:$0xff] %vm216, %v2708
  %2745 = vst.msk [vmem:[%s11 + $0x50] sm:$0xff] %vm216, %v2709
  %2746 = vst.msk [vmem:[%s11 + $0x58] sm:$0xff] %vm216, %v2710
  %2747 = vst.msk [vmem:[%s11 + $0x60] sm:$0xff] %vm216, %v2711
  %2748 = vst.msk [vmem:[%s11 + $0x68] sm:$0xff] %vm216, %v2712
  %2749 = vst.msk [vmem:[%s11 + $0x70] sm:$0xff] %vm216, %v2713
  %2750 = vst.msk [vmem:[%s11 + $0x78] sm:$0xff] %vm216, %v2714
  %2751 = vst.msk [vmem:[%s11 + $0x80] sm:$0xff] %vm216, %v2715
  %2752 = vst.msk [vmem:[%s11 + $0x88] sm:$0xff] %vm216, %v2716
  %2753 = vst.msk [vmem:[%s11 + $0x90] sm:$0xff] %vm216, %v2717
  %2754 = vst.msk [vmem:[%s11 + $0x98] sm:$0xff] %vm216, %v2718
  %2755 = vst.msk [vmem:[%s11 + $0xa0] sm:$0xff] %vm216, %v2719
  %2756 = vst.msk [vmem:[%s11 + $0xa8] sm:$0xff] %vm216, %v2720
  %2757 = vst.msk [vmem:[%s11 + $0xb0] sm:$0xff] %vm216, %v2721
  %2758 = vst.msk [vmem:[%s11 + $0xb8] sm:$0xff] %vm216, %v2722
  %2759 = vst.msk [vmem:[%s11 + $0xc0] sm:$0xff] %vm216, %v2723
  %2760 = vst.msk [vmem:[%s11 + $0xc8] sm:$0xff] %vm216, %v2724
  %2761 = vst.msk [vmem:[%s11 + $0xd0] sm:$0xff] %vm216, %v2725
  %2762 = vst.msk [vmem:[%s11 + $0xd8] sm:$0xff] %vm216, %v2726
  %2763 = vst.msk [vmem:[%s11 + $0xe0] sm:$0xff] %vm216, %v2727
  %2764 = vst.msk [vmem:[%s11 + $0xe8] sm:$0xff] %vm216, %v2728
  %2765 = vst.msk [vmem:[%s11 + $0xf0] sm:$0xff] %vm216, %v2729
  %2766 = vst.msk [vmem:[%s11 + $0xf8] sm:$0xff] %vm216, %v2730
  %2767 = vst.msk [vmem:[%s11 + $0x100] sm:$0xff] %vm216, %v2731
  %2768 = vst.msk [vmem:[%s11 + $0x108] sm:$0xff] %vm216, %v2732
  %2769 = vst.msk [vmem:[%s11 + $0x110] sm:$0xff] %vm216, %v2733
  %2770 = vst.msk [vmem:[%s11 + $0x118] sm:$0xff] %vm216, %v2734
  // Predicated region
  $region42: #{simple_resblock_sub1f1.4} parent=0 // pred_check
    _
  $region43: #{simple_resblock_sub1f1.4} parent=0 // pred_check_branch
    %2772 = sbr.rel (0) target = $region45
  $region44: #{simple_resblock_sub1f1.4} parent=0 // pred_region
    _
  $region45: #{simple_resblock_sub1f1.4} parent=0 // pred_fallthru
    _
  // Predicated region
  $region46: #{simple_resblock_sub1f1.4} parent=0 // pred_check
    _
  $region47: #{simple_resblock_sub1f1.4} parent=0 // pred_check_branch
    %2774 = sbr.rel (0) target = $region49
  $region48: #{simple_resblock_sub1f1.4} parent=0 // pred_region
    _
  $region49: #{simple_resblock_sub1f1.4} parent=0 // pred_fallthru
    _
  // Predicated region
  $region50: #{simple_resblock_sub1f1.4} parent=0 // pred_check
    _
  $region51: #{simple_resblock_sub1f1.4} parent=0 // pred_check_branch
    %2776 = sbr.rel (0) target = $region53
  $region52: #{simple_resblock_sub1f1.4} parent=0 // pred_region
    _
  $region53: #{simple_resblock_sub1f1.4} parent=0 // pred_fallthru
    _
  // Predicated region
  $region54: #{simple_resblock_sub1f1.4} parent=0 // pred_check
    _
  $region55: #{simple_resblock_sub1f1.4} parent=0 // pred_check_branch
    %2778 = sbr.rel (0) target = $region57
  $region56: #{simple_resblock_sub1f1.4} parent=0 // pred_region
    _
  $region57: #{simple_resblock_sub1f1.4} parent=0 // pred_fallthru
    _

// kernel: simple_resblock_sub1f1.3
$region0: #{simple_resblock_sub1f1.3}
  #allocation0 [shape = 'u32[]', space=smem, size = 0x4, offset = 0x4, fixed_abs, tag = 'smem constant byte address 0x4 - core index']
  #allocation1 [shape = 'u32[144,128]{1,0:T(1,128)}', space=vmem, size = 0x12000, scoped, tag = 'internal scratch']
  %s0 = inlined_call_operand.vmem [shape: bf16[2,18,18,4], index: 0, kind: input, shape index: {}]
  %s1 = inlined_call_operand.vmem [shape: bf16[9,4,32], index: 1, kind: input, shape index: {}]
  %s2 = inlined_call_operand.vmem [shape: f32[1,32], index: 2, kind: input, shape index: {}]
  %s3 = inlined_call_operand.vmem [shape: f32[1,32], index: 3, kind: input, shape index: {}]
  %s4 = inlined_call_operand.vmem [shape: f32[512,32], index: 4, kind: output, shape index: {}]
  %s5 = sld [smem:[#allocation0]]
  $region26: #{simple_resblock_sub1f1.3} parent=0
    _
  %s7 = ssub.s32 1, %s5
  %s8 = scalar_select 0, %s7, %s5
  // Predicated region
  $region2: #{simple_resblock_sub1f1.3} parent=0 // pred_check
    _
  $region3: #{simple_resblock_sub1f1.3} parent=0 // pred_check_branch
    %10 = sbr.rel (0) target = $region5
  $region4: #{simple_resblock_sub1f1.3} parent=0 // pred_region
    _
  $region5: #{simple_resblock_sub1f1.3} parent=0 // pred_fallthru
    _
  // Predicated region
  $region6: #{simple_resblock_sub1f1.3} parent=0 // pred_check
    _
  $region7: #{simple_resblock_sub1f1.3} parent=0 // pred_check_branch
    %12 = sbr.rel (0) target = $region9
  $region8: #{simple_resblock_sub1f1.3} parent=0 // pred_region
    _
  $region9: #{simple_resblock_sub1f1.3} parent=0 // pred_fallthru
    _
  // Predicated region
  $region10: #{simple_resblock_sub1f1.3} parent=0 // pred_check
    _
  $region11: #{simple_resblock_sub1f1.3} parent=0 // pred_check_branch
    %14 = sbr.rel (0) target = $region13
  $region12: #{simple_resblock_sub1f1.3} parent=0 // pred_region
    _
  $region13: #{simple_resblock_sub1f1.3} parent=0 // pred_fallthru
    _
  // Predicated region
  $region14: #{simple_resblock_sub1f1.3} parent=0 // pred_check
    _
  $region15: #{simple_resblock_sub1f1.3} parent=0 // pred_check_branch
    %16 = sbr.rel (0) target = $region17
  $region16: #{simple_resblock_sub1f1.3} parent=0 // pred_region
    _
  $region17: #{simple_resblock_sub1f1.3} parent=0 // pred_fallthru
    _
  %v18 = vld [vmem:[%s0] sm:$0xf]
  %v19 = vld [vmem:[%s0 + $0x4] sm:$0xf]
  %v20 = vld [vmem:[%s0 + $0xc] sm:$0xf]
  %v21 = vld [vmem:[%s0 + $0x10] sm:$0xf]
  %v22 = vld [vmem:[%s0 + $0x18] sm:$0xf]
  %v23 = vld [vmem:[%s0 + $0x1c] sm:$0xf]
  %v24 = vld [vmem:[%s0 + $0x24] sm:$0xf]
  %v25 = vld [vmem:[%s0 + $0x28] sm:$0xf]
  %v26 = vld [vmem:[%s0 + $0x30] sm:$0xf]
  %v27 = vld [vmem:[%s0 + $0x34] sm:$0xf]
  %v28 = vld [vmem:[%s0 + $0x3c] sm:$0xf]
  %v29 = vld [vmem:[%s0 + $0x40] sm:$0xf]
  %v30 = vld [vmem:[%s0 + $0x48] sm:$0xf]
  %v31 = vld [vmem:[%s0 + $0x4c] sm:$0xf]
  %v32 = vld [vmem:[%s0 + $0x54] sm:$0xf]
  %v33 = vld [vmem:[%s0 + $0x58] sm:$0xf]
  %v34 = vld [vmem:[%s0 + $0x60] sm:$0xf]
  %v35 = vld [vmem:[%s0 + $0x64] sm:$0xf]
  %v36 = vld [vmem:[%s0 + $0x6c] sm:$0xf]
  %v37 = vld [vmem:[%s0 + $0x70] sm:$0xf]
  %v38 = vld [vmem:[%s0 + $0x78] sm:$0xf]
  %v39 = vld [vmem:[%s0 + $0x7c] sm:$0xf]
  %v40 = vld [vmem:[%s0 + $0x84] sm:$0xf]
  %v41 = vld [vmem:[%s0 + $0x88] sm:$0xf]
  %v42 = vld [vmem:[%s0 + $0x90] sm:$0xf]
  %v43 = vld [vmem:[%s0 + $0x94] sm:$0xf]
  %v44 = vld [vmem:[%s0 + $0x9c] sm:$0xf]
  %v45 = vld [vmem:[%s0 + $0xa0] sm:$0xf]
  %v46 = vld [vmem:[%s0 + $0xa8] sm:$0xf]
  %v47 = vld [vmem:[%s0 + $0xac] sm:$0xf]
  %v48 = vld [vmem:[%s0 + $0xb4] sm:$0xf]
  %v49 = vld [vmem:[%s0 + $0xb8] sm:$0xf]
  %v50 = vld [vmem:[%s0 + $0xd8] sm:$0xf]
  %v51 = vld [vmem:[%s0 + $0xdc] sm:$0xf]
  %v52 = vld [vmem:[%s0 + $0xe4] sm:$0xf]
  %v53 = vld [vmem:[%s0 + $0xe8] sm:$0xf]
  %v54 = vld [vmem:[%s0 + $0xf0] sm:$0xf]
  %v55 = vld [vmem:[%s0 + $0xf4] sm:$0xf]
  %v56 = vld [vmem:[%s0 + $0xfc] sm:$0xf]
  %v57 = vld [vmem:[%s0 + $0x100] sm:$0xf]
  %v58 = vld [vmem:[%s0 + $0x108] sm:$0xf]
  %v59 = vld [vmem:[%s0 + $0x10c] sm:$0xf]
  %v60 = vld [vmem:[%s0 + $0x114] sm:$0xf]
  %v61 = vld [vmem:[%s0 + $0x118] sm:$0xf]
  %v62 = vld [vmem:[%s0 + $0x120] sm:$0xf]
  %v63 = vld [vmem:[%s0 + $0x124] sm:$0xf]
  %v64 = vld [vmem:[%s0 + $0x12c] sm:$0xf]
  %v65 = vld [vmem:[%s0 + $0x130] sm:$0xf]
  %v66 = vld [vmem:[%s0 + $0x138] sm:$0xf]
  %v67 = vld [vmem:[%s0 + $0x13c] sm:$0xf]
  %v68 = vld [vmem:[%s0 + $0x144] sm:$0xf]
  %v69 = vld [vmem:[%s0 + $0x148] sm:$0xf]
  %v70 = vld [vmem:[%s0 + $0x150] sm:$0xf]
  %v71 = vld [vmem:[%s0 + $0x154] sm:$0xf]
  %v72 = vld [vmem:[%s0 + $0x15c] sm:$0xf]
  %v73 = vld [vmem:[%s0 + $0x160] sm:$0xf]
  %v74 = vld [vmem:[%s0 + $0x168] sm:$0xf]
  %v75 = vld [vmem:[%s0 + $0x16c] sm:$0xf]
  %v76 = vld [vmem:[%s0 + $0x174] sm:$0xf]
  %v77 = vld [vmem:[%s0 + $0x178] sm:$0xf]
  %v78 = vld [vmem:[%s0 + $0x180] sm:$0xf]
  %v79 = vld [vmem:[%s0 + $0x184] sm:$0xf]
  %v80 = vld [vmem:[%s0 + $0x18c] sm:$0xf]
  %v81 = vld [vmem:[%s0 + $0x190] sm:$0xf]
  %v82 = vld [vmem:[%s1] sm:$0x3]
  %v83 = vld [vmem:[%s0 + $0x8] sm:$0x1]
  %v84 = vld [vmem:[%s0 + $0x14] sm:$0x1]
  %v85 = vld [vmem:[%s0 + $0x20] sm:$0x1]
  %v86 = vld [vmem:[%s0 + $0x2c] sm:$0x1]
  %v87 = vld [vmem:[%s0 + $0x38] sm:$0x1]
  %v88 = vld [vmem:[%s0 + $0x44] sm:$0x1]
  %v89 = vld [vmem:[%s0 + $0x50] sm:$0x1]
  %v90 = vld [vmem:[%s0 + $0x5c] sm:$0x1]
  %v91 = vld [vmem:[%s0 + $0x68] sm:$0x1]
  %v92 = vld [vmem:[%s0 + $0x74] sm:$0x1]
  %v93 = vld [vmem:[%s0 + $0x80] sm:$0x1]
  %v94 = vld [vmem:[%s0 + $0x8c] sm:$0x1]
  %v95 = vld [vmem:[%s0 + $0x98] sm:$0x1]
  %v96 = vld [vmem:[%s0 + $0xa4] sm:$0x1]
  %v97 = vld [vmem:[%s0 + $0xb0] sm:$0x1]
  %v98 = vld [vmem:[%s0 + $0xbc] sm:$0x1]
  %v99 = vld [vmem:[%s0 + $0xe0] sm:$0x1]
  %v100 = vld [vmem:[%s0 + $0xec] sm:$0x1]
  %v101 = vld [vmem:[%s0 + $0xf8] sm:$0x1]
  %v102 = vld [vmem:[%s0 + $0x104] sm:$0x1]
  %v103 = vld [vmem:[%s0 + $0x110] sm:$0x1]
  %v104 = vld [vmem:[%s0 + $0x11c] sm:$0x1]
  %v105 = vld [vmem:[%s0 + $0x128] sm:$0x1]
  %v106 = vld [vmem:[%s0 + $0x134] sm:$0x1]
  %v107 = vld [vmem:[%s0 + $0x140] sm:$0x1]
  %v108 = vld [vmem:[%s0 + $0x14c] sm:$0x1]
  %v109 = vld [vmem:[%s0 + $0x158] sm:$0x1]
  %v110 = vld [vmem:[%s0 + $0x164] sm:$0x1]
  %v111 = vld [vmem:[%s0 + $0x170] sm:$0x1]
  %v112 = vld [vmem:[%s0 + $0x17c] sm:$0x1]
  %v113 = vld [vmem:[%s0 + $0x188] sm:$0x1]
  %v114 = vld [vmem:[%s0 + $0x194] sm:$0x1]
  %vm115 = vsmask.f32 3328
  %vm116 = vsmask.f32 7440
  %vm117 = vmor %vm115, %vm116
  %v119 = vshrl.u32 %v18, 16
  %v121 = vrot.slane %v119, 4
  %v122 = vshll.u32 %v18, 16
  %v124 = vrot.slane %v122, 5
  %v125 = vor.u32 %v121, %v124
  %v126 = vrot.slane %v125, 4
  %v128 = vshll.u32 %v19, 16
  %v130 = vrot.slane %v128, 5
  %v131 = vsel %vm117, %v126, %v130
  %v132 = vshrl.u32 %v19, 16
  %v134 = vrot.slane %v132, 4
  %v135 = vor.u32 %v134, %v130
  %v136 = vrot.slane %v135, 4
  %v138 = vshll.u32 %v83, 16
  %v140 = vrot.slane %v138, 5
  %v141 = vsel %vm117, %v136, %v140
  %v143 = vshrl.u32 %v20, 16
  %v145 = vrot.slane %v143, 4
  %v146 = vshll.u32 %v20, 16
  %v148 = vrot.slane %v146, 5
  %v149 = vor.u32 %v145, %v148
  %v150 = vrot.slane %v149, 4
  %v152 = vshll.u32 %v21, 16
  %v154 = vrot.slane %v152, 5
  %v155 = vsel %vm117, %v150, %v154
  %v156 = vshrl.u32 %v21, 16
  %v158 = vrot.slane %v156, 4
  %v159 = vor.u32 %v158, %v154
  %v160 = vrot.slane %v159, 4
  %v162 = vshll.u32 %v84, 16
  %v164 = vrot.slane %v162, 5
  %v165 = vsel %vm117, %v160, %v164
  %v167 = vshrl.u32 %v22, 16
  %v169 = vrot.slane %v167, 4
  %v170 = vshll.u32 %v22, 16
  %v172 = vrot.slane %v170, 5
  %v173 = vor.u32 %v169, %v172
  %v174 = vrot.slane %v173, 4
  %v176 = vshll.u32 %v23, 16
  %v178 = vrot.slane %v176, 5
  %v179 = vsel %vm117, %v174, %v178
  %v180 = vshrl.u32 %v23, 16
  %v182 = vrot.slane %v180, 4
  %v183 = vor.u32 %v182, %v178
  %v184 = vrot.slane %v183, 4
  %v186 = vshll.u32 %v85, 16
  %v188 = vrot.slane %v186, 5
  %v189 = vsel %vm117, %v184, %v188
  %v191 = vshrl.u32 %v24, 16
  %v193 = vrot.slane %v191, 4
  %v194 = vshll.u32 %v24, 16
  %v196 = vrot.slane %v194, 5
  %v197 = vor.u32 %v193, %v196
  %v198 = vrot.slane %v197, 4
  %v200 = vshll.u32 %v25, 16
  %v202 = vrot.slane %v200, 5
  %v203 = vsel %vm117, %v198, %v202
  %v204 = vshrl.u32 %v25, 16
  %v206 = vrot.slane %v204, 4
  %v207 = vor.u32 %v206, %v202
  %v208 = vrot.slane %v207, 4
  %v210 = vshll.u32 %v86, 16
  %v212 = vrot.slane %v210, 5
  %v213 = vsel %vm117, %v208, %v212
  %v215 = vshrl.u32 %v26, 16
  %v217 = vrot.slane %v215, 4
  %v218 = vshll.u32 %v26, 16
  %v220 = vrot.slane %v218, 5
  %v221 = vor.u32 %v217, %v220
  %v222 = vrot.slane %v221, 4
  %v224 = vshll.u32 %v27, 16
  %v226 = vrot.slane %v224, 5
  %v227 = vsel %vm117, %v222, %v226
  %v228 = vshrl.u32 %v27, 16
  %v230 = vrot.slane %v228, 4
  %v231 = vor.u32 %v230, %v226
  %v232 = vrot.slane %v231, 4
  %v234 = vshll.u32 %v87, 16
  %v236 = vrot.slane %v234, 5
  %v237 = vsel %vm117, %v232, %v236
  %v239 = vshrl.u32 %v28, 16
  %v241 = vrot.slane %v239, 4
  %v242 = vshll.u32 %v28, 16
  %v244 = vrot.slane %v242, 5
  %v245 = vor.u32 %v241, %v244
  %v246 = vrot.slane %v245, 4
  %v248 = vshll.u32 %v29, 16
  %v250 = vrot.slane %v248, 5
  %v251 = vsel %vm117, %v246, %v250
  %v252 = vshrl.u32 %v29, 16
  %v254 = vrot.slane %v252, 4
  %v255 = vor.u32 %v254, %v250
  %v256 = vrot.slane %v255, 4
  %v258 = vshll.u32 %v88, 16
  %v260 = vrot.slane %v258, 5
  %v261 = vsel %vm117, %v256, %v260
  %v263 = vshrl.u32 %v30, 16
  %v265 = vrot.slane %v263, 4
  %v266 = vshll.u32 %v30, 16
  %v268 = vrot.slane %v266, 5
  %v269 = vor.u32 %v265, %v268
  %v270 = vrot.slane %v269, 4
  %v272 = vshll.u32 %v31, 16
  %v274 = vrot.slane %v272, 5
  %v275 = vsel %vm117, %v270, %v274
  %v276 = vshrl.u32 %v31, 16
  %v278 = vrot.slane %v276, 4
  %v279 = vor.u32 %v278, %v274
  %v280 = vrot.slane %v279, 4
  %v282 = vshll.u32 %v89, 16
  %v284 = vrot.slane %v282, 5
  %v285 = vsel %vm117, %v280, %v284
  %v287 = vshrl.u32 %v32, 16
  %v289 = vrot.slane %v287, 4
  %v290 = vshll.u32 %v32, 16
  %v292 = vrot.slane %v290, 5
  %v293 = vor.u32 %v289, %v292
  %v294 = vrot.slane %v293, 4
  %v296 = vshll.u32 %v33, 16
  %v298 = vrot.slane %v296, 5
  %v299 = vsel %vm117, %v294, %v298
  %v300 = vshrl.u32 %v33, 16
  %v302 = vrot.slane %v300, 4
  %v303 = vor.u32 %v302, %v298
  %v304 = vrot.slane %v303, 4
  %v306 = vshll.u32 %v90, 16
  %v308 = vrot.slane %v306, 5
  %v309 = vsel %vm117, %v304, %v308
  %v311 = vshrl.u32 %v34, 16
  %v313 = vrot.slane %v311, 4
  %v314 = vshll.u32 %v34, 16
  %v316 = vrot.slane %v314, 5
  %v317 = vor.u32 %v313, %v316
  %v318 = vrot.slane %v317, 4
  %v320 = vshll.u32 %v35, 16
  %v322 = vrot.slane %v320, 5
  %v323 = vsel %vm117, %v318, %v322
  %v324 = vshrl.u32 %v35, 16
  %v326 = vrot.slane %v324, 4
  %v327 = vor.u32 %v326, %v322
  %v328 = vrot.slane %v327, 4
  %v330 = vshll.u32 %v91, 16
  %v332 = vrot.slane %v330, 5
  %v333 = vsel %vm117, %v328, %v332
  %v335 = vshrl.u32 %v36, 16
  %v337 = vrot.slane %v335, 4
  %v338 = vshll.u32 %v36, 16
  %v340 = vrot.slane %v338, 5
  %v341 = vor.u32 %v337, %v340
  %v342 = vrot.slane %v341, 4
  %v344 = vshll.u32 %v37, 16
  %v346 = vrot.slane %v344, 5
  %v347 = vsel %vm117, %v342, %v346
  %v348 = vshrl.u32 %v37, 16
  %v350 = vrot.slane %v348, 4
  %v351 = vor.u32 %v350, %v346
  %v352 = vrot.slane %v351, 4
  %v354 = vshll.u32 %v92, 16
  %v356 = vrot.slane %v354, 5
  %v357 = vsel %vm117, %v352, %v356
  %v359 = vshrl.u32 %v38, 16
  %v361 = vrot.slane %v359, 4
  %v362 = vshll.u32 %v38, 16
  %v364 = vrot.slane %v362, 5
  %v365 = vor.u32 %v361, %v364
  %v366 = vrot.slane %v365, 4
  %v368 = vshll.u32 %v39, 16
  %v370 = vrot.slane %v368, 5
  %v371 = vsel %vm117, %v366, %v370
  %v372 = vshrl.u32 %v39, 16
  %v374 = vrot.slane %v372, 4
  %v375 = vor.u32 %v374, %v370
  %v376 = vrot.slane %v375, 4
  %v378 = vshll.u32 %v93, 16
  %v380 = vrot.slane %v378, 5
  %v381 = vsel %vm117, %v376, %v380
  %v383 = vshrl.u32 %v40, 16
  %v385 = vrot.slane %v383, 4
  %v386 = vshll.u32 %v40, 16
  %v388 = vrot.slane %v386, 5
  %v389 = vor.u32 %v385, %v388
  %v390 = vrot.slane %v389, 4
  %v392 = vshll.u32 %v41, 16
  %v394 = vrot.slane %v392, 5
  %v395 = vsel %vm117, %v390, %v394
  %v396 = vshrl.u32 %v41, 16
  %v398 = vrot.slane %v396, 4
  %v399 = vor.u32 %v398, %v394
  %v400 = vrot.slane %v399, 4
  %v402 = vshll.u32 %v94, 16
  %v404 = vrot.slane %v402, 5
  %v405 = vsel %vm117, %v400, %v404
  %v407 = vshrl.u32 %v42, 16
  %v409 = vrot.slane %v407, 4
  %v410 = vshll.u32 %v42, 16
  %v412 = vrot.slane %v410, 5
  %v413 = vor.u32 %v409, %v412
  %v414 = vrot.slane %v413, 4
  %v416 = vshll.u32 %v43, 16
  %v418 = vrot.slane %v416, 5
  %v419 = vsel %vm117, %v414, %v418
  %v420 = vshrl.u32 %v43, 16
  %v422 = vrot.slane %v420, 4
  %v423 = vor.u32 %v422, %v418
  %v424 = vrot.slane %v423, 4
  %v426 = vshll.u32 %v95, 16
  %v428 = vrot.slane %v426, 5
  %v429 = vsel %vm117, %v424, %v428
  %v431 = vshrl.u32 %v44, 16
  %v433 = vrot.slane %v431, 4
  %v434 = vshll.u32 %v44, 16
  %v436 = vrot.slane %v434, 5
  %v437 = vor.u32 %v433, %v436
  %v438 = vrot.slane %v437, 4
  %v440 = vshll.u32 %v45, 16
  %v442 = vrot.slane %v440, 5
  %v443 = vsel %vm117, %v438, %v442
  %v444 = vshrl.u32 %v45, 16
  %v446 = vrot.slane %v444, 4
  %v447 = vor.u32 %v446, %v442
  %v448 = vrot.slane %v447, 4
  %v450 = vshll.u32 %v96, 16
  %v452 = vrot.slane %v450, 5
  %v453 = vsel %vm117, %v448, %v452
  %v455 = vshrl.u32 %v46, 16
  %v457 = vrot.slane %v455, 4
  %v458 = vshll.u32 %v46, 16
  %v460 = vrot.slane %v458, 5
  %v461 = vor.u32 %v457, %v460
  %v462 = vrot.slane %v461, 4
  %v464 = vshll.u32 %v47, 16
  %v466 = vrot.slane %v464, 5
  %v467 = vsel %vm117, %v462, %v466
  %v468 = vshrl.u32 %v47, 16
  %v470 = vrot.slane %v468, 4
  %v471 = vor.u32 %v470, %v466
  %v472 = vrot.slane %v471, 4
  %v474 = vshll.u32 %v97, 16
  %v476 = vrot.slane %v474, 5
  %v477 = vsel %vm117, %v472, %v476
  %v479 = vshrl.u32 %v48, 16
  %v481 = vrot.slane %v479, 4
  %v482 = vshll.u32 %v48, 16
  %v484 = vrot.slane %v482, 5
  %v485 = vor.u32 %v481, %v484
  %v486 = vrot.slane %v485, 4
  %v488 = vshll.u32 %v49, 16
  %v490 = vrot.slane %v488, 5
  %v491 = vsel %vm117, %v486, %v490
  %v492 = vshrl.u32 %v49, 16
  %v494 = vrot.slane %v492, 4
  %v495 = vor.u32 %v494, %v490
  %v496 = vrot.slane %v495, 4
  %v498 = vshll.u32 %v98, 16
  %v500 = vrot.slane %v498, 5
  %v501 = vsel %vm117, %v496, %v500
  %v503 = vshrl.u32 %v50, 16
  %v505 = vrot.slane %v503, 4
  %v506 = vshll.u32 %v50, 16
  %v508 = vrot.slane %v506, 5
  %v509 = vor.u32 %v505, %v508
  %v510 = vrot.slane %v509, 4
  %v512 = vshll.u32 %v51, 16
  %v514 = vrot.slane %v512, 5
  %v515 = vsel %vm117, %v510, %v514
  %v516 = vshrl.u32 %v51, 16
  %v518 = vrot.slane %v516, 4
  %v519 = vor.u32 %v518, %v514
  %v520 = vrot.slane %v519, 4
  %v522 = vshll.u32 %v99, 16
  %v524 = vrot.slane %v522, 5
  %v525 = vsel %vm117, %v520, %v524
  %v527 = vshrl.u32 %v52, 16
  %v529 = vrot.slane %v527, 4
  %v530 = vshll.u32 %v52, 16
  %v532 = vrot.slane %v530, 5
  %v533 = vor.u32 %v529, %v532
  %v534 = vrot.slane %v533, 4
  %v536 = vshll.u32 %v53, 16
  %v538 = vrot.slane %v536, 5
  %v539 = vsel %vm117, %v534, %v538
  %v540 = vshrl.u32 %v53, 16
  %v542 = vrot.slane %v540, 4
  %v543 = vor.u32 %v542, %v538
  %v544 = vrot.slane %v543, 4
  %v546 = vshll.u32 %v100, 16
  %v548 = vrot.slane %v546, 5
  %v549 = vsel %vm117, %v544, %v548
  %v551 = vshrl.u32 %v54, 16
  %v553 = vrot.slane %v551, 4
  %v554 = vshll.u32 %v54, 16
  %v556 = vrot.slane %v554, 5
  %v557 = vor.u32 %v553, %v556
  %v558 = vrot.slane %v557, 4
  %v560 = vshll.u32 %v55, 16
  %v562 = vrot.slane %v560, 5
  %v563 = vsel %vm117, %v558, %v562
  %v564 = vshrl.u32 %v55, 16
  %v566 = vrot.slane %v564, 4
  %v567 = vor.u32 %v566, %v562
  %v568 = vrot.slane %v567, 4
  %v570 = vshll.u32 %v101, 16
  %v572 = vrot.slane %v570, 5
  %v573 = vsel %vm117, %v568, %v572
  %v575 = vshrl.u32 %v56, 16
  %v577 = vrot.slane %v575, 4
  %v578 = vshll.u32 %v56, 16
  %v580 = vrot.slane %v578, 5
  %v581 = vor.u32 %v577, %v580
  %v582 = vrot.slane %v581, 4
  %v584 = vshll.u32 %v57, 16
  %v586 = vrot.slane %v584, 5
  %v587 = vsel %vm117, %v582, %v586
  %v588 = vshrl.u32 %v57, 16
  %v590 = vrot.slane %v588, 4
  %v591 = vor.u32 %v590, %v586
  %v592 = vrot.slane %v591, 4
  %v594 = vshll.u32 %v102, 16
  %v596 = vrot.slane %v594, 5
  %v597 = vsel %vm117, %v592, %v596
  %v599 = vshrl.u32 %v58, 16
  %v601 = vrot.slane %v599, 4
  %v602 = vshll.u32 %v58, 16
  %v604 = vrot.slane %v602, 5
  %v605 = vor.u32 %v601, %v604
  %v606 = vrot.slane %v605, 4
  %v608 = vshll.u32 %v59, 16
  %v610 = vrot.slane %v608, 5
  %v611 = vsel %vm117, %v606, %v610
  %v612 = vshrl.u32 %v59, 16
  %v614 = vrot.slane %v612, 4
  %v615 = vor.u32 %v614, %v610
  %v616 = vrot.slane %v615, 4
  %v618 = vshll.u32 %v103, 16
  %v620 = vrot.slane %v618, 5
  %v621 = vsel %vm117, %v616, %v620
  %v623 = vshrl.u32 %v60, 16
  %v625 = vrot.slane %v623, 4
  %v626 = vshll.u32 %v60, 16
  %v628 = vrot.slane %v626, 5
  %v629 = vor.u32 %v625, %v628
  %v630 = vrot.slane %v629, 4
  %v632 = vshll.u32 %v61, 16
  %v634 = vrot.slane %v632, 5
  %v635 = vsel %vm117, %v630, %v634
  %v636 = vshrl.u32 %v61, 16
  %v638 = vrot.slane %v636, 4
  %v639 = vor.u32 %v638, %v634
  %v640 = vrot.slane %v639, 4
  %v642 = vshll.u32 %v104, 16
  %v644 = vrot.slane %v642, 5
  %v645 = vsel %vm117, %v640, %v644
  %v647 = vshrl.u32 %v62, 16
  %v649 = vrot.slane %v647, 4
  %v650 = vshll.u32 %v62, 16
  %v652 = vrot.slane %v650, 5
  %v653 = vor.u32 %v649, %v652
  %v654 = vrot.slane %v653, 4
  %v656 = vshll.u32 %v63, 16
  %v658 = vrot.slane %v656, 5
  %v659 = vsel %vm117, %v654, %v658
  %v660 = vshrl.u32 %v63, 16
  %v662 = vrot.slane %v660, 4
  %v663 = vor.u32 %v662, %v658
  %v664 = vrot.slane %v663, 4
  %v666 = vshll.u32 %v105, 16
  %v668 = vrot.slane %v666, 5
  %v669 = vsel %vm117, %v664, %v668
  %v671 = vshrl.u32 %v64, 16
  %v673 = vrot.slane %v671, 4
  %v674 = vshll.u32 %v64, 16
  %v676 = vrot.slane %v674, 5
  %v677 = vor.u32 %v673, %v676
  %v678 = vrot.slane %v677, 4
  %v680 = vshll.u32 %v65, 16
  %v682 = vrot.slane %v680, 5
  %v683 = vsel %vm117, %v678, %v682
  %v684 = vshrl.u32 %v65, 16
  %v686 = vrot.slane %v684, 4
  %v687 = vor.u32 %v686, %v682
  %v688 = vrot.slane %v687, 4
  %v690 = vshll.u32 %v106, 16
  %v692 = vrot.slane %v690, 5
  %v693 = vsel %vm117, %v688, %v692
  %v695 = vshrl.u32 %v66, 16
  %v697 = vrot.slane %v695, 4
  %v698 = vshll.u32 %v66, 16
  %v700 = vrot.slane %v698, 5
  %v701 = vor.u32 %v697, %v700
  %v702 = vrot.slane %v701, 4
  %v704 = vshll.u32 %v67, 16
  %v706 = vrot.slane %v704, 5
  %v707 = vsel %vm117, %v702, %v706
  %v708 = vshrl.u32 %v67, 16
  %v710 = vrot.slane %v708, 4
  %v711 = vor.u32 %v710, %v706
  %v712 = vrot.slane %v711, 4
  %v714 = vshll.u32 %v107, 16
  %v716 = vrot.slane %v714, 5
  %v717 = vsel %vm117, %v712, %v716
  %v719 = vshrl.u32 %v68, 16
  %v721 = vrot.slane %v719, 4
  %v722 = vshll.u32 %v68, 16
  %v724 = vrot.slane %v722, 5
  %v725 = vor.u32 %v721, %v724
  %v726 = vrot.slane %v725, 4
  %v728 = vshll.u32 %v69, 16
  %v730 = vrot.slane %v728, 5
  %v731 = vsel %vm117, %v726, %v730
  %v732 = vshrl.u32 %v69, 16
  %v734 = vrot.slane %v732, 4
  %v735 = vor.u32 %v734, %v730
  %v736 = vrot.slane %v735, 4
  %v738 = vshll.u32 %v108, 16
  %v740 = vrot.slane %v738, 5
  %v741 = vsel %vm117, %v736, %v740
  %v743 = vshrl.u32 %v70, 16
  %v745 = vrot.slane %v743, 4
  %v746 = vshll.u32 %v70, 16
  %v748 = vrot.slane %v746, 5
  %v749 = vor.u32 %v745, %v748
  %v750 = vrot.slane %v749, 4
  %v752 = vshll.u32 %v71, 16
  %v754 = vrot.slane %v752, 5
  %v755 = vsel %vm117, %v750, %v754
  %v756 = vshrl.u32 %v71, 16
  %v758 = vrot.slane %v756, 4
  %v759 = vor.u32 %v758, %v754
  %v760 = vrot.slane %v759, 4
  %v762 = vshll.u32 %v109, 16
  %v764 = vrot.slane %v762, 5
  %v765 = vsel %vm117, %v760, %v764
  %v767 = vshrl.u32 %v72, 16
  %v769 = vrot.slane %v767, 4
  %v770 = vshll.u32 %v72, 16
  %v772 = vrot.slane %v770, 5
  %v773 = vor.u32 %v769, %v772
  %v774 = vrot.slane %v773, 4
  %v776 = vshll.u32 %v73, 16
  %v778 = vrot.slane %v776, 5
  %v779 = vsel %vm117, %v774, %v778
  %v780 = vshrl.u32 %v73, 16
  %v782 = vrot.slane %v780, 4
  %v783 = vor.u32 %v782, %v778
  %v784 = vrot.slane %v783, 4
  %v786 = vshll.u32 %v110, 16
  %v788 = vrot.slane %v786, 5
  %v789 = vsel %vm117, %v784, %v788
  %v791 = vshrl.u32 %v74, 16
  %v793 = vrot.slane %v791, 4
  %v794 = vshll.u32 %v74, 16
  %v796 = vrot.slane %v794, 5
  %v797 = vor.u32 %v793, %v796
  %v798 = vrot.slane %v797, 4
  %v800 = vshll.u32 %v75, 16
  %v802 = vrot.slane %v800, 5
  %v803 = vsel %vm117, %v798, %v802
  %v804 = vshrl.u32 %v75, 16
  %v806 = vrot.slane %v804, 4
  %v807 = vor.u32 %v806, %v802
  %v808 = vrot.slane %v807, 4
  %v810 = vshll.u32 %v111, 16
  %v812 = vrot.slane %v810, 5
  %v813 = vsel %vm117, %v808, %v812
  %v815 = vshrl.u32 %v76, 16
  %v817 = vrot.slane %v815, 4
  %v818 = vshll.u32 %v76, 16
  %v820 = vrot.slane %v818, 5
  %v821 = vor.u32 %v817, %v820
  %v822 = vrot.slane %v821, 4
  %v824 = vshll.u32 %v77, 16
  %v826 = vrot.slane %v824, 5
  %v827 = vsel %vm117, %v822, %v826
  %v828 = vshrl.u32 %v77, 16
  %v830 = vrot.slane %v828, 4
  %v831 = vor.u32 %v830, %v826
  %v832 = vrot.slane %v831, 4
  %v834 = vshll.u32 %v112, 16
  %v836 = vrot.slane %v834, 5
  %v837 = vsel %vm117, %v832, %v836
  %v839 = vshrl.u32 %v78, 16
  %v841 = vrot.slane %v839, 4
  %v842 = vshll.u32 %v78, 16
  %v844 = vrot.slane %v842, 5
  %v845 = vor.u32 %v841, %v844
  %v846 = vrot.slane %v845, 4
  %v848 = vshll.u32 %v79, 16
  %v850 = vrot.slane %v848, 5
  %v851 = vsel %vm117, %v846, %v850
  %v852 = vshrl.u32 %v79, 16
  %v854 = vrot.slane %v852, 4
  %v855 = vor.u32 %v854, %v850
  %v856 = vrot.slane %v855, 4
  %v858 = vshll.u32 %v113, 16
  %v860 = vrot.slane %v858, 5
  %v861 = vsel %vm117, %v856, %v860
  %v863 = vshrl.u32 %v80, 16
  %v865 = vrot.slane %v863, 4
  %v866 = vshll.u32 %v80, 16
  %v868 = vrot.slane %v866, 5
  %v869 = vor.u32 %v865, %v868
  %v870 = vrot.slane %v869, 4
  %v872 = vshll.u32 %v81, 16
  %v874 = vrot.slane %v872, 5
  %v875 = vsel %vm117, %v870, %v874
  %v876 = vshrl.u32 %v81, 16
  %v878 = vrot.slane %v876, 4
  %v879 = vor.u32 %v878, %v874
  %v880 = vrot.slane %v879, 4
  %v882 = vshll.u32 %v114, 16
  %v884 = vrot.slane %v882, 5
  %v885 = vsel %vm117, %v880, %v884
  %s886 = scalar_lea.vmem %s1, 2
  %v887 = vld [vmem:[%s886] sm:$0x3]
  %v888 = vunpack.c.l.b16 %v131
  %v889 = vunpack.c.l.b16 %v141
  %v890 = vunpack.c.l.b16 %v155
  %v891 = vunpack.c.l.b16 %v165
  %v892 = vunpack.c.l.b16 %v179
  %v893 = vunpack.c.l.b16 %v189
  %v894 = vunpack.c.l.b16 %v203
  %v895 = vunpack.c.l.b16 %v213
  %v896 = vunpack.c.l.b16 %v227
  %v897 = vunpack.c.l.b16 %v237
  %v898 = vunpack.c.l.b16 %v251
  %v899 = vunpack.c.l.b16 %v261
  %v900 = vunpack.c.l.b16 %v275
  %v901 = vunpack.c.l.b16 %v285
  %v902 = vunpack.c.l.b16 %v299
  %v903 = vunpack.c.l.b16 %v309
  %v904 = vunpack.c.l.b16 %v323
  %v905 = vunpack.c.l.b16 %v333
  %v906 = vunpack.c.l.b16 %v347
  %v907 = vunpack.c.l.b16 %v357
  %v908 = vunpack.c.l.b16 %v371
  %v909 = vunpack.c.l.b16 %v381
  %v910 = vunpack.c.l.b16 %v395
  %v911 = vunpack.c.l.b16 %v405
  %v912 = vunpack.c.l.b16 %v419
  %v913 = vunpack.c.l.b16 %v429
  %v914 = vunpack.c.l.b16 %v443
  %v915 = vunpack.c.l.b16 %v453
  %v916 = vunpack.c.l.b16 %v467
  %v917 = vunpack.c.l.b16 %v477
  %v918 = vunpack.c.l.b16 %v491
  %v919 = vunpack.c.l.b16 %v501
  %v920 = vunpack.c.l.b16 %v515
  %v921 = vunpack.c.l.b16 %v525
  %v922 = vunpack.c.l.b16 %v539
  %v923 = vunpack.c.l.b16 %v549
  %v924 = vunpack.c.l.b16 %v563
  %v925 = vunpack.c.l.b16 %v573
  %v926 = vunpack.c.l.b16 %v587
  %v927 = vunpack.c.l.b16 %v597
  %v928 = vunpack.c.l.b16 %v611
  %v929 = vunpack.c.l.b16 %v621
  %v930 = vunpack.c.l.b16 %v635
  %v931 = vunpack.c.l.b16 %v645
  %v932 = vunpack.c.l.b16 %v659
  %v933 = vunpack.c.l.b16 %v669
  %v934 = vunpack.c.l.b16 %v683
  %v935 = vunpack.c.l.b16 %v693
  %v936 = vunpack.c.l.b16 %v707
  %v937 = vunpack.c.l.b16 %v717
  %v938 = vunpack.c.l.b16 %v731
  %v939 = vunpack.c.l.b16 %v741
  %v940 = vunpack.c.l.b16 %v755
  %v941 = vunpack.c.l.b16 %v765
  %v942 = vunpack.c.l.b16 %v779
  %v943 = vunpack.c.l.b16 %v789
  %v944 = vunpack.c.l.b16 %v803
  %v945 = vunpack.c.l.b16 %v813
  %v946 = vunpack.c.l.b16 %v827
  %v947 = vunpack.c.l.b16 %v837
  %v948 = vunpack.c.l.b16 %v851
  %v949 = vunpack.c.l.b16 %v861
  %v950 = vunpack.c.l.b16 %v875
  %v951 = vunpack.c.l.b16 %v885
  %v952 = vpack.c.b16 %v889, %v888
  %v953 = vpack.c.b16 %v891, %v890
  %v954 = vpack.c.b16 %v893, %v892
  %v955 = vpack.c.b16 %v895, %v894
  %v956 = vpack.c.b16 %v897, %v896
  %v957 = vpack.c.b16 %v899, %v898
  %v958 = vpack.c.b16 %v901, %v900
  %v959 = vpack.c.b16 %v903, %v902
  %v960 = vpack.c.b16 %v905, %v904
  %v961 = vpack.c.b16 %v907, %v906
  %v962 = vpack.c.b16 %v909, %v908
  %v963 = vpack.c.b16 %v911, %v910
  %v964 = vpack.c.b16 %v913, %v912
  %v965 = vpack.c.b16 %v915, %v914
  %v966 = vpack.c.b16 %v917, %v916
  %v967 = vpack.c.b16 %v919, %v918
  %v968 = vpack.c.b16 %v921, %v920
  %v969 = vpack.c.b16 %v923, %v922
  %v970 = vpack.c.b16 %v925, %v924
  %v971 = vpack.c.b16 %v927, %v926
  %v972 = vpack.c.b16 %v929, %v928
  %v973 = vpack.c.b16 %v931, %v930
  %v974 = vpack.c.b16 %v933, %v932
  %v975 = vpack.c.b16 %v935, %v934
  %v976 = vpack.c.b16 %v937, %v936
  %v977 = vpack.c.b16 %v939, %v938
  %v978 = vpack.c.b16 %v941, %v940
  %v979 = vpack.c.b16 %v943, %v942
  %v980 = vpack.c.b16 %v945, %v944
  %v981 = vpack.c.b16 %v947, %v946
  %v982 = vpack.c.b16 %v949, %v948
  %v983 = vpack.c.b16 %v951, %v950
  %vm984 = vcmask 31744
  %v986 = vsel %vm984, %v952, 0
  %v989 = vsel %vm984, %v953, 0
  %v992 = vsel %vm984, %v954, 0
  %v995 = vsel %vm984, %v955, 0
  %v998 = vsel %vm984, %v956, 0
  %v1001 = vsel %vm984, %v957, 0
  %v1004 = vsel %vm984, %v958, 0
  %v1007 = vsel %vm984, %v959, 0
  %v1010 = vsel %vm984, %v960, 0
  %v1013 = vsel %vm984, %v961, 0
  %v1016 = vsel %vm984, %v962, 0
  %v1019 = vsel %vm984, %v963, 0
  %v1022 = vsel %vm984, %v964, 0
  %v1025 = vsel %vm984, %v965, 0
  %v1028 = vsel %vm984, %v966, 0
  %v1031 = vsel %vm984, %v967, 0
  %v1034 = vsel %vm984, %v968, 0
  %v1037 = vsel %vm984, %v969, 0
  %v1040 = vsel %vm984, %v970, 0
  %v1043 = vsel %vm984, %v971, 0
  %v1046 = vsel %vm984, %v972, 0
  %v1049 = vsel %vm984, %v973, 0
  %v1052 = vsel %vm984, %v974, 0
  %v1055 = vsel %vm984, %v975, 0
  %v1058 = vsel %vm984, %v976, 0
  %v1061 = vsel %vm984, %v977, 0
  %v1064 = vsel %vm984, %v978, 0
  %v1067 = vsel %vm984, %v979, 0
  %v1070 = vsel %vm984, %v980, 0
  %v1073 = vsel %vm984, %v981, 0
  %v1076 = vsel %vm984, %v982, 0
  %v1079 = vsel %vm984, %v983, 0
  %vm1081 = vcmask 1041408
  %v1083 = vsel %vm1081, %v887, 0
  %1085 = vmatprep.subr.bf16.mxu0 0
  %1086 = vmatpush1.bf16.msra.mxu0 0
  %1087 = vmatprep.subr.bf16.mxu0 0
  %1088 = vmatpush1.bf16.msra.mxu0 0
  %1089 = vmatprep.subr.bf16.mxu0 0
  %1090 = vmatpush1.bf16.msra.mxu0 0
  %1091 = vmatprep.subr.bf16.mxu0 0
  %1092 = vmatpush1.bf16.msra.mxu0 0
  %1093 = vmatprep.subr.bf16.mxu0 0
  %1094 = vmatpush1.bf16.msra.mxu0 0
  %1095 = vmatprep.subr.bf16.mxu0 0
  %1096 = vmatpush1.bf16.msra.mxu0 0
  %1097 = vmatprep.subr.bf16.mxu0 0
  %1098 = vmatpush1.bf16.msra.mxu0 0
  %1099 = vmatprep.subr.bf16.mxu0 0
  %1100 = vmatpush1.bf16.msra.mxu0 %v1083
  %1101 = vmatprep.subr.bf16.mxu0 0
  %1102 = vmatpush2.bf16.msra.mxu0 0
  %1103 = vmatprep.subr.bf16.mxu0 0
  %1104 = vmatpush2.bf16.msra.mxu0 0
  %1105 = vmatprep.subr.bf16.mxu0 0
  %1106 = vmatpush2.bf16.msra.mxu0 0
  %1107 = vmatprep.subr.bf16.mxu0 0
  %1108 = vmatpush2.bf16.msra.mxu0 0
  %1109 = vmatprep.subr.bf16.mxu0 0
  %1110 = vmatpush2.bf16.msra.mxu0 0
  %1111 = vmatprep.subr.bf16.mxu0 0
  %1112 = vmatpush2.bf16.msra.mxu0 0
  %1113 = vmatprep.subr.bf16.mxu0 0
  %1114 = vmatpush2.bf16.msra.mxu0 0
  %1115 = vmatprep.subr.bf16.mxu0 0
  %1116 = vmatpush2.bf16.msra.mxu0 0
  %1117 = vmatprep.mubr.bf16.mxu0 0
  %1118 = vmatmul.mubr.bf16.gmra.mxu0 %v986
  %v1119 = vpop.f32.mrf.mxu0
  %v1120 = vadd.f32 0.0, %v1119
  %v1121 = vpop.f32.mrf.mxu0
  %v1122 = vpop.f32.mrf.mxu0
  %v1123 = vadd.f32 0.0, %v1122
  %v1124 = vpop.f32.mrf.mxu0
  %1125 = vmatprep.mubr.bf16.mxu0 0
  %1126 = vmatmul.mubr.bf16.gmra.mxu0 %v989
  %v1127 = vpop.f32.mrf.mxu0
  %v1128 = vadd.f32 0.0, %v1127
  %v1129 = vpop.f32.mrf.mxu0
  %v1130 = vpop.f32.mrf.mxu0
  %v1131 = vadd.f32 0.0, %v1130
  %v1132 = vpop.f32.mrf.mxu0
  %1133 = vmatprep.mubr.bf16.mxu0 0
  %1134 = vmatmul.mubr.bf16.gmra.mxu0 %v992
  %v1135 = vpop.f32.mrf.mxu0
  %v1136 = vadd.f32 0.0, %v1135
  %v1137 = vpop.f32.mrf.mxu0
  %v1138 = vpop.f32.mrf.mxu0
  %v1139 = vadd.f32 0.0, %v1138
  %v1140 = vpop.f32.mrf.mxu0
  %1141 = vmatprep.mubr.bf16.mxu0 0
  %1142 = vmatmul.mubr.bf16.gmra.mxu0 %v995
  %v1143 = vpop.f32.mrf.mxu0
  %v1144 = vadd.f32 0.0, %v1143
  %v1145 = vpop.f32.mrf.mxu0
  %v1146 = vpop.f32.mrf.mxu0
  %v1147 = vadd.f32 0.0, %v1146
  %v1148 = vpop.f32.mrf.mxu0
  %1149 = vmatprep.mubr.bf16.mxu0 0
  %1150 = vmatmul.mubr.bf16.gmra.mxu0 %v998
  %v1151 = vpop.f32.mrf.mxu0
  %v1152 = vadd.f32 0.0, %v1151
  %v1153 = vpop.f32.mrf.mxu0
  %v1154 = vpop.f32.mrf.mxu0
  %v1155 = vadd.f32 0.0, %v1154
  %v1156 = vpop.f32.mrf.mxu0
  %1157 = vmatprep.mubr.bf16.mxu0 0
  %1158 = vmatmul.mubr.bf16.gmra.mxu0 %v1001
  %v1159 = vpop.f32.mrf.mxu0
  %v1160 = vadd.f32 0.0, %v1159
  %v1161 = vpop.f32.mrf.mxu0
  %v1162 = vpop.f32.mrf.mxu0
  %v1163 = vadd.f32 0.0, %v1162
  %v1164 = vpop.f32.mrf.mxu0
  %1165 = vmatprep.mubr.bf16.mxu0 0
  %1166 = vmatmul.mubr.bf16.gmra.mxu0 %v1004
  %v1167 = vpop.f32.mrf.mxu0
  %v1168 = vadd.f32 0.0, %v1167
  %v1169 = vpop.f32.mrf.mxu0
  %v1170 = vpop.f32.mrf.mxu0
  %v1171 = vadd.f32 0.0, %v1170
  %v1172 = vpop.f32.mrf.mxu0
  %1173 = vmatprep.mubr.bf16.mxu0 0
  %1174 = vmatmul.mubr.bf16.gmra.mxu0 %v1007
  %v1175 = vpop.f32.mrf.mxu0
  %v1176 = vadd.f32 0.0, %v1175
  %v1177 = vpop.f32.mrf.mxu0
  %v1178 = vpop.f32.mrf.mxu0
  %v1179 = vadd.f32 0.0, %v1178
  %v1180 = vpop.f32.mrf.mxu0
  %1181 = vmatprep.mubr.bf16.mxu0 0
  %1182 = vmatmul.mubr.bf16.gmra.mxu0 %v1010
  %v1183 = vpop.f32.mrf.mxu0
  %v1184 = vadd.f32 0.0, %v1183
  %v1185 = vpop.f32.mrf.mxu0
  %v1186 = vpop.f32.mrf.mxu0
  %v1187 = vadd.f32 0.0, %v1186
  %v1188 = vpop.f32.mrf.mxu0
  %1189 = vmatprep.mubr.bf16.mxu0 0
  %1190 = vmatmul.mubr.bf16.gmra.mxu0 %v1013
  %v1191 = vpop.f32.mrf.mxu0
  %v1192 = vadd.f32 0.0, %v1191
  %v1193 = vpop.f32.mrf.mxu0
  %v1194 = vpop.f32.mrf.mxu0
  %v1195 = vadd.f32 0.0, %v1194
  %v1196 = vpop.f32.mrf.mxu0
  %1197 = vmatprep.mubr.bf16.mxu0 0
  %1198 = vmatmul.mubr.bf16.gmra.mxu0 %v1016
  %v1199 = vpop.f32.mrf.mxu0
  %v1200 = vadd.f32 0.0, %v1199
  %v1201 = vpop.f32.mrf.mxu0
  %v1202 = vpop.f32.mrf.mxu0
  %v1203 = vadd.f32 0.0, %v1202
  %v1204 = vpop.f32.mrf.mxu0
  %1205 = vmatprep.mubr.bf16.mxu0 0
  %1206 = vmatmul.mubr.bf16.gmra.mxu0 %v1019
  %v1207 = vpop.f32.mrf.mxu0
  %v1208 = vadd.f32 0.0, %v1207
  %v1209 = vpop.f32.mrf.mxu0
  %v1210 = vpop.f32.mrf.mxu0
  %v1211 = vadd.f32 0.0, %v1210
  %v1212 = vpop.f32.mrf.mxu0
  %1213 = vmatprep.mubr.bf16.mxu0 0
  %1214 = vmatmul.mubr.bf16.gmra.mxu0 %v1022
  %v1215 = vpop.f32.mrf.mxu0
  %v1216 = vadd.f32 0.0, %v1215
  %v1217 = vpop.f32.mrf.mxu0
  %v1218 = vpop.f32.mrf.mxu0
  %v1219 = vadd.f32 0.0, %v1218
  %v1220 = vpop.f32.mrf.mxu0
  %1221 = vmatprep.mubr.bf16.mxu0 0
  %1222 = vmatmul.mubr.bf16.gmra.mxu0 %v1025
  %v1223 = vpop.f32.mrf.mxu0
  %v1224 = vadd.f32 0.0, %v1223
  %v1225 = vpop.f32.mrf.mxu0
  %v1226 = vpop.f32.mrf.mxu0
  %v1227 = vadd.f32 0.0, %v1226
  %v1228 = vpop.f32.mrf.mxu0
  %1229 = vmatprep.mubr.bf16.mxu0 0
  %1230 = vmatmul.mubr.bf16.gmra.mxu0 %v1028
  %v1231 = vpop.f32.mrf.mxu0
  %v1232 = vadd.f32 0.0, %v1231
  %v1233 = vpop.f32.mrf.mxu0
  %v1234 = vpop.f32.mrf.mxu0
  %v1235 = vadd.f32 0.0, %v1234
  %v1236 = vpop.f32.mrf.mxu0
  %1237 = vmatprep.mubr.bf16.mxu0 0
  %1238 = vmatmul.mubr.bf16.gmra.mxu0 %v1031
  %v1239 = vpop.f32.mrf.mxu0
  %v1240 = vadd.f32 0.0, %v1239
  %v1241 = vpop.f32.mrf.mxu0
  %v1242 = vpop.f32.mrf.mxu0
  %v1243 = vadd.f32 0.0, %v1242
  %v1244 = vpop.f32.mrf.mxu0
  %1245 = vmatprep.mubr.bf16.mxu0 0
  %1246 = vmatmul.mubr.bf16.gmra.mxu0 %v1034
  %v1247 = vpop.f32.mrf.mxu0
  %v1248 = vadd.f32 0.0, %v1247
  %v1249 = vpop.f32.mrf.mxu0
  %v1250 = vpop.f32.mrf.mxu0
  %v1251 = vadd.f32 0.0, %v1250
  %v1252 = vpop.f32.mrf.mxu0
  %1253 = vmatprep.mubr.bf16.mxu0 0
  %1254 = vmatmul.mubr.bf16.gmra.mxu0 %v1037
  %v1255 = vpop.f32.mrf.mxu0
  %v1256 = vadd.f32 0.0, %v1255
  %v1257 = vpop.f32.mrf.mxu0
  %v1258 = vpop.f32.mrf.mxu0
  %v1259 = vadd.f32 0.0, %v1258
  %v1260 = vpop.f32.mrf.mxu0
  %1261 = vmatprep.mubr.bf16.mxu0 0
  %1262 = vmatmul.mubr.bf16.gmra.mxu0 %v1040
  %v1263 = vpop.f32.mrf.mxu0
  %v1264 = vadd.f32 0.0, %v1263
  %v1265 = vpop.f32.mrf.mxu0
  %v1266 = vpop.f32.mrf.mxu0
  %v1267 = vadd.f32 0.0, %v1266
  %v1268 = vpop.f32.mrf.mxu0
  %1269 = vmatprep.mubr.bf16.mxu0 0
  %1270 = vmatmul.mubr.bf16.gmra.mxu0 %v1043
  %v1271 = vpop.f32.mrf.mxu0
  %v1272 = vadd.f32 0.0, %v1271
  %v1273 = vpop.f32.mrf.mxu0
  %v1274 = vpop.f32.mrf.mxu0
  %v1275 = vadd.f32 0.0, %v1274
  %v1276 = vpop.f32.mrf.mxu0
  %1277 = vmatprep.mubr.bf16.mxu0 0
  %1278 = vmatmul.mubr.bf16.gmra.mxu0 %v1046
  %v1279 = vpop.f32.mrf.mxu0
  %v1280 = vadd.f32 0.0, %v1279
  %v1281 = vpop.f32.mrf.mxu0
  %v1282 = vpop.f32.mrf.mxu0
  %v1283 = vadd.f32 0.0, %v1282
  %v1284 = vpop.f32.mrf.mxu0
  %1285 = vmatprep.mubr.bf16.mxu0 0
  %1286 = vmatmul.mubr.bf16.gmra.mxu0 %v1049
  %v1287 = vpop.f32.mrf.mxu0
  %v1288 = vadd.f32 0.0, %v1287
  %v1289 = vpop.f32.mrf.mxu0
  %v1290 = vpop.f32.mrf.mxu0
  %v1291 = vadd.f32 0.0, %v1290
  %v1292 = vpop.f32.mrf.mxu0
  %1293 = vmatprep.mubr.bf16.mxu0 0
  %1294 = vmatmul.mubr.bf16.gmra.mxu0 %v1052
  %v1295 = vpop.f32.mrf.mxu0
  %v1296 = vadd.f32 0.0, %v1295
  %v1297 = vpop.f32.mrf.mxu0
  %v1298 = vpop.f32.mrf.mxu0
  %v1299 = vadd.f32 0.0, %v1298
  %v1300 = vpop.f32.mrf.mxu0
  %1301 = vmatprep.mubr.bf16.mxu0 0
  %1302 = vmatmul.mubr.bf16.gmra.mxu0 %v1055
  %v1303 = vpop.f32.mrf.mxu0
  %v1304 = vadd.f32 0.0, %v1303
  %v1305 = vpop.f32.mrf.mxu0
  %v1306 = vpop.f32.mrf.mxu0
  %v1307 = vadd.f32 0.0, %v1306
  %v1308 = vpop.f32.mrf.mxu0
  %1309 = vmatprep.mubr.bf16.mxu0 0
  %1310 = vmatmul.mubr.bf16.gmra.mxu0 %v1058
  %v1311 = vpop.f32.mrf.mxu0
  %v1312 = vadd.f32 0.0, %v1311
  %v1313 = vpop.f32.mrf.mxu0
  %v1314 = vpop.f32.mrf.mxu0
  %v1315 = vadd.f32 0.0, %v1314
  %v1316 = vpop.f32.mrf.mxu0
  %1317 = vmatprep.mubr.bf16.mxu0 0
  %1318 = vmatmul.mubr.bf16.gmra.mxu0 %v1061
  %v1319 = vpop.f32.mrf.mxu0
  %v1320 = vadd.f32 0.0, %v1319
  %v1321 = vpop.f32.mrf.mxu0
  %v1322 = vpop.f32.mrf.mxu0
  %v1323 = vadd.f32 0.0, %v1322
  %v1324 = vpop.f32.mrf.mxu0
  %1325 = vmatprep.mubr.bf16.mxu0 0
  %1326 = vmatmul.mubr.bf16.gmra.mxu0 %v1064
  %v1327 = vpop.f32.mrf.mxu0
  %v1328 = vadd.f32 0.0, %v1327
  %v1329 = vpop.f32.mrf.mxu0
  %v1330 = vpop.f32.mrf.mxu0
  %v1331 = vadd.f32 0.0, %v1330
  %v1332 = vpop.f32.mrf.mxu0
  %1333 = vmatprep.mubr.bf16.mxu0 0
  %1334 = vmatmul.mubr.bf16.gmra.mxu0 %v1067
  %v1335 = vpop.f32.mrf.mxu0
  %v1336 = vadd.f32 0.0, %v1335
  %v1337 = vpop.f32.mrf.mxu0
  %v1338 = vpop.f32.mrf.mxu0
  %v1339 = vadd.f32 0.0, %v1338
  %v1340 = vpop.f32.mrf.mxu0
  %1341 = vmatprep.mubr.bf16.mxu0 0
  %1342 = vmatmul.mubr.bf16.gmra.mxu0 %v1070
  %v1343 = vpop.f32.mrf.mxu0
  %v1344 = vadd.f32 0.0, %v1343
  %v1345 = vpop.f32.mrf.mxu0
  %v1346 = vpop.f32.mrf.mxu0
  %v1347 = vadd.f32 0.0, %v1346
  %v1348 = vpop.f32.mrf.mxu0
  %1349 = vmatprep.mubr.bf16.mxu0 0
  %1350 = vmatmul.mubr.bf16.gmra.mxu0 %v1073
  %v1351 = vpop.f32.mrf.mxu0
  %v1352 = vadd.f32 0.0, %v1351
  %v1353 = vpop.f32.mrf.mxu0
  %v1354 = vpop.f32.mrf.mxu0
  %v1355 = vadd.f32 0.0, %v1354
  %v1356 = vpop.f32.mrf.mxu0
  %1357 = vmatprep.mubr.bf16.mxu0 0
  %1358 = vmatmul.mubr.bf16.gmra.mxu0 %v1076
  %v1359 = vpop.f32.mrf.mxu0
  %v1360 = vadd.f32 0.0, %v1359
  %v1361 = vpop.f32.mrf.mxu0
  %v1362 = vpop.f32.mrf.mxu0
  %v1363 = vadd.f32 0.0, %v1362
  %v1364 = vpop.f32.mrf.mxu0
  %1365 = vmatprep.mubr.bf16.mxu0 0
  %1366 = vmatmul.mubr.bf16.gmra.mxu0 %v1079
  %v1367 = vpop.f32.mrf.mxu0
  %v1368 = vadd.f32 0.0, %v1367
  %v1369 = vpop.f32.mrf.mxu0
  %v1370 = vpop.f32.mrf.mxu0
  %v1371 = vadd.f32 0.0, %v1370
  %v1372 = vpop.f32.mrf.mxu0
  %1373 = vdwg.mxu0
  %v1438 = vunpack.c.l.b16 %v18
  %v1439 = vunpack.c.l.b16 %v19
  %v1440 = vunpack.c.l.b16 %v20
  %v1441 = vunpack.c.l.b16 %v21
  %v1442 = vunpack.c.l.b16 %v22
  %v1443 = vunpack.c.l.b16 %v23
  %v1444 = vunpack.c.l.b16 %v24
  %v1445 = vunpack.c.l.b16 %v25
  %v1446 = vunpack.c.l.b16 %v26
  %v1447 = vunpack.c.l.b16 %v27
  %v1448 = vunpack.c.l.b16 %v28
  %v1449 = vunpack.c.l.b16 %v29
  %v1450 = vunpack.c.l.b16 %v30
  %v1451 = vunpack.c.l.b16 %v31
  %v1452 = vunpack.c.l.b16 %v32
  %v1453 = vunpack.c.l.b16 %v33
  %v1454 = vunpack.c.l.b16 %v34
  %v1455 = vunpack.c.l.b16 %v35
  %v1456 = vunpack.c.l.b16 %v36
  %v1457 = vunpack.c.l.b16 %v37
  %v1458 = vunpack.c.l.b16 %v38
  %v1459 = vunpack.c.l.b16 %v39
  %v1460 = vunpack.c.l.b16 %v40
  %v1461 = vunpack.c.l.b16 %v41
  %v1462 = vunpack.c.l.b16 %v42
  %v1463 = vunpack.c.l.b16 %v43
  %v1464 = vunpack.c.l.b16 %v44
  %v1465 = vunpack.c.l.b16 %v45
  %v1466 = vunpack.c.l.b16 %v46
  %v1467 = vunpack.c.l.b16 %v47
  %v1468 = vunpack.c.l.b16 %v48
  %v1469 = vunpack.c.l.b16 %v49
  %v1470 = vunpack.c.l.b16 %v50
  %v1471 = vunpack.c.l.b16 %v51
  %v1472 = vunpack.c.l.b16 %v52
  %v1473 = vunpack.c.l.b16 %v53
  %v1474 = vunpack.c.l.b16 %v54
  %v1475 = vunpack.c.l.b16 %v55
  %v1476 = vunpack.c.l.b16 %v56
  %v1477 = vunpack.c.l.b16 %v57
  %v1478 = vunpack.c.l.b16 %v58
  %v1479 = vunpack.c.l.b16 %v59
  %v1480 = vunpack.c.l.b16 %v60
  %v1481 = vunpack.c.l.b16 %v61
  %v1482 = vunpack.c.l.b16 %v62
  %v1483 = vunpack.c.l.b16 %v63
  %v1484 = vunpack.c.l.b16 %v64
  %v1485 = vunpack.c.l.b16 %v65
  %v1486 = vunpack.c.l.b16 %v66
  %v1487 = vunpack.c.l.b16 %v67
  %v1488 = vunpack.c.l.b16 %v68
  %v1489 = vunpack.c.l.b16 %v69
  %v1490 = vunpack.c.l.b16 %v70
  %v1491 = vunpack.c.l.b16 %v71
  %v1492 = vunpack.c.l.b16 %v72
  %v1493 = vunpack.c.l.b16 %v73
  %v1494 = vunpack.c.l.b16 %v74
  %v1495 = vunpack.c.l.b16 %v75
  %v1496 = vunpack.c.l.b16 %v76
  %v1497 = vunpack.c.l.b16 %v77
  %v1498 = vunpack.c.l.b16 %v78
  %v1499 = vunpack.c.l.b16 %v79
  %v1500 = vunpack.c.l.b16 %v80
  %v1501 = vunpack.c.l.b16 %v81
  %v1502 = vpack.c.b16 %v1439, %v1438
  %v1503 = vpack.c.b16 %v1441, %v1440
  %v1504 = vpack.c.b16 %v1443, %v1442
  %v1505 = vpack.c.b16 %v1445, %v1444
  %v1506 = vpack.c.b16 %v1447, %v1446
  %v1507 = vpack.c.b16 %v1449, %v1448
  %v1508 = vpack.c.b16 %v1451, %v1450
  %v1509 = vpack.c.b16 %v1453, %v1452
  %v1510 = vpack.c.b16 %v1455, %v1454
  %v1511 = vpack.c.b16 %v1457, %v1456
  %v1512 = vpack.c.b16 %v1459, %v1458
  %v1513 = vpack.c.b16 %v1461, %v1460
  %v1514 = vpack.c.b16 %v1463, %v1462
  %v1515 = vpack.c.b16 %v1465, %v1464
  %v1516 = vpack.c.b16 %v1467, %v1466
  %v1517 = vpack.c.b16 %v1469, %v1468
  %v1518 = vpack.c.b16 %v1471, %v1470
  %v1519 = vpack.c.b16 %v1473, %v1472
  %v1520 = vpack.c.b16 %v1475, %v1474
  %v1521 = vpack.c.b16 %v1477, %v1476
  %v1522 = vpack.c.b16 %v1479, %v1478
  %v1523 = vpack.c.b16 %v1481, %v1480
  %v1524 = vpack.c.b16 %v1483, %v1482
  %v1525 = vpack.c.b16 %v1485, %v1484
  %v1526 = vpack.c.b16 %v1487, %v1486
  %v1527 = vpack.c.b16 %v1489, %v1488
  %v1528 = vpack.c.b16 %v1491, %v1490
  %v1529 = vpack.c.b16 %v1493, %v1492
  %v1530 = vpack.c.b16 %v1495, %v1494
  %v1531 = vpack.c.b16 %v1497, %v1496
  %v1532 = vpack.c.b16 %v1499, %v1498
  %v1533 = vpack.c.b16 %v1501, %v1500
  %v1535 = vsel %vm984, %v1502, 0
  %v1538 = vsel %vm984, %v1503, 0
  %v1541 = vsel %vm984, %v1504, 0
  %v1544 = vsel %vm984, %v1505, 0
  %v1547 = vsel %vm984, %v1506, 0
  %v1550 = vsel %vm984, %v1507, 0
  %v1553 = vsel %vm984, %v1508, 0
  %v1556 = vsel %vm984, %v1509, 0
  %v1559 = vsel %vm984, %v1510, 0
  %v1562 = vsel %vm984, %v1511, 0
  %v1565 = vsel %vm984, %v1512, 0
  %v1568 = vsel %vm984, %v1513, 0
  %v1571 = vsel %vm984, %v1514, 0
  %v1574 = vsel %vm984, %v1515, 0
  %v1577 = vsel %vm984, %v1516, 0
  %v1580 = vsel %vm984, %v1517, 0
  %v1583 = vsel %vm984, %v1518, 0
  %v1586 = vsel %vm984, %v1519, 0
  %v1589 = vsel %vm984, %v1520, 0
  %v1592 = vsel %vm984, %v1521, 0
  %v1595 = vsel %vm984, %v1522, 0
  %v1598 = vsel %vm984, %v1523, 0
  %v1601 = vsel %vm984, %v1524, 0
  %v1604 = vsel %vm984, %v1525, 0
  %v1607 = vsel %vm984, %v1526, 0
  %v1610 = vsel %vm984, %v1527, 0
  %v1613 = vsel %vm984, %v1528, 0
  %v1616 = vsel %vm984, %v1529, 0
  %v1619 = vsel %vm984, %v1530, 0
  %v1622 = vsel %vm984, %v1531, 0
  %v1625 = vsel %vm984, %v1532, 0
  %v1628 = vsel %vm984, %v1533, 0
  %v1631 = vsel %vm1081, %v82, 0
  %1633 = vmatprep.subr.bf16.mxu0 0
  %1634 = vmatpush1.bf16.msra.mxu0 0
  %1635 = vmatprep.subr.bf16.mxu0 0
  %1636 = vmatpush1.bf16.msra.mxu0 0
  %1637 = vmatprep.subr.bf16.mxu0 0
  %1638 = vmatpush1.bf16.msra.mxu0 0
  %1639 = vmatprep.subr.bf16.mxu0 0
  %1640 = vmatpush1.bf16.msra.mxu0 0
  %1641 = vmatprep.subr.bf16.mxu0 0
  %1642 = vmatpush1.bf16.msra.mxu0 0
  %1643 = vmatprep.subr.bf16.mxu0 0
  %1644 = vmatpush1.bf16.msra.mxu0 0
  %1645 = vmatprep.subr.bf16.mxu0 0
  %1646 = vmatpush1.bf16.msra.mxu0 0
  %1647 = vmatprep.subr.bf16.mxu0 0
  %1648 = vmatpush1.bf16.msra.mxu0 %v1631
  %1649 = vmatprep.subr.bf16.mxu0 0
  %1650 = vmatpush2.bf16.msra.mxu0 0
  %1651 = vmatprep.subr.bf16.mxu0 0
  %1652 = vmatpush2.bf16.msra.mxu0 0
  %1653 = vmatprep.subr.bf16.mxu0 0
  %1654 = vmatpush2.bf16.msra.mxu0 0
  %1655 = vmatprep.subr.bf16.mxu0 0
  %1656 = vmatpush2.bf16.msra.mxu0 0
  %1657 = vmatprep.subr.bf16.mxu0 0
  %1658 = vmatpush2.bf16.msra.mxu0 0
  %1659 = vmatprep.subr.bf16.mxu0 0
  %1660 = vmatpush2.bf16.msra.mxu0 0
  %1661 = vmatprep.subr.bf16.mxu0 0
  %1662 = vmatpush2.bf16.msra.mxu0 0
  %1663 = vmatprep.subr.bf16.mxu0 0
  %1664 = vmatpush2.bf16.msra.mxu0 0
  %1665 = vmatprep.mubr.bf16.mxu0 0
  %1666 = vmatmul.mubr.bf16.gmra.mxu0 %v1535
  %v1667 = vpop.f32.mrf.mxu0
  %v1668 = vadd.f32 %v1120, %v1667
  %v1669 = vpop.f32.mrf.mxu0
  %v1670 = vpop.f32.mrf.mxu0
  %v1671 = vadd.f32 %v1123, %v1670
  %v1672 = vpop.f32.mrf.mxu0
  %1673 = vmatprep.mubr.bf16.mxu0 0
  %1674 = vmatmul.mubr.bf16.gmra.mxu0 %v1538
  %v1675 = vpop.f32.mrf.mxu0
  %v1676 = vadd.f32 %v1128, %v1675
  %v1677 = vpop.f32.mrf.mxu0
  %v1678 = vpop.f32.mrf.mxu0
  %v1679 = vadd.f32 %v1131, %v1678
  %v1680 = vpop.f32.mrf.mxu0
  %1681 = vmatprep.mubr.bf16.mxu0 0
  %1682 = vmatmul.mubr.bf16.gmra.mxu0 %v1541
  %v1683 = vpop.f32.mrf.mxu0
  %v1684 = vadd.f32 %v1136, %v1683
  %v1685 = vpop.f32.mrf.mxu0
  %v1686 = vpop.f32.mrf.mxu0
  %v1687 = vadd.f32 %v1139, %v1686
  %v1688 = vpop.f32.mrf.mxu0
  %1689 = vmatprep.mubr.bf16.mxu0 0
  %1690 = vmatmul.mubr.bf16.gmra.mxu0 %v1544
  %v1691 = vpop.f32.mrf.mxu0
  %v1692 = vadd.f32 %v1144, %v1691
  %v1693 = vpop.f32.mrf.mxu0
  %v1694 = vpop.f32.mrf.mxu0
  %v1695 = vadd.f32 %v1147, %v1694
  %v1696 = vpop.f32.mrf.mxu0
  %1697 = vmatprep.mubr.bf16.mxu0 0
  %1698 = vmatmul.mubr.bf16.gmra.mxu0 %v1547
  %v1699 = vpop.f32.mrf.mxu0
  %v1700 = vadd.f32 %v1152, %v1699
  %v1701 = vpop.f32.mrf.mxu0
  %v1702 = vpop.f32.mrf.mxu0
  %v1703 = vadd.f32 %v1155, %v1702
  %v1704 = vpop.f32.mrf.mxu0
  %1705 = vmatprep.mubr.bf16.mxu0 0
  %1706 = vmatmul.mubr.bf16.gmra.mxu0 %v1550
  %v1707 = vpop.f32.mrf.mxu0
  %v1708 = vadd.f32 %v1160, %v1707
  %v1709 = vpop.f32.mrf.mxu0
  %v1710 = vpop.f32.mrf.mxu0
  %v1711 = vadd.f32 %v1163, %v1710
  %v1712 = vpop.f32.mrf.mxu0
  %1713 = vmatprep.mubr.bf16.mxu0 0
  %1714 = vmatmul.mubr.bf16.gmra.mxu0 %v1553
  %v1715 = vpop.f32.mrf.mxu0
  %v1716 = vadd.f32 %v1168, %v1715
  %v1717 = vpop.f32.mrf.mxu0
  %v1718 = vpop.f32.mrf.mxu0
  %v1719 = vadd.f32 %v1171, %v1718
  %v1720 = vpop.f32.mrf.mxu0
  %1721 = vmatprep.mubr.bf16.mxu0 0
  %1722 = vmatmul.mubr.bf16.gmra.mxu0 %v1556
  %v1723 = vpop.f32.mrf.mxu0
  %v1724 = vadd.f32 %v1176, %v1723
  %v1725 = vpop.f32.mrf.mxu0
  %v1726 = vpop.f32.mrf.mxu0
  %v1727 = vadd.f32 %v1179, %v1726
  %v1728 = vpop.f32.mrf.mxu0
  %1729 = vmatprep.mubr.bf16.mxu0 0
  %1730 = vmatmul.mubr.bf16.gmra.mxu0 %v1559
  %v1731 = vpop.f32.mrf.mxu0
  %v1732 = vadd.f32 %v1184, %v1731
  %v1733 = vpop.f32.mrf.mxu0
  %v1734 = vpop.f32.mrf.mxu0
  %v1735 = vadd.f32 %v1187, %v1734
  %v1736 = vpop.f32.mrf.mxu0
  %1737 = vmatprep.mubr.bf16.mxu0 0
  %1738 = vmatmul.mubr.bf16.gmra.mxu0 %v1562
  %v1739 = vpop.f32.mrf.mxu0
  %v1740 = vadd.f32 %v1192, %v1739
  %v1741 = vpop.f32.mrf.mxu0
  %v1742 = vpop.f32.mrf.mxu0
  %v1743 = vadd.f32 %v1195, %v1742
  %v1744 = vpop.f32.mrf.mxu0
  %1745 = vmatprep.mubr.bf16.mxu0 0
  %1746 = vmatmul.mubr.bf16.gmra.mxu0 %v1565
  %v1747 = vpop.f32.mrf.mxu0
  %v1748 = vadd.f32 %v1200, %v1747
  %v1749 = vpop.f32.mrf.mxu0
  %v1750 = vpop.f32.mrf.mxu0
  %v1751 = vadd.f32 %v1203, %v1750
  %v1752 = vpop.f32.mrf.mxu0
  %1753 = vmatprep.mubr.bf16.mxu0 0
  %1754 = vmatmul.mubr.bf16.gmra.mxu0 %v1568
  %v1755 = vpop.f32.mrf.mxu0
  %v1756 = vadd.f32 %v1208, %v1755
  %v1757 = vpop.f32.mrf.mxu0
  %v1758 = vpop.f32.mrf.mxu0
  %v1759 = vadd.f32 %v1211, %v1758
  %v1760 = vpop.f32.mrf.mxu0
  %1761 = vmatprep.mubr.bf16.mxu0 0
  %1762 = vmatmul.mubr.bf16.gmra.mxu0 %v1571
  %v1763 = vpop.f32.mrf.mxu0
  %v1764 = vadd.f32 %v1216, %v1763
  %v1765 = vpop.f32.mrf.mxu0
  %v1766 = vpop.f32.mrf.mxu0
  %v1767 = vadd.f32 %v1219, %v1766
  %v1768 = vpop.f32.mrf.mxu0
  %1769 = vmatprep.mubr.bf16.mxu0 0
  %1770 = vmatmul.mubr.bf16.gmra.mxu0 %v1574
  %v1771 = vpop.f32.mrf.mxu0
  %v1772 = vadd.f32 %v1224, %v1771
  %v1773 = vpop.f32.mrf.mxu0
  %v1774 = vpop.f32.mrf.mxu0
  %v1775 = vadd.f32 %v1227, %v1774
  %v1776 = vpop.f32.mrf.mxu0
  %1777 = vmatprep.mubr.bf16.mxu0 0
  %1778 = vmatmul.mubr.bf16.gmra.mxu0 %v1577
  %v1779 = vpop.f32.mrf.mxu0
  %v1780 = vadd.f32 %v1232, %v1779
  %v1781 = vpop.f32.mrf.mxu0
  %v1782 = vpop.f32.mrf.mxu0
  %v1783 = vadd.f32 %v1235, %v1782
  %v1784 = vpop.f32.mrf.mxu0
  %1785 = vmatprep.mubr.bf16.mxu0 0
  %1786 = vmatmul.mubr.bf16.gmra.mxu0 %v1580
  %v1787 = vpop.f32.mrf.mxu0
  %v1788 = vadd.f32 %v1240, %v1787
  %v1789 = vpop.f32.mrf.mxu0
  %v1790 = vpop.f32.mrf.mxu0
  %v1791 = vadd.f32 %v1243, %v1790
  %v1792 = vpop.f32.mrf.mxu0
  %1793 = vmatprep.mubr.bf16.mxu0 0
  %1794 = vmatmul.mubr.bf16.gmra.mxu0 %v1583
  %v1795 = vpop.f32.mrf.mxu0
  %v1796 = vadd.f32 %v1248, %v1795
  %v1797 = vpop.f32.mrf.mxu0
  %v1798 = vpop.f32.mrf.mxu0
  %v1799 = vadd.f32 %v1251, %v1798
  %v1800 = vpop.f32.mrf.mxu0
  %1801 = vmatprep.mubr.bf16.mxu0 0
  %1802 = vmatmul.mubr.bf16.gmra.mxu0 %v1586
  %v1803 = vpop.f32.mrf.mxu0
  %v1804 = vadd.f32 %v1256, %v1803
  %v1805 = vpop.f32.mrf.mxu0
  %v1806 = vpop.f32.mrf.mxu0
  %v1807 = vadd.f32 %v1259, %v1806
  %v1808 = vpop.f32.mrf.mxu0
  %1809 = vmatprep.mubr.bf16.mxu0 0
  %1810 = vmatmul.mubr.bf16.gmra.mxu0 %v1589
  %v1811 = vpop.f32.mrf.mxu0
  %v1812 = vadd.f32 %v1264, %v1811
  %v1813 = vpop.f32.mrf.mxu0
  %v1814 = vpop.f32.mrf.mxu0
  %v1815 = vadd.f32 %v1267, %v1814
  %v1816 = vpop.f32.mrf.mxu0
  %1817 = vmatprep.mubr.bf16.mxu0 0
  %1818 = vmatmul.mubr.bf16.gmra.mxu0 %v1592
  %v1819 = vpop.f32.mrf.mxu0
  %v1820 = vadd.f32 %v1272, %v1819
  %v1821 = vpop.f32.mrf.mxu0
  %v1822 = vpop.f32.mrf.mxu0
  %v1823 = vadd.f32 %v1275, %v1822
  %v1824 = vpop.f32.mrf.mxu0
  %1825 = vmatprep.mubr.bf16.mxu0 0
  %1826 = vmatmul.mubr.bf16.gmra.mxu0 %v1595
  %v1827 = vpop.f32.mrf.mxu0
  %v1828 = vadd.f32 %v1280, %v1827
  %v1829 = vpop.f32.mrf.mxu0
  %v1830 = vpop.f32.mrf.mxu0
  %v1831 = vadd.f32 %v1283, %v1830
  %v1832 = vpop.f32.mrf.mxu0
  %1833 = vmatprep.mubr.bf16.mxu0 0
  %1834 = vmatmul.mubr.bf16.gmra.mxu0 %v1598
  %v1835 = vpop.f32.mrf.mxu0
  %v1836 = vadd.f32 %v1288, %v1835
  %v1837 = vpop.f32.mrf.mxu0
  %v1838 = vpop.f32.mrf.mxu0
  %v1839 = vadd.f32 %v1291, %v1838
  %v1840 = vpop.f32.mrf.mxu0
  %1841 = vmatprep.mubr.bf16.mxu0 0
  %1842 = vmatmul.mubr.bf16.gmra.mxu0 %v1601
  %v1843 = vpop.f32.mrf.mxu0
  %v1844 = vadd.f32 %v1296, %v1843
  %v1845 = vpop.f32.mrf.mxu0
  %v1846 = vpop.f32.mrf.mxu0
  %v1847 = vadd.f32 %v1299, %v1846
  %v1848 = vpop.f32.mrf.mxu0
  %1849 = vmatprep.mubr.bf16.mxu0 0
  %1850 = vmatmul.mubr.bf16.gmra.mxu0 %v1604
  %v1851 = vpop.f32.mrf.mxu0
  %v1852 = vadd.f32 %v1304, %v1851
  %v1853 = vpop.f32.mrf.mxu0
  %v1854 = vpop.f32.mrf.mxu0
  %v1855 = vadd.f32 %v1307, %v1854
  %v1856 = vpop.f32.mrf.mxu0
  %1857 = vmatprep.mubr.bf16.mxu0 0
  %1858 = vmatmul.mubr.bf16.gmra.mxu0 %v1607
  %v1859 = vpop.f32.mrf.mxu0
  %v1860 = vadd.f32 %v1312, %v1859
  %v1861 = vpop.f32.mrf.mxu0
  %v1862 = vpop.f32.mrf.mxu0
  %v1863 = vadd.f32 %v1315, %v1862
  %v1864 = vpop.f32.mrf.mxu0
  %1865 = vmatprep.mubr.bf16.mxu0 0
  %1866 = vmatmul.mubr.bf16.gmra.mxu0 %v1610
  %v1867 = vpop.f32.mrf.mxu0
  %v1868 = vadd.f32 %v1320, %v1867
  %v1869 = vpop.f32.mrf.mxu0
  %v1870 = vpop.f32.mrf.mxu0
  %v1871 = vadd.f32 %v1323, %v1870
  %v1872 = vpop.f32.mrf.mxu0
  %1873 = vmatprep.mubr.bf16.mxu0 0
  %1874 = vmatmul.mubr.bf16.gmra.mxu0 %v1613
  %v1875 = vpop.f32.mrf.mxu0
  %v1876 = vadd.f32 %v1328, %v1875
  %v1877 = vpop.f32.mrf.mxu0
  %v1878 = vpop.f32.mrf.mxu0
  %v1879 = vadd.f32 %v1331, %v1878
  %v1880 = vpop.f32.mrf.mxu0
  %1881 = vmatprep.mubr.bf16.mxu0 0
  %1882 = vmatmul.mubr.bf16.gmra.mxu0 %v1616
  %v1883 = vpop.f32.mrf.mxu0
  %v1884 = vadd.f32 %v1336, %v1883
  %v1885 = vpop.f32.mrf.mxu0
  %v1886 = vpop.f32.mrf.mxu0
  %v1887 = vadd.f32 %v1339, %v1886
  %v1888 = vpop.f32.mrf.mxu0
  %1889 = vmatprep.mubr.bf16.mxu0 0
  %1890 = vmatmul.mubr.bf16.gmra.mxu0 %v1619
  %v1891 = vpop.f32.mrf.mxu0
  %v1892 = vadd.f32 %v1344, %v1891
  %v1893 = vpop.f32.mrf.mxu0
  %v1894 = vpop.f32.mrf.mxu0
  %v1895 = vadd.f32 %v1347, %v1894
  %v1896 = vpop.f32.mrf.mxu0
  %1897 = vmatprep.mubr.bf16.mxu0 0
  %1898 = vmatmul.mubr.bf16.gmra.mxu0 %v1622
  %v1899 = vpop.f32.mrf.mxu0
  %v1900 = vadd.f32 %v1352, %v1899
  %v1901 = vpop.f32.mrf.mxu0
  %v1902 = vpop.f32.mrf.mxu0
  %v1903 = vadd.f32 %v1355, %v1902
  %v1904 = vpop.f32.mrf.mxu0
  %1905 = vmatprep.mubr.bf16.mxu0 0
  %1906 = vmatmul.mubr.bf16.gmra.mxu0 %v1625
  %v1907 = vpop.f32.mrf.mxu0
  %v1908 = vadd.f32 %v1360, %v1907
  %v1909 = vpop.f32.mrf.mxu0
  %v1910 = vpop.f32.mrf.mxu0
  %v1911 = vadd.f32 %v1363, %v1910
  %v1912 = vpop.f32.mrf.mxu0
  %1913 = vmatprep.mubr.bf16.mxu0 0
  %1914 = vmatmul.mubr.bf16.gmra.mxu0 %v1628
  %v1915 = vpop.f32.mrf.mxu0
  %v1916 = vadd.f32 %v1368, %v1915
  %v1917 = vpop.f32.mrf.mxu0
  %v1918 = vpop.f32.mrf.mxu0
  %v1919 = vadd.f32 %v1371, %v1918
  %v1920 = vpop.f32.mrf.mxu0
  %1921 = vdwg.mxu0
  %v1922 = vld [vmem:[%s0] sm:$0xe]
  %v1923 = vld [vmem:[%s0 + $0xc] sm:$0xe]
  %v1924 = vld [vmem:[%s0 + $0x18] sm:$0xe]
  %v1925 = vld [vmem:[%s0 + $0x24] sm:$0xe]
  %v1926 = vld [vmem:[%s0 + $0x30] sm:$0xe]
  %v1927 = vld [vmem:[%s0 + $0x3c] sm:$0xe]
  %v1928 = vld [vmem:[%s0 + $0x48] sm:$0xe]
  %v1929 = vld [vmem:[%s0 + $0x54] sm:$0xe]
  %v1930 = vld [vmem:[%s0 + $0x60] sm:$0xe]
  %v1931 = vld [vmem:[%s0 + $0x6c] sm:$0xe]
  %v1932 = vld [vmem:[%s0 + $0x78] sm:$0xe]
  %v1933 = vld [vmem:[%s0 + $0x84] sm:$0xe]
  %v1934 = vld [vmem:[%s0 + $0x90] sm:$0xe]
  %v1935 = vld [vmem:[%s0 + $0x9c] sm:$0xe]
  %v1936 = vld [vmem:[%s0 + $0xa8] sm:$0xe]
  %v1937 = vld [vmem:[%s0 + $0xb4] sm:$0xe]
  %v1938 = vld [vmem:[%s0 + $0xd8] sm:$0xe]
  %v1939 = vld [vmem:[%s0 + $0xe4] sm:$0xe]
  %v1940 = vld [vmem:[%s0 + $0xf0] sm:$0xe]
  %v1941 = vld [vmem:[%s0 + $0xfc] sm:$0xe]
  %v1942 = vld [vmem:[%s0 + $0x108] sm:$0xe]
  %v1943 = vld [vmem:[%s0 + $0x114] sm:$0xe]
  %v1944 = vld [vmem:[%s0 + $0x120] sm:$0xe]
  %v1945 = vld [vmem:[%s0 + $0x12c] sm:$0xe]
  %v1946 = vld [vmem:[%s0 + $0x138] sm:$0xe]
  %v1947 = vld [vmem:[%s0 + $0x144] sm:$0xe]
  %v1948 = vld [vmem:[%s0 + $0x150] sm:$0xe]
  %v1949 = vld [vmem:[%s0 + $0x15c] sm:$0xe]
  %v1950 = vld [vmem:[%s0 + $0x168] sm:$0xe]
  %v1951 = vld [vmem:[%s0 + $0x174] sm:$0xe]
  %v1952 = vld [vmem:[%s0 + $0x180] sm:$0xe]
  %v1953 = vld [vmem:[%s0 + $0x18c] sm:$0xe]
  %vm2018 = vcmask 1042432
  %vm2019 = vcmask 1046532
  %vm2020 = vmor %vm2018, %vm2019
  %v2021 = vrot.slane %v1922, 5
  %v2022 = vrot.slane %v2021, 4
  %v2023 = vrot.slane %v19, 5
  %v2024 = vsel %vm2020, %v2022, %v2023
  %v2025 = vrot.slane %v2023, 4
  %v2026 = vrot.slane %v83, 5
  %v2027 = vsel %vm2020, %v2025, %v2026
  %v2028 = vrot.slane %v1923, 5
  %v2029 = vrot.slane %v2028, 4
  %v2030 = vrot.slane %v21, 5
  %v2031 = vsel %vm2020, %v2029, %v2030
  %v2032 = vrot.slane %v2030, 4
  %v2033 = vrot.slane %v84, 5
  %v2034 = vsel %vm2020, %v2032, %v2033
  %v2035 = vrot.slane %v1924, 5
  %v2036 = vrot.slane %v2035, 4
  %v2037 = vrot.slane %v23, 5
  %v2038 = vsel %vm2020, %v2036, %v2037
  %v2039 = vrot.slane %v2037, 4
  %v2040 = vrot.slane %v85, 5
  %v2041 = vsel %vm2020, %v2039, %v2040
  %v2042 = vrot.slane %v1925, 5
  %v2043 = vrot.slane %v2042, 4
  %v2044 = vrot.slane %v25, 5
  %v2045 = vsel %vm2020, %v2043, %v2044
  %v2046 = vrot.slane %v2044, 4
  %v2047 = vrot.slane %v86, 5
  %v2048 = vsel %vm2020, %v2046, %v2047
  %v2049 = vrot.slane %v1926, 5
  %v2050 = vrot.slane %v2049, 4
  %v2051 = vrot.slane %v27, 5
  %v2052 = vsel %vm2020, %v2050, %v2051
  %v2053 = vrot.slane %v2051, 4
  %v2054 = vrot.slane %v87, 5
  %v2055 = vsel %vm2020, %v2053, %v2054
  %v2056 = vrot.slane %v1927, 5
  %v2057 = vrot.slane %v2056, 4
  %v2058 = vrot.slane %v29, 5
  %v2059 = vsel %vm2020, %v2057, %v2058
  %v2060 = vrot.slane %v2058, 4
  %v2061 = vrot.slane %v88, 5
  %v2062 = vsel %vm2020, %v2060, %v2061
  %v2063 = vrot.slane %v1928, 5
  %v2064 = vrot.slane %v2063, 4
  %v2065 = vrot.slane %v31, 5
  %v2066 = vsel %vm2020, %v2064, %v2065
  %v2067 = vrot.slane %v2065, 4
  %v2068 = vrot.slane %v89, 5
  %v2069 = vsel %vm2020, %v2067, %v2068
  %v2070 = vrot.slane %v1929, 5
  %v2071 = vrot.slane %v2070, 4
  %v2072 = vrot.slane %v33, 5
  %v2073 = vsel %vm2020, %v2071, %v2072
  %v2074 = vrot.slane %v2072, 4
  %v2075 = vrot.slane %v90, 5
  %v2076 = vsel %vm2020, %v2074, %v2075
  %v2077 = vrot.slane %v1930, 5
  %v2078 = vrot.slane %v2077, 4
  %v2079 = vrot.slane %v35, 5
  %v2080 = vsel %vm2020, %v2078, %v2079
  %v2081 = vrot.slane %v2079, 4
  %v2082 = vrot.slane %v91, 5
  %v2083 = vsel %vm2020, %v2081, %v2082
  %v2084 = vrot.slane %v1931, 5
  %v2085 = vrot.slane %v2084, 4
  %v2086 = vrot.slane %v37, 5
  %v2087 = vsel %vm2020, %v2085, %v2086
  %v2088 = vrot.slane %v2086, 4
  %v2089 = vrot.slane %v92, 5
  %v2090 = vsel %vm2020, %v2088, %v2089
  %v2091 = vrot.slane %v1932, 5
  %v2092 = vrot.slane %v2091, 4
  %v2093 = vrot.slane %v39, 5
  %v2094 = vsel %vm2020, %v2092, %v2093
  %v2095 = vrot.slane %v2093, 4
  %v2096 = vrot.slane %v93, 5
  %v2097 = vsel %vm2020, %v2095, %v2096
  %v2098 = vrot.slane %v1933, 5
  %v2099 = vrot.slane %v2098, 4
  %v2100 = vrot.slane %v41, 5
  %v2101 = vsel %vm2020, %v2099, %v2100
  %v2102 = vrot.slane %v2100, 4
  %v2103 = vrot.slane %v94, 5
  %v2104 = vsel %vm2020, %v2102, %v2103
  %v2105 = vrot.slane %v1934, 5
  %v2106 = vrot.slane %v2105, 4
  %v2107 = vrot.slane %v43, 5
  %v2108 = vsel %vm2020, %v2106, %v2107
  %v2109 = vrot.slane %v2107, 4
  %v2110 = vrot.slane %v95, 5
  %v2111 = vsel %vm2020, %v2109, %v2110
  %v2112 = vrot.slane %v1935, 5
  %v2113 = vrot.slane %v2112, 4
  %v2114 = vrot.slane %v45, 5
  %v2115 = vsel %vm2020, %v2113, %v2114
  %v2116 = vrot.slane %v2114, 4
  %v2117 = vrot.slane %v96, 5
  %v2118 = vsel %vm2020, %v2116, %v2117
  %v2119 = vrot.slane %v1936, 5
  %v2120 = vrot.slane %v2119, 4
  %v2121 = vrot.slane %v47, 5
  %v2122 = vsel %vm2020, %v2120, %v2121
  %v2123 = vrot.slane %v2121, 4
  %v2124 = vrot.slane %v97, 5
  %v2125 = vsel %vm2020, %v2123, %v2124
  %v2126 = vrot.slane %v1937, 5
  %v2127 = vrot.slane %v2126, 4
  %v2128 = vrot.slane %v49, 5
  %v2129 = vsel %vm2020, %v2127, %v2128
  %v2130 = vrot.slane %v2128, 4
  %v2131 = vrot.slane %v98, 5
  %v2132 = vsel %vm2020, %v2130, %v2131
  %v2133 = vrot.slane %v1938, 5
  %v2134 = vrot.slane %v2133, 4
  %v2135 = vrot.slane %v51, 5
  %v2136 = vsel %vm2020, %v2134, %v2135
  %v2137 = vrot.slane %v2135, 4
  %v2138 = vrot.slane %v99, 5
  %v2139 = vsel %vm2020, %v2137, %v2138
  %v2140 = vrot.slane %v1939, 5
  %v2141 = vrot.slane %v2140, 4
  %v2142 = vrot.slane %v53, 5
  %v2143 = vsel %vm2020, %v2141, %v2142
  %v2144 = vrot.slane %v2142, 4
  %v2145 = vrot.slane %v100, 5
  %v2146 = vsel %vm2020, %v2144, %v2145
  %v2147 = vrot.slane %v1940, 5
  %v2148 = vrot.slane %v2147, 4
  %v2149 = vrot.slane %v55, 5
  %v2150 = vsel %vm2020, %v2148, %v2149
  %v2151 = vrot.slane %v2149, 4
  %v2152 = vrot.slane %v101, 5
  %v2153 = vsel %vm2020, %v2151, %v2152
  %v2154 = vrot.slane %v1941, 5
  %v2155 = vrot.slane %v2154, 4
  %v2156 = vrot.slane %v57, 5
  %v2157 = vsel %vm2020, %v2155, %v2156
  %v2158 = vrot.slane %v2156, 4
  %v2159 = vrot.slane %v102, 5
  %v2160 = vsel %vm2020, %v2158, %v2159
  %v2161 = vrot.slane %v1942, 5
  %v2162 = vrot.slane %v2161, 4
  %v2163 = vrot.slane %v59, 5
  %v2164 = vsel %vm2020, %v2162, %v2163
  %v2165 = vrot.slane %v2163, 4
  %v2166 = vrot.slane %v103, 5
  %v2167 = vsel %vm2020, %v2165, %v2166
  %v2168 = vrot.slane %v1943, 5
  %v2169 = vrot.slane %v2168, 4
  %v2170 = vrot.slane %v61, 5
  %v2171 = vsel %vm2020, %v2169, %v2170
  %v2172 = vrot.slane %v2170, 4
  %v2173 = vrot.slane %v104, 5
  %v2174 = vsel %vm2020, %v2172, %v2173
  %v2175 = vrot.slane %v1944, 5
  %v2176 = vrot.slane %v2175, 4
  %v2177 = vrot.slane %v63, 5
  %v2178 = vsel %vm2020, %v2176, %v2177
  %v2179 = vrot.slane %v2177, 4
  %v2180 = vrot.slane %v105, 5
  %v2181 = vsel %vm2020, %v2179, %v2180
  %v2182 = vrot.slane %v1945, 5
  %v2183 = vrot.slane %v2182, 4
  %v2184 = vrot.slane %v65, 5
  %v2185 = vsel %vm2020, %v2183, %v2184
  %v2186 = vrot.slane %v2184, 4
  %v2187 = vrot.slane %v106, 5
  %v2188 = vsel %vm2020, %v2186, %v2187
  %v2189 = vrot.slane %v1946, 5
  %v2190 = vrot.slane %v2189, 4
  %v2191 = vrot.slane %v67, 5
  %v2192 = vsel %vm2020, %v2190, %v2191
  %v2193 = vrot.slane %v2191, 4
  %v2194 = vrot.slane %v107, 5
  %v2195 = vsel %vm2020, %v2193, %v2194
  %v2196 = vrot.slane %v1947, 5
  %v2197 = vrot.slane %v2196, 4
  %v2198 = vrot.slane %v69, 5
  %v2199 = vsel %vm2020, %v2197, %v2198
  %v2200 = vrot.slane %v2198, 4
  %v2201 = vrot.slane %v108, 5
  %v2202 = vsel %vm2020, %v2200, %v2201
  %v2203 = vrot.slane %v1948, 5
  %v2204 = vrot.slane %v2203, 4
  %v2205 = vrot.slane %v71, 5
  %v2206 = vsel %vm2020, %v2204, %v2205
  %v2207 = vrot.slane %v2205, 4
  %v2208 = vrot.slane %v109, 5
  %v2209 = vsel %vm2020, %v2207, %v2208
  %v2210 = vrot.slane %v1949, 5
  %v2211 = vrot.slane %v2210, 4
  %v2212 = vrot.slane %v73, 5
  %v2213 = vsel %vm2020, %v2211, %v2212
  %v2214 = vrot.slane %v2212, 4
  %v2215 = vrot.slane %v110, 5
  %v2216 = vsel %vm2020, %v2214, %v2215
  %v2217 = vrot.slane %v1950, 5
  %v2218 = vrot.slane %v2217, 4
  %v2219 = vrot.slane %v75, 5
  %v2220 = vsel %vm2020, %v2218, %v2219
  %v2221 = vrot.slane %v2219, 4
  %v2222 = vrot.slane %v111, 5
  %v2223 = vsel %vm2020, %v2221, %v2222
  %v2224 = vrot.slane %v1951, 5
  %v2225 = vrot.slane %v2224, 4
  %v2226 = vrot.slane %v77, 5
  %v2227 = vsel %vm2020, %v2225, %v2226
  %v2228 = vrot.slane %v2226, 4
  %v2229 = vrot.slane %v112, 5
  %v2230 = vsel %vm2020, %v2228, %v2229
  %v2231 = vrot.slane %v1952, 5
  %v2232 = vrot.slane %v2231, 4
  %v2233 = vrot.slane %v79, 5
  %v2234 = vsel %vm2020, %v2232, %v2233
  %v2235 = vrot.slane %v2233, 4
  %v2236 = vrot.slane %v113, 5
  %v2237 = vsel %vm2020, %v2235, %v2236
  %v2238 = vrot.slane %v1953, 5
  %v2239 = vrot.slane %v2238, 4
  %v2240 = vrot.slane %v81, 5
  %v2241 = vsel %vm2020, %v2239, %v2240
  %v2242 = vrot.slane %v2240, 4
  %v2243 = vrot.slane %v114, 5
  %v2244 = vsel %vm2020, %v2242, %v2243
  %s2245 = scalar_lea.vmem %s1, 4
  %v2246 = vld [vmem:[%s2245] sm:$0x3]
  %v2247 = vunpack.c.l.b16 %v2024
  %v2248 = vunpack.c.l.b16 %v2027
  %v2249 = vunpack.c.l.b16 %v2031
  %v2250 = vunpack.c.l.b16 %v2034
  %v2251 = vunpack.c.l.b16 %v2038
  %v2252 = vunpack.c.l.b16 %v2041
  %v2253 = vunpack.c.l.b16 %v2045
  %v2254 = vunpack.c.l.b16 %v2048
  %v2255 = vunpack.c.l.b16 %v2052
  %v2256 = vunpack.c.l.b16 %v2055
  %v2257 = vunpack.c.l.b16 %v2059
  %v2258 = vunpack.c.l.b16 %v2062
  %v2259 = vunpack.c.l.b16 %v2066
  %v2260 = vunpack.c.l.b16 %v2069
  %v2261 = vunpack.c.l.b16 %v2073
  %v2262 = vunpack.c.l.b16 %v2076
  %v2263 = vunpack.c.l.b16 %v2080
  %v2264 = vunpack.c.l.b16 %v2083
  %v2265 = vunpack.c.l.b16 %v2087
  %v2266 = vunpack.c.l.b16 %v2090
  %v2267 = vunpack.c.l.b16 %v2094
  %v2268 = vunpack.c.l.b16 %v2097
  %v2269 = vunpack.c.l.b16 %v2101
  %v2270 = vunpack.c.l.b16 %v2104
  %v2271 = vunpack.c.l.b16 %v2108
  %v2272 = vunpack.c.l.b16 %v2111
  %v2273 = vunpack.c.l.b16 %v2115
  %v2274 = vunpack.c.l.b16 %v2118
  %v2275 = vunpack.c.l.b16 %v2122
  %v2276 = vunpack.c.l.b16 %v2125
  %v2277 = vunpack.c.l.b16 %v2129
  %v2278 = vunpack.c.l.b16 %v2132
  %v2279 = vunpack.c.l.b16 %v2136
  %v2280 = vunpack.c.l.b16 %v2139
  %v2281 = vunpack.c.l.b16 %v2143
  %v2282 = vunpack.c.l.b16 %v2146
  %v2283 = vunpack.c.l.b16 %v2150
  %v2284 = vunpack.c.l.b16 %v2153
  %v2285 = vunpack.c.l.b16 %v2157
  %v2286 = vunpack.c.l.b16 %v2160
  %v2287 = vunpack.c.l.b16 %v2164
  %v2288 = vunpack.c.l.b16 %v2167
  %v2289 = vunpack.c.l.b16 %v2171
  %v2290 = vunpack.c.l.b16 %v2174
  %v2291 = vunpack.c.l.b16 %v2178
  %v2292 = vunpack.c.l.b16 %v2181
  %v2293 = vunpack.c.l.b16 %v2185
  %v2294 = vunpack.c.l.b16 %v2188
  %v2295 = vunpack.c.l.b16 %v2192
  %v2296 = vunpack.c.l.b16 %v2195
  %v2297 = vunpack.c.l.b16 %v2199
  %v2298 = vunpack.c.l.b16 %v2202
  %v2299 = vunpack.c.l.b16 %v2206
  %v2300 = vunpack.c.l.b16 %v2209
  %v2301 = vunpack.c.l.b16 %v2213
  %v2302 = vunpack.c.l.b16 %v2216
  %v2303 = vunpack.c.l.b16 %v2220
  %v2304 = vunpack.c.l.b16 %v2223
  %v2305 = vunpack.c.l.b16 %v2227
  %v2306 = vunpack.c.l.b16 %v2230
  %v2307 = vunpack.c.l.b16 %v2234
  %v2308 = vunpack.c.l.b16 %v2237
  %v2309 = vunpack.c.l.b16 %v2241
  %v2310 = vunpack.c.l.b16 %v2244
  %v2311 = vpack.c.b16 %v2248, %v2247
  %v2312 = vpack.c.b16 %v2250, %v2249
  %v2313 = vpack.c.b16 %v2252, %v2251
  %v2314 = vpack.c.b16 %v2254, %v2253
  %v2315 = vpack.c.b16 %v2256, %v2255
  %v2316 = vpack.c.b16 %v2258, %v2257
  %v2317 = vpack.c.b16 %v2260, %v2259
  %v2318 = vpack.c.b16 %v2262, %v2261
  %v2319 = vpack.c.b16 %v2264, %v2263
  %v2320 = vpack.c.b16 %v2266, %v2265
  %v2321 = vpack.c.b16 %v2268, %v2267
  %v2322 = vpack.c.b16 %v2270, %v2269
  %v2323 = vpack.c.b16 %v2272, %v2271
  %v2324 = vpack.c.b16 %v2274, %v2273
  %v2325 = vpack.c.b16 %v2276, %v2275
  %v2326 = vpack.c.b16 %v2278, %v2277
  %v2327 = vpack.c.b16 %v2280, %v2279
  %v2328 = vpack.c.b16 %v2282, %v2281
  %v2329 = vpack.c.b16 %v2284, %v2283
  %v2330 = vpack.c.b16 %v2286, %v2285
  %v2331 = vpack.c.b16 %v2288, %v2287
  %v2332 = vpack.c.b16 %v2290, %v2289
  %v2333 = vpack.c.b16 %v2292, %v2291
  %v2334 = vpack.c.b16 %v2294, %v2293
  %v2335 = vpack.c.b16 %v2296, %v2295
  %v2336 = vpack.c.b16 %v2298, %v2297
  %v2337 = vpack.c.b16 %v2300, %v2299
  %v2338 = vpack.c.b16 %v2302, %v2301
  %v2339 = vpack.c.b16 %v2304, %v2303
  %v2340 = vpack.c.b16 %v2306, %v2305
  %v2341 = vpack.c.b16 %v2308, %v2307
  %v2342 = vpack.c.b16 %v2310, %v2309
  %v2344 = vsel %vm984, %v2311, 0
  %v2347 = vsel %vm984, %v2312, 0
  %v2350 = vsel %vm984, %v2313, 0
  %v2353 = vsel %vm984, %v2314, 0
  %v2356 = vsel %vm984, %v2315, 0
  %v2359 = vsel %vm984, %v2316, 0
  %v2362 = vsel %vm984, %v2317, 0
  %v2365 = vsel %vm984, %v2318, 0
  %v2368 = vsel %vm984, %v2319, 0
  %v2371 = vsel %vm984, %v2320, 0
  %v2374 = vsel %vm984, %v2321, 0
  %v2377 = vsel %vm984, %v2322, 0
  %v2380 = vsel %vm984, %v2323, 0
  %v2383 = vsel %vm984, %v2324, 0
  %v2386 = vsel %vm984, %v2325, 0
  %v2389 = vsel %vm984, %v2326, 0
  %v2392 = vsel %vm984, %v2327, 0
  %v2395 = vsel %vm984, %v2328, 0
  %v2398 = vsel %vm984, %v2329, 0
  %v2401 = vsel %vm984, %v2330, 0
  %v2404 = vsel %vm984, %v2331, 0
  %v2407 = vsel %vm984, %v2332, 0
  %v2410 = vsel %vm984, %v2333, 0
  %v2413 = vsel %vm984, %v2334, 0
  %v2416 = vsel %vm984, %v2335, 0
  %v2419 = vsel %vm984, %v2336, 0
  %v2422 = vsel %vm984, %v2337, 0
  %v2425 = vsel %vm984, %v2338, 0
  %v2428 = vsel %vm984, %v2339, 0
  %v2431 = vsel %vm984, %v2340, 0
  %v2434 = vsel %vm984, %v2341, 0
  %v2437 = vsel %vm984, %v2342, 0
  %v2440 = vsel %vm1081, %v2246, 0
  %2442 = vmatprep.subr.bf16.mxu0 0
  %2443 = vmatpush1.bf16.msra.mxu0 0
  %2444 = vmatprep.subr.bf16.mxu0 0
  %2445 = vmatpush1.bf16.msra.mxu0 0
  %2446 = vmatprep.subr.bf16.mxu0 0
  %2447 = vmatpush1.bf16.msra.mxu0 0
  %2448 = vmatprep.subr.bf16.mxu0 0
  %2449 = vmatpush1.bf16.msra.mxu0 0
  %2450 = vmatprep.subr.bf16.mxu0 0
  %2451 = vmatpush1.bf16.msra.mxu0 0
  %2452 = vmatprep.subr.bf16.mxu0 0
  %2453 = vmatpush1.bf16.msra.mxu0 0
  %2454 = vmatprep.subr.bf16.mxu0 0
  %2455 = vmatpush1.bf16.msra.mxu0 0
  %2456 = vmatprep.subr.bf16.mxu0 0
  %2457 = vmatpush1.bf16.msra.mxu0 %v2440
  %2458 = vmatprep.subr.bf16.mxu0 0
  %2459 = vmatpush2.bf16.msra.mxu0 0
  %2460 = vmatprep.subr.bf16.mxu0 0
  %2461 = vmatpush2.bf16.msra.mxu0 0
  %2462 = vmatprep.subr.bf16.mxu0 0
  %2463 = vmatpush2.bf16.msra.mxu0 0
  %2464 = vmatprep.subr.bf16.mxu0 0
  %2465 = vmatpush2.bf16.msra.mxu0 0
  %2466 = vmatprep.subr.bf16.mxu0 0
  %2467 = vmatpush2.bf16.msra.mxu0 0
  %2468 = vmatprep.subr.bf16.mxu0 0
  %2469 = vmatpush2.bf16.msra.mxu0 0
  %2470 = vmatprep.subr.bf16.mxu0 0
  %2471 = vmatpush2.bf16.msra.mxu0 0
  %2472 = vmatprep.subr.bf16.mxu0 0
  %2473 = vmatpush2.bf16.msra.mxu0 0
  %2474 = vmatprep.mubr.bf16.mxu0 0
  %2475 = vmatmul.mubr.bf16.gmra.mxu0 %v2344
  %v2476 = vpop.f32.mrf.mxu0
  %v2477 = vadd.f32 0.0, %v2476
  %v2478 = vpop.f32.mrf.mxu0
  %v2479 = vpop.f32.mrf.mxu0
  %v2480 = vadd.f32 0.0, %v2479
  %v2481 = vpop.f32.mrf.mxu0
  %2482 = vmatprep.mubr.bf16.mxu0 0
  %2483 = vmatmul.mubr.bf16.gmra.mxu0 %v2347
  %v2484 = vpop.f32.mrf.mxu0
  %v2485 = vadd.f32 0.0, %v2484
  %v2486 = vpop.f32.mrf.mxu0
  %v2487 = vpop.f32.mrf.mxu0
  %v2488 = vadd.f32 0.0, %v2487
  %v2489 = vpop.f32.mrf.mxu0
  %2490 = vmatprep.mubr.bf16.mxu0 0
  %2491 = vmatmul.mubr.bf16.gmra.mxu0 %v2350
  %v2492 = vpop.f32.mrf.mxu0
  %v2493 = vadd.f32 0.0, %v2492
  %v2494 = vpop.f32.mrf.mxu0
  %v2495 = vpop.f32.mrf.mxu0
  %v2496 = vadd.f32 0.0, %v2495
  %v2497 = vpop.f32.mrf.mxu0
  %2498 = vmatprep.mubr.bf16.mxu0 0
  %2499 = vmatmul.mubr.bf16.gmra.mxu0 %v2353
  %v2500 = vpop.f32.mrf.mxu0
  %v2501 = vadd.f32 0.0, %v2500
  %v2502 = vpop.f32.mrf.mxu0
  %v2503 = vpop.f32.mrf.mxu0
  %v2504 = vadd.f32 0.0, %v2503
  %v2505 = vpop.f32.mrf.mxu0
  %2506 = vmatprep.mubr.bf16.mxu0 0
  %2507 = vmatmul.mubr.bf16.gmra.mxu0 %v2356
  %v2508 = vpop.f32.mrf.mxu0
  %v2509 = vadd.f32 0.0, %v2508
  %v2510 = vpop.f32.mrf.mxu0
  %v2511 = vpop.f32.mrf.mxu0
  %v2512 = vadd.f32 0.0, %v2511
  %v2513 = vpop.f32.mrf.mxu0
  %2514 = vmatprep.mubr.bf16.mxu0 0
  %2515 = vmatmul.mubr.bf16.gmra.mxu0 %v2359
  %v2516 = vpop.f32.mrf.mxu0
  %v2517 = vadd.f32 0.0, %v2516
  %v2518 = vpop.f32.mrf.mxu0
  %v2519 = vpop.f32.mrf.mxu0
  %v2520 = vadd.f32 0.0, %v2519
  %v2521 = vpop.f32.mrf.mxu0
  %2522 = vmatprep.mubr.bf16.mxu0 0
  %2523 = vmatmul.mubr.bf16.gmra.mxu0 %v2362
  %v2524 = vpop.f32.mrf.mxu0
  %v2525 = vadd.f32 0.0, %v2524
  %v2526 = vpop.f32.mrf.mxu0
  %v2527 = vpop.f32.mrf.mxu0
  %v2528 = vadd.f32 0.0, %v2527
  %v2529 = vpop.f32.mrf.mxu0
  %2530 = vmatprep.mubr.bf16.mxu0 0
  %2531 = vmatmul.mubr.bf16.gmra.mxu0 %v2365
  %v2532 = vpop.f32.mrf.mxu0
  %v2533 = vadd.f32 0.0, %v2532
  %v2534 = vpop.f32.mrf.mxu0
  %v2535 = vpop.f32.mrf.mxu0
  %v2536 = vadd.f32 0.0, %v2535
  %v2537 = vpop.f32.mrf.mxu0
  %2538 = vmatprep.mubr.bf16.mxu0 0
  %2539 = vmatmul.mubr.bf16.gmra.mxu0 %v2368
  %v2540 = vpop.f32.mrf.mxu0
  %v2541 = vadd.f32 0.0, %v2540
  %v2542 = vpop.f32.mrf.mxu0
  %v2543 = vpop.f32.mrf.mxu0
  %v2544 = vadd.f32 0.0, %v2543
  %v2545 = vpop.f32.mrf.mxu0
  %2546 = vmatprep.mubr.bf16.mxu0 0
  %2547 = vmatmul.mubr.bf16.gmra.mxu0 %v2371
  %v2548 = vpop.f32.mrf.mxu0
  %v2549 = vadd.f32 0.0, %v2548
  %v2550 = vpop.f32.mrf.mxu0
  %v2551 = vpop.f32.mrf.mxu0
  %v2552 = vadd.f32 0.0, %v2551
  %v2553 = vpop.f32.mrf.mxu0
  %2554 = vmatprep.mubr.bf16.mxu0 0
  %2555 = vmatmul.mubr.bf16.gmra.mxu0 %v2374
  %v2556 = vpop.f32.mrf.mxu0
  %v2557 = vadd.f32 0.0, %v2556
  %v2558 = vpop.f32.mrf.mxu0
  %v2559 = vpop.f32.mrf.mxu0
  %v2560 = vadd.f32 0.0, %v2559
  %v2561 = vpop.f32.mrf.mxu0
  %2562 = vmatprep.mubr.bf16.mxu0 0
  %2563 = vmatmul.mubr.bf16.gmra.mxu0 %v2377
  %v2564 = vpop.f32.mrf.mxu0
  %v2565 = vadd.f32 0.0, %v2564
  %v2566 = vpop.f32.mrf.mxu0
  %v2567 = vpop.f32.mrf.mxu0
  %v2568 = vadd.f32 0.0, %v2567
  %v2569 = vpop.f32.mrf.mxu0
  %2570 = vmatprep.mubr.bf16.mxu0 0
  %2571 = vmatmul.mubr.bf16.gmra.mxu0 %v2380
  %v2572 = vpop.f32.mrf.mxu0
  %v2573 = vadd.f32 0.0, %v2572
  %v2574 = vpop.f32.mrf.mxu0
  %v2575 = vpop.f32.mrf.mxu0
  %v2576 = vadd.f32 0.0, %v2575
  %v2577 = vpop.f32.mrf.mxu0
  %2578 = vmatprep.mubr.bf16.mxu0 0
  %2579 = vmatmul.mubr.bf16.gmra.mxu0 %v2383
  %v2580 = vpop.f32.mrf.mxu0
  %v2581 = vadd.f32 0.0, %v2580
  %v2582 = vpop.f32.mrf.mxu0
  %v2583 = vpop.f32.mrf.mxu0
  %v2584 = vadd.f32 0.0, %v2583
  %v2585 = vpop.f32.mrf.mxu0
  %2586 = vmatprep.mubr.bf16.mxu0 0
  %2587 = vmatmul.mubr.bf16.gmra.mxu0 %v2386
  %v2588 = vpop.f32.mrf.mxu0
  %v2589 = vadd.f32 0.0, %v2588
  %v2590 = vpop.f32.mrf.mxu0
  %v2591 = vpop.f32.mrf.mxu0
  %v2592 = vadd.f32 0.0, %v2591
  %v2593 = vpop.f32.mrf.mxu0
  %2594 = vmatprep.mubr.bf16.mxu0 0
  %2595 = vmatmul.mubr.bf16.gmra.mxu0 %v2389
  %v2596 = vpop.f32.mrf.mxu0
  %v2597 = vadd.f32 0.0, %v2596
  %v2598 = vpop.f32.mrf.mxu0
  %v2599 = vpop.f32.mrf.mxu0
  %v2600 = vadd.f32 0.0, %v2599
  %v2601 = vpop.f32.mrf.mxu0
  %2602 = vmatprep.mubr.bf16.mxu0 0
  %2603 = vmatmul.mubr.bf16.gmra.mxu0 %v2392
  %v2604 = vpop.f32.mrf.mxu0
  %v2605 = vadd.f32 0.0, %v2604
  %v2606 = vpop.f32.mrf.mxu0
  %v2607 = vpop.f32.mrf.mxu0
  %v2608 = vadd.f32 0.0, %v2607
  %v2609 = vpop.f32.mrf.mxu0
  %2610 = vmatprep.mubr.bf16.mxu0 0
  %2611 = vmatmul.mubr.bf16.gmra.mxu0 %v2395
  %v2612 = vpop.f32.mrf.mxu0
  %v2613 = vadd.f32 0.0, %v2612
  %v2614 = vpop.f32.mrf.mxu0
  %v2615 = vpop.f32.mrf.mxu0
  %v2616 = vadd.f32 0.0, %v2615
  %v2617 = vpop.f32.mrf.mxu0
  %2618 = vmatprep.mubr.bf16.mxu0 0
  %2619 = vmatmul.mubr.bf16.gmra.mxu0 %v2398
  %v2620 = vpop.f32.mrf.mxu0
  %v2621 = vadd.f32 0.0, %v2620
  %v2622 = vpop.f32.mrf.mxu0
  %v2623 = vpop.f32.mrf.mxu0
  %v2624 = vadd.f32 0.0, %v2623
  %v2625 = vpop.f32.mrf.mxu0
  %2626 = vmatprep.mubr.bf16.mxu0 0
  %2627 = vmatmul.mubr.bf16.gmra.mxu0 %v2401
  %v2628 = vpop.f32.mrf.mxu0
  %v2629 = vadd.f32 0.0, %v2628
  %v2630 = vpop.f32.mrf.mxu0
  %v2631 = vpop.f32.mrf.mxu0
  %v2632 = vadd.f32 0.0, %v2631
  %v2633 = vpop.f32.mrf.mxu0
  %2634 = vmatprep.mubr.bf16.mxu0 0
  %2635 = vmatmul.mubr.bf16.gmra.mxu0 %v2404
  %v2636 = vpop.f32.mrf.mxu0
  %v2637 = vadd.f32 0.0, %v2636
  %v2638 = vpop.f32.mrf.mxu0
  %v2639 = vpop.f32.mrf.mxu0
  %v2640 = vadd.f32 0.0, %v2639
  %v2641 = vpop.f32.mrf.mxu0
  %2642 = vmatprep.mubr.bf16.mxu0 0
  %2643 = vmatmul.mubr.bf16.gmra.mxu0 %v2407
  %v2644 = vpop.f32.mrf.mxu0
  %v2645 = vadd.f32 0.0, %v2644
  %v2646 = vpop.f32.mrf.mxu0
  %v2647 = vpop.f32.mrf.mxu0
  %v2648 = vadd.f32 0.0, %v2647
  %v2649 = vpop.f32.mrf.mxu0
  %2650 = vmatprep.mubr.bf16.mxu0 0
  %2651 = vmatmul.mubr.bf16.gmra.mxu0 %v2410
  %v2652 = vpop.f32.mrf.mxu0
  %v2653 = vadd.f32 0.0, %v2652
  %v2654 = vpop.f32.mrf.mxu0
  %v2655 = vpop.f32.mrf.mxu0
  %v2656 = vadd.f32 0.0, %v2655
  %v2657 = vpop.f32.mrf.mxu0
  %2658 = vmatprep.mubr.bf16.mxu0 0
  %2659 = vmatmul.mubr.bf16.gmra.mxu0 %v2413
  %v2660 = vpop.f32.mrf.mxu0
  %v2661 = vadd.f32 0.0, %v2660
  %v2662 = vpop.f32.mrf.mxu0
  %v2663 = vpop.f32.mrf.mxu0
  %v2664 = vadd.f32 0.0, %v2663
  %v2665 = vpop.f32.mrf.mxu0
  %2666 = vmatprep.mubr.bf16.mxu0 0
  %2667 = vmatmul.mubr.bf16.gmra.mxu0 %v2416
  %v2668 = vpop.f32.mrf.mxu0
  %v2669 = vadd.f32 0.0, %v2668
  %v2670 = vpop.f32.mrf.mxu0
  %v2671 = vpop.f32.mrf.mxu0
  %v2672 = vadd.f32 0.0, %v2671
  %v2673 = vpop.f32.mrf.mxu0
  %2674 = vmatprep.mubr.bf16.mxu0 0
  %2675 = vmatmul.mubr.bf16.gmra.mxu0 %v2419
  %v2676 = vpop.f32.mrf.mxu0
  %v2677 = vadd.f32 0.0, %v2676
  %v2678 = vpop.f32.mrf.mxu0
  %v2679 = vpop.f32.mrf.mxu0
  %v2680 = vadd.f32 0.0, %v2679
  %v2681 = vpop.f32.mrf.mxu0
  %2682 = vmatprep.mubr.bf16.mxu0 0
  %2683 = vmatmul.mubr.bf16.gmra.mxu0 %v2422
  %v2684 = vpop.f32.mrf.mxu0
  %v2685 = vadd.f32 0.0, %v2684
  %v2686 = vpop.f32.mrf.mxu0
  %v2687 = vpop.f32.mrf.mxu0
  %v2688 = vadd.f32 0.0, %v2687
  %v2689 = vpop.f32.mrf.mxu0
  %2690 = vmatprep.mubr.bf16.mxu0 0
  %2691 = vmatmul.mubr.bf16.gmra.mxu0 %v2425
  %v2692 = vpop.f32.mrf.mxu0
  %v2693 = vadd.f32 0.0, %v2692
  %v2694 = vpop.f32.mrf.mxu0
  %v2695 = vpop.f32.mrf.mxu0
  %v2696 = vadd.f32 0.0, %v2695
  %v2697 = vpop.f32.mrf.mxu0
  %2698 = vmatprep.mubr.bf16.mxu0 0
  %2699 = vmatmul.mubr.bf16.gmra.mxu0 %v2428
  %v2700 = vpop.f32.mrf.mxu0
  %v2701 = vadd.f32 0.0, %v2700
  %v2702 = vpop.f32.mrf.mxu0
  %v2703 = vpop.f32.mrf.mxu0
  %v2704 = vadd.f32 0.0, %v2703
  %v2705 = vpop.f32.mrf.mxu0
  %2706 = vmatprep.mubr.bf16.mxu0 0
  %2707 = vmatmul.mubr.bf16.gmra.mxu0 %v2431
  %v2708 = vpop.f32.mrf.mxu0
  %v2709 = vadd.f32 0.0, %v2708
  %v2710 = vpop.f32.mrf.mxu0
  %v2711 = vpop.f32.mrf.mxu0
  %v2712 = vadd.f32 0.0, %v2711
  %v2713 = vpop.f32.mrf.mxu0
  %2714 = vmatprep.mubr.bf16.mxu0 0
  %2715 = vmatmul.mubr.bf16.gmra.mxu0 %v2434
  %v2716 = vpop.f32.mrf.mxu0
  %v2717 = vadd.f32 0.0, %v2716
  %v2718 = vpop.f32.mrf.mxu0
  %v2719 = vpop.f32.mrf.mxu0
  %v2720 = vadd.f32 0.0, %v2719
  %v2721 = vpop.f32.mrf.mxu0
  %2722 = vmatprep.mubr.bf16.mxu0 0
  %2723 = vmatmul.mubr.bf16.gmra.mxu0 %v2437
  %v2724 = vpop.f32.mrf.mxu0
  %v2725 = vadd.f32 0.0, %v2724
  %v2726 = vpop.f32.mrf.mxu0
  %v2727 = vpop.f32.mrf.mxu0
  %v2728 = vadd.f32 0.0, %v2727
  %v2729 = vpop.f32.mrf.mxu0
  %2730 = vdwg.mxu0
  %v2731 = vadd.f32 %v1668, %v2477
  %v2732 = vadd.f32 %v1671, %v2480
  %v2733 = vadd.f32 %v1676, %v2485
  %v2734 = vadd.f32 %v1679, %v2488
  %v2735 = vadd.f32 %v1684, %v2493
  %v2736 = vadd.f32 %v1687, %v2496
  %v2737 = vadd.f32 %v1692, %v2501
  %v2738 = vadd.f32 %v1695, %v2504
  %v2739 = vadd.f32 %v1700, %v2509
  %v2740 = vadd.f32 %v1703, %v2512
  %v2741 = vadd.f32 %v1708, %v2517
  %v2742 = vadd.f32 %v1711, %v2520
  %v2743 = vadd.f32 %v1716, %v2525
  %v2744 = vadd.f32 %v1719, %v2528
  %v2745 = vadd.f32 %v1724, %v2533
  %v2746 = vadd.f32 %v1727, %v2536
  %v2747 = vadd.f32 %v1732, %v2541
  %v2748 = vadd.f32 %v1735, %v2544
  %v2749 = vadd.f32 %v1740, %v2549
  %v2750 = vadd.f32 %v1743, %v2552
  %v2751 = vadd.f32 %v1748, %v2557
  %v2752 = vadd.f32 %v1751, %v2560
  %v2753 = vadd.f32 %v1756, %v2565
  %v2754 = vadd.f32 %v1759, %v2568
  %v2755 = vadd.f32 %v1764, %v2573
  %v2756 = vadd.f32 %v1767, %v2576
  %v2757 = vadd.f32 %v1772, %v2581
  %v2758 = vadd.f32 %v1775, %v2584
  %v2759 = vadd.f32 %v1780, %v2589
  %v2760 = vadd.f32 %v1783, %v2592
  %v2761 = vadd.f32 %v1788, %v2597
  %v2762 = vadd.f32 %v1791, %v2600
  %v2763 = vadd.f32 %v1796, %v2605
  %v2764 = vadd.f32 %v1799, %v2608
  %v2765 = vadd.f32 %v1804, %v2613
  %v2766 = vadd.f32 %v1807, %v2616
  %v2767 = vadd.f32 %v1812, %v2621
  %v2768 = vadd.f32 %v1815, %v2624
  %v2769 = vadd.f32 %v1820, %v2629
  %v2770 = vadd.f32 %v1823, %v2632
  %v2771 = vadd.f32 %v1828, %v2637
  %v2772 = vadd.f32 %v1831, %v2640
  %v2773 = vadd.f32 %v1836, %v2645
  %v2774 = vadd.f32 %v1839, %v2648
  %v2775 = vadd.f32 %v1844, %v2653
  %v2776 = vadd.f32 %v1847, %v2656
  %v2777 = vadd.f32 %v1852, %v2661
  %v2778 = vadd.f32 %v1855, %v2664
  %v2779 = vadd.f32 %v1860, %v2669
  %v2780 = vadd.f32 %v1863, %v2672
  %v2781 = vadd.f32 %v1868, %v2677
  %v2782 = vadd.f32 %v1871, %v2680
  %v2783 = vadd.f32 %v1876, %v2685
  %v2784 = vadd.f32 %v1879, %v2688
  %v2785 = vadd.f32 %v1884, %v2693
  %v2786 = vadd.f32 %v1887, %v2696
  %v2787 = vadd.f32 %v1892, %v2701
  %v2788 = vadd.f32 %v1895, %v2704
  %v2789 = vadd.f32 %v1900, %v2709
  %v2790 = vadd.f32 %v1903, %v2712
  %v2791 = vadd.f32 %v1908, %v2717
  %v2792 = vadd.f32 %v1911, %v2720
  %v2793 = vadd.f32 %v1916, %v2725
  %v2794 = vadd.f32 %v1919, %v2728
  %s2795 = scalar_lea.vmem %s0, 12
  %v2796 = vld [vmem:[%s2795] sm:$0xf]
  %v2797 = vld [vmem:[%s2795 + $0x4] sm:$0xf]
  %v2798 = vld [vmem:[%s2795 + $0xc] sm:$0xf]
  %v2799 = vld [vmem:[%s2795 + $0x10] sm:$0xf]
  %v2800 = vld [vmem:[%s2795 + $0x18] sm:$0xf]
  %v2801 = vld [vmem:[%s2795 + $0x1c] sm:$0xf]
  %v2802 = vld [vmem:[%s2795 + $0x24] sm:$0xf]
  %v2803 = vld [vmem:[%s2795 + $0x28] sm:$0xf]
  %v2804 = vld [vmem:[%s2795 + $0x30] sm:$0xf]
  %v2805 = vld [vmem:[%s2795 + $0x34] sm:$0xf]
  %v2806 = vld [vmem:[%s2795 + $0x3c] sm:$0xf]
  %v2807 = vld [vmem:[%s2795 + $0x40] sm:$0xf]
  %v2808 = vld [vmem:[%s2795 + $0x48] sm:$0xf]
  %v2809 = vld [vmem:[%s2795 + $0x4c] sm:$0xf]
  %v2810 = vld [vmem:[%s2795 + $0x54] sm:$0xf]
  %v2811 = vld [vmem:[%s2795 + $0x58] sm:$0xf]
  %v2812 = vld [vmem:[%s2795 + $0x60] sm:$0xf]
  %v2813 = vld [vmem:[%s2795 + $0x64] sm:$0xf]
  %v2814 = vld [vmem:[%s2795 + $0x6c] sm:$0xf]
  %v2815 = vld [vmem:[%s2795 + $0x70] sm:$0xf]
  %v2816 = vld [vmem:[%s2795 + $0x78] sm:$0xf]
  %v2817 = vld [vmem:[%s2795 + $0x7c] sm:$0xf]
  %v2818 = vld [vmem:[%s2795 + $0x84] sm:$0xf]
  %v2819 = vld [vmem:[%s2795 + $0x88] sm:$0xf]
  %v2820 = vld [vmem:[%s2795 + $0x90] sm:$0xf]
  %v2821 = vld [vmem:[%s2795 + $0x94] sm:$0xf]
  %v2822 = vld [vmem:[%s2795 + $0x9c] sm:$0xf]
  %v2823 = vld [vmem:[%s2795 + $0xa0] sm:$0xf]
  %v2824 = vld [vmem:[%s2795 + $0xa8] sm:$0xf]
  %v2825 = vld [vmem:[%s2795 + $0xac] sm:$0xf]
  %v2826 = vld [vmem:[%s2795 + $0xb4] sm:$0xf]
  %v2827 = vld [vmem:[%s2795 + $0xb8] sm:$0xf]
  %v2828 = vld [vmem:[%s2795 + $0xd8] sm:$0xf]
  %v2829 = vld [vmem:[%s2795 + $0xdc] sm:$0xf]
  %v2830 = vld [vmem:[%s2795 + $0xe4] sm:$0xf]
  %v2831 = vld [vmem:[%s2795 + $0xe8] sm:$0xf]
  %v2832 = vld [vmem:[%s2795 + $0xf0] sm:$0xf]
  %v2833 = vld [vmem:[%s2795 + $0xf4] sm:$0xf]
  %v2834 = vld [vmem:[%s2795 + $0xfc] sm:$0xf]
  %v2835 = vld [vmem:[%s2795 + $0x100] sm:$0xf]
  %v2836 = vld [vmem:[%s2795 + $0x108] sm:$0xf]
  %v2837 = vld [vmem:[%s2795 + $0x10c] sm:$0xf]
  %v2838 = vld [vmem:[%s2795 + $0x114] sm:$0xf]
  %v2839 = vld [vmem:[%s2795 + $0x118] sm:$0xf]
  %v2840 = vld [vmem:[%s2795 + $0x120] sm:$0xf]
  %v2841 = vld [vmem:[%s2795 + $0x124] sm:$0xf]
  %v2842 = vld [vmem:[%s2795 + $0x12c] sm:$0xf]
  %v2843 = vld [vmem:[%s2795 + $0x130] sm:$0xf]
  %v2844 = vld [vmem:[%s2795 + $0x138] sm:$0xf]
  %v2845 = vld [vmem:[%s2795 + $0x13c] sm:$0xf]
  %v2846 = vld [vmem:[%s2795 + $0x144] sm:$0xf]
  %v2847 = vld [vmem:[%s2795 + $0x148] sm:$0xf]
  %v2848 = vld [vmem:[%s2795 + $0x150] sm:$0xf]
  %v2849 = vld [vmem:[%s2795 + $0x154] sm:$0xf]
  %v2850 = vld [vmem:[%s2795 + $0x15c] sm:$0xf]
  %v2851 = vld [vmem:[%s2795 + $0x160] sm:$0xf]
  %v2852 = vld [vmem:[%s2795 + $0x168] sm:$0xf]
  %v2853 = vld [vmem:[%s2795 + $0x16c] sm:$0xf]
  %v2854 = vld [vmem:[%s2795 + $0x174] sm:$0xf]
  %v2855 = vld [vmem:[%s2795 + $0x178] sm:$0xf]
  %v2856 = vld [vmem:[%s2795 + $0x180] sm:$0xf]
  %v2857 = vld [vmem:[%s2795 + $0x184] sm:$0xf]
  %v2858 = vld [vmem:[%s2795 + $0x18c] sm:$0xf]
  %v2859 = vld [vmem:[%s2795 + $0x190] sm:$0xf]
  %s2860 = scalar_lea.vmem %s1, 6
  %v2861 = vld [vmem:[%s2860] sm:$0x3]
  %v2926 = vunpack.c.l.b16 %v2796
  %v2927 = vunpack.c.l.b16 %v2797
  %v2928 = vunpack.c.l.b16 %v2798
  %v2929 = vunpack.c.l.b16 %v2799
  %v2930 = vunpack.c.l.b16 %v2800
  %v2931 = vunpack.c.l.b16 %v2801
  %v2932 = vunpack.c.l.b16 %v2802
  %v2933 = vunpack.c.l.b16 %v2803
  %v2934 = vunpack.c.l.b16 %v2804
  %v2935 = vunpack.c.l.b16 %v2805
  %v2936 = vunpack.c.l.b16 %v2806
  %v2937 = vunpack.c.l.b16 %v2807
  %v2938 = vunpack.c.l.b16 %v2808
  %v2939 = vunpack.c.l.b16 %v2809
  %v2940 = vunpack.c.l.b16 %v2810
  %v2941 = vunpack.c.l.b16 %v2811
  %v2942 = vunpack.c.l.b16 %v2812
  %v2943 = vunpack.c.l.b16 %v2813
  %v2944 = vunpack.c.l.b16 %v2814
  %v2945 = vunpack.c.l.b16 %v2815
  %v2946 = vunpack.c.l.b16 %v2816
  %v2947 = vunpack.c.l.b16 %v2817
  %v2948 = vunpack.c.l.b16 %v2818
  %v2949 = vunpack.c.l.b16 %v2819
  %v2950 = vunpack.c.l.b16 %v2820
  %v2951 = vunpack.c.l.b16 %v2821
  %v2952 = vunpack.c.l.b16 %v2822
  %v2953 = vunpack.c.l.b16 %v2823
  %v2954 = vunpack.c.l.b16 %v2824
  %v2955 = vunpack.c.l.b16 %v2825
  %v2956 = vunpack.c.l.b16 %v2826
  %v2957 = vunpack.c.l.b16 %v2827
  %v2958 = vunpack.c.l.b16 %v2828
  %v2959 = vunpack.c.l.b16 %v2829
  %v2960 = vunpack.c.l.b16 %v2830
  %v2961 = vunpack.c.l.b16 %v2831
  %v2962 = vunpack.c.l.b16 %v2832
  %v2963 = vunpack.c.l.b16 %v2833
  %v2964 = vunpack.c.l.b16 %v2834
  %v2965 = vunpack.c.l.b16 %v2835
  %v2966 = vunpack.c.l.b16 %v2836
  %v2967 = vunpack.c.l.b16 %v2837
  %v2968 = vunpack.c.l.b16 %v2838
  %v2969 = vunpack.c.l.b16 %v2839
  %v2970 = vunpack.c.l.b16 %v2840
  %v2971 = vunpack.c.l.b16 %v2841
  %v2972 = vunpack.c.l.b16 %v2842
  %v2973 = vunpack.c.l.b16 %v2843
  %v2974 = vunpack.c.l.b16 %v2844
  %v2975 = vunpack.c.l.b16 %v2845
  %v2976 = vunpack.c.l.b16 %v2846
  %v2977 = vunpack.c.l.b16 %v2847
  %v2978 = vunpack.c.l.b16 %v2848
  %v2979 = vunpack.c.l.b16 %v2849
  %v2980 = vunpack.c.l.b16 %v2850
  %v2981 = vunpack.c.l.b16 %v2851
  %v2982 = vunpack.c.l.b16 %v2852
  %v2983 = vunpack.c.l.b16 %v2853
  %v2984 = vunpack.c.l.b16 %v2854
  %v2985 = vunpack.c.l.b16 %v2855
  %v2986 = vunpack.c.l.b16 %v2856
  %v2987 = vunpack.c.l.b16 %v2857
  %v2988 = vunpack.c.l.b16 %v2858
  %v2989 = vunpack.c.l.b16 %v2859
  %v2990 = vpack.c.b16 %v2927, %v2926
  %v2991 = vpack.c.b16 %v2929, %v2928
  %v2992 = vpack.c.b16 %v2931, %v2930
  %v2993 = vpack.c.b16 %v2933, %v2932
  %v2994 = vpack.c.b16 %v2935, %v2934
  %v2995 = vpack.c.b16 %v2937, %v2936
  %v2996 = vpack.c.b16 %v2939, %v2938
  %v2997 = vpack.c.b16 %v2941, %v2940
  %v2998 = vpack.c.b16 %v2943, %v2942
  %v2999 = vpack.c.b16 %v2945, %v2944
  %v3000 = vpack.c.b16 %v2947, %v2946
  %v3001 = vpack.c.b16 %v2949, %v2948
  %v3002 = vpack.c.b16 %v2951, %v2950
  %v3003 = vpack.c.b16 %v2953, %v2952
  %v3004 = vpack.c.b16 %v2955, %v2954
  %v3005 = vpack.c.b16 %v2957, %v2956
  %v3006 = vpack.c.b16 %v2959, %v2958
  %v3007 = vpack.c.b16 %v2961, %v2960
  %v3008 = vpack.c.b16 %v2963, %v2962
  %v3009 = vpack.c.b16 %v2965, %v2964
  %v3010 = vpack.c.b16 %v2967, %v2966
  %v3011 = vpack.c.b16 %v2969, %v2968
  %v3012 = vpack.c.b16 %v2971, %v2970
  %v3013 = vpack.c.b16 %v2973, %v2972
  %v3014 = vpack.c.b16 %v2975, %v2974
  %v3015 = vpack.c.b16 %v2977, %v2976
  %v3016 = vpack.c.b16 %v2979, %v2978
  %v3017 = vpack.c.b16 %v2981, %v2980
  %v3018 = vpack.c.b16 %v2983, %v2982
  %v3019 = vpack.c.b16 %v2985, %v2984
  %v3020 = vpack.c.b16 %v2987, %v2986
  %v3021 = vpack.c.b16 %v2989, %v2988
  %v3023 = vsel %vm984, %v2990, 0
  %v3026 = vsel %vm984, %v2991, 0
  %v3029 = vsel %vm984, %v2992, 0
  %v3032 = vsel %vm984, %v2993, 0
  %v3035 = vsel %vm984, %v2994, 0
  %v3038 = vsel %vm984, %v2995, 0
  %v3041 = vsel %vm984, %v2996, 0
  %v3044 = vsel %vm984, %v2997, 0
  %v3047 = vsel %vm984, %v2998, 0
  %v3050 = vsel %vm984, %v2999, 0
  %v3053 = vsel %vm984, %v3000, 0
  %v3056 = vsel %vm984, %v3001, 0
  %v3059 = vsel %vm984, %v3002, 0
  %v3062 = vsel %vm984, %v3003, 0
  %v3065 = vsel %vm984, %v3004, 0
  %v3068 = vsel %vm984, %v3005, 0
  %v3071 = vsel %vm984, %v3006, 0
  %v3074 = vsel %vm984, %v3007, 0
  %v3077 = vsel %vm984, %v3008, 0
  %v3080 = vsel %vm984, %v3009, 0
  %v3083 = vsel %vm984, %v3010, 0
  %v3086 = vsel %vm984, %v3011, 0
  %v3089 = vsel %vm984, %v3012, 0
  %v3092 = vsel %vm984, %v3013, 0
  %v3095 = vsel %vm984, %v3014, 0
  %v3098 = vsel %vm984, %v3015, 0
  %v3101 = vsel %vm984, %v3016, 0
  %v3104 = vsel %vm984, %v3017, 0
  %v3107 = vsel %vm984, %v3018, 0
  %v3110 = vsel %vm984, %v3019, 0
  %v3113 = vsel %vm984, %v3020, 0
  %v3116 = vsel %vm984, %v3021, 0
  %v3119 = vsel %vm1081, %v2861, 0
  %3121 = vmatprep.subr.bf16.mxu0 0
  %3122 = vmatpush1.bf16.msra.mxu0 0
  %3123 = vmatprep.subr.bf16.mxu0 0
  %3124 = vmatpush1.bf16.msra.mxu0 0
  %3125 = vmatprep.subr.bf16.mxu0 0
  %3126 = vmatpush1.bf16.msra.mxu0 0
  %3127 = vmatprep.subr.bf16.mxu0 0
  %3128 = vmatpush1.bf16.msra.mxu0 0
  %3129 = vmatprep.subr.bf16.mxu0 0
  %3130 = vmatpush1.bf16.msra.mxu0 0
  %3131 = vmatprep.subr.bf16.mxu0 0
  %3132 = vmatpush1.bf16.msra.mxu0 0
  %3133 = vmatprep.subr.bf16.mxu0 0
  %3134 = vmatpush1.bf16.msra.mxu0 0
  %3135 = vmatprep.subr.bf16.mxu0 0
  %3136 = vmatpush1.bf16.msra.mxu0 %v3119
  %3137 = vmatprep.subr.bf16.mxu0 0
  %3138 = vmatpush2.bf16.msra.mxu0 0
  %3139 = vmatprep.subr.bf16.mxu0 0
  %3140 = vmatpush2.bf16.msra.mxu0 0
  %3141 = vmatprep.subr.bf16.mxu0 0
  %3142 = vmatpush2.bf16.msra.mxu0 0
  %3143 = vmatprep.subr.bf16.mxu0 0
  %3144 = vmatpush2.bf16.msra.mxu0 0
  %3145 = vmatprep.subr.bf16.mxu0 0
  %3146 = vmatpush2.bf16.msra.mxu0 0
  %3147 = vmatprep.subr.bf16.mxu0 0
  %3148 = vmatpush2.bf16.msra.mxu0 0
  %3149 = vmatprep.subr.bf16.mxu0 0
  %3150 = vmatpush2.bf16.msra.mxu0 0
  %3151 = vmatprep.subr.bf16.mxu0 0
  %3152 = vmatpush2.bf16.msra.mxu0 0
  %3153 = vmatprep.mubr.bf16.mxu0 0
  %3154 = vmatmul.mubr.bf16.gmra.mxu0 %v3023
  %v3155 = vpop.f32.mrf.mxu0
  %v3156 = vadd.f32 0.0, %v3155
  %v3157 = vpop.f32.mrf.mxu0
  %v3158 = vpop.f32.mrf.mxu0
  %v3159 = vadd.f32 0.0, %v3158
  %v3160 = vpop.f32.mrf.mxu0
  %3161 = vmatprep.mubr.bf16.mxu0 0
  %3162 = vmatmul.mubr.bf16.gmra.mxu0 %v3026
  %v3163 = vpop.f32.mrf.mxu0
  %v3164 = vadd.f32 0.0, %v3163
  %v3165 = vpop.f32.mrf.mxu0
  %v3166 = vpop.f32.mrf.mxu0
  %v3167 = vadd.f32 0.0, %v3166
  %v3168 = vpop.f32.mrf.mxu0
  %3169 = vmatprep.mubr.bf16.mxu0 0
  %3170 = vmatmul.mubr.bf16.gmra.mxu0 %v3029
  %v3171 = vpop.f32.mrf.mxu0
  %v3172 = vadd.f32 0.0, %v3171
  %v3173 = vpop.f32.mrf.mxu0
  %v3174 = vpop.f32.mrf.mxu0
  %v3175 = vadd.f32 0.0, %v3174
  %v3176 = vpop.f32.mrf.mxu0
  %3177 = vmatprep.mubr.bf16.mxu0 0
  %3178 = vmatmul.mubr.bf16.gmra.mxu0 %v3032
  %v3179 = vpop.f32.mrf.mxu0
  %v3180 = vadd.f32 0.0, %v3179
  %v3181 = vpop.f32.mrf.mxu0
  %v3182 = vpop.f32.mrf.mxu0
  %v3183 = vadd.f32 0.0, %v3182
  %v3184 = vpop.f32.mrf.mxu0
  %3185 = vmatprep.mubr.bf16.mxu0 0
  %3186 = vmatmul.mubr.bf16.gmra.mxu0 %v3035
  %v3187 = vpop.f32.mrf.mxu0
  %v3188 = vadd.f32 0.0, %v3187
  %v3189 = vpop.f32.mrf.mxu0
  %v3190 = vpop.f32.mrf.mxu0
  %v3191 = vadd.f32 0.0, %v3190
  %v3192 = vpop.f32.mrf.mxu0
  %3193 = vmatprep.mubr.bf16.mxu0 0
  %3194 = vmatmul.mubr.bf16.gmra.mxu0 %v3038
  %v3195 = vpop.f32.mrf.mxu0
  %v3196 = vadd.f32 0.0, %v3195
  %v3197 = vpop.f32.mrf.mxu0
  %v3198 = vpop.f32.mrf.mxu0
  %v3199 = vadd.f32 0.0, %v3198
  %v3200 = vpop.f32.mrf.mxu0
  %3201 = vmatprep.mubr.bf16.mxu0 0
  %3202 = vmatmul.mubr.bf16.gmra.mxu0 %v3041
  %v3203 = vpop.f32.mrf.mxu0
  %v3204 = vadd.f32 0.0, %v3203
  %v3205 = vpop.f32.mrf.mxu0
  %v3206 = vpop.f32.mrf.mxu0
  %v3207 = vadd.f32 0.0, %v3206
  %v3208 = vpop.f32.mrf.mxu0
  %3209 = vmatprep.mubr.bf16.mxu0 0
  %3210 = vmatmul.mubr.bf16.gmra.mxu0 %v3044
  %v3211 = vpop.f32.mrf.mxu0
  %v3212 = vadd.f32 0.0, %v3211
  %v3213 = vpop.f32.mrf.mxu0
  %v3214 = vpop.f32.mrf.mxu0
  %v3215 = vadd.f32 0.0, %v3214
  %v3216 = vpop.f32.mrf.mxu0
  %3217 = vmatprep.mubr.bf16.mxu0 0
  %3218 = vmatmul.mubr.bf16.gmra.mxu0 %v3047
  %v3219 = vpop.f32.mrf.mxu0
  %v3220 = vadd.f32 0.0, %v3219
  %v3221 = vpop.f32.mrf.mxu0
  %v3222 = vpop.f32.mrf.mxu0
  %v3223 = vadd.f32 0.0, %v3222
  %v3224 = vpop.f32.mrf.mxu0
  %3225 = vmatprep.mubr.bf16.mxu0 0
  %3226 = vmatmul.mubr.bf16.gmra.mxu0 %v3050
  %v3227 = vpop.f32.mrf.mxu0
  %v3228 = vadd.f32 0.0, %v3227
  %v3229 = vpop.f32.mrf.mxu0
  %v3230 = vpop.f32.mrf.mxu0
  %v3231 = vadd.f32 0.0, %v3230
  %v3232 = vpop.f32.mrf.mxu0
  %3233 = vmatprep.mubr.bf16.mxu0 0
  %3234 = vmatmul.mubr.bf16.gmra.mxu0 %v3053
  %v3235 = vpop.f32.mrf.mxu0
  %v3236 = vadd.f32 0.0, %v3235
  %v3237 = vpop.f32.mrf.mxu0
  %v3238 = vpop.f32.mrf.mxu0
  %v3239 = vadd.f32 0.0, %v3238
  %v3240 = vpop.f32.mrf.mxu0
  %3241 = vmatprep.mubr.bf16.mxu0 0
  %3242 = vmatmul.mubr.bf16.gmra.mxu0 %v3056
  %v3243 = vpop.f32.mrf.mxu0
  %v3244 = vadd.f32 0.0, %v3243
  %v3245 = vpop.f32.mrf.mxu0
  %v3246 = vpop.f32.mrf.mxu0
  %v3247 = vadd.f32 0.0, %v3246
  %v3248 = vpop.f32.mrf.mxu0
  %3249 = vmatprep.mubr.bf16.mxu0 0
  %3250 = vmatmul.mubr.bf16.gmra.mxu0 %v3059
  %v3251 = vpop.f32.mrf.mxu0
  %v3252 = vadd.f32 0.0, %v3251
  %v3253 = vpop.f32.mrf.mxu0
  %v3254 = vpop.f32.mrf.mxu0
  %v3255 = vadd.f32 0.0, %v3254
  %v3256 = vpop.f32.mrf.mxu0
  %3257 = vmatprep.mubr.bf16.mxu0 0
  %3258 = vmatmul.mubr.bf16.gmra.mxu0 %v3062
  %v3259 = vpop.f32.mrf.mxu0
  %v3260 = vadd.f32 0.0, %v3259
  %v3261 = vpop.f32.mrf.mxu0
  %v3262 = vpop.f32.mrf.mxu0
  %v3263 = vadd.f32 0.0, %v3262
  %v3264 = vpop.f32.mrf.mxu0
  %3265 = vmatprep.mubr.bf16.mxu0 0
  %3266 = vmatmul.mubr.bf16.gmra.mxu0 %v3065
  %v3267 = vpop.f32.mrf.mxu0
  %v3268 = vadd.f32 0.0, %v3267
  %v3269 = vpop.f32.mrf.mxu0
  %v3270 = vpop.f32.mrf.mxu0
  %v3271 = vadd.f32 0.0, %v3270
  %v3272 = vpop.f32.mrf.mxu0
  %3273 = vmatprep.mubr.bf16.mxu0 0
  %3274 = vmatmul.mubr.bf16.gmra.mxu0 %v3068
  %v3275 = vpop.f32.mrf.mxu0
  %v3276 = vadd.f32 0.0, %v3275
  %v3277 = vpop.f32.mrf.mxu0
  %v3278 = vpop.f32.mrf.mxu0
  %v3279 = vadd.f32 0.0, %v3278
  %v3280 = vpop.f32.mrf.mxu0
  %3281 = vmatprep.mubr.bf16.mxu0 0
  %3282 = vmatmul.mubr.bf16.gmra.mxu0 %v3071
  %v3283 = vpop.f32.mrf.mxu0
  %v3284 = vadd.f32 0.0, %v3283
  %v3285 = vpop.f32.mrf.mxu0
  %v3286 = vpop.f32.mrf.mxu0
  %v3287 = vadd.f32 0.0, %v3286
  %v3288 = vpop.f32.mrf.mxu0
  %3289 = vmatprep.mubr.bf16.mxu0 0
  %3290 = vmatmul.mubr.bf16.gmra.mxu0 %v3074
  %v3291 = vpop.f32.mrf.mxu0
  %v3292 = vadd.f32 0.0, %v3291
  %v3293 = vpop.f32.mrf.mxu0
  %v3294 = vpop.f32.mrf.mxu0
  %v3295 = vadd.f32 0.0, %v3294
  %v3296 = vpop.f32.mrf.mxu0
  %3297 = vmatprep.mubr.bf16.mxu0 0
  %3298 = vmatmul.mubr.bf16.gmra.mxu0 %v3077
  %v3299 = vpop.f32.mrf.mxu0
  %v3300 = vadd.f32 0.0, %v3299
  %v3301 = vpop.f32.mrf.mxu0
  %v3302 = vpop.f32.mrf.mxu0
  %v3303 = vadd.f32 0.0, %v3302
  %v3304 = vpop.f32.mrf.mxu0
  %3305 = vmatprep.mubr.bf16.mxu0 0
  %3306 = vmatmul.mubr.bf16.gmra.mxu0 %v3080
  %v3307 = vpop.f32.mrf.mxu0
  %v3308 = vadd.f32 0.0, %v3307
  %v3309 = vpop.f32.mrf.mxu0
  %v3310 = vpop.f32.mrf.mxu0
  %v3311 = vadd.f32 0.0, %v3310
  %v3312 = vpop.f32.mrf.mxu0
  %3313 = vmatprep.mubr.bf16.mxu0 0
  %3314 = vmatmul.mubr.bf16.gmra.mxu0 %v3083
  %v3315 = vpop.f32.mrf.mxu0
  %v3316 = vadd.f32 0.0, %v3315
  %v3317 = vpop.f32.mrf.mxu0
  %v3318 = vpop.f32.mrf.mxu0
  %v3319 = vadd.f32 0.0, %v3318
  %v3320 = vpop.f32.mrf.mxu0
  %3321 = vmatprep.mubr.bf16.mxu0 0
  %3322 = vmatmul.mubr.bf16.gmra.mxu0 %v3086
  %v3323 = vpop.f32.mrf.mxu0
  %v3324 = vadd.f32 0.0, %v3323
  %v3325 = vpop.f32.mrf.mxu0
  %v3326 = vpop.f32.mrf.mxu0
  %v3327 = vadd.f32 0.0, %v3326
  %v3328 = vpop.f32.mrf.mxu0
  %3329 = vmatprep.mubr.bf16.mxu0 0
  %3330 = vmatmul.mubr.bf16.gmra.mxu0 %v3089
  %v3331 = vpop.f32.mrf.mxu0
  %v3332 = vadd.f32 0.0, %v3331
  %v3333 = vpop.f32.mrf.mxu0
  %v3334 = vpop.f32.mrf.mxu0
  %v3335 = vadd.f32 0.0, %v3334
  %v3336 = vpop.f32.mrf.mxu0
  %3337 = vmatprep.mubr.bf16.mxu0 0
  %3338 = vmatmul.mubr.bf16.gmra.mxu0 %v3092
  %v3339 = vpop.f32.mrf.mxu0
  %v3340 = vadd.f32 0.0, %v3339
  %v3341 = vpop.f32.mrf.mxu0
  %v3342 = vpop.f32.mrf.mxu0
  %v3343 = vadd.f32 0.0, %v3342
  %v3344 = vpop.f32.mrf.mxu0
  %3345 = vmatprep.mubr.bf16.mxu0 0
  %3346 = vmatmul.mubr.bf16.gmra.mxu0 %v3095
  %v3347 = vpop.f32.mrf.mxu0
  %v3348 = vadd.f32 0.0, %v3347
  %v3349 = vpop.f32.mrf.mxu0
  %v3350 = vpop.f32.mrf.mxu0
  %v3351 = vadd.f32 0.0, %v3350
  %v3352 = vpop.f32.mrf.mxu0
  %3353 = vmatprep.mubr.bf16.mxu0 0
  %3354 = vmatmul.mubr.bf16.gmra.mxu0 %v3098
  %v3355 = vpop.f32.mrf.mxu0
  %v3356 = vadd.f32 0.0, %v3355
  %v3357 = vpop.f32.mrf.mxu0
  %v3358 = vpop.f32.mrf.mxu0
  %v3359 = vadd.f32 0.0, %v3358
  %v3360 = vpop.f32.mrf.mxu0
  %3361 = vmatprep.mubr.bf16.mxu0 0
  %3362 = vmatmul.mubr.bf16.gmra.mxu0 %v3101
  %v3363 = vpop.f32.mrf.mxu0
  %v3364 = vadd.f32 0.0, %v3363
  %v3365 = vpop.f32.mrf.mxu0
  %v3366 = vpop.f32.mrf.mxu0
  %v3367 = vadd.f32 0.0, %v3366
  %v3368 = vpop.f32.mrf.mxu0
  %3369 = vmatprep.mubr.bf16.mxu0 0
  %3370 = vmatmul.mubr.bf16.gmra.mxu0 %v3104
  %v3371 = vpop.f32.mrf.mxu0
  %v3372 = vadd.f32 0.0, %v3371
  %v3373 = vpop.f32.mrf.mxu0
  %v3374 = vpop.f32.mrf.mxu0
  %v3375 = vadd.f32 0.0, %v3374
  %v3376 = vpop.f32.mrf.mxu0
  %3377 = vmatprep.mubr.bf16.mxu0 0
  %3378 = vmatmul.mubr.bf16.gmra.mxu0 %v3107
  %v3379 = vpop.f32.mrf.mxu0
  %v3380 = vadd.f32 0.0, %v3379
  %v3381 = vpop.f32.mrf.mxu0
  %v3382 = vpop.f32.mrf.mxu0
  %v3383 = vadd.f32 0.0, %v3382
  %v3384 = vpop.f32.mrf.mxu0
  %3385 = vmatprep.mubr.bf16.mxu0 0
  %3386 = vmatmul.mubr.bf16.gmra.mxu0 %v3110
  %v3387 = vpop.f32.mrf.mxu0
  %v3388 = vadd.f32 0.0, %v3387
  %v3389 = vpop.f32.mrf.mxu0
  %v3390 = vpop.f32.mrf.mxu0
  %v3391 = vadd.f32 0.0, %v3390
  %v3392 = vpop.f32.mrf.mxu0
  %3393 = vmatprep.mubr.bf16.mxu0 0
  %3394 = vmatmul.mubr.bf16.gmra.mxu0 %v3113
  %v3395 = vpop.f32.mrf.mxu0
  %v3396 = vadd.f32 0.0, %v3395
  %v3397 = vpop.f32.mrf.mxu0
  %v3398 = vpop.f32.mrf.mxu0
  %v3399 = vadd.f32 0.0, %v3398
  %v3400 = vpop.f32.mrf.mxu0
  %3401 = vmatprep.mubr.bf16.mxu0 0
  %3402 = vmatmul.mubr.bf16.gmra.mxu0 %v3116
  %v3403 = vpop.f32.mrf.mxu0
  %v3404 = vadd.f32 0.0, %v3403
  %v3405 = vpop.f32.mrf.mxu0
  %v3406 = vpop.f32.mrf.mxu0
  %v3407 = vadd.f32 0.0, %v3406
  %v3408 = vpop.f32.mrf.mxu0
  %3409 = vdwg.mxu0
  %v3410 = vadd.f32 %v2731, %v3156
  %v3411 = vadd.f32 %v2732, %v3159
  %v3412 = vadd.f32 %v2733, %v3164
  %v3413 = vadd.f32 %v2734, %v3167
  %v3414 = vadd.f32 %v2735, %v3172
  %v3415 = vadd.f32 %v2736, %v3175
  %v3416 = vadd.f32 %v2737, %v3180
  %v3417 = vadd.f32 %v2738, %v3183
  %v3418 = vadd.f32 %v2739, %v3188
  %v3419 = vadd.f32 %v2740, %v3191
  %v3420 = vadd.f32 %v2741, %v3196
  %v3421 = vadd.f32 %v2742, %v3199
  %v3422 = vadd.f32 %v2743, %v3204
  %v3423 = vadd.f32 %v2744, %v3207
  %v3424 = vadd.f32 %v2745, %v3212
  %v3425 = vadd.f32 %v2746, %v3215
  %v3426 = vadd.f32 %v2747, %v3220
  %v3427 = vadd.f32 %v2748, %v3223
  %v3428 = vadd.f32 %v2749, %v3228
  %v3429 = vadd.f32 %v2750, %v3231
  %v3430 = vadd.f32 %v2751, %v3236
  %v3431 = vadd.f32 %v2752, %v3239
  %v3432 = vadd.f32 %v2753, %v3244
  %v3433 = vadd.f32 %v2754, %v3247
  %v3434 = vadd.f32 %v2755, %v3252
  %v3435 = vadd.f32 %v2756, %v3255
  %v3436 = vadd.f32 %v2757, %v3260
  %v3437 = vadd.f32 %v2758, %v3263
  %v3438 = vadd.f32 %v2759, %v3268
  %v3439 = vadd.f32 %v2760, %v3271
  %v3440 = vadd.f32 %v2761, %v3276
  %v3441 = vadd.f32 %v2762, %v3279
  %v3442 = vadd.f32 %v2763, %v3284
  %v3443 = vadd.f32 %v2764, %v3287
  %v3444 = vadd.f32 %v2765, %v3292
  %v3445 = vadd.f32 %v2766, %v3295
  %v3446 = vadd.f32 %v2767, %v3300
  %v3447 = vadd.f32 %v2768, %v3303
  %v3448 = vadd.f32 %v2769, %v3308
  %v3449 = vadd.f32 %v2770, %v3311
  %v3450 = vadd.f32 %v2771, %v3316
  %v3451 = vadd.f32 %v2772, %v3319
  %v3452 = vadd.f32 %v2773, %v3324
  %v3453 = vadd.f32 %v2774, %v3327
  %v3454 = vadd.f32 %v2775, %v3332
  %v3455 = vadd.f32 %v2776, %v3335
  %v3456 = vadd.f32 %v2777, %v3340
  %v3457 = vadd.f32 %v2778, %v3343
  %v3458 = vadd.f32 %v2779, %v3348
  %v3459 = vadd.f32 %v2780, %v3351
  %v3460 = vadd.f32 %v2781, %v3356
  %v3461 = vadd.f32 %v2782, %v3359
  %v3462 = vadd.f32 %v2783, %v3364
  %v3463 = vadd.f32 %v2784, %v3367
  %v3464 = vadd.f32 %v2785, %v3372
  %v3465 = vadd.f32 %v2786, %v3375
  %v3466 = vadd.f32 %v2787, %v3380
  %v3467 = vadd.f32 %v2788, %v3383
  %v3468 = vadd.f32 %v2789, %v3388
  %v3469 = vadd.f32 %v2790, %v3391
  %v3470 = vadd.f32 %v2791, %v3396
  %v3471 = vadd.f32 %v2792, %v3399
  %v3472 = vadd.f32 %v2793, %v3404
  %v3473 = vadd.f32 %v2794, %v3407
  %v3474 = vld [vmem:[%s2795] sm:$0xf]
  %v3475 = vld [vmem:[%s2795 + $0x4] sm:$0xf]
  %v3476 = vld [vmem:[%s2795 + $0x8] sm:$0x1]
  %v3477 = vld [vmem:[%s2795 + $0xc] sm:$0xf]
  %v3478 = vld [vmem:[%s2795 + $0x10] sm:$0xf]
  %v3479 = vld [vmem:[%s2795 + $0x14] sm:$0x1]
  %v3480 = vld [vmem:[%s2795 + $0x18] sm:$0xf]
  %v3481 = vld [vmem:[%s2795 + $0x1c] sm:$0xf]
  %v3482 = vld [vmem:[%s2795 + $0x20] sm:$0x1]
  %v3483 = vld [vmem:[%s2795 + $0x24] sm:$0xf]
  %v3484 = vld [vmem:[%s2795 + $0x28] sm:$0xf]
  %v3485 = vld [vmem:[%s2795 + $0x2c] sm:$0x1]
  %v3486 = vld [vmem:[%s2795 + $0x30] sm:$0xf]
  %v3487 = vld [vmem:[%s2795 + $0x34] sm:$0xf]
  %v3488 = vld [vmem:[%s2795 + $0x38] sm:$0x1]
  %v3489 = vld [vmem:[%s2795 + $0x3c] sm:$0xf]
  %v3490 = vld [vmem:[%s2795 + $0x40] sm:$0xf]
  %v3491 = vld [vmem:[%s2795 + $0x44] sm:$0x1]
  %v3492 = vld [vmem:[%s2795 + $0x48] sm:$0xf]
  %v3493 = vld [vmem:[%s2795 + $0x4c] sm:$0xf]
  %v3494 = vld [vmem:[%s2795 + $0x50] sm:$0x1]
  %v3495 = vld [vmem:[%s2795 + $0x54] sm:$0xf]
  %v3496 = vld [vmem:[%s2795 + $0x58] sm:$0xf]
  %v3497 = vld [vmem:[%s2795 + $0x5c] sm:$0x1]
  %v3498 = vld [vmem:[%s2795 + $0x60] sm:$0xf]
  %v3499 = vld [vmem:[%s2795 + $0x64] sm:$0xf]
  %v3500 = vld [vmem:[%s2795 + $0x68] sm:$0x1]
  %v3501 = vld [vmem:[%s2795 + $0x6c] sm:$0xf]
  %v3502 = vld [vmem:[%s2795 + $0x70] sm:$0xf]
  %v3503 = vld [vmem:[%s2795 + $0x74] sm:$0x1]
  %v3504 = vld [vmem:[%s2795 + $0x78] sm:$0xf]
  %v3505 = vld [vmem:[%s2795 + $0x7c] sm:$0xf]
  %v3506 = vld [vmem:[%s2795 + $0x80] sm:$0x1]
  %v3507 = vld [vmem:[%s2795 + $0x84] sm:$0xf]
  %v3508 = vld [vmem:[%s2795 + $0x88] sm:$0xf]
  %v3509 = vld [vmem:[%s2795 + $0x8c] sm:$0x1]
  %v3510 = vld [vmem:[%s2795 + $0x90] sm:$0xf]
  %v3511 = vld [vmem:[%s2795 + $0x94] sm:$0xf]
  %v3512 = vld [vmem:[%s2795 + $0x98] sm:$0x1]
  %v3513 = vld [vmem:[%s2795 + $0x9c] sm:$0xf]
  %v3514 = vld [vmem:[%s2795 + $0xa0] sm:$0xf]
  %v3515 = vld [vmem:[%s2795 + $0xa4] sm:$0x1]
  %v3516 = vld [vmem:[%s2795 + $0xa8] sm:$0xf]
  %v3517 = vld [vmem:[%s2795 + $0xac] sm:$0xf]
  %v3518 = vld [vmem:[%s2795 + $0xb0] sm:$0x1]
  %v3519 = vld [vmem:[%s2795 + $0xb4] sm:$0xf]
  %v3520 = vld [vmem:[%s2795 + $0xb8] sm:$0xf]
  %v3521 = vld [vmem:[%s2795 + $0xbc] sm:$0x1]
  %v3522 = vld [vmem:[%s2795 + $0xd8] sm:$0xf]
  %v3523 = vld [vmem:[%s2795 + $0xdc] sm:$0xf]
  %v3524 = vld [vmem:[%s2795 + $0xe0] sm:$0x1]
  %v3525 = vld [vmem:[%s2795 + $0xe4] sm:$0xf]
  %v3526 = vld [vmem:[%s2795 + $0xe8] sm:$0xf]
  %v3527 = vld [vmem:[%s2795 + $0xec] sm:$0x1]
  %v3528 = vld [vmem:[%s2795 + $0xf0] sm:$0xf]
  %v3529 = vld [vmem:[%s2795 + $0xf4] sm:$0xf]
  %v3530 = vld [vmem:[%s2795 + $0xf8] sm:$0x1]
  %v3531 = vld [vmem:[%s2795 + $0xfc] sm:$0xf]
  %v3532 = vld [vmem:[%s2795 + $0x100] sm:$0xf]
  %v3533 = vld [vmem:[%s2795 + $0x104] sm:$0x1]
  %v3534 = vld [vmem:[%s2795 + $0x108] sm:$0xf]
  %v3535 = vld [vmem:[%s2795 + $0x10c] sm:$0xf]
  %v3536 = vld [vmem:[%s2795 + $0x110] sm:$0x1]
  %v3537 = vld [vmem:[%s2795 + $0x114] sm:$0xf]
  %v3538 = vld [vmem:[%s2795 + $0x118] sm:$0xf]
  %v3539 = vld [vmem:[%s2795 + $0x11c] sm:$0x1]
  %v3540 = vld [vmem:[%s2795 + $0x120] sm:$0xf]
  %v3541 = vld [vmem:[%s2795 + $0x124] sm:$0xf]
  %v3542 = vld [vmem:[%s2795 + $0x128] sm:$0x1]
  %v3543 = vld [vmem:[%s2795 + $0x12c] sm:$0xf]
  %v3544 = vld [vmem:[%s2795 + $0x130] sm:$0xf]
  %v3545 = vld [vmem:[%s2795 + $0x134] sm:$0x1]
  %v3546 = vld [vmem:[%s2795 + $0x138] sm:$0xf]
  %v3547 = vld [vmem:[%s2795 + $0x13c] sm:$0xf]
  %v3548 = vld [vmem:[%s2795 + $0x140] sm:$0x1]
  %v3549 = vld [vmem:[%s2795 + $0x144] sm:$0xf]
  %v3550 = vld [vmem:[%s2795 + $0x148] sm:$0xf]
  %v3551 = vld [vmem:[%s2795 + $0x14c] sm:$0x1]
  %v3552 = vld [vmem:[%s2795 + $0x150] sm:$0xf]
  %v3553 = vld [vmem:[%s2795 + $0x154] sm:$0xf]
  %v3554 = vld [vmem:[%s2795 + $0x158] sm:$0x1]
  %v3555 = vld [vmem:[%s2795 + $0x15c] sm:$0xf]
  %v3556 = vld [vmem:[%s2795 + $0x160] sm:$0xf]
  %v3557 = vld [vmem:[%s2795 + $0x164] sm:$0x1]
  %v3558 = vld [vmem:[%s2795 + $0x168] sm:$0xf]
  %v3559 = vld [vmem:[%s2795 + $0x16c] sm:$0xf]
  %v3560 = vld [vmem:[%s2795 + $0x170] sm:$0x1]
  %v3561 = vld [vmem:[%s2795 + $0x174] sm:$0xf]
  %v3562 = vld [vmem:[%s2795 + $0x178] sm:$0xf]
  %v3563 = vld [vmem:[%s2795 + $0x17c] sm:$0x1]
  %v3564 = vld [vmem:[%s2795 + $0x180] sm:$0xf]
  %v3565 = vld [vmem:[%s2795 + $0x184] sm:$0xf]
  %v3566 = vld [vmem:[%s2795 + $0x188] sm:$0x1]
  %v3567 = vld [vmem:[%s2795 + $0x18c] sm:$0xf]
  %v3568 = vld [vmem:[%s2795 + $0x190] sm:$0xf]
  %v3569 = vld [vmem:[%s2795 + $0x194] sm:$0x1]
  %v3571 = vshrl.u32 %v3474, 16
  %v3573 = vrot.slane %v3571, 4
  %v3574 = vshll.u32 %v3474, 16
  %v3576 = vrot.slane %v3574, 5
  %v3577 = vor.u32 %v3573, %v3576
  %v3578 = vrot.slane %v3577, 4
  %v3580 = vshll.u32 %v3475, 16
  %v3582 = vrot.slane %v3580, 5
  %v3583 = vsel %vm117, %v3578, %v3582
  %v3584 = vshrl.u32 %v3475, 16
  %v3586 = vrot.slane %v3584, 4
  %v3587 = vor.u32 %v3586, %v3582
  %v3588 = vrot.slane %v3587, 4
  %v3590 = vshll.u32 %v3476, 16
  %v3592 = vrot.slane %v3590, 5
  %v3593 = vsel %vm117, %v3588, %v3592
  %v3595 = vshrl.u32 %v3477, 16
  %v3597 = vrot.slane %v3595, 4
  %v3598 = vshll.u32 %v3477, 16
  %v3600 = vrot.slane %v3598, 5
  %v3601 = vor.u32 %v3597, %v3600
  %v3602 = vrot.slane %v3601, 4
  %v3604 = vshll.u32 %v3478, 16
  %v3606 = vrot.slane %v3604, 5
  %v3607 = vsel %vm117, %v3602, %v3606
  %v3608 = vshrl.u32 %v3478, 16
  %v3610 = vrot.slane %v3608, 4
  %v3611 = vor.u32 %v3610, %v3606
  %v3612 = vrot.slane %v3611, 4
  %v3614 = vshll.u32 %v3479, 16
  %v3616 = vrot.slane %v3614, 5
  %v3617 = vsel %vm117, %v3612, %v3616
  %v3619 = vshrl.u32 %v3480, 16
  %v3621 = vrot.slane %v3619, 4
  %v3622 = vshll.u32 %v3480, 16
  %v3624 = vrot.slane %v3622, 5
  %v3625 = vor.u32 %v3621, %v3624
  %v3626 = vrot.slane %v3625, 4
  %v3628 = vshll.u32 %v3481, 16
  %v3630 = vrot.slane %v3628, 5
  %v3631 = vsel %vm117, %v3626, %v3630
  %v3632 = vshrl.u32 %v3481, 16
  %v3634 = vrot.slane %v3632, 4
  %v3635 = vor.u32 %v3634, %v3630
  %v3636 = vrot.slane %v3635, 4
  %v3638 = vshll.u32 %v3482, 16
  %v3640 = vrot.slane %v3638, 5
  %v3641 = vsel %vm117, %v3636, %v3640
  %v3643 = vshrl.u32 %v3483, 16
  %v3645 = vrot.slane %v3643, 4
  %v3646 = vshll.u32 %v3483, 16
  %v3648 = vrot.slane %v3646, 5
  %v3649 = vor.u32 %v3645, %v3648
  %v3650 = vrot.slane %v3649, 4
  %v3652 = vshll.u32 %v3484, 16
  %v3654 = vrot.slane %v3652, 5
  %v3655 = vsel %vm117, %v3650, %v3654
  %v3656 = vshrl.u32 %v3484, 16
  %v3658 = vrot.slane %v3656, 4
  %v3659 = vor.u32 %v3658, %v3654
  %v3660 = vrot.slane %v3659, 4
  %v3662 = vshll.u32 %v3485, 16
  %v3664 = vrot.slane %v3662, 5
  %v3665 = vsel %vm117, %v3660, %v3664
  %v3667 = vshrl.u32 %v3486, 16
  %v3669 = vrot.slane %v3667, 4
  %v3670 = vshll.u32 %v3486, 16
  %v3672 = vrot.slane %v3670, 5
  %v3673 = vor.u32 %v3669, %v3672
  %v3674 = vrot.slane %v3673, 4
  %v3676 = vshll.u32 %v3487, 16
  %v3678 = vrot.slane %v3676, 5
  %v3679 = vsel %vm117, %v3674, %v3678
  %v3680 = vshrl.u32 %v3487, 16
  %v3682 = vrot.slane %v3680, 4
  %v3683 = vor.u32 %v3682, %v3678
  %v3684 = vrot.slane %v3683, 4
  %v3686 = vshll.u32 %v3488, 16
  %v3688 = vrot.slane %v3686, 5
  %v3689 = vsel %vm117, %v3684, %v3688
  %v3691 = vshrl.u32 %v3489, 16
  %v3693 = vrot.slane %v3691, 4
  %v3694 = vshll.u32 %v3489, 16
  %v3696 = vrot.slane %v3694, 5
  %v3697 = vor.u32 %v3693, %v3696
  %v3698 = vrot.slane %v3697, 4
  %v3700 = vshll.u32 %v3490, 16
  %v3702 = vrot.slane %v3700, 5
  %v3703 = vsel %vm117, %v3698, %v3702
  %v3704 = vshrl.u32 %v3490, 16
  %v3706 = vrot.slane %v3704, 4
  %v3707 = vor.u32 %v3706, %v3702
  %v3708 = vrot.slane %v3707, 4
  %v3710 = vshll.u32 %v3491, 16
  %v3712 = vrot.slane %v3710, 5
  %v3713 = vsel %vm117, %v3708, %v3712
  %v3715 = vshrl.u32 %v3492, 16
  %v3717 = vrot.slane %v3715, 4
  %v3718 = vshll.u32 %v3492, 16
  %v3720 = vrot.slane %v3718, 5
  %v3721 = vor.u32 %v3717, %v3720
  %v3722 = vrot.slane %v3721, 4
  %v3724 = vshll.u32 %v3493, 16
  %v3726 = vrot.slane %v3724, 5
  %v3727 = vsel %vm117, %v3722, %v3726
  %v3728 = vshrl.u32 %v3493, 16
  %v3730 = vrot.slane %v3728, 4
  %v3731 = vor.u32 %v3730, %v3726
  %v3732 = vrot.slane %v3731, 4
  %v3734 = vshll.u32 %v3494, 16
  %v3736 = vrot.slane %v3734, 5
  %v3737 = vsel %vm117, %v3732, %v3736
  %v3739 = vshrl.u32 %v3495, 16
  %v3741 = vrot.slane %v3739, 4
  %v3742 = vshll.u32 %v3495, 16
  %v3744 = vrot.slane %v3742, 5
  %v3745 = vor.u32 %v3741, %v3744
  %v3746 = vrot.slane %v3745, 4
  %v3748 = vshll.u32 %v3496, 16
  %v3750 = vrot.slane %v3748, 5
  %v3751 = vsel %vm117, %v3746, %v3750
  %v3752 = vshrl.u32 %v3496, 16
  %v3754 = vrot.slane %v3752, 4
  %v3755 = vor.u32 %v3754, %v3750
  %v3756 = vrot.slane %v3755, 4
  %v3758 = vshll.u32 %v3497, 16
  %v3760 = vrot.slane %v3758, 5
  %v3761 = vsel %vm117, %v3756, %v3760
  %v3763 = vshrl.u32 %v3498, 16
  %v3765 = vrot.slane %v3763, 4
  %v3766 = vshll.u32 %v3498, 16
  %v3768 = vrot.slane %v3766, 5
  %v3769 = vor.u32 %v3765, %v3768
  %v3770 = vrot.slane %v3769, 4
  %v3772 = vshll.u32 %v3499, 16
  %v3774 = vrot.slane %v3772, 5
  %v3775 = vsel %vm117, %v3770, %v3774
  %v3776 = vshrl.u32 %v3499, 16
  %v3778 = vrot.slane %v3776, 4
  %v3779 = vor.u32 %v3778, %v3774
  %v3780 = vrot.slane %v3779, 4
  %v3782 = vshll.u32 %v3500, 16
  %v3784 = vrot.slane %v3782, 5
  %v3785 = vsel %vm117, %v3780, %v3784
  %v3787 = vshrl.u32 %v3501, 16
  %v3789 = vrot.slane %v3787, 4
  %v3790 = vshll.u32 %v3501, 16
  %v3792 = vrot.slane %v3790, 5
  %v3793 = vor.u32 %v3789, %v3792
  %v3794 = vrot.slane %v3793, 4
  %v3796 = vshll.u32 %v3502, 16
  %v3798 = vrot.slane %v3796, 5
  %v3799 = vsel %vm117, %v3794, %v3798
  %v3800 = vshrl.u32 %v3502, 16
  %v3802 = vrot.slane %v3800, 4
  %v3803 = vor.u32 %v3802, %v3798
  %v3804 = vrot.slane %v3803, 4
  %v3806 = vshll.u32 %v3503, 16
  %v3808 = vrot.slane %v3806, 5
  %v3809 = vsel %vm117, %v3804, %v3808
  %v3811 = vshrl.u32 %v3504, 16
  %v3813 = vrot.slane %v3811, 4
  %v3814 = vshll.u32 %v3504, 16
  %v3816 = vrot.slane %v3814, 5
  %v3817 = vor.u32 %v3813, %v3816
  %v3818 = vrot.slane %v3817, 4
  %v3820 = vshll.u32 %v3505, 16
  %v3822 = vrot.slane %v3820, 5
  %v3823 = vsel %vm117, %v3818, %v3822
  %v3824 = vshrl.u32 %v3505, 16
  %v3826 = vrot.slane %v3824, 4
  %v3827 = vor.u32 %v3826, %v3822
  %v3828 = vrot.slane %v3827, 4
  %v3830 = vshll.u32 %v3506, 16
  %v3832 = vrot.slane %v3830, 5
  %v3833 = vsel %vm117, %v3828, %v3832
  %v3835 = vshrl.u32 %v3507, 16
  %v3837 = vrot.slane %v3835, 4
  %v3838 = vshll.u32 %v3507, 16
  %v3840 = vrot.slane %v3838, 5
  %v3841 = vor.u32 %v3837, %v3840
  %v3842 = vrot.slane %v3841, 4
  %v3844 = vshll.u32 %v3508, 16
  %v3846 = vrot.slane %v3844, 5
  %v3847 = vsel %vm117, %v3842, %v3846
  %v3848 = vshrl.u32 %v3508, 16
  %v3850 = vrot.slane %v3848, 4
  %v3851 = vor.u32 %v3850, %v3846
  %v3852 = vrot.slane %v3851, 4
  %v3854 = vshll.u32 %v3509, 16
  %v3856 = vrot.slane %v3854, 5
  %v3857 = vsel %vm117, %v3852, %v3856
  %v3859 = vshrl.u32 %v3510, 16
  %v3861 = vrot.slane %v3859, 4
  %v3862 = vshll.u32 %v3510, 16
  %v3864 = vrot.slane %v3862, 5
  %v3865 = vor.u32 %v3861, %v3864
  %v3866 = vrot.slane %v3865, 4
  %v3868 = vshll.u32 %v3511, 16
  %v3870 = vrot.slane %v3868, 5
  %v3871 = vsel %vm117, %v3866, %v3870
  %v3872 = vshrl.u32 %v3511, 16
  %v3874 = vrot.slane %v3872, 4
  %v3875 = vor.u32 %v3874, %v3870
  %v3876 = vrot.slane %v3875, 4
  %v3878 = vshll.u32 %v3512, 16
  %v3880 = vrot.slane %v3878, 5
  %v3881 = vsel %vm117, %v3876, %v3880
  %v3883 = vshrl.u32 %v3513, 16
  %v3885 = vrot.slane %v3883, 4
  %v3886 = vshll.u32 %v3513, 16
  %v3888 = vrot.slane %v3886, 5
  %v3889 = vor.u32 %v3885, %v3888
  %v3890 = vrot.slane %v3889, 4
  %v3892 = vshll.u32 %v3514, 16
  %v3894 = vrot.slane %v3892, 5
  %v3895 = vsel %vm117, %v3890, %v3894
  %v3896 = vshrl.u32 %v3514, 16
  %v3898 = vrot.slane %v3896, 4
  %v3899 = vor.u32 %v3898, %v3894
  %v3900 = vrot.slane %v3899, 4
  %v3902 = vshll.u32 %v3515, 16
  %v3904 = vrot.slane %v3902, 5
  %v3905 = vsel %vm117, %v3900, %v3904
  %v3907 = vshrl.u32 %v3516, 16
  %v3909 = vrot.slane %v3907, 4
  %v3910 = vshll.u32 %v3516, 16
  %v3912 = vrot.slane %v3910, 5
  %v3913 = vor.u32 %v3909, %v3912
  %v3914 = vrot.slane %v3913, 4
  %v3916 = vshll.u32 %v3517, 16
  %v3918 = vrot.slane %v3916, 5
  %v3919 = vsel %vm117, %v3914, %v3918
  %v3920 = vshrl.u32 %v3517, 16
  %v3922 = vrot.slane %v3920, 4
  %v3923 = vor.u32 %v3922, %v3918
  %v3924 = vrot.slane %v3923, 4
  %v3926 = vshll.u32 %v3518, 16
  %v3928 = vrot.slane %v3926, 5
  %v3929 = vsel %vm117, %v3924, %v3928
  %v3931 = vshrl.u32 %v3519, 16
  %v3933 = vrot.slane %v3931, 4
  %v3934 = vshll.u32 %v3519, 16
  %v3936 = vrot.slane %v3934, 5
  %v3937 = vor.u32 %v3933, %v3936
  %v3938 = vrot.slane %v3937, 4
  %v3940 = vshll.u32 %v3520, 16
  %v3942 = vrot.slane %v3940, 5
  %v3943 = vsel %vm117, %v3938, %v3942
  %v3944 = vshrl.u32 %v3520, 16
  %v3946 = vrot.slane %v3944, 4
  %v3947 = vor.u32 %v3946, %v3942
  %v3948 = vrot.slane %v3947, 4
  %v3950 = vshll.u32 %v3521, 16
  %v3952 = vrot.slane %v3950, 5
  %v3953 = vsel %vm117, %v3948, %v3952
  %v3955 = vshrl.u32 %v3522, 16
  %v3957 = vrot.slane %v3955, 4
  %v3958 = vshll.u32 %v3522, 16
  %v3960 = vrot.slane %v3958, 5
  %v3961 = vor.u32 %v3957, %v3960
  %v3962 = vrot.slane %v3961, 4
  %v3964 = vshll.u32 %v3523, 16
  %v3966 = vrot.slane %v3964, 5
  %v3967 = vsel %vm117, %v3962, %v3966
  %v3968 = vshrl.u32 %v3523, 16
  %v3970 = vrot.slane %v3968, 4
  %v3971 = vor.u32 %v3970, %v3966
  %v3972 = vrot.slane %v3971, 4
  %v3974 = vshll.u32 %v3524, 16
  %v3976 = vrot.slane %v3974, 5
  %v3977 = vsel %vm117, %v3972, %v3976
  %v3979 = vshrl.u32 %v3525, 16
  %v3981 = vrot.slane %v3979, 4
  %v3982 = vshll.u32 %v3525, 16
  %v3984 = vrot.slane %v3982, 5
  %v3985 = vor.u32 %v3981, %v3984
  %v3986 = vrot.slane %v3985, 4
  %v3988 = vshll.u32 %v3526, 16
  %v3990 = vrot.slane %v3988, 5
  %v3991 = vsel %vm117, %v3986, %v3990
  %v3992 = vshrl.u32 %v3526, 16
  %v3994 = vrot.slane %v3992, 4
  %v3995 = vor.u32 %v3994, %v3990
  %v3996 = vrot.slane %v3995, 4
  %v3998 = vshll.u32 %v3527, 16
  %v4000 = vrot.slane %v3998, 5
  %v4001 = vsel %vm117, %v3996, %v4000
  %v4003 = vshrl.u32 %v3528, 16
  %v4005 = vrot.slane %v4003, 4
  %v4006 = vshll.u32 %v3528, 16
  %v4008 = vrot.slane %v4006, 5
  %v4009 = vor.u32 %v4005, %v4008
  %v4010 = vrot.slane %v4009, 4
  %v4012 = vshll.u32 %v3529, 16
  %v4014 = vrot.slane %v4012, 5
  %v4015 = vsel %vm117, %v4010, %v4014
  %v4016 = vshrl.u32 %v3529, 16
  %v4018 = vrot.slane %v4016, 4
  %v4019 = vor.u32 %v4018, %v4014
  %v4020 = vrot.slane %v4019, 4
  %v4022 = vshll.u32 %v3530, 16
  %v4024 = vrot.slane %v4022, 5
  %v4025 = vsel %vm117, %v4020, %v4024
  %v4027 = vshrl.u32 %v3531, 16
  %v4029 = vrot.slane %v4027, 4
  %v4030 = vshll.u32 %v3531, 16
  %v4032 = vrot.slane %v4030, 5
  %v4033 = vor.u32 %v4029, %v4032
  %v4034 = vrot.slane %v4033, 4
  %v4036 = vshll.u32 %v3532, 16
  %v4038 = vrot.slane %v4036, 5
  %v4039 = vsel %vm117, %v4034, %v4038
  %v4040 = vshrl.u32 %v3532, 16
  %v4042 = vrot.slane %v4040, 4
  %v4043 = vor.u32 %v4042, %v4038
  %v4044 = vrot.slane %v4043, 4
  %v4046 = vshll.u32 %v3533, 16
  %v4048 = vrot.slane %v4046, 5
  %v4049 = vsel %vm117, %v4044, %v4048
  %v4051 = vshrl.u32 %v3534, 16
  %v4053 = vrot.slane %v4051, 4
  %v4054 = vshll.u32 %v3534, 16
  %v4056 = vrot.slane %v4054, 5
  %v4057 = vor.u32 %v4053, %v4056
  %v4058 = vrot.slane %v4057, 4
  %v4060 = vshll.u32 %v3535, 16
  %v4062 = vrot.slane %v4060, 5
  %v4063 = vsel %vm117, %v4058, %v4062
  %v4064 = vshrl.u32 %v3535, 16
  %v4066 = vrot.slane %v4064, 4
  %v4067 = vor.u32 %v4066, %v4062
  %v4068 = vrot.slane %v4067, 4
  %v4070 = vshll.u32 %v3536, 16
  %v4072 = vrot.slane %v4070, 5
  %v4073 = vsel %vm117, %v4068, %v4072
  %v4075 = vshrl.u32 %v3537, 16
  %v4077 = vrot.slane %v4075, 4
  %v4078 = vshll.u32 %v3537, 16
  %v4080 = vrot.slane %v4078, 5
  %v4081 = vor.u32 %v4077, %v4080
  %v4082 = vrot.slane %v4081, 4
  %v4084 = vshll.u32 %v3538, 16
  %v4086 = vrot.slane %v4084, 5
  %v4087 = vsel %vm117, %v4082, %v4086
  %v4088 = vshrl.u32 %v3538, 16
  %v4090 = vrot.slane %v4088, 4
  %v4091 = vor.u32 %v4090, %v4086
  %v4092 = vrot.slane %v4091, 4
  %v4094 = vshll.u32 %v3539, 16
  %v4096 = vrot.slane %v4094, 5
  %v4097 = vsel %vm117, %v4092, %v4096
  %v4099 = vshrl.u32 %v3540, 16
  %v4101 = vrot.slane %v4099, 4
  %v4102 = vshll.u32 %v3540, 16
  %v4104 = vrot.slane %v4102, 5
  %v4105 = vor.u32 %v4101, %v4104
  %v4106 = vrot.slane %v4105, 4
  %v4108 = vshll.u32 %v3541, 16
  %v4110 = vrot.slane %v4108, 5
  %v4111 = vsel %vm117, %v4106, %v4110
  %v4112 = vshrl.u32 %v3541, 16
  %v4114 = vrot.slane %v4112, 4
  %v4115 = vor.u32 %v4114, %v4110
  %v4116 = vrot.slane %v4115, 4
  %v4118 = vshll.u32 %v3542, 16
  %v4120 = vrot.slane %v4118, 5
  %v4121 = vsel %vm117, %v4116, %v4120
  %v4123 = vshrl.u32 %v3543, 16
  %v4125 = vrot.slane %v4123, 4
  %v4126 = vshll.u32 %v3543, 16
  %v4128 = vrot.slane %v4126, 5
  %v4129 = vor.u32 %v4125, %v4128
  %v4130 = vrot.slane %v4129, 4
  %v4132 = vshll.u32 %v3544, 16
  %v4134 = vrot.slane %v4132, 5
  %v4135 = vsel %vm117, %v4130, %v4134
  %v4136 = vshrl.u32 %v3544, 16
  %v4138 = vrot.slane %v4136, 4
  %v4139 = vor.u32 %v4138, %v4134
  %v4140 = vrot.slane %v4139, 4
  %v4142 = vshll.u32 %v3545, 16
  %v4144 = vrot.slane %v4142, 5
  %v4145 = vsel %vm117, %v4140, %v4144
  %v4147 = vshrl.u32 %v3546, 16
  %v4149 = vrot.slane %v4147, 4
  %v4150 = vshll.u32 %v3546, 16
  %v4152 = vrot.slane %v4150, 5
  %v4153 = vor.u32 %v4149, %v4152
  %v4154 = vrot.slane %v4153, 4
  %v4156 = vshll.u32 %v3547, 16
  %v4158 = vrot.slane %v4156, 5
  %v4159 = vsel %vm117, %v4154, %v4158
  %v4160 = vshrl.u32 %v3547, 16
  %v4162 = vrot.slane %v4160, 4
  %v4163 = vor.u32 %v4162, %v4158
  %v4164 = vrot.slane %v4163, 4
  %v4166 = vshll.u32 %v3548, 16
  %v4168 = vrot.slane %v4166, 5
  %v4169 = vsel %vm117, %v4164, %v4168
  %v4171 = vshrl.u32 %v3549, 16
  %v4173 = vrot.slane %v4171, 4
  %v4174 = vshll.u32 %v3549, 16
  %v4176 = vrot.slane %v4174, 5
  %v4177 = vor.u32 %v4173, %v4176
  %v4178 = vrot.slane %v4177, 4
  %v4180 = vshll.u32 %v3550, 16
  %v4182 = vrot.slane %v4180, 5
  %v4183 = vsel %vm117, %v4178, %v4182
  %v4184 = vshrl.u32 %v3550, 16
  %v4186 = vrot.slane %v4184, 4
  %v4187 = vor.u32 %v4186, %v4182
  %v4188 = vrot.slane %v4187, 4
  %v4190 = vshll.u32 %v3551, 16
  %v4192 = vrot.slane %v4190, 5
  %v4193 = vsel %vm117, %v4188, %v4192
  %v4195 = vshrl.u32 %v3552, 16
  %v4197 = vrot.slane %v4195, 4
  %v4198 = vshll.u32 %v3552, 16
  %v4200 = vrot.slane %v4198, 5
  %v4201 = vor.u32 %v4197, %v4200
  %v4202 = vrot.slane %v4201, 4
  %v4204 = vshll.u32 %v3553, 16
  %v4206 = vrot.slane %v4204, 5
  %v4207 = vsel %vm117, %v4202, %v4206
  %v4208 = vshrl.u32 %v3553, 16
  %v4210 = vrot.slane %v4208, 4
  %v4211 = vor.u32 %v4210, %v4206
  %v4212 = vrot.slane %v4211, 4
  %v4214 = vshll.u32 %v3554, 16
  %v4216 = vrot.slane %v4214, 5
  %v4217 = vsel %vm117, %v4212, %v4216
  %v4219 = vshrl.u32 %v3555, 16
  %v4221 = vrot.slane %v4219, 4
  %v4222 = vshll.u32 %v3555, 16
  %v4224 = vrot.slane %v4222, 5
  %v4225 = vor.u32 %v4221, %v4224
  %v4226 = vrot.slane %v4225, 4
  %v4228 = vshll.u32 %v3556, 16
  %v4230 = vrot.slane %v4228, 5
  %v4231 = vsel %vm117, %v4226, %v4230
  %v4232 = vshrl.u32 %v3556, 16
  %v4234 = vrot.slane %v4232, 4
  %v4235 = vor.u32 %v4234, %v4230
  %v4236 = vrot.slane %v4235, 4
  %v4238 = vshll.u32 %v3557, 16
  %v4240 = vrot.slane %v4238, 5
  %v4241 = vsel %vm117, %v4236, %v4240
  %v4243 = vshrl.u32 %v3558, 16
  %v4245 = vrot.slane %v4243, 4
  %v4246 = vshll.u32 %v3558, 16
  %v4248 = vrot.slane %v4246, 5
  %v4249 = vor.u32 %v4245, %v4248
  %v4250 = vrot.slane %v4249, 4
  %v4252 = vshll.u32 %v3559, 16
  %v4254 = vrot.slane %v4252, 5
  %v4255 = vsel %vm117, %v4250, %v4254
  %v4256 = vshrl.u32 %v3559, 16
  %v4258 = vrot.slane %v4256, 4
  %v4259 = vor.u32 %v4258, %v4254
  %v4260 = vrot.slane %v4259, 4
  %v4262 = vshll.u32 %v3560, 16
  %v4264 = vrot.slane %v4262, 5
  %v4265 = vsel %vm117, %v4260, %v4264
  %v4267 = vshrl.u32 %v3561, 16
  %v4269 = vrot.slane %v4267, 4
  %v4270 = vshll.u32 %v3561, 16
  %v4272 = vrot.slane %v4270, 5
  %v4273 = vor.u32 %v4269, %v4272
  %v4274 = vrot.slane %v4273, 4
  %v4276 = vshll.u32 %v3562, 16
  %v4278 = vrot.slane %v4276, 5
  %v4279 = vsel %vm117, %v4274, %v4278
  %v4280 = vshrl.u32 %v3562, 16
  %v4282 = vrot.slane %v4280, 4
  %v4283 = vor.u32 %v4282, %v4278
  %v4284 = vrot.slane %v4283, 4
  %v4286 = vshll.u32 %v3563, 16
  %v4288 = vrot.slane %v4286, 5
  %v4289 = vsel %vm117, %v4284, %v4288
  %v4291 = vshrl.u32 %v3564, 16
  %v4293 = vrot.slane %v4291, 4
  %v4294 = vshll.u32 %v3564, 16
  %v4296 = vrot.slane %v4294, 5
  %v4297 = vor.u32 %v4293, %v4296
  %v4298 = vrot.slane %v4297, 4
  %v4300 = vshll.u32 %v3565, 16
  %v4302 = vrot.slane %v4300, 5
  %v4303 = vsel %vm117, %v4298, %v4302
  %v4304 = vshrl.u32 %v3565, 16
  %v4306 = vrot.slane %v4304, 4
  %v4307 = vor.u32 %v4306, %v4302
  %v4308 = vrot.slane %v4307, 4
  %v4310 = vshll.u32 %v3566, 16
  %v4312 = vrot.slane %v4310, 5
  %v4313 = vsel %vm117, %v4308, %v4312
  %v4315 = vshrl.u32 %v3567, 16
  %v4317 = vrot.slane %v4315, 4
  %v4318 = vshll.u32 %v3567, 16
  %v4320 = vrot.slane %v4318, 5
  %v4321 = vor.u32 %v4317, %v4320
  %v4322 = vrot.slane %v4321, 4
  %v4324 = vshll.u32 %v3568, 16
  %v4326 = vrot.slane %v4324, 5
  %v4327 = vsel %vm117, %v4322, %v4326
  %v4328 = vshrl.u32 %v3568, 16
  %v4330 = vrot.slane %v4328, 4
  %v4331 = vor.u32 %v4330, %v4326
  %v4332 = vrot.slane %v4331, 4
  %v4334 = vshll.u32 %v3569, 16
  %v4336 = vrot.slane %v4334, 5
  %v4337 = vsel %vm117, %v4332, %v4336
  %s4338 = scalar_lea.vmem %s1, 8
  %v4339 = vld [vmem:[%s4338] sm:$0x3]
  %v4340 = vunpack.c.l.b16 %v3583
  %v4341 = vunpack.c.l.b16 %v3593
  %v4342 = vunpack.c.l.b16 %v3607
  %v4343 = vunpack.c.l.b16 %v3617
  %v4344 = vunpack.c.l.b16 %v3631
  %v4345 = vunpack.c.l.b16 %v3641
  %v4346 = vunpack.c.l.b16 %v3655
  %v4347 = vunpack.c.l.b16 %v3665
  %v4348 = vunpack.c.l.b16 %v3679
  %v4349 = vunpack.c.l.b16 %v3689
  %v4350 = vunpack.c.l.b16 %v3703
  %v4351 = vunpack.c.l.b16 %v3713
  %v4352 = vunpack.c.l.b16 %v3727
  %v4353 = vunpack.c.l.b16 %v3737
  %v4354 = vunpack.c.l.b16 %v3751
  %v4355 = vunpack.c.l.b16 %v3761
  %v4356 = vunpack.c.l.b16 %v3775
  %v4357 = vunpack.c.l.b16 %v3785
  %v4358 = vunpack.c.l.b16 %v3799
  %v4359 = vunpack.c.l.b16 %v3809
  %v4360 = vunpack.c.l.b16 %v3823
  %v4361 = vunpack.c.l.b16 %v3833
  %v4362 = vunpack.c.l.b16 %v3847
  %v4363 = vunpack.c.l.b16 %v3857
  %v4364 = vunpack.c.l.b16 %v3871
  %v4365 = vunpack.c.l.b16 %v3881
  %v4366 = vunpack.c.l.b16 %v3895
  %v4367 = vunpack.c.l.b16 %v3905
  %v4368 = vunpack.c.l.b16 %v3919
  %v4369 = vunpack.c.l.b16 %v3929
  %v4370 = vunpack.c.l.b16 %v3943
  %v4371 = vunpack.c.l.b16 %v3953
  %v4372 = vunpack.c.l.b16 %v3967
  %v4373 = vunpack.c.l.b16 %v3977
  %v4374 = vunpack.c.l.b16 %v3991
  %v4375 = vunpack.c.l.b16 %v4001
  %v4376 = vunpack.c.l.b16 %v4015
  %v4377 = vunpack.c.l.b16 %v4025
  %v4378 = vunpack.c.l.b16 %v4039
  %v4379 = vunpack.c.l.b16 %v4049
  %v4380 = vunpack.c.l.b16 %v4063
  %v4381 = vunpack.c.l.b16 %v4073
  %v4382 = vunpack.c.l.b16 %v4087
  %v4383 = vunpack.c.l.b16 %v4097
  %v4384 = vunpack.c.l.b16 %v4111
  %v4385 = vunpack.c.l.b16 %v4121
  %v4386 = vunpack.c.l.b16 %v4135
  %v4387 = vunpack.c.l.b16 %v4145
  %v4388 = vunpack.c.l.b16 %v4159
  %v4389 = vunpack.c.l.b16 %v4169
  %v4390 = vunpack.c.l.b16 %v4183
  %v4391 = vunpack.c.l.b16 %v4193
  %v4392 = vunpack.c.l.b16 %v4207
  %v4393 = vunpack.c.l.b16 %v4217
  %v4394 = vunpack.c.l.b16 %v4231
  %v4395 = vunpack.c.l.b16 %v4241
  %v4396 = vunpack.c.l.b16 %v4255
  %v4397 = vunpack.c.l.b16 %v4265
  %v4398 = vunpack.c.l.b16 %v4279
  %v4399 = vunpack.c.l.b16 %v4289
  %v4400 = vunpack.c.l.b16 %v4303
  %v4401 = vunpack.c.l.b16 %v4313
  %v4402 = vunpack.c.l.b16 %v4327
  %v4403 = vunpack.c.l.b16 %v4337
  %v4404 = vpack.c.b16 %v4341, %v4340
  %v4405 = vpack.c.b16 %v4343, %v4342
  %v4406 = vpack.c.b16 %v4345, %v4344
  %v4407 = vpack.c.b16 %v4347, %v4346
  %v4408 = vpack.c.b16 %v4349, %v4348
  %v4409 = vpack.c.b16 %v4351, %v4350
  %v4410 = vpack.c.b16 %v4353, %v4352
  %v4411 = vpack.c.b16 %v4355, %v4354
  %v4412 = vpack.c.b16 %v4357, %v4356
  %v4413 = vpack.c.b16 %v4359, %v4358
  %v4414 = vpack.c.b16 %v4361, %v4360
  %v4415 = vpack.c.b16 %v4363, %v4362
  %v4416 = vpack.c.b16 %v4365, %v4364
  %v4417 = vpack.c.b16 %v4367, %v4366
  %v4418 = vpack.c.b16 %v4369, %v4368
  %v4419 = vpack.c.b16 %v4371, %v4370
  %v4420 = vpack.c.b16 %v4373, %v4372
  %v4421 = vpack.c.b16 %v4375, %v4374
  %v4422 = vpack.c.b16 %v4377, %v4376
  %v4423 = vpack.c.b16 %v4379, %v4378
  %v4424 = vpack.c.b16 %v4381, %v4380
  %v4425 = vpack.c.b16 %v4383, %v4382
  %v4426 = vpack.c.b16 %v4385, %v4384
  %v4427 = vpack.c.b16 %v4387, %v4386
  %v4428 = vpack.c.b16 %v4389, %v4388
  %v4429 = vpack.c.b16 %v4391, %v4390
  %v4430 = vpack.c.b16 %v4393, %v4392
  %v4431 = vpack.c.b16 %v4395, %v4394
  %v4432 = vpack.c.b16 %v4397, %v4396
  %v4433 = vpack.c.b16 %v4399, %v4398
  %v4434 = vpack.c.b16 %v4401, %v4400
  %v4435 = vpack.c.b16 %v4403, %v4402
  %v4437 = vsel %vm984, %v4404, 0
  %v4440 = vsel %vm984, %v4405, 0
  %v4443 = vsel %vm984, %v4406, 0
  %v4446 = vsel %vm984, %v4407, 0
  %v4449 = vsel %vm984, %v4408, 0
  %v4452 = vsel %vm984, %v4409, 0
  %v4455 = vsel %vm984, %v4410, 0
  %v4458 = vsel %vm984, %v4411, 0
  %v4461 = vsel %vm984, %v4412, 0
  %v4464 = vsel %vm984, %v4413, 0
  %v4467 = vsel %vm984, %v4414, 0
  %v4470 = vsel %vm984, %v4415, 0
  %v4473 = vsel %vm984, %v4416, 0
  %v4476 = vsel %vm984, %v4417, 0
  %v4479 = vsel %vm984, %v4418, 0
  %v4482 = vsel %vm984, %v4419, 0
  %v4485 = vsel %vm984, %v4420, 0
  %v4488 = vsel %vm984, %v4421, 0
  %v4491 = vsel %vm984, %v4422, 0
  %v4494 = vsel %vm984, %v4423, 0
  %v4497 = vsel %vm984, %v4424, 0
  %v4500 = vsel %vm984, %v4425, 0
  %v4503 = vsel %vm984, %v4426, 0
  %v4506 = vsel %vm984, %v4427, 0
  %v4509 = vsel %vm984, %v4428, 0
  %v4512 = vsel %vm984, %v4429, 0
  %v4515 = vsel %vm984, %v4430, 0
  %v4518 = vsel %vm984, %v4431, 0
  %v4521 = vsel %vm984, %v4432, 0
  %v4524 = vsel %vm984, %v4433, 0
  %v4527 = vsel %vm984, %v4434, 0
  %v4530 = vsel %vm984, %v4435, 0
  %v4533 = vsel %vm1081, %v4339, 0
  %4535 = vmatprep.subr.bf16.mxu0 0
  %4536 = vmatpush1.bf16.msra.mxu0 0
  %4537 = vmatprep.subr.bf16.mxu0 0
  %4538 = vmatpush1.bf16.msra.mxu0 0
  %4539 = vmatprep.subr.bf16.mxu0 0
  %4540 = vmatpush1.bf16.msra.mxu0 0
  %4541 = vmatprep.subr.bf16.mxu0 0
  %4542 = vmatpush1.bf16.msra.mxu0 0
  %4543 = vmatprep.subr.bf16.mxu0 0
  %4544 = vmatpush1.bf16.msra.mxu0 0
  %4545 = vmatprep.subr.bf16.mxu0 0
  %4546 = vmatpush1.bf16.msra.mxu0 0
  %4547 = vmatprep.subr.bf16.mxu0 0
  %4548 = vmatpush1.bf16.msra.mxu0 0
  %4549 = vmatprep.subr.bf16.mxu0 0
  %4550 = vmatpush1.bf16.msra.mxu0 %v4533
  %4551 = vmatprep.subr.bf16.mxu0 0
  %4552 = vmatpush2.bf16.msra.mxu0 0
  %4553 = vmatprep.subr.bf16.mxu0 0
  %4554 = vmatpush2.bf16.msra.mxu0 0
  %4555 = vmatprep.subr.bf16.mxu0 0
  %4556 = vmatpush2.bf16.msra.mxu0 0
  %4557 = vmatprep.subr.bf16.mxu0 0
  %4558 = vmatpush2.bf16.msra.mxu0 0
  %4559 = vmatprep.subr.bf16.mxu0 0
  %4560 = vmatpush2.bf16.msra.mxu0 0
  %4561 = vmatprep.subr.bf16.mxu0 0
  %4562 = vmatpush2.bf16.msra.mxu0 0
  %4563 = vmatprep.subr.bf16.mxu0 0
  %4564 = vmatpush2.bf16.msra.mxu0 0
  %4565 = vmatprep.subr.bf16.mxu0 0
  %4566 = vmatpush2.bf16.msra.mxu0 0
  %4567 = vmatprep.mubr.bf16.mxu0 0
  %4568 = vmatmul.mubr.bf16.gmra.mxu0 %v4437
  %v4569 = vpop.f32.mrf.mxu0
  %v4570 = vadd.f32 0.0, %v4569
  %v4571 = vpop.f32.mrf.mxu0
  %v4572 = vpop.f32.mrf.mxu0
  %v4573 = vadd.f32 0.0, %v4572
  %v4574 = vpop.f32.mrf.mxu0
  %4575 = vmatprep.mubr.bf16.mxu0 0
  %4576 = vmatmul.mubr.bf16.gmra.mxu0 %v4440
  %v4577 = vpop.f32.mrf.mxu0
  %v4578 = vadd.f32 0.0, %v4577
  %v4579 = vpop.f32.mrf.mxu0
  %v4580 = vpop.f32.mrf.mxu0
  %v4581 = vadd.f32 0.0, %v4580
  %v4582 = vpop.f32.mrf.mxu0
  %4583 = vmatprep.mubr.bf16.mxu0 0
  %4584 = vmatmul.mubr.bf16.gmra.mxu0 %v4443
  %v4585 = vpop.f32.mrf.mxu0
  %v4586 = vadd.f32 0.0, %v4585
  %v4587 = vpop.f32.mrf.mxu0
  %v4588 = vpop.f32.mrf.mxu0
  %v4589 = vadd.f32 0.0, %v4588
  %v4590 = vpop.f32.mrf.mxu0
  %4591 = vmatprep.mubr.bf16.mxu0 0
  %4592 = vmatmul.mubr.bf16.gmra.mxu0 %v4446
  %v4593 = vpop.f32.mrf.mxu0
  %v4594 = vadd.f32 0.0, %v4593
  %v4595 = vpop.f32.mrf.mxu0
  %v4596 = vpop.f32.mrf.mxu0
  %v4597 = vadd.f32 0.0, %v4596
  %v4598 = vpop.f32.mrf.mxu0
  %4599 = vmatprep.mubr.bf16.mxu0 0
  %4600 = vmatmul.mubr.bf16.gmra.mxu0 %v4449
  %v4601 = vpop.f32.mrf.mxu0
  %v4602 = vadd.f32 0.0, %v4601
  %v4603 = vpop.f32.mrf.mxu0
  %v4604 = vpop.f32.mrf.mxu0
  %v4605 = vadd.f32 0.0, %v4604
  %v4606 = vpop.f32.mrf.mxu0
  %4607 = vmatprep.mubr.bf16.mxu0 0
  %4608 = vmatmul.mubr.bf16.gmra.mxu0 %v4452
  %v4609 = vpop.f32.mrf.mxu0
  %v4610 = vadd.f32 0.0, %v4609
  %v4611 = vpop.f32.mrf.mxu0
  %v4612 = vpop.f32.mrf.mxu0
  %v4613 = vadd.f32 0.0, %v4612
  %v4614 = vpop.f32.mrf.mxu0
  %4615 = vmatprep.mubr.bf16.mxu0 0
  %4616 = vmatmul.mubr.bf16.gmra.mxu0 %v4455
  %v4617 = vpop.f32.mrf.mxu0
  %v4618 = vadd.f32 0.0, %v4617
  %v4619 = vpop.f32.mrf.mxu0
  %v4620 = vpop.f32.mrf.mxu0
  %v4621 = vadd.f32 0.0, %v4620
  %v4622 = vpop.f32.mrf.mxu0
  %4623 = vmatprep.mubr.bf16.mxu0 0
  %4624 = vmatmul.mubr.bf16.gmra.mxu0 %v4458
  %v4625 = vpop.f32.mrf.mxu0
  %v4626 = vadd.f32 0.0, %v4625
  %v4627 = vpop.f32.mrf.mxu0
  %v4628 = vpop.f32.mrf.mxu0
  %v4629 = vadd.f32 0.0, %v4628
  %v4630 = vpop.f32.mrf.mxu0
  %4631 = vmatprep.mubr.bf16.mxu0 0
  %4632 = vmatmul.mubr.bf16.gmra.mxu0 %v4461
  %v4633 = vpop.f32.mrf.mxu0
  %v4634 = vadd.f32 0.0, %v4633
  %v4635 = vpop.f32.mrf.mxu0
  %v4636 = vpop.f32.mrf.mxu0
  %v4637 = vadd.f32 0.0, %v4636
  %v4638 = vpop.f32.mrf.mxu0
  %4639 = vmatprep.mubr.bf16.mxu0 0
  %4640 = vmatmul.mubr.bf16.gmra.mxu0 %v4464
  %v4641 = vpop.f32.mrf.mxu0
  %v4642 = vadd.f32 0.0, %v4641
  %v4643 = vpop.f32.mrf.mxu0
  %v4644 = vpop.f32.mrf.mxu0
  %v4645 = vadd.f32 0.0, %v4644
  %v4646 = vpop.f32.mrf.mxu0
  %4647 = vmatprep.mubr.bf16.mxu0 0
  %4648 = vmatmul.mubr.bf16.gmra.mxu0 %v4467
  %v4649 = vpop.f32.mrf.mxu0
  %v4650 = vadd.f32 0.0, %v4649
  %v4651 = vpop.f32.mrf.mxu0
  %v4652 = vpop.f32.mrf.mxu0
  %v4653 = vadd.f32 0.0, %v4652
  %v4654 = vpop.f32.mrf.mxu0
  %4655 = vmatprep.mubr.bf16.mxu0 0
  %4656 = vmatmul.mubr.bf16.gmra.mxu0 %v4470
  %v4657 = vpop.f32.mrf.mxu0
  %v4658 = vadd.f32 0.0, %v4657
  %v4659 = vpop.f32.mrf.mxu0
  %v4660 = vpop.f32.mrf.mxu0
  %v4661 = vadd.f32 0.0, %v4660
  %v4662 = vpop.f32.mrf.mxu0
  %4663 = vmatprep.mubr.bf16.mxu0 0
  %4664 = vmatmul.mubr.bf16.gmra.mxu0 %v4473
  %v4665 = vpop.f32.mrf.mxu0
  %v4666 = vadd.f32 0.0, %v4665
  %v4667 = vpop.f32.mrf.mxu0
  %v4668 = vpop.f32.mrf.mxu0
  %v4669 = vadd.f32 0.0, %v4668
  %v4670 = vpop.f32.mrf.mxu0
  %4671 = vmatprep.mubr.bf16.mxu0 0
  %4672 = vmatmul.mubr.bf16.gmra.mxu0 %v4476
  %v4673 = vpop.f32.mrf.mxu0
  %v4674 = vadd.f32 0.0, %v4673
  %v4675 = vpop.f32.mrf.mxu0
  %v4676 = vpop.f32.mrf.mxu0
  %v4677 = vadd.f32 0.0, %v4676
  %v4678 = vpop.f32.mrf.mxu0
  %4679 = vmatprep.mubr.bf16.mxu0 0
  %4680 = vmatmul.mubr.bf16.gmra.mxu0 %v4479
  %v4681 = vpop.f32.mrf.mxu0
  %v4682 = vadd.f32 0.0, %v4681
  %v4683 = vpop.f32.mrf.mxu0
  %v4684 = vpop.f32.mrf.mxu0
  %v4685 = vadd.f32 0.0, %v4684
  %v4686 = vpop.f32.mrf.mxu0
  %4687 = vmatprep.mubr.bf16.mxu0 0
  %4688 = vmatmul.mubr.bf16.gmra.mxu0 %v4482
  %v4689 = vpop.f32.mrf.mxu0
  %v4690 = vadd.f32 0.0, %v4689
  %v4691 = vpop.f32.mrf.mxu0
  %v4692 = vpop.f32.mrf.mxu0
  %v4693 = vadd.f32 0.0, %v4692
  %v4694 = vpop.f32.mrf.mxu0
  %4695 = vmatprep.mubr.bf16.mxu0 0
  %4696 = vmatmul.mubr.bf16.gmra.mxu0 %v4485
  %v4697 = vpop.f32.mrf.mxu0
  %v4698 = vadd.f32 0.0, %v4697
  %v4699 = vpop.f32.mrf.mxu0
  %v4700 = vpop.f32.mrf.mxu0
  %v4701 = vadd.f32 0.0, %v4700
  %v4702 = vpop.f32.mrf.mxu0
  %4703 = vmatprep.mubr.bf16.mxu0 0
  %4704 = vmatmul.mubr.bf16.gmra.mxu0 %v4488
  %v4705 = vpop.f32.mrf.mxu0
  %v4706 = vadd.f32 0.0, %v4705
  %v4707 = vpop.f32.mrf.mxu0
  %v4708 = vpop.f32.mrf.mxu0
  %v4709 = vadd.f32 0.0, %v4708
  %v4710 = vpop.f32.mrf.mxu0
  %4711 = vmatprep.mubr.bf16.mxu0 0
  %4712 = vmatmul.mubr.bf16.gmra.mxu0 %v4491
  %v4713 = vpop.f32.mrf.mxu0
  %v4714 = vadd.f32 0.0, %v4713
  %v4715 = vpop.f32.mrf.mxu0
  %v4716 = vpop.f32.mrf.mxu0
  %v4717 = vadd.f32 0.0, %v4716
  %v4718 = vpop.f32.mrf.mxu0
  %4719 = vmatprep.mubr.bf16.mxu0 0
  %4720 = vmatmul.mubr.bf16.gmra.mxu0 %v4494
  %v4721 = vpop.f32.mrf.mxu0
  %v4722 = vadd.f32 0.0, %v4721
  %v4723 = vpop.f32.mrf.mxu0
  %v4724 = vpop.f32.mrf.mxu0
  %v4725 = vadd.f32 0.0, %v4724
  %v4726 = vpop.f32.mrf.mxu0
  %4727 = vmatprep.mubr.bf16.mxu0 0
  %4728 = vmatmul.mubr.bf16.gmra.mxu0 %v4497
  %v4729 = vpop.f32.mrf.mxu0
  %v4730 = vadd.f32 0.0, %v4729
  %v4731 = vpop.f32.mrf.mxu0
  %v4732 = vpop.f32.mrf.mxu0
  %v4733 = vadd.f32 0.0, %v4732
  %v4734 = vpop.f32.mrf.mxu0
  %4735 = vmatprep.mubr.bf16.mxu0 0
  %4736 = vmatmul.mubr.bf16.gmra.mxu0 %v4500
  %v4737 = vpop.f32.mrf.mxu0
  %v4738 = vadd.f32 0.0, %v4737
  %v4739 = vpop.f32.mrf.mxu0
  %v4740 = vpop.f32.mrf.mxu0
  %v4741 = vadd.f32 0.0, %v4740
  %v4742 = vpop.f32.mrf.mxu0
  %4743 = vmatprep.mubr.bf16.mxu0 0
  %4744 = vmatmul.mubr.bf16.gmra.mxu0 %v4503
  %v4745 = vpop.f32.mrf.mxu0
  %v4746 = vadd.f32 0.0, %v4745
  %v4747 = vpop.f32.mrf.mxu0
  %v4748 = vpop.f32.mrf.mxu0
  %v4749 = vadd.f32 0.0, %v4748
  %v4750 = vpop.f32.mrf.mxu0
  %4751 = vmatprep.mubr.bf16.mxu0 0
  %4752 = vmatmul.mubr.bf16.gmra.mxu0 %v4506
  %v4753 = vpop.f32.mrf.mxu0
  %v4754 = vadd.f32 0.0, %v4753
  %v4755 = vpop.f32.mrf.mxu0
  %v4756 = vpop.f32.mrf.mxu0
  %v4757 = vadd.f32 0.0, %v4756
  %v4758 = vpop.f32.mrf.mxu0
  %4759 = vmatprep.mubr.bf16.mxu0 0
  %4760 = vmatmul.mubr.bf16.gmra.mxu0 %v4509
  %v4761 = vpop.f32.mrf.mxu0
  %v4762 = vadd.f32 0.0, %v4761
  %v4763 = vpop.f32.mrf.mxu0
  %v4764 = vpop.f32.mrf.mxu0
  %v4765 = vadd.f32 0.0, %v4764
  %v4766 = vpop.f32.mrf.mxu0
  %4767 = vmatprep.mubr.bf16.mxu0 0
  %4768 = vmatmul.mubr.bf16.gmra.mxu0 %v4512
  %v4769 = vpop.f32.mrf.mxu0
  %v4770 = vadd.f32 0.0, %v4769
  %v4771 = vpop.f32.mrf.mxu0
  %v4772 = vpop.f32.mrf.mxu0
  %v4773 = vadd.f32 0.0, %v4772
  %v4774 = vpop.f32.mrf.mxu0
  %4775 = vmatprep.mubr.bf16.mxu0 0
  %4776 = vmatmul.mubr.bf16.gmra.mxu0 %v4515
  %v4777 = vpop.f32.mrf.mxu0
  %v4778 = vadd.f32 0.0, %v4777
  %v4779 = vpop.f32.mrf.mxu0
  %v4780 = vpop.f32.mrf.mxu0
  %v4781 = vadd.f32 0.0, %v4780
  %v4782 = vpop.f32.mrf.mxu0
  %4783 = vmatprep.mubr.bf16.mxu0 0
  %4784 = vmatmul.mubr.bf16.gmra.mxu0 %v4518
  %v4785 = vpop.f32.mrf.mxu0
  %v4786 = vadd.f32 0.0, %v4785
  %v4787 = vpop.f32.mrf.mxu0
  %v4788 = vpop.f32.mrf.mxu0
  %v4789 = vadd.f32 0.0, %v4788
  %v4790 = vpop.f32.mrf.mxu0
  %4791 = vmatprep.mubr.bf16.mxu0 0
  %4792 = vmatmul.mubr.bf16.gmra.mxu0 %v4521
  %v4793 = vpop.f32.mrf.mxu0
  %v4794 = vadd.f32 0.0, %v4793
  %v4795 = vpop.f32.mrf.mxu0
  %v4796 = vpop.f32.mrf.mxu0
  %v4797 = vadd.f32 0.0, %v4796
  %v4798 = vpop.f32.mrf.mxu0
  %4799 = vmatprep.mubr.bf16.mxu0 0
  %4800 = vmatmul.mubr.bf16.gmra.mxu0 %v4524
  %v4801 = vpop.f32.mrf.mxu0
  %v4802 = vadd.f32 0.0, %v4801
  %v4803 = vpop.f32.mrf.mxu0
  %v4804 = vpop.f32.mrf.mxu0
  %v4805 = vadd.f32 0.0, %v4804
  %v4806 = vpop.f32.mrf.mxu0
  %4807 = vmatprep.mubr.bf16.mxu0 0
  %4808 = vmatmul.mubr.bf16.gmra.mxu0 %v4527
  %v4809 = vpop.f32.mrf.mxu0
  %v4810 = vadd.f32 0.0, %v4809
  %v4811 = vpop.f32.mrf.mxu0
  %v4812 = vpop.f32.mrf.mxu0
  %v4813 = vadd.f32 0.0, %v4812
  %v4814 = vpop.f32.mrf.mxu0
  %4815 = vmatprep.mubr.bf16.mxu0 0
  %4816 = vmatmul.mubr.bf16.gmra.mxu0 %v4530
  %v4817 = vpop.f32.mrf.mxu0
  %v4818 = vadd.f32 0.0, %v4817
  %v4819 = vpop.f32.mrf.mxu0
  %v4820 = vpop.f32.mrf.mxu0
  %v4821 = vadd.f32 0.0, %v4820
  %v4822 = vpop.f32.mrf.mxu0
  %4823 = vdwg.mxu0
  %v4824 = vadd.f32 %v3410, %v4570
  %v4825 = vadd.f32 %v3411, %v4573
  %v4826 = vadd.f32 %v3412, %v4578
  %v4827 = vadd.f32 %v3413, %v4581
  %v4828 = vadd.f32 %v3414, %v4586
  %v4829 = vadd.f32 %v3415, %v4589
  %v4830 = vadd.f32 %v3416, %v4594
  %v4831 = vadd.f32 %v3417, %v4597
  %v4832 = vadd.f32 %v3418, %v4602
  %v4833 = vadd.f32 %v3419, %v4605
  %v4834 = vadd.f32 %v3420, %v4610
  %v4835 = vadd.f32 %v3421, %v4613
  %v4836 = vadd.f32 %v3422, %v4618
  %v4837 = vadd.f32 %v3423, %v4621
  %v4838 = vadd.f32 %v3424, %v4626
  %v4839 = vadd.f32 %v3425, %v4629
  %v4840 = vadd.f32 %v3426, %v4634
  %v4841 = vadd.f32 %v3427, %v4637
  %v4842 = vadd.f32 %v3428, %v4642
  %v4843 = vadd.f32 %v3429, %v4645
  %v4844 = vadd.f32 %v3430, %v4650
  %v4845 = vadd.f32 %v3431, %v4653
  %v4846 = vadd.f32 %v3432, %v4658
  %v4847 = vadd.f32 %v3433, %v4661
  %v4848 = vadd.f32 %v3434, %v4666
  %v4849 = vadd.f32 %v3435, %v4669
  %v4850 = vadd.f32 %v3436, %v4674
  %v4851 = vadd.f32 %v3437, %v4677
  %v4852 = vadd.f32 %v3438, %v4682
  %v4853 = vadd.f32 %v3439, %v4685
  %v4854 = vadd.f32 %v3440, %v4690
  %v4855 = vadd.f32 %v3441, %v4693
  %v4856 = vadd.f32 %v3442, %v4698
  %v4857 = vadd.f32 %v3443, %v4701
  %v4858 = vadd.f32 %v3444, %v4706
  %v4859 = vadd.f32 %v3445, %v4709
  %v4860 = vadd.f32 %v3446, %v4714
  %v4861 = vadd.f32 %v3447, %v4717
  %v4862 = vadd.f32 %v3448, %v4722
  %v4863 = vadd.f32 %v3449, %v4725
  %v4864 = vadd.f32 %v3450, %v4730
  %v4865 = vadd.f32 %v3451, %v4733
  %v4866 = vadd.f32 %v3452, %v4738
  %v4867 = vadd.f32 %v3453, %v4741
  %v4868 = vadd.f32 %v3454, %v4746
  %v4869 = vadd.f32 %v3455, %v4749
  %v4870 = vadd.f32 %v3456, %v4754
  %v4871 = vadd.f32 %v3457, %v4757
  %v4872 = vadd.f32 %v3458, %v4762
  %v4873 = vadd.f32 %v3459, %v4765
  %v4874 = vadd.f32 %v3460, %v4770
  %v4875 = vadd.f32 %v3461, %v4773
  %v4876 = vadd.f32 %v3462, %v4778
  %v4877 = vadd.f32 %v3463, %v4781
  %v4878 = vadd.f32 %v3464, %v4786
  %v4879 = vadd.f32 %v3465, %v4789
  %v4880 = vadd.f32 %v3466, %v4794
  %v4881 = vadd.f32 %v3467, %v4797
  %v4882 = vadd.f32 %v3468, %v4802
  %v4883 = vadd.f32 %v3469, %v4805
  %v4884 = vadd.f32 %v3470, %v4810
  %v4885 = vadd.f32 %v3471, %v4813
  %v4886 = vadd.f32 %v3472, %v4818
  %v4887 = vadd.f32 %v3473, %v4821
  %v4888 = vld [vmem:[%s2795] sm:$0xe]
  %v4889 = vld [vmem:[%s2795 + $0xc] sm:$0xe]
  %v4890 = vld [vmem:[%s2795 + $0x18] sm:$0xe]
  %v4891 = vld [vmem:[%s2795 + $0x24] sm:$0xe]
  %v4892 = vld [vmem:[%s2795 + $0x30] sm:$0xe]
  %v4893 = vld [vmem:[%s2795 + $0x3c] sm:$0xe]
  %v4894 = vld [vmem:[%s2795 + $0x48] sm:$0xe]
  %v4895 = vld [vmem:[%s2795 + $0x54] sm:$0xe]
  %v4896 = vld [vmem:[%s2795 + $0x60] sm:$0xe]
  %v4897 = vld [vmem:[%s2795 + $0x6c] sm:$0xe]
  %v4898 = vld [vmem:[%s2795 + $0x78] sm:$0xe]
  %v4899 = vld [vmem:[%s2795 + $0x84] sm:$0xe]
  %v4900 = vld [vmem:[%s2795 + $0x90] sm:$0xe]
  %v4901 = vld [vmem:[%s2795 + $0x9c] sm:$0xe]
  %v4902 = vld [vmem:[%s2795 + $0xa8] sm:$0xe]
  %v4903 = vld [vmem:[%s2795 + $0xb4] sm:$0xe]
  %v4904 = vld [vmem:[%s2795 + $0xd8] sm:$0xe]
  %v4905 = vld [vmem:[%s2795 + $0xe4] sm:$0xe]
  %v4906 = vld [vmem:[%s2795 + $0xf0] sm:$0xe]
  %v4907 = vld [vmem:[%s2795 + $0xfc] sm:$0xe]
  %v4908 = vld [vmem:[%s2795 + $0x108] sm:$0xe]
  %v4909 = vld [vmem:[%s2795 + $0x114] sm:$0xe]
  %v4910 = vld [vmem:[%s2795 + $0x120] sm:$0xe]
  %v4911 = vld [vmem:[%s2795 + $0x12c] sm:$0xe]
  %v4912 = vld [vmem:[%s2795 + $0x138] sm:$0xe]
  %v4913 = vld [vmem:[%s2795 + $0x144] sm:$0xe]
  %v4914 = vld [vmem:[%s2795 + $0x150] sm:$0xe]
  %v4915 = vld [vmem:[%s2795 + $0x15c] sm:$0xe]
  %v4916 = vld [vmem:[%s2795 + $0x168] sm:$0xe]
  %v4917 = vld [vmem:[%s2795 + $0x174] sm:$0xe]
  %v4918 = vld [vmem:[%s2795 + $0x180] sm:$0xe]
  %v4919 = vld [vmem:[%s2795 + $0x18c] sm:$0xe]
  %v5016 = vrot.slane %v4888, 5
  %v5017 = vrot.slane %v5016, 4
  %v5018 = vrot.slane %v3475, 5
  %v5019 = vsel %vm2020, %v5017, %v5018
  %v5020 = vrot.slane %v5018, 4
  %v5021 = vrot.slane %v3476, 5
  %v5022 = vsel %vm2020, %v5020, %v5021
  %v5023 = vrot.slane %v4889, 5
  %v5024 = vrot.slane %v5023, 4
  %v5025 = vrot.slane %v3478, 5
  %v5026 = vsel %vm2020, %v5024, %v5025
  %v5027 = vrot.slane %v5025, 4
  %v5028 = vrot.slane %v3479, 5
  %v5029 = vsel %vm2020, %v5027, %v5028
  %v5030 = vrot.slane %v4890, 5
  %v5031 = vrot.slane %v5030, 4
  %v5032 = vrot.slane %v3481, 5
  %v5033 = vsel %vm2020, %v5031, %v5032
  %v5034 = vrot.slane %v5032, 4
  %v5035 = vrot.slane %v3482, 5
  %v5036 = vsel %vm2020, %v5034, %v5035
  %v5037 = vrot.slane %v4891, 5
  %v5038 = vrot.slane %v5037, 4
  %v5039 = vrot.slane %v3484, 5
  %v5040 = vsel %vm2020, %v5038, %v5039
  %v5041 = vrot.slane %v5039, 4
  %v5042 = vrot.slane %v3485, 5
  %v5043 = vsel %vm2020, %v5041, %v5042
  %v5044 = vrot.slane %v4892, 5
  %v5045 = vrot.slane %v5044, 4
  %v5046 = vrot.slane %v3487, 5
  %v5047 = vsel %vm2020, %v5045, %v5046
  %v5048 = vrot.slane %v5046, 4
  %v5049 = vrot.slane %v3488, 5
  %v5050 = vsel %vm2020, %v5048, %v5049
  %v5051 = vrot.slane %v4893, 5
  %v5052 = vrot.slane %v5051, 4
  %v5053 = vrot.slane %v3490, 5
  %v5054 = vsel %vm2020, %v5052, %v5053
  %v5055 = vrot.slane %v5053, 4
  %v5056 = vrot.slane %v3491, 5
  %v5057 = vsel %vm2020, %v5055, %v5056
  %v5058 = vrot.slane %v4894, 5
  %v5059 = vrot.slane %v5058, 4
  %v5060 = vrot.slane %v3493, 5
  %v5061 = vsel %vm2020, %v5059, %v5060
  %v5062 = vrot.slane %v5060, 4
  %v5063 = vrot.slane %v3494, 5
  %v5064 = vsel %vm2020, %v5062, %v5063
  %v5065 = vrot.slane %v4895, 5
  %v5066 = vrot.slane %v5065, 4
  %v5067 = vrot.slane %v3496, 5
  %v5068 = vsel %vm2020, %v5066, %v5067
  %v5069 = vrot.slane %v5067, 4
  %v5070 = vrot.slane %v3497, 5
  %v5071 = vsel %vm2020, %v5069, %v5070
  %v5072 = vrot.slane %v4896, 5
  %v5073 = vrot.slane %v5072, 4
  %v5074 = vrot.slane %v3499, 5
  %v5075 = vsel %vm2020, %v5073, %v5074
  %v5076 = vrot.slane %v5074, 4
  %v5077 = vrot.slane %v3500, 5
  %v5078 = vsel %vm2020, %v5076, %v5077
  %v5079 = vrot.slane %v4897, 5
  %v5080 = vrot.slane %v5079, 4
  %v5081 = vrot.slane %v3502, 5
  %v5082 = vsel %vm2020, %v5080, %v5081
  %v5083 = vrot.slane %v5081, 4
  %v5084 = vrot.slane %v3503, 5
  %v5085 = vsel %vm2020, %v5083, %v5084
  %v5086 = vrot.slane %v4898, 5
  %v5087 = vrot.slane %v5086, 4
  %v5088 = vrot.slane %v3505, 5
  %v5089 = vsel %vm2020, %v5087, %v5088
  %v5090 = vrot.slane %v5088, 4
  %v5091 = vrot.slane %v3506, 5
  %v5092 = vsel %vm2020, %v5090, %v5091
  %v5093 = vrot.slane %v4899, 5
  %v5094 = vrot.slane %v5093, 4
  %v5095 = vrot.slane %v3508, 5
  %v5096 = vsel %vm2020, %v5094, %v5095
  %v5097 = vrot.slane %v5095, 4
  %v5098 = vrot.slane %v3509, 5
  %v5099 = vsel %vm2020, %v5097, %v5098
  %v5100 = vrot.slane %v4900, 5
  %v5101 = vrot.slane %v5100, 4
  %v5102 = vrot.slane %v3511, 5
  %v5103 = vsel %vm2020, %v5101, %v5102
  %v5104 = vrot.slane %v5102, 4
  %v5105 = vrot.slane %v3512, 5
  %v5106 = vsel %vm2020, %v5104, %v5105
  %v5107 = vrot.slane %v4901, 5
  %v5108 = vrot.slane %v5107, 4
  %v5109 = vrot.slane %v3514, 5
  %v5110 = vsel %vm2020, %v5108, %v5109
  %v5111 = vrot.slane %v5109, 4
  %v5112 = vrot.slane %v3515, 5
  %v5113 = vsel %vm2020, %v5111, %v5112
  %v5114 = vrot.slane %v4902, 5
  %v5115 = vrot.slane %v5114, 4
  %v5116 = vrot.slane %v3517, 5
  %v5117 = vsel %vm2020, %v5115, %v5116
  %v5118 = vrot.slane %v5116, 4
  %v5119 = vrot.slane %v3518, 5
  %v5120 = vsel %vm2020, %v5118, %v5119
  %v5121 = vrot.slane %v4903, 5
  %v5122 = vrot.slane %v5121, 4
  %v5123 = vrot.slane %v3520, 5
  %v5124 = vsel %vm2020, %v5122, %v5123
  %v5125 = vrot.slane %v5123, 4
  %v5126 = vrot.slane %v3521, 5
  %v5127 = vsel %vm2020, %v5125, %v5126
  %v5128 = vrot.slane %v4904, 5
  %v5129 = vrot.slane %v5128, 4
  %v5130 = vrot.slane %v3523, 5
  %v5131 = vsel %vm2020, %v5129, %v5130
  %v5132 = vrot.slane %v5130, 4
  %v5133 = vrot.slane %v3524, 5
  %v5134 = vsel %vm2020, %v5132, %v5133
  %v5135 = vrot.slane %v4905, 5
  %v5136 = vrot.slane %v5135, 4
  %v5137 = vrot.slane %v3526, 5
  %v5138 = vsel %vm2020, %v5136, %v5137
  %v5139 = vrot.slane %v5137, 4
  %v5140 = vrot.slane %v3527, 5
  %v5141 = vsel %vm2020, %v5139, %v5140
  %v5142 = vrot.slane %v4906, 5
  %v5143 = vrot.slane %v5142, 4
  %v5144 = vrot.slane %v3529, 5
  %v5145 = vsel %vm2020, %v5143, %v5144
  %v5146 = vrot.slane %v5144, 4
  %v5147 = vrot.slane %v3530, 5
  %v5148 = vsel %vm2020, %v5146, %v5147
  %v5149 = vrot.slane %v4907, 5
  %v5150 = vrot.slane %v5149, 4
  %v5151 = vrot.slane %v3532, 5
  %v5152 = vsel %vm2020, %v5150, %v5151
  %v5153 = vrot.slane %v5151, 4
  %v5154 = vrot.slane %v3533, 5
  %v5155 = vsel %vm2020, %v5153, %v5154
  %v5156 = vrot.slane %v4908, 5
  %v5157 = vrot.slane %v5156, 4
  %v5158 = vrot.slane %v3535, 5
  %v5159 = vsel %vm2020, %v5157, %v5158
  %v5160 = vrot.slane %v5158, 4
  %v5161 = vrot.slane %v3536, 5
  %v5162 = vsel %vm2020, %v5160, %v5161
  %v5163 = vrot.slane %v4909, 5
  %v5164 = vrot.slane %v5163, 4
  %v5165 = vrot.slane %v3538, 5
  %v5166 = vsel %vm2020, %v5164, %v5165
  %v5167 = vrot.slane %v5165, 4
  %v5168 = vrot.slane %v3539, 5
  %v5169 = vsel %vm2020, %v5167, %v5168
  %v5170 = vrot.slane %v4910, 5
  %v5171 = vrot.slane %v5170, 4
  %v5172 = vrot.slane %v3541, 5
  %v5173 = vsel %vm2020, %v5171, %v5172
  %v5174 = vrot.slane %v5172, 4
  %v5175 = vrot.slane %v3542, 5
  %v5176 = vsel %vm2020, %v5174, %v5175
  %v5177 = vrot.slane %v4911, 5
  %v5178 = vrot.slane %v5177, 4
  %v5179 = vrot.slane %v3544, 5
  %v5180 = vsel %vm2020, %v5178, %v5179
  %v5181 = vrot.slane %v5179, 4
  %v5182 = vrot.slane %v3545, 5
  %v5183 = vsel %vm2020, %v5181, %v5182
  %v5184 = vrot.slane %v4912, 5
  %v5185 = vrot.slane %v5184, 4
  %v5186 = vrot.slane %v3547, 5
  %v5187 = vsel %vm2020, %v5185, %v5186
  %v5188 = vrot.slane %v5186, 4
  %v5189 = vrot.slane %v3548, 5
  %v5190 = vsel %vm2020, %v5188, %v5189
  %v5191 = vrot.slane %v4913, 5
  %v5192 = vrot.slane %v5191, 4
  %v5193 = vrot.slane %v3550, 5
  %v5194 = vsel %vm2020, %v5192, %v5193
  %v5195 = vrot.slane %v5193, 4
  %v5196 = vrot.slane %v3551, 5
  %v5197 = vsel %vm2020, %v5195, %v5196
  %v5198 = vrot.slane %v4914, 5
  %v5199 = vrot.slane %v5198, 4
  %v5200 = vrot.slane %v3553, 5
  %v5201 = vsel %vm2020, %v5199, %v5200
  %v5202 = vrot.slane %v5200, 4
  %v5203 = vrot.slane %v3554, 5
  %v5204 = vsel %vm2020, %v5202, %v5203
  %v5205 = vrot.slane %v4915, 5
  %v5206 = vrot.slane %v5205, 4
  %v5207 = vrot.slane %v3556, 5
  %v5208 = vsel %vm2020, %v5206, %v5207
  %v5209 = vrot.slane %v5207, 4
  %v5210 = vrot.slane %v3557, 5
  %v5211 = vsel %vm2020, %v5209, %v5210
  %v5212 = vrot.slane %v4916, 5
  %v5213 = vrot.slane %v5212, 4
  %v5214 = vrot.slane %v3559, 5
  %v5215 = vsel %vm2020, %v5213, %v5214
  %v5216 = vrot.slane %v5214, 4
  %v5217 = vrot.slane %v3560, 5
  %v5218 = vsel %vm2020, %v5216, %v5217
  %v5219 = vrot.slane %v4917, 5
  %v5220 = vrot.slane %v5219, 4
  %v5221 = vrot.slane %v3562, 5
  %v5222 = vsel %vm2020, %v5220, %v5221
  %v5223 = vrot.slane %v5221, 4
  %v5224 = vrot.slane %v3563, 5
  %v5225 = vsel %vm2020, %v5223, %v5224
  %v5226 = vrot.slane %v4918, 5
  %v5227 = vrot.slane %v5226, 4
  %v5228 = vrot.slane %v3565, 5
  %v5229 = vsel %vm2020, %v5227, %v5228
  %v5230 = vrot.slane %v5228, 4
  %v5231 = vrot.slane %v3566, 5
  %v5232 = vsel %vm2020, %v5230, %v5231
  %v5233 = vrot.slane %v4919, 5
  %v5234 = vrot.slane %v5233, 4
  %v5235 = vrot.slane %v3568, 5
  %v5236 = vsel %vm2020, %v5234, %v5235
  %v5237 = vrot.slane %v5235, 4
  %v5238 = vrot.slane %v3569, 5
  %v5239 = vsel %vm2020, %v5237, %v5238
  %s5240 = scalar_lea.vmem %s1, 10
  %v5241 = vld [vmem:[%s5240] sm:$0x3]
  %v5242 = vunpack.c.l.b16 %v5019
  %v5243 = vunpack.c.l.b16 %v5022
  %v5244 = vunpack.c.l.b16 %v5026
  %v5245 = vunpack.c.l.b16 %v5029
  %v5246 = vunpack.c.l.b16 %v5033
  %v5247 = vunpack.c.l.b16 %v5036
  %v5248 = vunpack.c.l.b16 %v5040
  %v5249 = vunpack.c.l.b16 %v5043
  %v5250 = vunpack.c.l.b16 %v5047
  %v5251 = vunpack.c.l.b16 %v5050
  %v5252 = vunpack.c.l.b16 %v5054
  %v5253 = vunpack.c.l.b16 %v5057
  %v5254 = vunpack.c.l.b16 %v5061
  %v5255 = vunpack.c.l.b16 %v5064
  %v5256 = vunpack.c.l.b16 %v5068
  %v5257 = vunpack.c.l.b16 %v5071
  %v5258 = vunpack.c.l.b16 %v5075
  %v5259 = vunpack.c.l.b16 %v5078
  %v5260 = vunpack.c.l.b16 %v5082
  %v5261 = vunpack.c.l.b16 %v5085
  %v5262 = vunpack.c.l.b16 %v5089
  %v5263 = vunpack.c.l.b16 %v5092
  %v5264 = vunpack.c.l.b16 %v5096
  %v5265 = vunpack.c.l.b16 %v5099
  %v5266 = vunpack.c.l.b16 %v5103
  %v5267 = vunpack.c.l.b16 %v5106
  %v5268 = vunpack.c.l.b16 %v5110
  %v5269 = vunpack.c.l.b16 %v5113
  %v5270 = vunpack.c.l.b16 %v5117
  %v5271 = vunpack.c.l.b16 %v5120
  %v5272 = vunpack.c.l.b16 %v5124
  %v5273 = vunpack.c.l.b16 %v5127
  %v5274 = vunpack.c.l.b16 %v5131
  %v5275 = vunpack.c.l.b16 %v5134
  %v5276 = vunpack.c.l.b16 %v5138
  %v5277 = vunpack.c.l.b16 %v5141
  %v5278 = vunpack.c.l.b16 %v5145
  %v5279 = vunpack.c.l.b16 %v5148
  %v5280 = vunpack.c.l.b16 %v5152
  %v5281 = vunpack.c.l.b16 %v5155
  %v5282 = vunpack.c.l.b16 %v5159
  %v5283 = vunpack.c.l.b16 %v5162
  %v5284 = vunpack.c.l.b16 %v5166
  %v5285 = vunpack.c.l.b16 %v5169
  %v5286 = vunpack.c.l.b16 %v5173
  %v5287 = vunpack.c.l.b16 %v5176
  %v5288 = vunpack.c.l.b16 %v5180
  %v5289 = vunpack.c.l.b16 %v5183
  %v5290 = vunpack.c.l.b16 %v5187
  %v5291 = vunpack.c.l.b16 %v5190
  %v5292 = vunpack.c.l.b16 %v5194
  %v5293 = vunpack.c.l.b16 %v5197
  %v5294 = vunpack.c.l.b16 %v5201
  %v5295 = vunpack.c.l.b16 %v5204
  %v5296 = vunpack.c.l.b16 %v5208
  %v5297 = vunpack.c.l.b16 %v5211
  %v5298 = vunpack.c.l.b16 %v5215
  %v5299 = vunpack.c.l.b16 %v5218
  %v5300 = vunpack.c.l.b16 %v5222
  %v5301 = vunpack.c.l.b16 %v5225
  %v5302 = vunpack.c.l.b16 %v5229
  %v5303 = vunpack.c.l.b16 %v5232
  %v5304 = vunpack.c.l.b16 %v5236
  %v5305 = vunpack.c.l.b16 %v5239
  %v5306 = vpack.c.b16 %v5243, %v5242
  %v5307 = vpack.c.b16 %v5245, %v5244
  %v5308 = vpack.c.b16 %v5247, %v5246
  %v5309 = vpack.c.b16 %v5249, %v5248
  %v5310 = vpack.c.b16 %v5251, %v5250
  %v5311 = vpack.c.b16 %v5253, %v5252
  %v5312 = vpack.c.b16 %v5255, %v5254
  %v5313 = vpack.c.b16 %v5257, %v5256
  %v5314 = vpack.c.b16 %v5259, %v5258
  %v5315 = vpack.c.b16 %v5261, %v5260
  %v5316 = vpack.c.b16 %v5263, %v5262
  %v5317 = vpack.c.b16 %v5265, %v5264
  %v5318 = vpack.c.b16 %v5267, %v5266
  %v5319 = vpack.c.b16 %v5269, %v5268
  %v5320 = vpack.c.b16 %v5271, %v5270
  %v5321 = vpack.c.b16 %v5273, %v5272
  %v5322 = vpack.c.b16 %v5275, %v5274
  %v5323 = vpack.c.b16 %v5277, %v5276
  %v5324 = vpack.c.b16 %v5279, %v5278
  %v5325 = vpack.c.b16 %v5281, %v5280
  %v5326 = vpack.c.b16 %v5283, %v5282
  %v5327 = vpack.c.b16 %v5285, %v5284
  %v5328 = vpack.c.b16 %v5287, %v5286
  %v5329 = vpack.c.b16 %v5289, %v5288
  %v5330 = vpack.c.b16 %v5291, %v5290
  %v5331 = vpack.c.b16 %v5293, %v5292
  %v5332 = vpack.c.b16 %v5295, %v5294
  %v5333 = vpack.c.b16 %v5297, %v5296
  %v5334 = vpack.c.b16 %v5299, %v5298
  %v5335 = vpack.c.b16 %v5301, %v5300
  %v5336 = vpack.c.b16 %v5303, %v5302
  %v5337 = vpack.c.b16 %v5305, %v5304
  %v5339 = vsel %vm984, %v5306, 0
  %v5342 = vsel %vm984, %v5307, 0
  %v5345 = vsel %vm984, %v5308, 0
  %v5348 = vsel %vm984, %v5309, 0
  %v5351 = vsel %vm984, %v5310, 0
  %v5354 = vsel %vm984, %v5311, 0
  %v5357 = vsel %vm984, %v5312, 0
  %v5360 = vsel %vm984, %v5313, 0
  %v5363 = vsel %vm984, %v5314, 0
  %v5366 = vsel %vm984, %v5315, 0
  %v5369 = vsel %vm984, %v5316, 0
  %v5372 = vsel %vm984, %v5317, 0
  %v5375 = vsel %vm984, %v5318, 0
  %v5378 = vsel %vm984, %v5319, 0
  %v5381 = vsel %vm984, %v5320, 0
  %v5384 = vsel %vm984, %v5321, 0
  %v5387 = vsel %vm984, %v5322, 0
  %v5390 = vsel %vm984, %v5323, 0
  %v5393 = vsel %vm984, %v5324, 0
  %v5396 = vsel %vm984, %v5325, 0
  %v5399 = vsel %vm984, %v5326, 0
  %v5402 = vsel %vm984, %v5327, 0
  %v5405 = vsel %vm984, %v5328, 0
  %v5408 = vsel %vm984, %v5329, 0
  %v5411 = vsel %vm984, %v5330, 0
  %v5414 = vsel %vm984, %v5331, 0
  %v5417 = vsel %vm984, %v5332, 0
  %v5420 = vsel %vm984, %v5333, 0
  %v5423 = vsel %vm984, %v5334, 0
  %v5426 = vsel %vm984, %v5335, 0
  %v5429 = vsel %vm984, %v5336, 0
  %v5432 = vsel %vm984, %v5337, 0
  %v5435 = vsel %vm1081, %v5241, 0
  %5437 = vmatprep.subr.bf16.mxu0 0
  %5438 = vmatpush1.bf16.msra.mxu0 0
  %5439 = vmatprep.subr.bf16.mxu0 0
  %5440 = vmatpush1.bf16.msra.mxu0 0
  %5441 = vmatprep.subr.bf16.mxu0 0
  %5442 = vmatpush1.bf16.msra.mxu0 0
  %5443 = vmatprep.subr.bf16.mxu0 0
  %5444 = vmatpush1.bf16.msra.mxu0 0
  %5445 = vmatprep.subr.bf16.mxu0 0
  %5446 = vmatpush1.bf16.msra.mxu0 0
  %5447 = vmatprep.subr.bf16.mxu0 0
  %5448 = vmatpush1.bf16.msra.mxu0 0
  %5449 = vmatprep.subr.bf16.mxu0 0
  %5450 = vmatpush1.bf16.msra.mxu0 0
  %5451 = vmatprep.subr.bf16.mxu0 0
  %5452 = vmatpush1.bf16.msra.mxu0 %v5435
  %5453 = vmatprep.subr.bf16.mxu0 0
  %5454 = vmatpush2.bf16.msra.mxu0 0
  %5455 = vmatprep.subr.bf16.mxu0 0
  %5456 = vmatpush2.bf16.msra.mxu0 0
  %5457 = vmatprep.subr.bf16.mxu0 0
  %5458 = vmatpush2.bf16.msra.mxu0 0
  %5459 = vmatprep.subr.bf16.mxu0 0
  %5460 = vmatpush2.bf16.msra.mxu0 0
  %5461 = vmatprep.subr.bf16.mxu0 0
  %5462 = vmatpush2.bf16.msra.mxu0 0
  %5463 = vmatprep.subr.bf16.mxu0 0
  %5464 = vmatpush2.bf16.msra.mxu0 0
  %5465 = vmatprep.subr.bf16.mxu0 0
  %5466 = vmatpush2.bf16.msra.mxu0 0
  %5467 = vmatprep.subr.bf16.mxu0 0
  %5468 = vmatpush2.bf16.msra.mxu0 0
  %5469 = vmatprep.mubr.bf16.mxu0 0
  %5470 = vmatmul.mubr.bf16.gmra.mxu0 %v5339
  %v5471 = vpop.f32.mrf.mxu0
  %v5472 = vadd.f32 0.0, %v5471
  %v5473 = vpop.f32.mrf.mxu0
  %v5474 = vpop.f32.mrf.mxu0
  %v5475 = vadd.f32 0.0, %v5474
  %v5476 = vpop.f32.mrf.mxu0
  %5477 = vmatprep.mubr.bf16.mxu0 0
  %5478 = vmatmul.mubr.bf16.gmra.mxu0 %v5342
  %v5479 = vpop.f32.mrf.mxu0
  %v5480 = vadd.f32 0.0, %v5479
  %v5481 = vpop.f32.mrf.mxu0
  %v5482 = vpop.f32.mrf.mxu0
  %v5483 = vadd.f32 0.0, %v5482
  %v5484 = vpop.f32.mrf.mxu0
  %5485 = vmatprep.mubr.bf16.mxu0 0
  %5486 = vmatmul.mubr.bf16.gmra.mxu0 %v5345
  %v5487 = vpop.f32.mrf.mxu0
  %v5488 = vadd.f32 0.0, %v5487
  %v5489 = vpop.f32.mrf.mxu0
  %v5490 = vpop.f32.mrf.mxu0
  %v5491 = vadd.f32 0.0, %v5490
  %v5492 = vpop.f32.mrf.mxu0
  %5493 = vmatprep.mubr.bf16.mxu0 0
  %5494 = vmatmul.mubr.bf16.gmra.mxu0 %v5348
  %v5495 = vpop.f32.mrf.mxu0
  %v5496 = vadd.f32 0.0, %v5495
  %v5497 = vpop.f32.mrf.mxu0
  %v5498 = vpop.f32.mrf.mxu0
  %v5499 = vadd.f32 0.0, %v5498
  %v5500 = vpop.f32.mrf.mxu0
  %5501 = vmatprep.mubr.bf16.mxu0 0
  %5502 = vmatmul.mubr.bf16.gmra.mxu0 %v5351
  %v5503 = vpop.f32.mrf.mxu0
  %v5504 = vadd.f32 0.0, %v5503
  %v5505 = vpop.f32.mrf.mxu0
  %v5506 = vpop.f32.mrf.mxu0
  %v5507 = vadd.f32 0.0, %v5506
  %v5508 = vpop.f32.mrf.mxu0
  %5509 = vmatprep.mubr.bf16.mxu0 0
  %5510 = vmatmul.mubr.bf16.gmra.mxu0 %v5354
  %v5511 = vpop.f32.mrf.mxu0
  %v5512 = vadd.f32 0.0, %v5511
  %v5513 = vpop.f32.mrf.mxu0
  %v5514 = vpop.f32.mrf.mxu0
  %v5515 = vadd.f32 0.0, %v5514
  %v5516 = vpop.f32.mrf.mxu0
  %5517 = vmatprep.mubr.bf16.mxu0 0
  %5518 = vmatmul.mubr.bf16.gmra.mxu0 %v5357
  %v5519 = vpop.f32.mrf.mxu0
  %v5520 = vadd.f32 0.0, %v5519
  %v5521 = vpop.f32.mrf.mxu0
  %v5522 = vpop.f32.mrf.mxu0
  %v5523 = vadd.f32 0.0, %v5522
  %v5524 = vpop.f32.mrf.mxu0
  %5525 = vmatprep.mubr.bf16.mxu0 0
  %5526 = vmatmul.mubr.bf16.gmra.mxu0 %v5360
  %v5527 = vpop.f32.mrf.mxu0
  %v5528 = vadd.f32 0.0, %v5527
  %v5529 = vpop.f32.mrf.mxu0
  %v5530 = vpop.f32.mrf.mxu0
  %v5531 = vadd.f32 0.0, %v5530
  %v5532 = vpop.f32.mrf.mxu0
  %5533 = vmatprep.mubr.bf16.mxu0 0
  %5534 = vmatmul.mubr.bf16.gmra.mxu0 %v5363
  %v5535 = vpop.f32.mrf.mxu0
  %v5536 = vadd.f32 0.0, %v5535
  %v5537 = vpop.f32.mrf.mxu0
  %v5538 = vpop.f32.mrf.mxu0
  %v5539 = vadd.f32 0.0, %v5538
  %v5540 = vpop.f32.mrf.mxu0
  %5541 = vmatprep.mubr.bf16.mxu0 0
  %5542 = vmatmul.mubr.bf16.gmra.mxu0 %v5366
  %v5543 = vpop.f32.mrf.mxu0
  %v5544 = vadd.f32 0.0, %v5543
  %v5545 = vpop.f32.mrf.mxu0
  %v5546 = vpop.f32.mrf.mxu0
  %v5547 = vadd.f32 0.0, %v5546
  %v5548 = vpop.f32.mrf.mxu0
  %5549 = vmatprep.mubr.bf16.mxu0 0
  %5550 = vmatmul.mubr.bf16.gmra.mxu0 %v5369
  %v5551 = vpop.f32.mrf.mxu0
  %v5552 = vadd.f32 0.0, %v5551
  %v5553 = vpop.f32.mrf.mxu0
  %v5554 = vpop.f32.mrf.mxu0
  %v5555 = vadd.f32 0.0, %v5554
  %v5556 = vpop.f32.mrf.mxu0
  %5557 = vmatprep.mubr.bf16.mxu0 0
  %5558 = vmatmul.mubr.bf16.gmra.mxu0 %v5372
  %v5559 = vpop.f32.mrf.mxu0
  %v5560 = vadd.f32 0.0, %v5559
  %v5561 = vpop.f32.mrf.mxu0
  %v5562 = vpop.f32.mrf.mxu0
  %v5563 = vadd.f32 0.0, %v5562
  %v5564 = vpop.f32.mrf.mxu0
  %5565 = vmatprep.mubr.bf16.mxu0 0
  %5566 = vmatmul.mubr.bf16.gmra.mxu0 %v5375
  %v5567 = vpop.f32.mrf.mxu0
  %v5568 = vadd.f32 0.0, %v5567
  %v5569 = vpop.f32.mrf.mxu0
  %v5570 = vpop.f32.mrf.mxu0
  %v5571 = vadd.f32 0.0, %v5570
  %v5572 = vpop.f32.mrf.mxu0
  %5573 = vmatprep.mubr.bf16.mxu0 0
  %5574 = vmatmul.mubr.bf16.gmra.mxu0 %v5378
  %v5575 = vpop.f32.mrf.mxu0
  %v5576 = vadd.f32 0.0, %v5575
  %v5577 = vpop.f32.mrf.mxu0
  %v5578 = vpop.f32.mrf.mxu0
  %v5579 = vadd.f32 0.0, %v5578
  %v5580 = vpop.f32.mrf.mxu0
  %5581 = vmatprep.mubr.bf16.mxu0 0
  %5582 = vmatmul.mubr.bf16.gmra.mxu0 %v5381
  %v5583 = vpop.f32.mrf.mxu0
  %v5584 = vadd.f32 0.0, %v5583
  %v5585 = vpop.f32.mrf.mxu0
  %v5586 = vpop.f32.mrf.mxu0
  %v5587 = vadd.f32 0.0, %v5586
  %v5588 = vpop.f32.mrf.mxu0
  %5589 = vmatprep.mubr.bf16.mxu0 0
  %5590 = vmatmul.mubr.bf16.gmra.mxu0 %v5384
  %v5591 = vpop.f32.mrf.mxu0
  %v5592 = vadd.f32 0.0, %v5591
  %v5593 = vpop.f32.mrf.mxu0
  %v5594 = vpop.f32.mrf.mxu0
  %v5595 = vadd.f32 0.0, %v5594
  %v5596 = vpop.f32.mrf.mxu0
  %5597 = vmatprep.mubr.bf16.mxu0 0
  %5598 = vmatmul.mubr.bf16.gmra.mxu0 %v5387
  %v5599 = vpop.f32.mrf.mxu0
  %v5600 = vadd.f32 0.0, %v5599
  %v5601 = vpop.f32.mrf.mxu0
  %v5602 = vpop.f32.mrf.mxu0
  %v5603 = vadd.f32 0.0, %v5602
  %v5604 = vpop.f32.mrf.mxu0
  %5605 = vmatprep.mubr.bf16.mxu0 0
  %5606 = vmatmul.mubr.bf16.gmra.mxu0 %v5390
  %v5607 = vpop.f32.mrf.mxu0
  %v5608 = vadd.f32 0.0, %v5607
  %v5609 = vpop.f32.mrf.mxu0
  %v5610 = vpop.f32.mrf.mxu0
  %v5611 = vadd.f32 0.0, %v5610
  %v5612 = vpop.f32.mrf.mxu0
  %5613 = vmatprep.mubr.bf16.mxu0 0
  %5614 = vmatmul.mubr.bf16.gmra.mxu0 %v5393
  %v5615 = vpop.f32.mrf.mxu0
  %v5616 = vadd.f32 0.0, %v5615
  %v5617 = vpop.f32.mrf.mxu0
  %v5618 = vpop.f32.mrf.mxu0
  %v5619 = vadd.f32 0.0, %v5618
  %v5620 = vpop.f32.mrf.mxu0
  %5621 = vmatprep.mubr.bf16.mxu0 0
  %5622 = vmatmul.mubr.bf16.gmra.mxu0 %v5396
  %v5623 = vpop.f32.mrf.mxu0
  %v5624 = vadd.f32 0.0, %v5623
  %v5625 = vpop.f32.mrf.mxu0
  %v5626 = vpop.f32.mrf.mxu0
  %v5627 = vadd.f32 0.0, %v5626
  %v5628 = vpop.f32.mrf.mxu0
  %5629 = vmatprep.mubr.bf16.mxu0 0
  %5630 = vmatmul.mubr.bf16.gmra.mxu0 %v5399
  %v5631 = vpop.f32.mrf.mxu0
  %v5632 = vadd.f32 0.0, %v5631
  %v5633 = vpop.f32.mrf.mxu0
  %v5634 = vpop.f32.mrf.mxu0
  %v5635 = vadd.f32 0.0, %v5634
  %v5636 = vpop.f32.mrf.mxu0
  %5637 = vmatprep.mubr.bf16.mxu0 0
  %5638 = vmatmul.mubr.bf16.gmra.mxu0 %v5402
  %v5639 = vpop.f32.mrf.mxu0
  %v5640 = vadd.f32 0.0, %v5639
  %v5641 = vpop.f32.mrf.mxu0
  %v5642 = vpop.f32.mrf.mxu0
  %v5643 = vadd.f32 0.0, %v5642
  %v5644 = vpop.f32.mrf.mxu0
  %5645 = vmatprep.mubr.bf16.mxu0 0
  %5646 = vmatmul.mubr.bf16.gmra.mxu0 %v5405
  %v5647 = vpop.f32.mrf.mxu0
  %v5648 = vadd.f32 0.0, %v5647
  %v5649 = vpop.f32.mrf.mxu0
  %v5650 = vpop.f32.mrf.mxu0
  %v5651 = vadd.f32 0.0, %v5650
  %v5652 = vpop.f32.mrf.mxu0
  %5653 = vmatprep.mubr.bf16.mxu0 0
  %5654 = vmatmul.mubr.bf16.gmra.mxu0 %v5408
  %v5655 = vpop.f32.mrf.mxu0
  %v5656 = vadd.f32 0.0, %v5655
  %v5657 = vpop.f32.mrf.mxu0
  %v5658 = vpop.f32.mrf.mxu0
  %v5659 = vadd.f32 0.0, %v5658
  %v5660 = vpop.f32.mrf.mxu0
  %5661 = vmatprep.mubr.bf16.mxu0 0
  %5662 = vmatmul.mubr.bf16.gmra.mxu0 %v5411
  %v5663 = vpop.f32.mrf.mxu0
  %v5664 = vadd.f32 0.0, %v5663
  %v5665 = vpop.f32.mrf.mxu0
  %v5666 = vpop.f32.mrf.mxu0
  %v5667 = vadd.f32 0.0, %v5666
  %v5668 = vpop.f32.mrf.mxu0
  %5669 = vmatprep.mubr.bf16.mxu0 0
  %5670 = vmatmul.mubr.bf16.gmra.mxu0 %v5414
  %v5671 = vpop.f32.mrf.mxu0
  %v5672 = vadd.f32 0.0, %v5671
  %v5673 = vpop.f32.mrf.mxu0
  %v5674 = vpop.f32.mrf.mxu0
  %v5675 = vadd.f32 0.0, %v5674
  %v5676 = vpop.f32.mrf.mxu0
  %5677 = vmatprep.mubr.bf16.mxu0 0
  %5678 = vmatmul.mubr.bf16.gmra.mxu0 %v5417
  %v5679 = vpop.f32.mrf.mxu0
  %v5680 = vadd.f32 0.0, %v5679
  %v5681 = vpop.f32.mrf.mxu0
  %v5682 = vpop.f32.mrf.mxu0
  %v5683 = vadd.f32 0.0, %v5682
  %v5684 = vpop.f32.mrf.mxu0
  %5685 = vmatprep.mubr.bf16.mxu0 0
  %5686 = vmatmul.mubr.bf16.gmra.mxu0 %v5420
  %v5687 = vpop.f32.mrf.mxu0
  %v5688 = vadd.f32 0.0, %v5687
  %v5689 = vpop.f32.mrf.mxu0
  %v5690 = vpop.f32.mrf.mxu0
  %v5691 = vadd.f32 0.0, %v5690
  %v5692 = vpop.f32.mrf.mxu0
  %5693 = vmatprep.mubr.bf16.mxu0 0
  %5694 = vmatmul.mubr.bf16.gmra.mxu0 %v5423
  %v5695 = vpop.f32.mrf.mxu0
  %v5696 = vadd.f32 0.0, %v5695
  %v5697 = vpop.f32.mrf.mxu0
  %v5698 = vpop.f32.mrf.mxu0
  %v5699 = vadd.f32 0.0, %v5698
  %v5700 = vpop.f32.mrf.mxu0
  %5701 = vmatprep.mubr.bf16.mxu0 0
  %5702 = vmatmul.mubr.bf16.gmra.mxu0 %v5426
  %v5703 = vpop.f32.mrf.mxu0
  %v5704 = vadd.f32 0.0, %v5703
  %v5705 = vpop.f32.mrf.mxu0
  %v5706 = vpop.f32.mrf.mxu0
  %v5707 = vadd.f32 0.0, %v5706
  %v5708 = vpop.f32.mrf.mxu0
  %5709 = vmatprep.mubr.bf16.mxu0 0
  %5710 = vmatmul.mubr.bf16.gmra.mxu0 %v5429
  %v5711 = vpop.f32.mrf.mxu0
  %v5712 = vadd.f32 0.0, %v5711
  %v5713 = vpop.f32.mrf.mxu0
  %v5714 = vpop.f32.mrf.mxu0
  %v5715 = vadd.f32 0.0, %v5714
  %v5716 = vpop.f32.mrf.mxu0
  %5717 = vmatprep.mubr.bf16.mxu0 0
  %5718 = vmatmul.mubr.bf16.gmra.mxu0 %v5432
  %v5719 = vpop.f32.mrf.mxu0
  %v5720 = vadd.f32 0.0, %v5719
  %v5721 = vpop.f32.mrf.mxu0
  %v5722 = vpop.f32.mrf.mxu0
  %v5723 = vadd.f32 0.0, %v5722
  %v5724 = vpop.f32.mrf.mxu0
  %5725 = vdwg.mxu0
  %v5726 = vadd.f32 %v4824, %v5472
  %v5727 = vadd.f32 %v4825, %v5475
  %v5728 = vadd.f32 %v4826, %v5480
  %v5729 = vadd.f32 %v4827, %v5483
  %v5730 = vadd.f32 %v4828, %v5488
  %v5731 = vadd.f32 %v4829, %v5491
  %v5732 = vadd.f32 %v4830, %v5496
  %v5733 = vadd.f32 %v4831, %v5499
  %v5734 = vadd.f32 %v4832, %v5504
  %v5735 = vadd.f32 %v4833, %v5507
  %v5736 = vadd.f32 %v4834, %v5512
  %v5737 = vadd.f32 %v4835, %v5515
  %v5738 = vadd.f32 %v4836, %v5520
  %v5739 = vadd.f32 %v4837, %v5523
  %v5740 = vadd.f32 %v4838, %v5528
  %v5741 = vadd.f32 %v4839, %v5531
  %v5742 = vadd.f32 %v4840, %v5536
  %v5743 = vadd.f32 %v4841, %v5539
  %v5744 = vadd.f32 %v4842, %v5544
  %v5745 = vadd.f32 %v4843, %v5547
  %v5746 = vadd.f32 %v4844, %v5552
  %v5747 = vadd.f32 %v4845, %v5555
  %v5748 = vadd.f32 %v4846, %v5560
  %v5749 = vadd.f32 %v4847, %v5563
  %v5750 = vadd.f32 %v4848, %v5568
  %v5751 = vadd.f32 %v4849, %v5571
  %v5752 = vadd.f32 %v4850, %v5576
  %v5753 = vadd.f32 %v4851, %v5579
  %v5754 = vadd.f32 %v4852, %v5584
  %v5755 = vadd.f32 %v4853, %v5587
  %v5756 = vadd.f32 %v4854, %v5592
  %v5757 = vadd.f32 %v4855, %v5595
  %v5758 = vadd.f32 %v4856, %v5600
  %v5759 = vadd.f32 %v4857, %v5603
  %v5760 = vadd.f32 %v4858, %v5608
  %v5761 = vadd.f32 %v4859, %v5611
  %v5762 = vadd.f32 %v4860, %v5616
  %v5763 = vadd.f32 %v4861, %v5619
  %v5764 = vadd.f32 %v4862, %v5624
  %v5765 = vadd.f32 %v4863, %v5627
  %v5766 = vadd.f32 %v4864, %v5632
  %v5767 = vadd.f32 %v4865, %v5635
  %v5768 = vadd.f32 %v4866, %v5640
  %v5769 = vadd.f32 %v4867, %v5643
  %v5770 = vadd.f32 %v4868, %v5648
  %v5771 = vadd.f32 %v4869, %v5651
  %v5772 = vadd.f32 %v4870, %v5656
  %v5773 = vadd.f32 %v4871, %v5659
  %v5774 = vadd.f32 %v4872, %v5664
  %v5775 = vadd.f32 %v4873, %v5667
  %v5776 = vadd.f32 %v4874, %v5672
  %v5777 = vadd.f32 %v4875, %v5675
  %v5778 = vadd.f32 %v4876, %v5680
  %v5779 = vadd.f32 %v4877, %v5683
  %v5780 = vadd.f32 %v4878, %v5688
  %v5781 = vadd.f32 %v4879, %v5691
  %v5782 = vadd.f32 %v4880, %v5696
  %v5783 = vadd.f32 %v4881, %v5699
  %v5784 = vadd.f32 %v4882, %v5704
  %v5785 = vadd.f32 %v4883, %v5707
  %v5786 = vadd.f32 %v4884, %v5712
  %v5787 = vadd.f32 %v4885, %v5715
  %v5788 = vadd.f32 %v4886, %v5720
  %v5789 = vadd.f32 %v4887, %v5723
  %s5790 = scalar_lea.vmem %s0, 24
  %v5791 = vld [vmem:[%s5790] sm:$0xf]
  %v5792 = vld [vmem:[%s5790 + $0x4] sm:$0xf]
  %v5793 = vld [vmem:[%s5790 + $0xc] sm:$0xf]
  %v5794 = vld [vmem:[%s5790 + $0x10] sm:$0xf]
  %v5795 = vld [vmem:[%s5790 + $0x18] sm:$0xf]
  %v5796 = vld [vmem:[%s5790 + $0x1c] sm:$0xf]
  %v5797 = vld [vmem:[%s5790 + $0x24] sm:$0xf]
  %v5798 = vld [vmem:[%s5790 + $0x28] sm:$0xf]
  %v5799 = vld [vmem:[%s5790 + $0x30] sm:$0xf]
  %v5800 = vld [vmem:[%s5790 + $0x34] sm:$0xf]
  %v5801 = vld [vmem:[%s5790 + $0x3c] sm:$0xf]
  %v5802 = vld [vmem:[%s5790 + $0x40] sm:$0xf]
  %v5803 = vld [vmem:[%s5790 + $0x48] sm:$0xf]
  %v5804 = vld [vmem:[%s5790 + $0x4c] sm:$0xf]
  %v5805 = vld [vmem:[%s5790 + $0x54] sm:$0xf]
  %v5806 = vld [vmem:[%s5790 + $0x58] sm:$0xf]
  %v5807 = vld [vmem:[%s5790 + $0x60] sm:$0xf]
  %v5808 = vld [vmem:[%s5790 + $0x64] sm:$0xf]
  %v5809 = vld [vmem:[%s5790 + $0x6c] sm:$0xf]
  %v5810 = vld [vmem:[%s5790 + $0x70] sm:$0xf]
  %v5811 = vld [vmem:[%s5790 + $0x78] sm:$0xf]
  %v5812 = vld [vmem:[%s5790 + $0x7c] sm:$0xf]
  %v5813 = vld [vmem:[%s5790 + $0x84] sm:$0xf]
  %v5814 = vld [vmem:[%s5790 + $0x88] sm:$0xf]
  %v5815 = vld [vmem:[%s5790 + $0x90] sm:$0xf]
  %v5816 = vld [vmem:[%s5790 + $0x94] sm:$0xf]
  %v5817 = vld [vmem:[%s5790 + $0x9c] sm:$0xf]
  %v5818 = vld [vmem:[%s5790 + $0xa0] sm:$0xf]
  %v5819 = vld [vmem:[%s5790 + $0xa8] sm:$0xf]
  %v5820 = vld [vmem:[%s5790 + $0xac] sm:$0xf]
  %v5821 = vld [vmem:[%s5790 + $0xb4] sm:$0xf]
  %v5822 = vld [vmem:[%s5790 + $0xb8] sm:$0xf]
  %v5823 = vld [vmem:[%s5790 + $0xd8] sm:$0xf]
  %v5824 = vld [vmem:[%s5790 + $0xdc] sm:$0xf]
  %v5825 = vld [vmem:[%s5790 + $0xe4] sm:$0xf]
  %v5826 = vld [vmem:[%s5790 + $0xe8] sm:$0xf]
  %v5827 = vld [vmem:[%s5790 + $0xf0] sm:$0xf]
  %v5828 = vld [vmem:[%s5790 + $0xf4] sm:$0xf]
  %v5829 = vld [vmem:[%s5790 + $0xfc] sm:$0xf]
  %v5830 = vld [vmem:[%s5790 + $0x100] sm:$0xf]
  %v5831 = vld [vmem:[%s5790 + $0x108] sm:$0xf]
  %v5832 = vld [vmem:[%s5790 + $0x10c] sm:$0xf]
  %v5833 = vld [vmem:[%s5790 + $0x114] sm:$0xf]
  %v5834 = vld [vmem:[%s5790 + $0x118] sm:$0xf]
  %v5835 = vld [vmem:[%s5790 + $0x120] sm:$0xf]
  %v5836 = vld [vmem:[%s5790 + $0x124] sm:$0xf]
  %v5837 = vld [vmem:[%s5790 + $0x12c] sm:$0xf]
  %v5838 = vld [vmem:[%s5790 + $0x130] sm:$0xf]
  %v5839 = vld [vmem:[%s5790 + $0x138] sm:$0xf]
  %v5840 = vld [vmem:[%s5790 + $0x13c] sm:$0xf]
  %v5841 = vld [vmem:[%s5790 + $0x144] sm:$0xf]
  %v5842 = vld [vmem:[%s5790 + $0x148] sm:$0xf]
  %v5843 = vld [vmem:[%s5790 + $0x150] sm:$0xf]
  %v5844 = vld [vmem:[%s5790 + $0x154] sm:$0xf]
  %v5845 = vld [vmem:[%s5790 + $0x15c] sm:$0xf]
  %v5846 = vld [vmem:[%s5790 + $0x160] sm:$0xf]
  %v5847 = vld [vmem:[%s5790 + $0x168] sm:$0xf]
  %v5848 = vld [vmem:[%s5790 + $0x16c] sm:$0xf]
  %v5849 = vld [vmem:[%s5790 + $0x174] sm:$0xf]
  %v5850 = vld [vmem:[%s5790 + $0x178] sm:$0xf]
  %v5851 = vld [vmem:[%s5790 + $0x180] sm:$0xf]
  %v5852 = vld [vmem:[%s5790 + $0x184] sm:$0xf]
  %v5853 = vld [vmem:[%s5790 + $0x18c] sm:$0xf]
  %v5854 = vld [vmem:[%s5790 + $0x190] sm:$0xf]
  %s5855 = scalar_lea.vmem %s1, 12
  %v5856 = vld [vmem:[%s5855] sm:$0x3]
  %v5921 = vunpack.c.l.b16 %v5791
  %v5922 = vunpack.c.l.b16 %v5792
  %v5923 = vunpack.c.l.b16 %v5793
  %v5924 = vunpack.c.l.b16 %v5794
  %v5925 = vunpack.c.l.b16 %v5795
  %v5926 = vunpack.c.l.b16 %v5796
  %v5927 = vunpack.c.l.b16 %v5797
  %v5928 = vunpack.c.l.b16 %v5798
  %v5929 = vunpack.c.l.b16 %v5799
  %v5930 = vunpack.c.l.b16 %v5800
  %v5931 = vunpack.c.l.b16 %v5801
  %v5932 = vunpack.c.l.b16 %v5802
  %v5933 = vunpack.c.l.b16 %v5803
  %v5934 = vunpack.c.l.b16 %v5804
  %v5935 = vunpack.c.l.b16 %v5805
  %v5936 = vunpack.c.l.b16 %v5806
  %v5937 = vunpack.c.l.b16 %v5807
  %v5938 = vunpack.c.l.b16 %v5808
  %v5939 = vunpack.c.l.b16 %v5809
  %v5940 = vunpack.c.l.b16 %v5810
  %v5941 = vunpack.c.l.b16 %v5811
  %v5942 = vunpack.c.l.b16 %v5812
  %v5943 = vunpack.c.l.b16 %v5813
  %v5944 = vunpack.c.l.b16 %v5814
  %v5945 = vunpack.c.l.b16 %v5815
  %v5946 = vunpack.c.l.b16 %v5816
  %v5947 = vunpack.c.l.b16 %v5817
  %v5948 = vunpack.c.l.b16 %v5818
  %v5949 = vunpack.c.l.b16 %v5819
  %v5950 = vunpack.c.l.b16 %v5820
  %v5951 = vunpack.c.l.b16 %v5821
  %v5952 = vunpack.c.l.b16 %v5822
  %v5953 = vunpack.c.l.b16 %v5823
  %v5954 = vunpack.c.l.b16 %v5824
  %v5955 = vunpack.c.l.b16 %v5825
  %v5956 = vunpack.c.l.b16 %v5826
  %v5957 = vunpack.c.l.b16 %v5827
  %v5958 = vunpack.c.l.b16 %v5828
  %v5959 = vunpack.c.l.b16 %v5829
  %v5960 = vunpack.c.l.b16 %v5830
  %v5961 = vunpack.c.l.b16 %v5831
  %v5962 = vunpack.c.l.b16 %v5832
  %v5963 = vunpack.c.l.b16 %v5833
  %v5964 = vunpack.c.l.b16 %v5834
  %v5965 = vunpack.c.l.b16 %v5835
  %v5966 = vunpack.c.l.b16 %v5836
  %v5967 = vunpack.c.l.b16 %v5837
  %v5968 = vunpack.c.l.b16 %v5838
  %v5969 = vunpack.c.l.b16 %v5839
  %v5970 = vunpack.c.l.b16 %v5840
  %v5971 = vunpack.c.l.b16 %v5841
  %v5972 = vunpack.c.l.b16 %v5842
  %v5973 = vunpack.c.l.b16 %v5843
  %v5974 = vunpack.c.l.b16 %v5844
  %v5975 = vunpack.c.l.b16 %v5845
  %v5976 = vunpack.c.l.b16 %v5846
  %v5977 = vunpack.c.l.b16 %v5847
  %v5978 = vunpack.c.l.b16 %v5848
  %v5979 = vunpack.c.l.b16 %v5849
  %v5980 = vunpack.c.l.b16 %v5850
  %v5981 = vunpack.c.l.b16 %v5851
  %v5982 = vunpack.c.l.b16 %v5852
  %v5983 = vunpack.c.l.b16 %v5853
  %v5984 = vunpack.c.l.b16 %v5854
  %v5985 = vpack.c.b16 %v5922, %v5921
  %v5986 = vpack.c.b16 %v5924, %v5923
  %v5987 = vpack.c.b16 %v5926, %v5925
  %v5988 = vpack.c.b16 %v5928, %v5927
  %v5989 = vpack.c.b16 %v5930, %v5929
  %v5990 = vpack.c.b16 %v5932, %v5931
  %v5991 = vpack.c.b16 %v5934, %v5933
  %v5992 = vpack.c.b16 %v5936, %v5935
  %v5993 = vpack.c.b16 %v5938, %v5937
  %v5994 = vpack.c.b16 %v5940, %v5939
  %v5995 = vpack.c.b16 %v5942, %v5941
  %v5996 = vpack.c.b16 %v5944, %v5943
  %v5997 = vpack.c.b16 %v5946, %v5945
  %v5998 = vpack.c.b16 %v5948, %v5947
  %v5999 = vpack.c.b16 %v5950, %v5949
  %v6000 = vpack.c.b16 %v5952, %v5951
  %v6001 = vpack.c.b16 %v5954, %v5953
  %v6002 = vpack.c.b16 %v5956, %v5955
  %v6003 = vpack.c.b16 %v5958, %v5957
  %v6004 = vpack.c.b16 %v5960, %v5959
  %v6005 = vpack.c.b16 %v5962, %v5961
  %v6006 = vpack.c.b16 %v5964, %v5963
  %v6007 = vpack.c.b16 %v5966, %v5965
  %v6008 = vpack.c.b16 %v5968, %v5967
  %v6009 = vpack.c.b16 %v5970, %v5969
  %v6010 = vpack.c.b16 %v5972, %v5971
  %v6011 = vpack.c.b16 %v5974, %v5973
  %v6012 = vpack.c.b16 %v5976, %v5975
  %v6013 = vpack.c.b16 %v5978, %v5977
  %v6014 = vpack.c.b16 %v5980, %v5979
  %v6015 = vpack.c.b16 %v5982, %v5981
  %v6016 = vpack.c.b16 %v5984, %v5983
  %v6018 = vsel %vm984, %v5985, 0
  %v6021 = vsel %vm984, %v5986, 0
  %v6024 = vsel %vm984, %v5987, 0
  %v6027 = vsel %vm984, %v5988, 0
  %v6030 = vsel %vm984, %v5989, 0
  %v6033 = vsel %vm984, %v5990, 0
  %v6036 = vsel %vm984, %v5991, 0
  %v6039 = vsel %vm984, %v5992, 0
  %v6042 = vsel %vm984, %v5993, 0
  %v6045 = vsel %vm984, %v5994, 0
  %v6048 = vsel %vm984, %v5995, 0
  %v6051 = vsel %vm984, %v5996, 0
  %v6054 = vsel %vm984, %v5997, 0
  %v6057 = vsel %vm984, %v5998, 0
  %v6060 = vsel %vm984, %v5999, 0
  %v6063 = vsel %vm984, %v6000, 0
  %v6066 = vsel %vm984, %v6001, 0
  %v6069 = vsel %vm984, %v6002, 0
  %v6072 = vsel %vm984, %v6003, 0
  %v6075 = vsel %vm984, %v6004, 0
  %v6078 = vsel %vm984, %v6005, 0
  %v6081 = vsel %vm984, %v6006, 0
  %v6084 = vsel %vm984, %v6007, 0
  %v6087 = vsel %vm984, %v6008, 0
  %v6090 = vsel %vm984, %v6009, 0
  %v6093 = vsel %vm984, %v6010, 0
  %v6096 = vsel %vm984, %v6011, 0
  %v6099 = vsel %vm984, %v6012, 0
  %v6102 = vsel %vm984, %v6013, 0
  %v6105 = vsel %vm984, %v6014, 0
  %v6108 = vsel %vm984, %v6015, 0
  %v6111 = vsel %vm984, %v6016, 0
  %v6114 = vsel %vm1081, %v5856, 0
  %6116 = vmatprep.subr.bf16.mxu0 0
  %6117 = vmatpush1.bf16.msra.mxu0 0
  %6118 = vmatprep.subr.bf16.mxu0 0
  %6119 = vmatpush1.bf16.msra.mxu0 0
  %6120 = vmatprep.subr.bf16.mxu0 0
  %6121 = vmatpush1.bf16.msra.mxu0 0
  %6122 = vmatprep.subr.bf16.mxu0 0
  %6123 = vmatpush1.bf16.msra.mxu0 0
  %6124 = vmatprep.subr.bf16.mxu0 0
  %6125 = vmatpush1.bf16.msra.mxu0 0
  %6126 = vmatprep.subr.bf16.mxu0 0
  %6127 = vmatpush1.bf16.msra.mxu0 0
  %6128 = vmatprep.subr.bf16.mxu0 0
  %6129 = vmatpush1.bf16.msra.mxu0 0
  %6130 = vmatprep.subr.bf16.mxu0 0
  %6131 = vmatpush1.bf16.msra.mxu0 %v6114
  %6132 = vmatprep.subr.bf16.mxu0 0
  %6133 = vmatpush2.bf16.msra.mxu0 0
  %6134 = vmatprep.subr.bf16.mxu0 0
  %6135 = vmatpush2.bf16.msra.mxu0 0
  %6136 = vmatprep.subr.bf16.mxu0 0
  %6137 = vmatpush2.bf16.msra.mxu0 0
  %6138 = vmatprep.subr.bf16.mxu0 0
  %6139 = vmatpush2.bf16.msra.mxu0 0
  %6140 = vmatprep.subr.bf16.mxu0 0
  %6141 = vmatpush2.bf16.msra.mxu0 0
  %6142 = vmatprep.subr.bf16.mxu0 0
  %6143 = vmatpush2.bf16.msra.mxu0 0
  %6144 = vmatprep.subr.bf16.mxu0 0
  %6145 = vmatpush2.bf16.msra.mxu0 0
  %6146 = vmatprep.subr.bf16.mxu0 0
  %6147 = vmatpush2.bf16.msra.mxu0 0
  %6148 = vmatprep.mubr.bf16.mxu0 0
  %6149 = vmatmul.mubr.bf16.gmra.mxu0 %v6018
  %v6150 = vpop.f32.mrf.mxu0
  %v6151 = vadd.f32 0.0, %v6150
  %v6152 = vpop.f32.mrf.mxu0
  %v6153 = vpop.f32.mrf.mxu0
  %v6154 = vadd.f32 0.0, %v6153
  %v6155 = vpop.f32.mrf.mxu0
  %6156 = vmatprep.mubr.bf16.mxu0 0
  %6157 = vmatmul.mubr.bf16.gmra.mxu0 %v6021
  %v6158 = vpop.f32.mrf.mxu0
  %v6159 = vadd.f32 0.0, %v6158
  %v6160 = vpop.f32.mrf.mxu0
  %v6161 = vpop.f32.mrf.mxu0
  %v6162 = vadd.f32 0.0, %v6161
  %v6163 = vpop.f32.mrf.mxu0
  %6164 = vmatprep.mubr.bf16.mxu0 0
  %6165 = vmatmul.mubr.bf16.gmra.mxu0 %v6024
  %v6166 = vpop.f32.mrf.mxu0
  %v6167 = vadd.f32 0.0, %v6166
  %v6168 = vpop.f32.mrf.mxu0
  %v6169 = vpop.f32.mrf.mxu0
  %v6170 = vadd.f32 0.0, %v6169
  %v6171 = vpop.f32.mrf.mxu0
  %6172 = vmatprep.mubr.bf16.mxu0 0
  %6173 = vmatmul.mubr.bf16.gmra.mxu0 %v6027
  %v6174 = vpop.f32.mrf.mxu0
  %v6175 = vadd.f32 0.0, %v6174
  %v6176 = vpop.f32.mrf.mxu0
  %v6177 = vpop.f32.mrf.mxu0
  %v6178 = vadd.f32 0.0, %v6177
  %v6179 = vpop.f32.mrf.mxu0
  %6180 = vmatprep.mubr.bf16.mxu0 0
  %6181 = vmatmul.mubr.bf16.gmra.mxu0 %v6030
  %v6182 = vpop.f32.mrf.mxu0
  %v6183 = vadd.f32 0.0, %v6182
  %v6184 = vpop.f32.mrf.mxu0
  %v6185 = vpop.f32.mrf.mxu0
  %v6186 = vadd.f32 0.0, %v6185
  %v6187 = vpop.f32.mrf.mxu0
  %6188 = vmatprep.mubr.bf16.mxu0 0
  %6189 = vmatmul.mubr.bf16.gmra.mxu0 %v6033
  %v6190 = vpop.f32.mrf.mxu0
  %v6191 = vadd.f32 0.0, %v6190
  %v6192 = vpop.f32.mrf.mxu0
  %v6193 = vpop.f32.mrf.mxu0
  %v6194 = vadd.f32 0.0, %v6193
  %v6195 = vpop.f32.mrf.mxu0
  %6196 = vmatprep.mubr.bf16.mxu0 0
  %6197 = vmatmul.mubr.bf16.gmra.mxu0 %v6036
  %v6198 = vpop.f32.mrf.mxu0
  %v6199 = vadd.f32 0.0, %v6198
  %v6200 = vpop.f32.mrf.mxu0
  %v6201 = vpop.f32.mrf.mxu0
  %v6202 = vadd.f32 0.0, %v6201
  %v6203 = vpop.f32.mrf.mxu0
  %6204 = vmatprep.mubr.bf16.mxu0 0
  %6205 = vmatmul.mubr.bf16.gmra.mxu0 %v6039
  %v6206 = vpop.f32.mrf.mxu0
  %v6207 = vadd.f32 0.0, %v6206
  %v6208 = vpop.f32.mrf.mxu0
  %v6209 = vpop.f32.mrf.mxu0
  %v6210 = vadd.f32 0.0, %v6209
  %v6211 = vpop.f32.mrf.mxu0
  %6212 = vmatprep.mubr.bf16.mxu0 0
  %6213 = vmatmul.mubr.bf16.gmra.mxu0 %v6042
  %v6214 = vpop.f32.mrf.mxu0
  %v6215 = vadd.f32 0.0, %v6214
  %v6216 = vpop.f32.mrf.mxu0
  %v6217 = vpop.f32.mrf.mxu0
  %v6218 = vadd.f32 0.0, %v6217
  %v6219 = vpop.f32.mrf.mxu0
  %6220 = vmatprep.mubr.bf16.mxu0 0
  %6221 = vmatmul.mubr.bf16.gmra.mxu0 %v6045
  %v6222 = vpop.f32.mrf.mxu0
  %v6223 = vadd.f32 0.0, %v6222
  %v6224 = vpop.f32.mrf.mxu0
  %v6225 = vpop.f32.mrf.mxu0
  %v6226 = vadd.f32 0.0, %v6225
  %v6227 = vpop.f32.mrf.mxu0
  %6228 = vmatprep.mubr.bf16.mxu0 0
  %6229 = vmatmul.mubr.bf16.gmra.mxu0 %v6048
  %v6230 = vpop.f32.mrf.mxu0
  %v6231 = vadd.f32 0.0, %v6230
  %v6232 = vpop.f32.mrf.mxu0
  %v6233 = vpop.f32.mrf.mxu0
  %v6234 = vadd.f32 0.0, %v6233
  %v6235 = vpop.f32.mrf.mxu0
  %6236 = vmatprep.mubr.bf16.mxu0 0
  %6237 = vmatmul.mubr.bf16.gmra.mxu0 %v6051
  %v6238 = vpop.f32.mrf.mxu0
  %v6239 = vadd.f32 0.0, %v6238
  %v6240 = vpop.f32.mrf.mxu0
  %v6241 = vpop.f32.mrf.mxu0
  %v6242 = vadd.f32 0.0, %v6241
  %v6243 = vpop.f32.mrf.mxu0
  %6244 = vmatprep.mubr.bf16.mxu0 0
  %6245 = vmatmul.mubr.bf16.gmra.mxu0 %v6054
  %v6246 = vpop.f32.mrf.mxu0
  %v6247 = vadd.f32 0.0, %v6246
  %v6248 = vpop.f32.mrf.mxu0
  %v6249 = vpop.f32.mrf.mxu0
  %v6250 = vadd.f32 0.0, %v6249
  %v6251 = vpop.f32.mrf.mxu0
  %6252 = vmatprep.mubr.bf16.mxu0 0
  %6253 = vmatmul.mubr.bf16.gmra.mxu0 %v6057
  %v6254 = vpop.f32.mrf.mxu0
  %v6255 = vadd.f32 0.0, %v6254
  %v6256 = vpop.f32.mrf.mxu0
  %v6257 = vpop.f32.mrf.mxu0
  %v6258 = vadd.f32 0.0, %v6257
  %v6259 = vpop.f32.mrf.mxu0
  %6260 = vmatprep.mubr.bf16.mxu0 0
  %6261 = vmatmul.mubr.bf16.gmra.mxu0 %v6060
  %v6262 = vpop.f32.mrf.mxu0
  %v6263 = vadd.f32 0.0, %v6262
  %v6264 = vpop.f32.mrf.mxu0
  %v6265 = vpop.f32.mrf.mxu0
  %v6266 = vadd.f32 0.0, %v6265
  %v6267 = vpop.f32.mrf.mxu0
  %6268 = vmatprep.mubr.bf16.mxu0 0
  %6269 = vmatmul.mubr.bf16.gmra.mxu0 %v6063
  %v6270 = vpop.f32.mrf.mxu0
  %v6271 = vadd.f32 0.0, %v6270
  %v6272 = vpop.f32.mrf.mxu0
  %v6273 = vpop.f32.mrf.mxu0
  %v6274 = vadd.f32 0.0, %v6273
  %v6275 = vpop.f32.mrf.mxu0
  %6276 = vmatprep.mubr.bf16.mxu0 0
  %6277 = vmatmul.mubr.bf16.gmra.mxu0 %v6066
  %v6278 = vpop.f32.mrf.mxu0
  %v6279 = vadd.f32 0.0, %v6278
  %v6280 = vpop.f32.mrf.mxu0
  %v6281 = vpop.f32.mrf.mxu0
  %v6282 = vadd.f32 0.0, %v6281
  %v6283 = vpop.f32.mrf.mxu0
  %6284 = vmatprep.mubr.bf16.mxu0 0
  %6285 = vmatmul.mubr.bf16.gmra.mxu0 %v6069
  %v6286 = vpop.f32.mrf.mxu0
  %v6287 = vadd.f32 0.0, %v6286
  %v6288 = vpop.f32.mrf.mxu0
  %v6289 = vpop.f32.mrf.mxu0
  %v6290 = vadd.f32 0.0, %v6289
  %v6291 = vpop.f32.mrf.mxu0
  %6292 = vmatprep.mubr.bf16.mxu0 0
  %6293 = vmatmul.mubr.bf16.gmra.mxu0 %v6072
  %v6294 = vpop.f32.mrf.mxu0
  %v6295 = vadd.f32 0.0, %v6294
  %v6296 = vpop.f32.mrf.mxu0
  %v6297 = vpop.f32.mrf.mxu0
  %v6298 = vadd.f32 0.0, %v6297
  %v6299 = vpop.f32.mrf.mxu0
  %6300 = vmatprep.mubr.bf16.mxu0 0
  %6301 = vmatmul.mubr.bf16.gmra.mxu0 %v6075
  %v6302 = vpop.f32.mrf.mxu0
  %v6303 = vadd.f32 0.0, %v6302
  %v6304 = vpop.f32.mrf.mxu0
  %v6305 = vpop.f32.mrf.mxu0
  %v6306 = vadd.f32 0.0, %v6305
  %v6307 = vpop.f32.mrf.mxu0
  %6308 = vmatprep.mubr.bf16.mxu0 0
  %6309 = vmatmul.mubr.bf16.gmra.mxu0 %v6078
  %v6310 = vpop.f32.mrf.mxu0
  %v6311 = vadd.f32 0.0, %v6310
  %v6312 = vpop.f32.mrf.mxu0
  %v6313 = vpop.f32.mrf.mxu0
  %v6314 = vadd.f32 0.0, %v6313
  %v6315 = vpop.f32.mrf.mxu0
  %6316 = vmatprep.mubr.bf16.mxu0 0
  %6317 = vmatmul.mubr.bf16.gmra.mxu0 %v6081
  %v6318 = vpop.f32.mrf.mxu0
  %v6319 = vadd.f32 0.0, %v6318
  %v6320 = vpop.f32.mrf.mxu0
  %v6321 = vpop.f32.mrf.mxu0
  %v6322 = vadd.f32 0.0, %v6321
  %v6323 = vpop.f32.mrf.mxu0
  %6324 = vmatprep.mubr.bf16.mxu0 0
  %6325 = vmatmul.mubr.bf16.gmra.mxu0 %v6084
  %v6326 = vpop.f32.mrf.mxu0
  %v6327 = vadd.f32 0.0, %v6326
  %v6328 = vpop.f32.mrf.mxu0
  %v6329 = vpop.f32.mrf.mxu0
  %v6330 = vadd.f32 0.0, %v6329
  %v6331 = vpop.f32.mrf.mxu0
  %6332 = vmatprep.mubr.bf16.mxu0 0
  %6333 = vmatmul.mubr.bf16.gmra.mxu0 %v6087
  %v6334 = vpop.f32.mrf.mxu0
  %v6335 = vadd.f32 0.0, %v6334
  %v6336 = vpop.f32.mrf.mxu0
  %v6337 = vpop.f32.mrf.mxu0
  %v6338 = vadd.f32 0.0, %v6337
  %v6339 = vpop.f32.mrf.mxu0
  %6340 = vmatprep.mubr.bf16.mxu0 0
  %6341 = vmatmul.mubr.bf16.gmra.mxu0 %v6090
  %v6342 = vpop.f32.mrf.mxu0
  %v6343 = vadd.f32 0.0, %v6342
  %v6344 = vpop.f32.mrf.mxu0
  %v6345 = vpop.f32.mrf.mxu0
  %v6346 = vadd.f32 0.0, %v6345
  %v6347 = vpop.f32.mrf.mxu0
  %6348 = vmatprep.mubr.bf16.mxu0 0
  %6349 = vmatmul.mubr.bf16.gmra.mxu0 %v6093
  %v6350 = vpop.f32.mrf.mxu0
  %v6351 = vadd.f32 0.0, %v6350
  %v6352 = vpop.f32.mrf.mxu0
  %v6353 = vpop.f32.mrf.mxu0
  %v6354 = vadd.f32 0.0, %v6353
  %v6355 = vpop.f32.mrf.mxu0
  %6356 = vmatprep.mubr.bf16.mxu0 0
  %6357 = vmatmul.mubr.bf16.gmra.mxu0 %v6096
  %v6358 = vpop.f32.mrf.mxu0
  %v6359 = vadd.f32 0.0, %v6358
  %v6360 = vpop.f32.mrf.mxu0
  %v6361 = vpop.f32.mrf.mxu0
  %v6362 = vadd.f32 0.0, %v6361
  %v6363 = vpop.f32.mrf.mxu0
  %6364 = vmatprep.mubr.bf16.mxu0 0
  %6365 = vmatmul.mubr.bf16.gmra.mxu0 %v6099
  %v6366 = vpop.f32.mrf.mxu0
  %v6367 = vadd.f32 0.0, %v6366
  %v6368 = vpop.f32.mrf.mxu0
  %v6369 = vpop.f32.mrf.mxu0
  %v6370 = vadd.f32 0.0, %v6369
  %v6371 = vpop.f32.mrf.mxu0
  %6372 = vmatprep.mubr.bf16.mxu0 0
  %6373 = vmatmul.mubr.bf16.gmra.mxu0 %v6102
  %v6374 = vpop.f32.mrf.mxu0
  %v6375 = vadd.f32 0.0, %v6374
  %v6376 = vpop.f32.mrf.mxu0
  %v6377 = vpop.f32.mrf.mxu0
  %v6378 = vadd.f32 0.0, %v6377
  %v6379 = vpop.f32.mrf.mxu0
  %6380 = vmatprep.mubr.bf16.mxu0 0
  %6381 = vmatmul.mubr.bf16.gmra.mxu0 %v6105
  %v6382 = vpop.f32.mrf.mxu0
  %v6383 = vadd.f32 0.0, %v6382
  %v6384 = vpop.f32.mrf.mxu0
  %v6385 = vpop.f32.mrf.mxu0
  %v6386 = vadd.f32 0.0, %v6385
  %v6387 = vpop.f32.mrf.mxu0
  %6388 = vmatprep.mubr.bf16.mxu0 0
  %6389 = vmatmul.mubr.bf16.gmra.mxu0 %v6108
  %v6390 = vpop.f32.mrf.mxu0
  %v6391 = vadd.f32 0.0, %v6390
  %v6392 = vpop.f32.mrf.mxu0
  %v6393 = vpop.f32.mrf.mxu0
  %v6394 = vadd.f32 0.0, %v6393
  %v6395 = vpop.f32.mrf.mxu0
  %6396 = vmatprep.mubr.bf16.mxu0 0
  %6397 = vmatmul.mubr.bf16.gmra.mxu0 %v6111
  %v6398 = vpop.f32.mrf.mxu0
  %v6399 = vadd.f32 0.0, %v6398
  %v6400 = vpop.f32.mrf.mxu0
  %v6401 = vpop.f32.mrf.mxu0
  %v6402 = vadd.f32 0.0, %v6401
  %v6403 = vpop.f32.mrf.mxu0
  %6404 = vdwg.mxu0
  %v6405 = vadd.f32 %v5726, %v6151
  %v6406 = vadd.f32 %v5727, %v6154
  %v6407 = vadd.f32 %v5728, %v6159
  %v6408 = vadd.f32 %v5729, %v6162
  %v6409 = vadd.f32 %v5730, %v6167
  %v6410 = vadd.f32 %v5731, %v6170
  %v6411 = vadd.f32 %v5732, %v6175
  %v6412 = vadd.f32 %v5733, %v6178
  %v6413 = vadd.f32 %v5734, %v6183
  %v6414 = vadd.f32 %v5735, %v6186
  %v6415 = vadd.f32 %v5736, %v6191
  %v6416 = vadd.f32 %v5737, %v6194
  %v6417 = vadd.f32 %v5738, %v6199
  %v6418 = vadd.f32 %v5739, %v6202
  %v6419 = vadd.f32 %v5740, %v6207
  %v6420 = vadd.f32 %v5741, %v6210
  %v6421 = vadd.f32 %v5742, %v6215
  %v6422 = vadd.f32 %v5743, %v6218
  %v6423 = vadd.f32 %v5744, %v6223
  %v6424 = vadd.f32 %v5745, %v6226
  %v6425 = vadd.f32 %v5746, %v6231
  %v6426 = vadd.f32 %v5747, %v6234
  %v6427 = vadd.f32 %v5748, %v6239
  %v6428 = vadd.f32 %v5749, %v6242
  %v6429 = vadd.f32 %v5750, %v6247
  %v6430 = vadd.f32 %v5751, %v6250
  %v6431 = vadd.f32 %v5752, %v6255
  %v6432 = vadd.f32 %v5753, %v6258
  %v6433 = vadd.f32 %v5754, %v6263
  %v6434 = vadd.f32 %v5755, %v6266
  %v6435 = vadd.f32 %v5756, %v6271
  %v6436 = vadd.f32 %v5757, %v6274
  %v6437 = vadd.f32 %v5758, %v6279
  %v6438 = vadd.f32 %v5759, %v6282
  %v6439 = vadd.f32 %v5760, %v6287
  %v6440 = vadd.f32 %v5761, %v6290
  %v6441 = vadd.f32 %v5762, %v6295
  %v6442 = vadd.f32 %v5763, %v6298
  %v6443 = vadd.f32 %v5764, %v6303
  %v6444 = vadd.f32 %v5765, %v6306
  %v6445 = vadd.f32 %v5766, %v6311
  %v6446 = vadd.f32 %v5767, %v6314
  %v6447 = vadd.f32 %v5768, %v6319
  %v6448 = vadd.f32 %v5769, %v6322
  %v6449 = vadd.f32 %v5770, %v6327
  %v6450 = vadd.f32 %v5771, %v6330
  %v6451 = vadd.f32 %v5772, %v6335
  %v6452 = vadd.f32 %v5773, %v6338
  %v6453 = vadd.f32 %v5774, %v6343
  %v6454 = vadd.f32 %v5775, %v6346
  %v6455 = vadd.f32 %v5776, %v6351
  %v6456 = vadd.f32 %v5777, %v6354
  %v6457 = vadd.f32 %v5778, %v6359
  %v6458 = vadd.f32 %v5779, %v6362
  %v6459 = vadd.f32 %v5780, %v6367
  %v6460 = vadd.f32 %v5781, %v6370
  %v6461 = vadd.f32 %v5782, %v6375
  %v6462 = vadd.f32 %v5783, %v6378
  %v6463 = vadd.f32 %v5784, %v6383
  %v6464 = vadd.f32 %v5785, %v6386
  %v6465 = vadd.f32 %v5786, %v6391
  %v6466 = vadd.f32 %v5787, %v6394
  %v6467 = vadd.f32 %v5788, %v6399
  %v6468 = vadd.f32 %v5789, %v6402
  %v6469 = vld [vmem:[%s5790] sm:$0xf]
  %v6470 = vld [vmem:[%s5790 + $0x4] sm:$0xf]
  %v6471 = vld [vmem:[%s5790 + $0x8] sm:$0x1]
  %v6472 = vld [vmem:[%s5790 + $0xc] sm:$0xf]
  %v6473 = vld [vmem:[%s5790 + $0x10] sm:$0xf]
  %v6474 = vld [vmem:[%s5790 + $0x14] sm:$0x1]
  %v6475 = vld [vmem:[%s5790 + $0x18] sm:$0xf]
  %v6476 = vld [vmem:[%s5790 + $0x1c] sm:$0xf]
  %v6477 = vld [vmem:[%s5790 + $0x20] sm:$0x1]
  %v6478 = vld [vmem:[%s5790 + $0x24] sm:$0xf]
  %v6479 = vld [vmem:[%s5790 + $0x28] sm:$0xf]
  %v6480 = vld [vmem:[%s5790 + $0x2c] sm:$0x1]
  %v6481 = vld [vmem:[%s5790 + $0x30] sm:$0xf]
  %v6482 = vld [vmem:[%s5790 + $0x34] sm:$0xf]
  %v6483 = vld [vmem:[%s5790 + $0x38] sm:$0x1]
  %v6484 = vld [vmem:[%s5790 + $0x3c] sm:$0xf]
  %v6485 = vld [vmem:[%s5790 + $0x40] sm:$0xf]
  %v6486 = vld [vmem:[%s5790 + $0x44] sm:$0x1]
  %v6487 = vld [vmem:[%s5790 + $0x48] sm:$0xf]
  %v6488 = vld [vmem:[%s5790 + $0x4c] sm:$0xf]
  %v6489 = vld [vmem:[%s5790 + $0x50] sm:$0x1]
  %v6490 = vld [vmem:[%s5790 + $0x54] sm:$0xf]
  %v6491 = vld [vmem:[%s5790 + $0x58] sm:$0xf]
  %v6492 = vld [vmem:[%s5790 + $0x5c] sm:$0x1]
  %v6493 = vld [vmem:[%s5790 + $0x60] sm:$0xf]
  %v6494 = vld [vmem:[%s5790 + $0x64] sm:$0xf]
  %v6495 = vld [vmem:[%s5790 + $0x68] sm:$0x1]
  %v6496 = vld [vmem:[%s5790 + $0x6c] sm:$0xf]
  %v6497 = vld [vmem:[%s5790 + $0x70] sm:$0xf]
  %v6498 = vld [vmem:[%s5790 + $0x74] sm:$0x1]
  %v6499 = vld [vmem:[%s5790 + $0x78] sm:$0xf]
  %v6500 = vld [vmem:[%s5790 + $0x7c] sm:$0xf]
  %v6501 = vld [vmem:[%s5790 + $0x80] sm:$0x1]
  %v6502 = vld [vmem:[%s5790 + $0x84] sm:$0xf]
  %v6503 = vld [vmem:[%s5790 + $0x88] sm:$0xf]
  %v6504 = vld [vmem:[%s5790 + $0x8c] sm:$0x1]
  %v6505 = vld [vmem:[%s5790 + $0x90] sm:$0xf]
  %v6506 = vld [vmem:[%s5790 + $0x94] sm:$0xf]
  %v6507 = vld [vmem:[%s5790 + $0x98] sm:$0x1]
  %v6508 = vld [vmem:[%s5790 + $0x9c] sm:$0xf]
  %v6509 = vld [vmem:[%s5790 + $0xa0] sm:$0xf]
  %v6510 = vld [vmem:[%s5790 + $0xa4] sm:$0x1]
  %v6511 = vld [vmem:[%s5790 + $0xa8] sm:$0xf]
  %v6512 = vld [vmem:[%s5790 + $0xac] sm:$0xf]
  %v6513 = vld [vmem:[%s5790 + $0xb0] sm:$0x1]
  %v6514 = vld [vmem:[%s5790 + $0xb4] sm:$0xf]
  %v6515 = vld [vmem:[%s5790 + $0xb8] sm:$0xf]
  %v6516 = vld [vmem:[%s5790 + $0xbc] sm:$0x1]
  %v6517 = vld [vmem:[%s5790 + $0xd8] sm:$0xf]
  %v6518 = vld [vmem:[%s5790 + $0xdc] sm:$0xf]
  %v6519 = vld [vmem:[%s5790 + $0xe0] sm:$0x1]
  %v6520 = vld [vmem:[%s5790 + $0xe4] sm:$0xf]
  %v6521 = vld [vmem:[%s5790 + $0xe8] sm:$0xf]
  %v6522 = vld [vmem:[%s5790 + $0xec] sm:$0x1]
  %v6523 = vld [vmem:[%s5790 + $0xf0] sm:$0xf]
  %v6524 = vld [vmem:[%s5790 + $0xf4] sm:$0xf]
  %v6525 = vld [vmem:[%s5790 + $0xf8] sm:$0x1]
  %v6526 = vld [vmem:[%s5790 + $0xfc] sm:$0xf]
  %v6527 = vld [vmem:[%s5790 + $0x100] sm:$0xf]
  %v6528 = vld [vmem:[%s5790 + $0x104] sm:$0x1]
  %v6529 = vld [vmem:[%s5790 + $0x108] sm:$0xf]
  %v6530 = vld [vmem:[%s5790 + $0x10c] sm:$0xf]
  %v6531 = vld [vmem:[%s5790 + $0x110] sm:$0x1]
  %v6532 = vld [vmem:[%s5790 + $0x114] sm:$0xf]
  %v6533 = vld [vmem:[%s5790 + $0x118] sm:$0xf]
  %v6534 = vld [vmem:[%s5790 + $0x11c] sm:$0x1]
  %v6535 = vld [vmem:[%s5790 + $0x120] sm:$0xf]
  %v6536 = vld [vmem:[%s5790 + $0x124] sm:$0xf]
  %v6537 = vld [vmem:[%s5790 + $0x128] sm:$0x1]
  %v6538 = vld [vmem:[%s5790 + $0x12c] sm:$0xf]
  %v6539 = vld [vmem:[%s5790 + $0x130] sm:$0xf]
  %v6540 = vld [vmem:[%s5790 + $0x134] sm:$0x1]
  %v6541 = vld [vmem:[%s5790 + $0x138] sm:$0xf]
  %v6542 = vld [vmem:[%s5790 + $0x13c] sm:$0xf]
  %v6543 = vld [vmem:[%s5790 + $0x140] sm:$0x1]
  %v6544 = vld [vmem:[%s5790 + $0x144] sm:$0xf]
  %v6545 = vld [vmem:[%s5790 + $0x148] sm:$0xf]
  %v6546 = vld [vmem:[%s5790 + $0x14c] sm:$0x1]
  %v6547 = vld [vmem:[%s5790 + $0x150] sm:$0xf]
  %v6548 = vld [vmem:[%s5790 + $0x154] sm:$0xf]
  %v6549 = vld [vmem:[%s5790 + $0x158] sm:$0x1]
  %v6550 = vld [vmem:[%s5790 + $0x15c] sm:$0xf]
  %v6551 = vld [vmem:[%s5790 + $0x160] sm:$0xf]
  %v6552 = vld [vmem:[%s5790 + $0x164] sm:$0x1]
  %v6553 = vld [vmem:[%s5790 + $0x168] sm:$0xf]
  %v6554 = vld [vmem:[%s5790 + $0x16c] sm:$0xf]
  %v6555 = vld [vmem:[%s5790 + $0x170] sm:$0x1]
  %v6556 = vld [vmem:[%s5790 + $0x174] sm:$0xf]
  %v6557 = vld [vmem:[%s5790 + $0x178] sm:$0xf]
  %v6558 = vld [vmem:[%s5790 + $0x17c] sm:$0x1]
  %v6559 = vld [vmem:[%s5790 + $0x180] sm:$0xf]
  %v6560 = vld [vmem:[%s5790 + $0x184] sm:$0xf]
  %v6561 = vld [vmem:[%s5790 + $0x188] sm:$0x1]
  %v6562 = vld [vmem:[%s5790 + $0x18c] sm:$0xf]
  %v6563 = vld [vmem:[%s5790 + $0x190] sm:$0xf]
  %v6564 = vld [vmem:[%s5790 + $0x194] sm:$0x1]
  %v6566 = vshrl.u32 %v6469, 16
  %v6568 = vrot.slane %v6566, 4
  %v6569 = vshll.u32 %v6469, 16
  %v6571 = vrot.slane %v6569, 5
  %v6572 = vor.u32 %v6568, %v6571
  %v6573 = vrot.slane %v6572, 4
  %v6575 = vshll.u32 %v6470, 16
  %v6577 = vrot.slane %v6575, 5
  %v6578 = vsel %vm117, %v6573, %v6577
  %v6579 = vshrl.u32 %v6470, 16
  %v6581 = vrot.slane %v6579, 4
  %v6582 = vor.u32 %v6581, %v6577
  %v6583 = vrot.slane %v6582, 4
  %v6585 = vshll.u32 %v6471, 16
  %v6587 = vrot.slane %v6585, 5
  %v6588 = vsel %vm117, %v6583, %v6587
  %v6590 = vshrl.u32 %v6472, 16
  %v6592 = vrot.slane %v6590, 4
  %v6593 = vshll.u32 %v6472, 16
  %v6595 = vrot.slane %v6593, 5
  %v6596 = vor.u32 %v6592, %v6595
  %v6597 = vrot.slane %v6596, 4
  %v6599 = vshll.u32 %v6473, 16
  %v6601 = vrot.slane %v6599, 5
  %v6602 = vsel %vm117, %v6597, %v6601
  %v6603 = vshrl.u32 %v6473, 16
  %v6605 = vrot.slane %v6603, 4
  %v6606 = vor.u32 %v6605, %v6601
  %v6607 = vrot.slane %v6606, 4
  %v6609 = vshll.u32 %v6474, 16
  %v6611 = vrot.slane %v6609, 5
  %v6612 = vsel %vm117, %v6607, %v6611
  %v6614 = vshrl.u32 %v6475, 16
  %v6616 = vrot.slane %v6614, 4
  %v6617 = vshll.u32 %v6475, 16
  %v6619 = vrot.slane %v6617, 5
  %v6620 = vor.u32 %v6616, %v6619
  %v6621 = vrot.slane %v6620, 4
  %v6623 = vshll.u32 %v6476, 16
  %v6625 = vrot.slane %v6623, 5
  %v6626 = vsel %vm117, %v6621, %v6625
  %v6627 = vshrl.u32 %v6476, 16
  %v6629 = vrot.slane %v6627, 4
  %v6630 = vor.u32 %v6629, %v6625
  %v6631 = vrot.slane %v6630, 4
  %v6633 = vshll.u32 %v6477, 16
  %v6635 = vrot.slane %v6633, 5
  %v6636 = vsel %vm117, %v6631, %v6635
  %v6638 = vshrl.u32 %v6478, 16
  %v6640 = vrot.slane %v6638, 4
  %v6641 = vshll.u32 %v6478, 16
  %v6643 = vrot.slane %v6641, 5
  %v6644 = vor.u32 %v6640, %v6643
  %v6645 = vrot.slane %v6644, 4
  %v6647 = vshll.u32 %v6479, 16
  %v6649 = vrot.slane %v6647, 5
  %v6650 = vsel %vm117, %v6645, %v6649
  %v6651 = vshrl.u32 %v6479, 16
  %v6653 = vrot.slane %v6651, 4
  %v6654 = vor.u32 %v6653, %v6649
  %v6655 = vrot.slane %v6654, 4
  %v6657 = vshll.u32 %v6480, 16
  %v6659 = vrot.slane %v6657, 5
  %v6660 = vsel %vm117, %v6655, %v6659
  %v6662 = vshrl.u32 %v6481, 16
  %v6664 = vrot.slane %v6662, 4
  %v6665 = vshll.u32 %v6481, 16
  %v6667 = vrot.slane %v6665, 5
  %v6668 = vor.u32 %v6664, %v6667
  %v6669 = vrot.slane %v6668, 4
  %v6671 = vshll.u32 %v6482, 16
  %v6673 = vrot.slane %v6671, 5
  %v6674 = vsel %vm117, %v6669, %v6673
  %v6675 = vshrl.u32 %v6482, 16
  %v6677 = vrot.slane %v6675, 4
  %v6678 = vor.u32 %v6677, %v6673
  %v6679 = vrot.slane %v6678, 4
  %v6681 = vshll.u32 %v6483, 16
  %v6683 = vrot.slane %v6681, 5
  %v6684 = vsel %vm117, %v6679, %v6683
  %v6686 = vshrl.u32 %v6484, 16
  %v6688 = vrot.slane %v6686, 4
  %v6689 = vshll.u32 %v6484, 16
  %v6691 = vrot.slane %v6689, 5
  %v6692 = vor.u32 %v6688, %v6691
  %v6693 = vrot.slane %v6692, 4
  %v6695 = vshll.u32 %v6485, 16
  %v6697 = vrot.slane %v6695, 5
  %v6698 = vsel %vm117, %v6693, %v6697
  %v6699 = vshrl.u32 %v6485, 16
  %v6701 = vrot.slane %v6699, 4
  %v6702 = vor.u32 %v6701, %v6697
  %v6703 = vrot.slane %v6702, 4
  %v6705 = vshll.u32 %v6486, 16
  %v6707 = vrot.slane %v6705, 5
  %v6708 = vsel %vm117, %v6703, %v6707
  %v6710 = vshrl.u32 %v6487, 16
  %v6712 = vrot.slane %v6710, 4
  %v6713 = vshll.u32 %v6487, 16
  %v6715 = vrot.slane %v6713, 5
  %v6716 = vor.u32 %v6712, %v6715
  %v6717 = vrot.slane %v6716, 4
  %v6719 = vshll.u32 %v6488, 16
  %v6721 = vrot.slane %v6719, 5
  %v6722 = vsel %vm117, %v6717, %v6721
  %v6723 = vshrl.u32 %v6488, 16
  %v6725 = vrot.slane %v6723, 4
  %v6726 = vor.u32 %v6725, %v6721
  %v6727 = vrot.slane %v6726, 4
  %v6729 = vshll.u32 %v6489, 16
  %v6731 = vrot.slane %v6729, 5
  %v6732 = vsel %vm117, %v6727, %v6731
  %v6734 = vshrl.u32 %v6490, 16
  %v6736 = vrot.slane %v6734, 4
  %v6737 = vshll.u32 %v6490, 16
  %v6739 = vrot.slane %v6737, 5
  %v6740 = vor.u32 %v6736, %v6739
  %v6741 = vrot.slane %v6740, 4
  %v6743 = vshll.u32 %v6491, 16
  %v6745 = vrot.slane %v6743, 5
  %v6746 = vsel %vm117, %v6741, %v6745
  %v6747 = vshrl.u32 %v6491, 16
  %v6749 = vrot.slane %v6747, 4
  %v6750 = vor.u32 %v6749, %v6745
  %v6751 = vrot.slane %v6750, 4
  %v6753 = vshll.u32 %v6492, 16
  %v6755 = vrot.slane %v6753, 5
  %v6756 = vsel %vm117, %v6751, %v6755
  %v6758 = vshrl.u32 %v6493, 16
  %v6760 = vrot.slane %v6758, 4
  %v6761 = vshll.u32 %v6493, 16
  %v6763 = vrot.slane %v6761, 5
  %v6764 = vor.u32 %v6760, %v6763
  %v6765 = vrot.slane %v6764, 4
  %v6767 = vshll.u32 %v6494, 16
  %v6769 = vrot.slane %v6767, 5
  %v6770 = vsel %vm117, %v6765, %v6769
  %v6771 = vshrl.u32 %v6494, 16
  %v6773 = vrot.slane %v6771, 4
  %v6774 = vor.u32 %v6773, %v6769
  %v6775 = vrot.slane %v6774, 4
  %v6777 = vshll.u32 %v6495, 16
  %v6779 = vrot.slane %v6777, 5
  %v6780 = vsel %vm117, %v6775, %v6779
  %v6782 = vshrl.u32 %v6496, 16
  %v6784 = vrot.slane %v6782, 4
  %v6785 = vshll.u32 %v6496, 16
  %v6787 = vrot.slane %v6785, 5
  %v6788 = vor.u32 %v6784, %v6787
  %v6789 = vrot.slane %v6788, 4
  %v6791 = vshll.u32 %v6497, 16
  %v6793 = vrot.slane %v6791, 5
  %v6794 = vsel %vm117, %v6789, %v6793
  %v6795 = vshrl.u32 %v6497, 16
  %v6797 = vrot.slane %v6795, 4
  %v6798 = vor.u32 %v6797, %v6793
  %v6799 = vrot.slane %v6798, 4
  %v6801 = vshll.u32 %v6498, 16
  %v6803 = vrot.slane %v6801, 5
  %v6804 = vsel %vm117, %v6799, %v6803
  %v6806 = vshrl.u32 %v6499, 16
  %v6808 = vrot.slane %v6806, 4
  %v6809 = vshll.u32 %v6499, 16
  %v6811 = vrot.slane %v6809, 5
  %v6812 = vor.u32 %v6808, %v6811
  %v6813 = vrot.slane %v6812, 4
  %v6815 = vshll.u32 %v6500, 16
  %v6817 = vrot.slane %v6815, 5
  %v6818 = vsel %vm117, %v6813, %v6817
  %v6819 = vshrl.u32 %v6500, 16
  %v6821 = vrot.slane %v6819, 4
  %v6822 = vor.u32 %v6821, %v6817
  %v6823 = vrot.slane %v6822, 4
  %v6825 = vshll.u32 %v6501, 16
  %v6827 = vrot.slane %v6825, 5
  %v6828 = vsel %vm117, %v6823, %v6827
  %v6830 = vshrl.u32 %v6502, 16
  %v6832 = vrot.slane %v6830, 4
  %v6833 = vshll.u32 %v6502, 16
  %v6835 = vrot.slane %v6833, 5
  %v6836 = vor.u32 %v6832, %v6835
  %v6837 = vrot.slane %v6836, 4
  %v6839 = vshll.u32 %v6503, 16
  %v6841 = vrot.slane %v6839, 5
  %v6842 = vsel %vm117, %v6837, %v6841
  %v6843 = vshrl.u32 %v6503, 16
  %v6845 = vrot.slane %v6843, 4
  %v6846 = vor.u32 %v6845, %v6841
  %v6847 = vrot.slane %v6846, 4
  %v6849 = vshll.u32 %v6504, 16
  %v6851 = vrot.slane %v6849, 5
  %v6852 = vsel %vm117, %v6847, %v6851
  %v6854 = vshrl.u32 %v6505, 16
  %v6856 = vrot.slane %v6854, 4
  %v6857 = vshll.u32 %v6505, 16
  %v6859 = vrot.slane %v6857, 5
  %v6860 = vor.u32 %v6856, %v6859
  %v6861 = vrot.slane %v6860, 4
  %v6863 = vshll.u32 %v6506, 16
  %v6865 = vrot.slane %v6863, 5
  %v6866 = vsel %vm117, %v6861, %v6865
  %v6867 = vshrl.u32 %v6506, 16
  %v6869 = vrot.slane %v6867, 4
  %v6870 = vor.u32 %v6869, %v6865
  %v6871 = vrot.slane %v6870, 4
  %v6873 = vshll.u32 %v6507, 16
  %v6875 = vrot.slane %v6873, 5
  %v6876 = vsel %vm117, %v6871, %v6875
  %v6878 = vshrl.u32 %v6508, 16
  %v6880 = vrot.slane %v6878, 4
  %v6881 = vshll.u32 %v6508, 16
  %v6883 = vrot.slane %v6881, 5
  %v6884 = vor.u32 %v6880, %v6883
  %v6885 = vrot.slane %v6884, 4
  %v6887 = vshll.u32 %v6509, 16
  %v6889 = vrot.slane %v6887, 5
  %v6890 = vsel %vm117, %v6885, %v6889
  %v6891 = vshrl.u32 %v6509, 16
  %v6893 = vrot.slane %v6891, 4
  %v6894 = vor.u32 %v6893, %v6889
  %v6895 = vrot.slane %v6894, 4
  %v6897 = vshll.u32 %v6510, 16
  %v6899 = vrot.slane %v6897, 5
  %v6900 = vsel %vm117, %v6895, %v6899
  %v6902 = vshrl.u32 %v6511, 16
  %v6904 = vrot.slane %v6902, 4
  %v6905 = vshll.u32 %v6511, 16
  %v6907 = vrot.slane %v6905, 5
  %v6908 = vor.u32 %v6904, %v6907
  %v6909 = vrot.slane %v6908, 4
  %v6911 = vshll.u32 %v6512, 16
  %v6913 = vrot.slane %v6911, 5
  %v6914 = vsel %vm117, %v6909, %v6913
  %v6915 = vshrl.u32 %v6512, 16
  %v6917 = vrot.slane %v6915, 4
  %v6918 = vor.u32 %v6917, %v6913
  %v6919 = vrot.slane %v6918, 4
  %v6921 = vshll.u32 %v6513, 16
  %v6923 = vrot.slane %v6921, 5
  %v6924 = vsel %vm117, %v6919, %v6923
  %v6926 = vshrl.u32 %v6514, 16
  %v6928 = vrot.slane %v6926, 4
  %v6929 = vshll.u32 %v6514, 16
  %v6931 = vrot.slane %v6929, 5
  %v6932 = vor.u32 %v6928, %v6931
  %v6933 = vrot.slane %v6932, 4
  %v6935 = vshll.u32 %v6515, 16
  %v6937 = vrot.slane %v6935, 5
  %v6938 = vsel %vm117, %v6933, %v6937
  %v6939 = vshrl.u32 %v6515, 16
  %v6941 = vrot.slane %v6939, 4
  %v6942 = vor.u32 %v6941, %v6937
  %v6943 = vrot.slane %v6942, 4
  %v6945 = vshll.u32 %v6516, 16
  %v6947 = vrot.slane %v6945, 5
  %v6948 = vsel %vm117, %v6943, %v6947
  %v6950 = vshrl.u32 %v6517, 16
  %v6952 = vrot.slane %v6950, 4
  %v6953 = vshll.u32 %v6517, 16
  %v6955 = vrot.slane %v6953, 5
  %v6956 = vor.u32 %v6952, %v6955
  %v6957 = vrot.slane %v6956, 4
  %v6959 = vshll.u32 %v6518, 16
  %v6961 = vrot.slane %v6959, 5
  %v6962 = vsel %vm117, %v6957, %v6961
  %v6963 = vshrl.u32 %v6518, 16
  %v6965 = vrot.slane %v6963, 4
  %v6966 = vor.u32 %v6965, %v6961
  %v6967 = vrot.slane %v6966, 4
  %v6969 = vshll.u32 %v6519, 16
  %v6971 = vrot.slane %v6969, 5
  %v6972 = vsel %vm117, %v6967, %v6971
  %v6974 = vshrl.u32 %v6520, 16
  %v6976 = vrot.slane %v6974, 4
  %v6977 = vshll.u32 %v6520, 16
  %v6979 = vrot.slane %v6977, 5
  %v6980 = vor.u32 %v6976, %v6979
  %v6981 = vrot.slane %v6980, 4
  %v6983 = vshll.u32 %v6521, 16
  %v6985 = vrot.slane %v6983, 5
  %v6986 = vsel %vm117, %v6981, %v6985
  %v6987 = vshrl.u32 %v6521, 16
  %v6989 = vrot.slane %v6987, 4
  %v6990 = vor.u32 %v6989, %v6985
  %v6991 = vrot.slane %v6990, 4
  %v6993 = vshll.u32 %v6522, 16
  %v6995 = vrot.slane %v6993, 5
  %v6996 = vsel %vm117, %v6991, %v6995
  %v6998 = vshrl.u32 %v6523, 16
  %v7000 = vrot.slane %v6998, 4
  %v7001 = vshll.u32 %v6523, 16
  %v7003 = vrot.slane %v7001, 5
  %v7004 = vor.u32 %v7000, %v7003
  %v7005 = vrot.slane %v7004, 4
  %v7007 = vshll.u32 %v6524, 16
  %v7009 = vrot.slane %v7007, 5
  %v7010 = vsel %vm117, %v7005, %v7009
  %v7011 = vshrl.u32 %v6524, 16
  %v7013 = vrot.slane %v7011, 4
  %v7014 = vor.u32 %v7013, %v7009
  %v7015 = vrot.slane %v7014, 4
  %v7017 = vshll.u32 %v6525, 16
  %v7019 = vrot.slane %v7017, 5
  %v7020 = vsel %vm117, %v7015, %v7019
  %v7022 = vshrl.u32 %v6526, 16
  %v7024 = vrot.slane %v7022, 4
  %v7025 = vshll.u32 %v6526, 16
  %v7027 = vrot.slane %v7025, 5
  %v7028 = vor.u32 %v7024, %v7027
  %v7029 = vrot.slane %v7028, 4
  %v7031 = vshll.u32 %v6527, 16
  %v7033 = vrot.slane %v7031, 5
  %v7034 = vsel %vm117, %v7029, %v7033
  %v7035 = vshrl.u32 %v6527, 16
  %v7037 = vrot.slane %v7035, 4
  %v7038 = vor.u32 %v7037, %v7033
  %v7039 = vrot.slane %v7038, 4
  %v7041 = vshll.u32 %v6528, 16
  %v7043 = vrot.slane %v7041, 5
  %v7044 = vsel %vm117, %v7039, %v7043
  %v7046 = vshrl.u32 %v6529, 16
  %v7048 = vrot.slane %v7046, 4
  %v7049 = vshll.u32 %v6529, 16
  %v7051 = vrot.slane %v7049, 5
  %v7052 = vor.u32 %v7048, %v7051
  %v7053 = vrot.slane %v7052, 4
  %v7055 = vshll.u32 %v6530, 16
  %v7057 = vrot.slane %v7055, 5
  %v7058 = vsel %vm117, %v7053, %v7057
  %v7059 = vshrl.u32 %v6530, 16
  %v7061 = vrot.slane %v7059, 4
  %v7062 = vor.u32 %v7061, %v7057
  %v7063 = vrot.slane %v7062, 4
  %v7065 = vshll.u32 %v6531, 16
  %v7067 = vrot.slane %v7065, 5
  %v7068 = vsel %vm117, %v7063, %v7067
  %v7070 = vshrl.u32 %v6532, 16
  %v7072 = vrot.slane %v7070, 4
  %v7073 = vshll.u32 %v6532, 16
  %v7075 = vrot.slane %v7073, 5
  %v7076 = vor.u32 %v7072, %v7075
  %v7077 = vrot.slane %v7076, 4
  %v7079 = vshll.u32 %v6533, 16
  %v7081 = vrot.slane %v7079, 5
  %v7082 = vsel %vm117, %v7077, %v7081
  %v7083 = vshrl.u32 %v6533, 16
  %v7085 = vrot.slane %v7083, 4
  %v7086 = vor.u32 %v7085, %v7081
  %v7087 = vrot.slane %v7086, 4
  %v7089 = vshll.u32 %v6534, 16
  %v7091 = vrot.slane %v7089, 5
  %v7092 = vsel %vm117, %v7087, %v7091
  %v7094 = vshrl.u32 %v6535, 16
  %v7096 = vrot.slane %v7094, 4
  %v7097 = vshll.u32 %v6535, 16
  %v7099 = vrot.slane %v7097, 5
  %v7100 = vor.u32 %v7096, %v7099
  %v7101 = vrot.slane %v7100, 4
  %v7103 = vshll.u32 %v6536, 16
  %v7105 = vrot.slane %v7103, 5
  %v7106 = vsel %vm117, %v7101, %v7105
  %v7107 = vshrl.u32 %v6536, 16
  %v7109 = vrot.slane %v7107, 4
  %v7110 = vor.u32 %v7109, %v7105
  %v7111 = vrot.slane %v7110, 4
  %v7113 = vshll.u32 %v6537, 16
  %v7115 = vrot.slane %v7113, 5
  %v7116 = vsel %vm117, %v7111, %v7115
  %v7118 = vshrl.u32 %v6538, 16
  %v7120 = vrot.slane %v7118, 4
  %v7121 = vshll.u32 %v6538, 16
  %v7123 = vrot.slane %v7121, 5
  %v7124 = vor.u32 %v7120, %v7123
  %v7125 = vrot.slane %v7124, 4
  %v7127 = vshll.u32 %v6539, 16
  %v7129 = vrot.slane %v7127, 5
  %v7130 = vsel %vm117, %v7125, %v7129
  %v7131 = vshrl.u32 %v6539, 16
  %v7133 = vrot.slane %v7131, 4
  %v7134 = vor.u32 %v7133, %v7129
  %v7135 = vrot.slane %v7134, 4
  %v7137 = vshll.u32 %v6540, 16
  %v7139 = vrot.slane %v7137, 5
  %v7140 = vsel %vm117, %v7135, %v7139
  %v7142 = vshrl.u32 %v6541, 16
  %v7144 = vrot.slane %v7142, 4
  %v7145 = vshll.u32 %v6541, 16
  %v7147 = vrot.slane %v7145, 5
  %v7148 = vor.u32 %v7144, %v7147
  %v7149 = vrot.slane %v7148, 4
  %v7151 = vshll.u32 %v6542, 16
  %v7153 = vrot.slane %v7151, 5
  %v7154 = vsel %vm117, %v7149, %v7153
  %v7155 = vshrl.u32 %v6542, 16
  %v7157 = vrot.slane %v7155, 4
  %v7158 = vor.u32 %v7157, %v7153
  %v7159 = vrot.slane %v7158, 4
  %v7161 = vshll.u32 %v6543, 16
  %v7163 = vrot.slane %v7161, 5
  %v7164 = vsel %vm117, %v7159, %v7163
  %v7166 = vshrl.u32 %v6544, 16
  %v7168 = vrot.slane %v7166, 4
  %v7169 = vshll.u32 %v6544, 16
  %v7171 = vrot.slane %v7169, 5
  %v7172 = vor.u32 %v7168, %v7171
  %v7173 = vrot.slane %v7172, 4
  %v7175 = vshll.u32 %v6545, 16
  %v7177 = vrot.slane %v7175, 5
  %v7178 = vsel %vm117, %v7173, %v7177
  %v7179 = vshrl.u32 %v6545, 16
  %v7181 = vrot.slane %v7179, 4
  %v7182 = vor.u32 %v7181, %v7177
  %v7183 = vrot.slane %v7182, 4
  %v7185 = vshll.u32 %v6546, 16
  %v7187 = vrot.slane %v7185, 5
  %v7188 = vsel %vm117, %v7183, %v7187
  %v7190 = vshrl.u32 %v6547, 16
  %v7192 = vrot.slane %v7190, 4
  %v7193 = vshll.u32 %v6547, 16
  %v7195 = vrot.slane %v7193, 5
  %v7196 = vor.u32 %v7192, %v7195
  %v7197 = vrot.slane %v7196, 4
  %v7199 = vshll.u32 %v6548, 16
  %v7201 = vrot.slane %v7199, 5
  %v7202 = vsel %vm117, %v7197, %v7201
  %v7203 = vshrl.u32 %v6548, 16
  %v7205 = vrot.slane %v7203, 4
  %v7206 = vor.u32 %v7205, %v7201
  %v7207 = vrot.slane %v7206, 4
  %v7209 = vshll.u32 %v6549, 16
  %v7211 = vrot.slane %v7209, 5
  %v7212 = vsel %vm117, %v7207, %v7211
  %v7214 = vshrl.u32 %v6550, 16
  %v7216 = vrot.slane %v7214, 4
  %v7217 = vshll.u32 %v6550, 16
  %v7219 = vrot.slane %v7217, 5
  %v7220 = vor.u32 %v7216, %v7219
  %v7221 = vrot.slane %v7220, 4
  %v7223 = vshll.u32 %v6551, 16
  %v7225 = vrot.slane %v7223, 5
  %v7226 = vsel %vm117, %v7221, %v7225
  %v7227 = vshrl.u32 %v6551, 16
  %v7229 = vrot.slane %v7227, 4
  %v7230 = vor.u32 %v7229, %v7225
  %v7231 = vrot.slane %v7230, 4
  %v7233 = vshll.u32 %v6552, 16
  %v7235 = vrot.slane %v7233, 5
  %v7236 = vsel %vm117, %v7231, %v7235
  %v7238 = vshrl.u32 %v6553, 16
  %v7240 = vrot.slane %v7238, 4
  %v7241 = vshll.u32 %v6553, 16
  %v7243 = vrot.slane %v7241, 5
  %v7244 = vor.u32 %v7240, %v7243
  %v7245 = vrot.slane %v7244, 4
  %v7247 = vshll.u32 %v6554, 16
  %v7249 = vrot.slane %v7247, 5
  %v7250 = vsel %vm117, %v7245, %v7249
  %v7251 = vshrl.u32 %v6554, 16
  %v7253 = vrot.slane %v7251, 4
  %v7254 = vor.u32 %v7253, %v7249
  %v7255 = vrot.slane %v7254, 4
  %v7257 = vshll.u32 %v6555, 16
  %v7259 = vrot.slane %v7257, 5
  %v7260 = vsel %vm117, %v7255, %v7259
  %v7262 = vshrl.u32 %v6556, 16
  %v7264 = vrot.slane %v7262, 4
  %v7265 = vshll.u32 %v6556, 16
  %v7267 = vrot.slane %v7265, 5
  %v7268 = vor.u32 %v7264, %v7267
  %v7269 = vrot.slane %v7268, 4
  %v7271 = vshll.u32 %v6557, 16
  %v7273 = vrot.slane %v7271, 5
  %v7274 = vsel %vm117, %v7269, %v7273
  %v7275 = vshrl.u32 %v6557, 16
  %v7277 = vrot.slane %v7275, 4
  %v7278 = vor.u32 %v7277, %v7273
  %v7279 = vrot.slane %v7278, 4
  %v7281 = vshll.u32 %v6558, 16
  %v7283 = vrot.slane %v7281, 5
  %v7284 = vsel %vm117, %v7279, %v7283
  %v7286 = vshrl.u32 %v6559, 16
  %v7288 = vrot.slane %v7286, 4
  %v7289 = vshll.u32 %v6559, 16
  %v7291 = vrot.slane %v7289, 5
  %v7292 = vor.u32 %v7288, %v7291
  %v7293 = vrot.slane %v7292, 4
  %v7295 = vshll.u32 %v6560, 16
  %v7297 = vrot.slane %v7295, 5
  %v7298 = vsel %vm117, %v7293, %v7297
  %v7299 = vshrl.u32 %v6560, 16
  %v7301 = vrot.slane %v7299, 4
  %v7302 = vor.u32 %v7301, %v7297
  %v7303 = vrot.slane %v7302, 4
  %v7305 = vshll.u32 %v6561, 16
  %v7307 = vrot.slane %v7305, 5
  %v7308 = vsel %vm117, %v7303, %v7307
  %v7310 = vshrl.u32 %v6562, 16
  %v7312 = vrot.slane %v7310, 4
  %v7313 = vshll.u32 %v6562, 16
  %v7315 = vrot.slane %v7313, 5
  %v7316 = vor.u32 %v7312, %v7315
  %v7317 = vrot.slane %v7316, 4
  %v7319 = vshll.u32 %v6563, 16
  %v7321 = vrot.slane %v7319, 5
  %v7322 = vsel %vm117, %v7317, %v7321
  %v7323 = vshrl.u32 %v6563, 16
  %v7325 = vrot.slane %v7323, 4
  %v7326 = vor.u32 %v7325, %v7321
  %v7327 = vrot.slane %v7326, 4
  %v7329 = vshll.u32 %v6564, 16
  %v7331 = vrot.slane %v7329, 5
  %v7332 = vsel %vm117, %v7327, %v7331
  %s7333 = scalar_lea.vmem %s1, 14
  %v7334 = vld [vmem:[%s7333] sm:$0x3]
  %v7335 = vunpack.c.l.b16 %v6578
  %v7336 = vunpack.c.l.b16 %v6588
  %v7337 = vunpack.c.l.b16 %v6602
  %v7338 = vunpack.c.l.b16 %v6612
  %v7339 = vunpack.c.l.b16 %v6626
  %v7340 = vunpack.c.l.b16 %v6636
  %v7341 = vunpack.c.l.b16 %v6650
  %v7342 = vunpack.c.l.b16 %v6660
  %v7343 = vunpack.c.l.b16 %v6674
  %v7344 = vunpack.c.l.b16 %v6684
  %v7345 = vunpack.c.l.b16 %v6698
  %v7346 = vunpack.c.l.b16 %v6708
  %v7347 = vunpack.c.l.b16 %v6722
  %v7348 = vunpack.c.l.b16 %v6732
  %v7349 = vunpack.c.l.b16 %v6746
  %v7350 = vunpack.c.l.b16 %v6756
  %v7351 = vunpack.c.l.b16 %v6770
  %v7352 = vunpack.c.l.b16 %v6780
  %v7353 = vunpack.c.l.b16 %v6794
  %v7354 = vunpack.c.l.b16 %v6804
  %v7355 = vunpack.c.l.b16 %v6818
  %v7356 = vunpack.c.l.b16 %v6828
  %v7357 = vunpack.c.l.b16 %v6842
  %v7358 = vunpack.c.l.b16 %v6852
  %v7359 = vunpack.c.l.b16 %v6866
  %v7360 = vunpack.c.l.b16 %v6876
  %v7361 = vunpack.c.l.b16 %v6890
  %v7362 = vunpack.c.l.b16 %v6900
  %v7363 = vunpack.c.l.b16 %v6914
  %v7364 = vunpack.c.l.b16 %v6924
  %v7365 = vunpack.c.l.b16 %v6938
  %v7366 = vunpack.c.l.b16 %v6948
  %v7367 = vunpack.c.l.b16 %v6962
  %v7368 = vunpack.c.l.b16 %v6972
  %v7369 = vunpack.c.l.b16 %v6986
  %v7370 = vunpack.c.l.b16 %v6996
  %v7371 = vunpack.c.l.b16 %v7010
  %v7372 = vunpack.c.l.b16 %v7020
  %v7373 = vunpack.c.l.b16 %v7034
  %v7374 = vunpack.c.l.b16 %v7044
  %v7375 = vunpack.c.l.b16 %v7058
  %v7376 = vunpack.c.l.b16 %v7068
  %v7377 = vunpack.c.l.b16 %v7082
  %v7378 = vunpack.c.l.b16 %v7092
  %v7379 = vunpack.c.l.b16 %v7106
  %v7380 = vunpack.c.l.b16 %v7116
  %v7381 = vunpack.c.l.b16 %v7130
  %v7382 = vunpack.c.l.b16 %v7140
  %v7383 = vunpack.c.l.b16 %v7154
  %v7384 = vunpack.c.l.b16 %v7164
  %v7385 = vunpack.c.l.b16 %v7178
  %v7386 = vunpack.c.l.b16 %v7188
  %v7387 = vunpack.c.l.b16 %v7202
  %v7388 = vunpack.c.l.b16 %v7212
  %v7389 = vunpack.c.l.b16 %v7226
  %v7390 = vunpack.c.l.b16 %v7236
  %v7391 = vunpack.c.l.b16 %v7250
  %v7392 = vunpack.c.l.b16 %v7260
  %v7393 = vunpack.c.l.b16 %v7274
  %v7394 = vunpack.c.l.b16 %v7284
  %v7395 = vunpack.c.l.b16 %v7298
  %v7396 = vunpack.c.l.b16 %v7308
  %v7397 = vunpack.c.l.b16 %v7322
  %v7398 = vunpack.c.l.b16 %v7332
  %v7399 = vpack.c.b16 %v7336, %v7335
  %v7400 = vpack.c.b16 %v7338, %v7337
  %v7401 = vpack.c.b16 %v7340, %v7339
  %v7402 = vpack.c.b16 %v7342, %v7341
  %v7403 = vpack.c.b16 %v7344, %v7343
  %v7404 = vpack.c.b16 %v7346, %v7345
  %v7405 = vpack.c.b16 %v7348, %v7347
  %v7406 = vpack.c.b16 %v7350, %v7349
  %v7407 = vpack.c.b16 %v7352, %v7351
  %v7408 = vpack.c.b16 %v7354, %v7353
  %v7409 = vpack.c.b16 %v7356, %v7355
  %v7410 = vpack.c.b16 %v7358, %v7357
  %v7411 = vpack.c.b16 %v7360, %v7359
  %v7412 = vpack.c.b16 %v7362, %v7361
  %v7413 = vpack.c.b16 %v7364, %v7363
  %v7414 = vpack.c.b16 %v7366, %v7365
  %v7415 = vpack.c.b16 %v7368, %v7367
  %v7416 = vpack.c.b16 %v7370, %v7369
  %v7417 = vpack.c.b16 %v7372, %v7371
  %v7418 = vpack.c.b16 %v7374, %v7373
  %v7419 = vpack.c.b16 %v7376, %v7375
  %v7420 = vpack.c.b16 %v7378, %v7377
  %v7421 = vpack.c.b16 %v7380, %v7379
  %v7422 = vpack.c.b16 %v7382, %v7381
  %v7423 = vpack.c.b16 %v7384, %v7383
  %v7424 = vpack.c.b16 %v7386, %v7385
  %v7425 = vpack.c.b16 %v7388, %v7387
  %v7426 = vpack.c.b16 %v7390, %v7389
  %v7427 = vpack.c.b16 %v7392, %v7391
  %v7428 = vpack.c.b16 %v7394, %v7393
  %v7429 = vpack.c.b16 %v7396, %v7395
  %v7430 = vpack.c.b16 %v7398, %v7397
  %v7432 = vsel %vm984, %v7399, 0
  %v7435 = vsel %vm984, %v7400, 0
  %v7438 = vsel %vm984, %v7401, 0
  %v7441 = vsel %vm984, %v7402, 0
  %v7444 = vsel %vm984, %v7403, 0
  %v7447 = vsel %vm984, %v7404, 0
  %v7450 = vsel %vm984, %v7405, 0
  %v7453 = vsel %vm984, %v7406, 0
  %v7456 = vsel %vm984, %v7407, 0
  %v7459 = vsel %vm984, %v7408, 0
  %v7462 = vsel %vm984, %v7409, 0
  %v7465 = vsel %vm984, %v7410, 0
  %v7468 = vsel %vm984, %v7411, 0
  %v7471 = vsel %vm984, %v7412, 0
  %v7474 = vsel %vm984, %v7413, 0
  %v7477 = vsel %vm984, %v7414, 0
  %v7480 = vsel %vm984, %v7415, 0
  %v7483 = vsel %vm984, %v7416, 0
  %v7486 = vsel %vm984, %v7417, 0
  %v7489 = vsel %vm984, %v7418, 0
  %v7492 = vsel %vm984, %v7419, 0
  %v7495 = vsel %vm984, %v7420, 0
  %v7498 = vsel %vm984, %v7421, 0
  %v7501 = vsel %vm984, %v7422, 0
  %v7504 = vsel %vm984, %v7423, 0
  %v7507 = vsel %vm984, %v7424, 0
  %v7510 = vsel %vm984, %v7425, 0
  %v7513 = vsel %vm984, %v7426, 0
  %v7516 = vsel %vm984, %v7427, 0
  %v7519 = vsel %vm984, %v7428, 0
  %v7522 = vsel %vm984, %v7429, 0
  %v7525 = vsel %vm984, %v7430, 0
  %v7528 = vsel %vm1081, %v7334, 0
  %7530 = vmatprep.subr.bf16.mxu0 0
  %7531 = vmatpush1.bf16.msra.mxu0 0
  %7532 = vmatprep.subr.bf16.mxu0 0
  %7533 = vmatpush1.bf16.msra.mxu0 0
  %7534 = vmatprep.subr.bf16.mxu0 0
  %7535 = vmatpush1.bf16.msra.mxu0 0
  %7536 = vmatprep.subr.bf16.mxu0 0
  %7537 = vmatpush1.bf16.msra.mxu0 0
  %7538 = vmatprep.subr.bf16.mxu0 0
  %7539 = vmatpush1.bf16.msra.mxu0 0
  %7540 = vmatprep.subr.bf16.mxu0 0
  %7541 = vmatpush1.bf16.msra.mxu0 0
  %7542 = vmatprep.subr.bf16.mxu0 0
  %7543 = vmatpush1.bf16.msra.mxu0 0
  %7544 = vmatprep.subr.bf16.mxu0 0
  %7545 = vmatpush1.bf16.msra.mxu0 %v7528
  %7546 = vmatprep.subr.bf16.mxu0 0
  %7547 = vmatpush2.bf16.msra.mxu0 0
  %7548 = vmatprep.subr.bf16.mxu0 0
  %7549 = vmatpush2.bf16.msra.mxu0 0
  %7550 = vmatprep.subr.bf16.mxu0 0
  %7551 = vmatpush2.bf16.msra.mxu0 0
  %7552 = vmatprep.subr.bf16.mxu0 0
  %7553 = vmatpush2.bf16.msra.mxu0 0
  %7554 = vmatprep.subr.bf16.mxu0 0
  %7555 = vmatpush2.bf16.msra.mxu0 0
  %7556 = vmatprep.subr.bf16.mxu0 0
  %7557 = vmatpush2.bf16.msra.mxu0 0
  %7558 = vmatprep.subr.bf16.mxu0 0
  %7559 = vmatpush2.bf16.msra.mxu0 0
  %7560 = vmatprep.subr.bf16.mxu0 0
  %7561 = vmatpush2.bf16.msra.mxu0 0
  %7562 = vmatprep.mubr.bf16.mxu0 0
  %7563 = vmatmul.mubr.bf16.gmra.mxu0 %v7432
  %v7564 = vpop.f32.mrf.mxu0
  %v7565 = vadd.f32 0.0, %v7564
  %v7566 = vpop.f32.mrf.mxu0
  %v7567 = vpop.f32.mrf.mxu0
  %v7568 = vadd.f32 0.0, %v7567
  %v7569 = vpop.f32.mrf.mxu0
  %7570 = vmatprep.mubr.bf16.mxu0 0
  %7571 = vmatmul.mubr.bf16.gmra.mxu0 %v7435
  %v7572 = vpop.f32.mrf.mxu0
  %v7573 = vadd.f32 0.0, %v7572
  %v7574 = vpop.f32.mrf.mxu0
  %v7575 = vpop.f32.mrf.mxu0
  %v7576 = vadd.f32 0.0, %v7575
  %v7577 = vpop.f32.mrf.mxu0
  %7578 = vmatprep.mubr.bf16.mxu0 0
  %7579 = vmatmul.mubr.bf16.gmra.mxu0 %v7438
  %v7580 = vpop.f32.mrf.mxu0
  %v7581 = vadd.f32 0.0, %v7580
  %v7582 = vpop.f32.mrf.mxu0
  %v7583 = vpop.f32.mrf.mxu0
  %v7584 = vadd.f32 0.0, %v7583
  %v7585 = vpop.f32.mrf.mxu0
  %7586 = vmatprep.mubr.bf16.mxu0 0
  %7587 = vmatmul.mubr.bf16.gmra.mxu0 %v7441
  %v7588 = vpop.f32.mrf.mxu0
  %v7589 = vadd.f32 0.0, %v7588
  %v7590 = vpop.f32.mrf.mxu0
  %v7591 = vpop.f32.mrf.mxu0
  %v7592 = vadd.f32 0.0, %v7591
  %v7593 = vpop.f32.mrf.mxu0
  %7594 = vmatprep.mubr.bf16.mxu0 0
  %7595 = vmatmul.mubr.bf16.gmra.mxu0 %v7444
  %v7596 = vpop.f32.mrf.mxu0
  %v7597 = vadd.f32 0.0, %v7596
  %v7598 = vpop.f32.mrf.mxu0
  %v7599 = vpop.f32.mrf.mxu0
  %v7600 = vadd.f32 0.0, %v7599
  %v7601 = vpop.f32.mrf.mxu0
  %7602 = vmatprep.mubr.bf16.mxu0 0
  %7603 = vmatmul.mubr.bf16.gmra.mxu0 %v7447
  %v7604 = vpop.f32.mrf.mxu0
  %v7605 = vadd.f32 0.0, %v7604
  %v7606 = vpop.f32.mrf.mxu0
  %v7607 = vpop.f32.mrf.mxu0
  %v7608 = vadd.f32 0.0, %v7607
  %v7609 = vpop.f32.mrf.mxu0
  %7610 = vmatprep.mubr.bf16.mxu0 0
  %7611 = vmatmul.mubr.bf16.gmra.mxu0 %v7450
  %v7612 = vpop.f32.mrf.mxu0
  %v7613 = vadd.f32 0.0, %v7612
  %v7614 = vpop.f32.mrf.mxu0
  %v7615 = vpop.f32.mrf.mxu0
  %v7616 = vadd.f32 0.0, %v7615
  %v7617 = vpop.f32.mrf.mxu0
  %7618 = vmatprep.mubr.bf16.mxu0 0
  %7619 = vmatmul.mubr.bf16.gmra.mxu0 %v7453
  %v7620 = vpop.f32.mrf.mxu0
  %v7621 = vadd.f32 0.0, %v7620
  %v7622 = vpop.f32.mrf.mxu0
  %v7623 = vpop.f32.mrf.mxu0
  %v7624 = vadd.f32 0.0, %v7623
  %v7625 = vpop.f32.mrf.mxu0
  %7626 = vmatprep.mubr.bf16.mxu0 0
  %7627 = vmatmul.mubr.bf16.gmra.mxu0 %v7456
  %v7628 = vpop.f32.mrf.mxu0
  %v7629 = vadd.f32 0.0, %v7628
  %v7630 = vpop.f32.mrf.mxu0
  %v7631 = vpop.f32.mrf.mxu0
  %v7632 = vadd.f32 0.0, %v7631
  %v7633 = vpop.f32.mrf.mxu0
  %7634 = vmatprep.mubr.bf16.mxu0 0
  %7635 = vmatmul.mubr.bf16.gmra.mxu0 %v7459
  %v7636 = vpop.f32.mrf.mxu0
  %v7637 = vadd.f32 0.0, %v7636
  %v7638 = vpop.f32.mrf.mxu0
  %v7639 = vpop.f32.mrf.mxu0
  %v7640 = vadd.f32 0.0, %v7639
  %v7641 = vpop.f32.mrf.mxu0
  %7642 = vmatprep.mubr.bf16.mxu0 0
  %7643 = vmatmul.mubr.bf16.gmra.mxu0 %v7462
  %v7644 = vpop.f32.mrf.mxu0
  %v7645 = vadd.f32 0.0, %v7644
  %v7646 = vpop.f32.mrf.mxu0
  %v7647 = vpop.f32.mrf.mxu0
  %v7648 = vadd.f32 0.0, %v7647
  %v7649 = vpop.f32.mrf.mxu0
  %7650 = vmatprep.mubr.bf16.mxu0 0
  %7651 = vmatmul.mubr.bf16.gmra.mxu0 %v7465
  %v7652 = vpop.f32.mrf.mxu0
  %v7653 = vadd.f32 0.0, %v7652
  %v7654 = vpop.f32.mrf.mxu0
  %v7655 = vpop.f32.mrf.mxu0
  %v7656 = vadd.f32 0.0, %v7655
  %v7657 = vpop.f32.mrf.mxu0
  %7658 = vmatprep.mubr.bf16.mxu0 0
  %7659 = vmatmul.mubr.bf16.gmra.mxu0 %v7468
  %v7660 = vpop.f32.mrf.mxu0
  %v7661 = vadd.f32 0.0, %v7660
  %v7662 = vpop.f32.mrf.mxu0
  %v7663 = vpop.f32.mrf.mxu0
  %v7664 = vadd.f32 0.0, %v7663
  %v7665 = vpop.f32.mrf.mxu0
  %7666 = vmatprep.mubr.bf16.mxu0 0
  %7667 = vmatmul.mubr.bf16.gmra.mxu0 %v7471
  %v7668 = vpop.f32.mrf.mxu0
  %v7669 = vadd.f32 0.0, %v7668
  %v7670 = vpop.f32.mrf.mxu0
  %v7671 = vpop.f32.mrf.mxu0
  %v7672 = vadd.f32 0.0, %v7671
  %v7673 = vpop.f32.mrf.mxu0
  %7674 = vmatprep.mubr.bf16.mxu0 0
  %7675 = vmatmul.mubr.bf16.gmra.mxu0 %v7474
  %v7676 = vpop.f32.mrf.mxu0
  %v7677 = vadd.f32 0.0, %v7676
  %v7678 = vpop.f32.mrf.mxu0
  %v7679 = vpop.f32.mrf.mxu0
  %v7680 = vadd.f32 0.0, %v7679
  %v7681 = vpop.f32.mrf.mxu0
  %7682 = vmatprep.mubr.bf16.mxu0 0
  %7683 = vmatmul.mubr.bf16.gmra.mxu0 %v7477
  %v7684 = vpop.f32.mrf.mxu0
  %v7685 = vadd.f32 0.0, %v7684
  %v7686 = vpop.f32.mrf.mxu0
  %v7687 = vpop.f32.mrf.mxu0
  %v7688 = vadd.f32 0.0, %v7687
  %v7689 = vpop.f32.mrf.mxu0
  %7690 = vmatprep.mubr.bf16.mxu0 0
  %7691 = vmatmul.mubr.bf16.gmra.mxu0 %v7480
  %v7692 = vpop.f32.mrf.mxu0
  %v7693 = vadd.f32 0.0, %v7692
  %v7694 = vpop.f32.mrf.mxu0
  %v7695 = vpop.f32.mrf.mxu0
  %v7696 = vadd.f32 0.0, %v7695
  %v7697 = vpop.f32.mrf.mxu0
  %7698 = vmatprep.mubr.bf16.mxu0 0
  %7699 = vmatmul.mubr.bf16.gmra.mxu0 %v7483
  %v7700 = vpop.f32.mrf.mxu0
  %v7701 = vadd.f32 0.0, %v7700
  %v7702 = vpop.f32.mrf.mxu0
  %v7703 = vpop.f32.mrf.mxu0
  %v7704 = vadd.f32 0.0, %v7703
  %v7705 = vpop.f32.mrf.mxu0
  %7706 = vmatprep.mubr.bf16.mxu0 0
  %7707 = vmatmul.mubr.bf16.gmra.mxu0 %v7486
  %v7708 = vpop.f32.mrf.mxu0
  %v7709 = vadd.f32 0.0, %v7708
  %v7710 = vpop.f32.mrf.mxu0
  %v7711 = vpop.f32.mrf.mxu0
  %v7712 = vadd.f32 0.0, %v7711
  %v7713 = vpop.f32.mrf.mxu0
  %7714 = vmatprep.mubr.bf16.mxu0 0
  %7715 = vmatmul.mubr.bf16.gmra.mxu0 %v7489
  %v7716 = vpop.f32.mrf.mxu0
  %v7717 = vadd.f32 0.0, %v7716
  %v7718 = vpop.f32.mrf.mxu0
  %v7719 = vpop.f32.mrf.mxu0
  %v7720 = vadd.f32 0.0, %v7719
  %v7721 = vpop.f32.mrf.mxu0
  %7722 = vmatprep.mubr.bf16.mxu0 0
  %7723 = vmatmul.mubr.bf16.gmra.mxu0 %v7492
  %v7724 = vpop.f32.mrf.mxu0
  %v7725 = vadd.f32 0.0, %v7724
  %v7726 = vpop.f32.mrf.mxu0
  %v7727 = vpop.f32.mrf.mxu0
  %v7728 = vadd.f32 0.0, %v7727
  %v7729 = vpop.f32.mrf.mxu0
  %7730 = vmatprep.mubr.bf16.mxu0 0
  %7731 = vmatmul.mubr.bf16.gmra.mxu0 %v7495
  %v7732 = vpop.f32.mrf.mxu0
  %v7733 = vadd.f32 0.0, %v7732
  %v7734 = vpop.f32.mrf.mxu0
  %v7735 = vpop.f32.mrf.mxu0
  %v7736 = vadd.f32 0.0, %v7735
  %v7737 = vpop.f32.mrf.mxu0
  %7738 = vmatprep.mubr.bf16.mxu0 0
  %7739 = vmatmul.mubr.bf16.gmra.mxu0 %v7498
  %v7740 = vpop.f32.mrf.mxu0
  %v7741 = vadd.f32 0.0, %v7740
  %v7742 = vpop.f32.mrf.mxu0
  %v7743 = vpop.f32.mrf.mxu0
  %v7744 = vadd.f32 0.0, %v7743
  %v7745 = vpop.f32.mrf.mxu0
  %7746 = vmatprep.mubr.bf16.mxu0 0
  %7747 = vmatmul.mubr.bf16.gmra.mxu0 %v7501
  %v7748 = vpop.f32.mrf.mxu0
  %v7749 = vadd.f32 0.0, %v7748
  %v7750 = vpop.f32.mrf.mxu0
  %v7751 = vpop.f32.mrf.mxu0
  %v7752 = vadd.f32 0.0, %v7751
  %v7753 = vpop.f32.mrf.mxu0
  %7754 = vmatprep.mubr.bf16.mxu0 0
  %7755 = vmatmul.mubr.bf16.gmra.mxu0 %v7504
  %v7756 = vpop.f32.mrf.mxu0
  %v7757 = vadd.f32 0.0, %v7756
  %v7758 = vpop.f32.mrf.mxu0
  %v7759 = vpop.f32.mrf.mxu0
  %v7760 = vadd.f32 0.0, %v7759
  %v7761 = vpop.f32.mrf.mxu0
  %7762 = vmatprep.mubr.bf16.mxu0 0
  %7763 = vmatmul.mubr.bf16.gmra.mxu0 %v7507
  %v7764 = vpop.f32.mrf.mxu0
  %v7765 = vadd.f32 0.0, %v7764
  %v7766 = vpop.f32.mrf.mxu0
  %v7767 = vpop.f32.mrf.mxu0
  %v7768 = vadd.f32 0.0, %v7767
  %v7769 = vpop.f32.mrf.mxu0
  %7770 = vmatprep.mubr.bf16.mxu0 0
  %7771 = vmatmul.mubr.bf16.gmra.mxu0 %v7510
  %v7772 = vpop.f32.mrf.mxu0
  %v7773 = vadd.f32 0.0, %v7772
  %v7774 = vpop.f32.mrf.mxu0
  %v7775 = vpop.f32.mrf.mxu0
  %v7776 = vadd.f32 0.0, %v7775
  %v7777 = vpop.f32.mrf.mxu0
  %7778 = vmatprep.mubr.bf16.mxu0 0
  %7779 = vmatmul.mubr.bf16.gmra.mxu0 %v7513
  %v7780 = vpop.f32.mrf.mxu0
  %v7781 = vadd.f32 0.0, %v7780
  %v7782 = vpop.f32.mrf.mxu0
  %v7783 = vpop.f32.mrf.mxu0
  %v7784 = vadd.f32 0.0, %v7783
  %v7785 = vpop.f32.mrf.mxu0
  %7786 = vmatprep.mubr.bf16.mxu0 0
  %7787 = vmatmul.mubr.bf16.gmra.mxu0 %v7516
  %v7788 = vpop.f32.mrf.mxu0
  %v7789 = vadd.f32 0.0, %v7788
  %v7790 = vpop.f32.mrf.mxu0
  %v7791 = vpop.f32.mrf.mxu0
  %v7792 = vadd.f32 0.0, %v7791
  %v7793 = vpop.f32.mrf.mxu0
  %7794 = vmatprep.mubr.bf16.mxu0 0
  %7795 = vmatmul.mubr.bf16.gmra.mxu0 %v7519
  %v7796 = vpop.f32.mrf.mxu0
  %v7797 = vadd.f32 0.0, %v7796
  %v7798 = vpop.f32.mrf.mxu0
  %v7799 = vpop.f32.mrf.mxu0
  %v7800 = vadd.f32 0.0, %v7799
  %v7801 = vpop.f32.mrf.mxu0
  %7802 = vmatprep.mubr.bf16.mxu0 0
  %7803 = vmatmul.mubr.bf16.gmra.mxu0 %v7522
  %v7804 = vpop.f32.mrf.mxu0
  %v7805 = vadd.f32 0.0, %v7804
  %v7806 = vpop.f32.mrf.mxu0
  %v7807 = vpop.f32.mrf.mxu0
  %v7808 = vadd.f32 0.0, %v7807
  %v7809 = vpop.f32.mrf.mxu0
  %7810 = vmatprep.mubr.bf16.mxu0 0
  %7811 = vmatmul.mubr.bf16.gmra.mxu0 %v7525
  %v7812 = vpop.f32.mrf.mxu0
  %v7813 = vadd.f32 0.0, %v7812
  %v7814 = vpop.f32.mrf.mxu0
  %v7815 = vpop.f32.mrf.mxu0
  %v7816 = vadd.f32 0.0, %v7815
  %v7817 = vpop.f32.mrf.mxu0
  %7818 = vdwg.mxu0
  %v7819 = vadd.f32 %v6405, %v7565
  %v7820 = vadd.f32 %v6406, %v7568
  %v7821 = vadd.f32 %v6407, %v7573
  %v7822 = vadd.f32 %v6408, %v7576
  %v7823 = vadd.f32 %v6409, %v7581
  %v7824 = vadd.f32 %v6410, %v7584
  %v7825 = vadd.f32 %v6411, %v7589
  %v7826 = vadd.f32 %v6412, %v7592
  %v7827 = vadd.f32 %v6413, %v7597
  %v7828 = vadd.f32 %v6414, %v7600
  %v7829 = vadd.f32 %v6415, %v7605
  %v7830 = vadd.f32 %v6416, %v7608
  %v7831 = vadd.f32 %v6417, %v7613
  %v7832 = vadd.f32 %v6418, %v7616
  %v7833 = vadd.f32 %v6419, %v7621
  %v7834 = vadd.f32 %v6420, %v7624
  %v7835 = vadd.f32 %v6421, %v7629
  %v7836 = vadd.f32 %v6422, %v7632
  %v7837 = vadd.f32 %v6423, %v7637
  %v7838 = vadd.f32 %v6424, %v7640
  %v7839 = vadd.f32 %v6425, %v7645
  %v7840 = vadd.f32 %v6426, %v7648
  %v7841 = vadd.f32 %v6427, %v7653
  %v7842 = vadd.f32 %v6428, %v7656
  %v7843 = vadd.f32 %v6429, %v7661
  %v7844 = vadd.f32 %v6430, %v7664
  %v7845 = vadd.f32 %v6431, %v7669
  %v7846 = vadd.f32 %v6432, %v7672
  %v7847 = vadd.f32 %v6433, %v7677
  %v7848 = vadd.f32 %v6434, %v7680
  %v7849 = vadd.f32 %v6435, %v7685
  %v7850 = vadd.f32 %v6436, %v7688
  %v7851 = vadd.f32 %v6437, %v7693
  %v7852 = vadd.f32 %v6438, %v7696
  %v7853 = vadd.f32 %v6439, %v7701
  %v7854 = vadd.f32 %v6440, %v7704
  %v7855 = vadd.f32 %v6441, %v7709
  %v7856 = vadd.f32 %v6442, %v7712
  %v7857 = vadd.f32 %v6443, %v7717
  %v7858 = vadd.f32 %v6444, %v7720
  %v7859 = vadd.f32 %v6445, %v7725
  %v7860 = vadd.f32 %v6446, %v7728
  %v7861 = vadd.f32 %v6447, %v7733
  %v7862 = vadd.f32 %v6448, %v7736
  %v7863 = vadd.f32 %v6449, %v7741
  %v7864 = vadd.f32 %v6450, %v7744
  %v7865 = vadd.f32 %v6451, %v7749
  %v7866 = vadd.f32 %v6452, %v7752
  %v7867 = vadd.f32 %v6453, %v7757
  %v7868 = vadd.f32 %v6454, %v7760
  %v7869 = vadd.f32 %v6455, %v7765
  %v7870 = vadd.f32 %v6456, %v7768
  %v7871 = vadd.f32 %v6457, %v7773
  %v7872 = vadd.f32 %v6458, %v7776
  %v7873 = vadd.f32 %v6459, %v7781
  %v7874 = vadd.f32 %v6460, %v7784
  %v7875 = vadd.f32 %v6461, %v7789
  %v7876 = vadd.f32 %v6462, %v7792
  %v7877 = vadd.f32 %v6463, %v7797
  %v7878 = vadd.f32 %v6464, %v7800
  %v7879 = vadd.f32 %v6465, %v7805
  %v7880 = vadd.f32 %v6466, %v7808
  %v7881 = vadd.f32 %v6467, %v7813
  %v7882 = vadd.f32 %v6468, %v7816
  %v7883 = vld [vmem:[%s5790] sm:$0xe]
  %v7884 = vld [vmem:[%s5790 + $0xc] sm:$0xe]
  %v7885 = vld [vmem:[%s5790 + $0x18] sm:$0xe]
  %v7886 = vld [vmem:[%s5790 + $0x24] sm:$0xe]
  %v7887 = vld [vmem:[%s5790 + $0x30] sm:$0xe]
  %v7888 = vld [vmem:[%s5790 + $0x3c] sm:$0xe]
  %v7889 = vld [vmem:[%s5790 + $0x48] sm:$0xe]
  %v7890 = vld [vmem:[%s5790 + $0x54] sm:$0xe]
  %v7891 = vld [vmem:[%s5790 + $0x60] sm:$0xe]
  %v7892 = vld [vmem:[%s5790 + $0x6c] sm:$0xe]
  %v7893 = vld [vmem:[%s5790 + $0x78] sm:$0xe]
  %v7894 = vld [vmem:[%s5790 + $0x84] sm:$0xe]
  %v7895 = vld [vmem:[%s5790 + $0x90] sm:$0xe]
  %v7896 = vld [vmem:[%s5790 + $0x9c] sm:$0xe]
  %v7897 = vld [vmem:[%s5790 + $0xa8] sm:$0xe]
  %v7898 = vld [vmem:[%s5790 + $0xb4] sm:$0xe]
  %v7899 = vld [vmem:[%s5790 + $0xd8] sm:$0xe]
  %v7900 = vld [vmem:[%s5790 + $0xe4] sm:$0xe]
  %v7901 = vld [vmem:[%s5790 + $0xf0] sm:$0xe]
  %v7902 = vld [vmem:[%s5790 + $0xfc] sm:$0xe]
  %v7903 = vld [vmem:[%s5790 + $0x108] sm:$0xe]
  %v7904 = vld [vmem:[%s5790 + $0x114] sm:$0xe]
  %v7905 = vld [vmem:[%s5790 + $0x120] sm:$0xe]
  %v7906 = vld [vmem:[%s5790 + $0x12c] sm:$0xe]
  %v7907 = vld [vmem:[%s5790 + $0x138] sm:$0xe]
  %v7908 = vld [vmem:[%s5790 + $0x144] sm:$0xe]
  %v7909 = vld [vmem:[%s5790 + $0x150] sm:$0xe]
  %v7910 = vld [vmem:[%s5790 + $0x15c] sm:$0xe]
  %v7911 = vld [vmem:[%s5790 + $0x168] sm:$0xe]
  %v7912 = vld [vmem:[%s5790 + $0x174] sm:$0xe]
  %v7913 = vld [vmem:[%s5790 + $0x180] sm:$0xe]
  %v7914 = vld [vmem:[%s5790 + $0x18c] sm:$0xe]
  %v8011 = vrot.slane %v7883, 5
  %v8012 = vrot.slane %v8011, 4
  %v8013 = vrot.slane %v6470, 5
  %v8014 = vsel %vm2020, %v8012, %v8013
  %v8015 = vrot.slane %v8013, 4
  %v8016 = vrot.slane %v6471, 5
  %v8017 = vsel %vm2020, %v8015, %v8016
  %v8018 = vrot.slane %v7884, 5
  %v8019 = vrot.slane %v8018, 4
  %v8020 = vrot.slane %v6473, 5
  %v8021 = vsel %vm2020, %v8019, %v8020
  %v8022 = vrot.slane %v8020, 4
  %v8023 = vrot.slane %v6474, 5
  %v8024 = vsel %vm2020, %v8022, %v8023
  %v8025 = vrot.slane %v7885, 5
  %v8026 = vrot.slane %v8025, 4
  %v8027 = vrot.slane %v6476, 5
  %v8028 = vsel %vm2020, %v8026, %v8027
  %v8029 = vrot.slane %v8027, 4
  %v8030 = vrot.slane %v6477, 5
  %v8031 = vsel %vm2020, %v8029, %v8030
  %v8032 = vrot.slane %v7886, 5
  %v8033 = vrot.slane %v8032, 4
  %v8034 = vrot.slane %v6479, 5
  %v8035 = vsel %vm2020, %v8033, %v8034
  %v8036 = vrot.slane %v8034, 4
  %v8037 = vrot.slane %v6480, 5
  %v8038 = vsel %vm2020, %v8036, %v8037
  %v8039 = vrot.slane %v7887, 5
  %v8040 = vrot.slane %v8039, 4
  %v8041 = vrot.slane %v6482, 5
  %v8042 = vsel %vm2020, %v8040, %v8041
  %v8043 = vrot.slane %v8041, 4
  %v8044 = vrot.slane %v6483, 5
  %v8045 = vsel %vm2020, %v8043, %v8044
  %v8046 = vrot.slane %v7888, 5
  %v8047 = vrot.slane %v8046, 4
  %v8048 = vrot.slane %v6485, 5
  %v8049 = vsel %vm2020, %v8047, %v8048
  %v8050 = vrot.slane %v8048, 4
  %v8051 = vrot.slane %v6486, 5
  %v8052 = vsel %vm2020, %v8050, %v8051
  %v8053 = vrot.slane %v7889, 5
  %v8054 = vrot.slane %v8053, 4
  %v8055 = vrot.slane %v6488, 5
  %v8056 = vsel %vm2020, %v8054, %v8055
  %v8057 = vrot.slane %v8055, 4
  %v8058 = vrot.slane %v6489, 5
  %v8059 = vsel %vm2020, %v8057, %v8058
  %v8060 = vrot.slane %v7890, 5
  %v8061 = vrot.slane %v8060, 4
  %v8062 = vrot.slane %v6491, 5
  %v8063 = vsel %vm2020, %v8061, %v8062
  %v8064 = vrot.slane %v8062, 4
  %v8065 = vrot.slane %v6492, 5
  %v8066 = vsel %vm2020, %v8064, %v8065
  %v8067 = vrot.slane %v7891, 5
  %v8068 = vrot.slane %v8067, 4
  %v8069 = vrot.slane %v6494, 5
  %v8070 = vsel %vm2020, %v8068, %v8069
  %v8071 = vrot.slane %v8069, 4
  %v8072 = vrot.slane %v6495, 5
  %v8073 = vsel %vm2020, %v8071, %v8072
  %v8074 = vrot.slane %v7892, 5
  %v8075 = vrot.slane %v8074, 4
  %v8076 = vrot.slane %v6497, 5
  %v8077 = vsel %vm2020, %v8075, %v8076
  %v8078 = vrot.slane %v8076, 4
  %v8079 = vrot.slane %v6498, 5
  %v8080 = vsel %vm2020, %v8078, %v8079
  %v8081 = vrot.slane %v7893, 5
  %v8082 = vrot.slane %v8081, 4
  %v8083 = vrot.slane %v6500, 5
  %v8084 = vsel %vm2020, %v8082, %v8083
  %v8085 = vrot.slane %v8083, 4
  %v8086 = vrot.slane %v6501, 5
  %v8087 = vsel %vm2020, %v8085, %v8086
  %v8088 = vrot.slane %v7894, 5
  %v8089 = vrot.slane %v8088, 4
  %v8090 = vrot.slane %v6503, 5
  %v8091 = vsel %vm2020, %v8089, %v8090
  %v8092 = vrot.slane %v8090, 4
  %v8093 = vrot.slane %v6504, 5
  %v8094 = vsel %vm2020, %v8092, %v8093
  %v8095 = vrot.slane %v7895, 5
  %v8096 = vrot.slane %v8095, 4
  %v8097 = vrot.slane %v6506, 5
  %v8098 = vsel %vm2020, %v8096, %v8097
  %v8099 = vrot.slane %v8097, 4
  %v8100 = vrot.slane %v6507, 5
  %v8101 = vsel %vm2020, %v8099, %v8100
  %v8102 = vrot.slane %v7896, 5
  %v8103 = vrot.slane %v8102, 4
  %v8104 = vrot.slane %v6509, 5
  %v8105 = vsel %vm2020, %v8103, %v8104
  %v8106 = vrot.slane %v8104, 4
  %v8107 = vrot.slane %v6510, 5
  %v8108 = vsel %vm2020, %v8106, %v8107
  %v8109 = vrot.slane %v7897, 5
  %v8110 = vrot.slane %v8109, 4
  %v8111 = vrot.slane %v6512, 5
  %v8112 = vsel %vm2020, %v8110, %v8111
  %v8113 = vrot.slane %v8111, 4
  %v8114 = vrot.slane %v6513, 5
  %v8115 = vsel %vm2020, %v8113, %v8114
  %v8116 = vrot.slane %v7898, 5
  %v8117 = vrot.slane %v8116, 4
  %v8118 = vrot.slane %v6515, 5
  %v8119 = vsel %vm2020, %v8117, %v8118
  %v8120 = vrot.slane %v8118, 4
  %v8121 = vrot.slane %v6516, 5
  %v8122 = vsel %vm2020, %v8120, %v8121
  %v8123 = vrot.slane %v7899, 5
  %v8124 = vrot.slane %v8123, 4
  %v8125 = vrot.slane %v6518, 5
  %v8126 = vsel %vm2020, %v8124, %v8125
  %v8127 = vrot.slane %v8125, 4
  %v8128 = vrot.slane %v6519, 5
  %v8129 = vsel %vm2020, %v8127, %v8128
  %v8130 = vrot.slane %v7900, 5
  %v8131 = vrot.slane %v8130, 4
  %v8132 = vrot.slane %v6521, 5
  %v8133 = vsel %vm2020, %v8131, %v8132
  %v8134 = vrot.slane %v8132, 4
  %v8135 = vrot.slane %v6522, 5
  %v8136 = vsel %vm2020, %v8134, %v8135
  %v8137 = vrot.slane %v7901, 5
  %v8138 = vrot.slane %v8137, 4
  %v8139 = vrot.slane %v6524, 5
  %v8140 = vsel %vm2020, %v8138, %v8139
  %v8141 = vrot.slane %v8139, 4
  %v8142 = vrot.slane %v6525, 5
  %v8143 = vsel %vm2020, %v8141, %v8142
  %v8144 = vrot.slane %v7902, 5
  %v8145 = vrot.slane %v8144, 4
  %v8146 = vrot.slane %v6527, 5
  %v8147 = vsel %vm2020, %v8145, %v8146
  %v8148 = vrot.slane %v8146, 4
  %v8149 = vrot.slane %v6528, 5
  %v8150 = vsel %vm2020, %v8148, %v8149
  %v8151 = vrot.slane %v7903, 5
  %v8152 = vrot.slane %v8151, 4
  %v8153 = vrot.slane %v6530, 5
  %v8154 = vsel %vm2020, %v8152, %v8153
  %v8155 = vrot.slane %v8153, 4
  %v8156 = vrot.slane %v6531, 5
  %v8157 = vsel %vm2020, %v8155, %v8156
  %v8158 = vrot.slane %v7904, 5
  %v8159 = vrot.slane %v8158, 4
  %v8160 = vrot.slane %v6533, 5
  %v8161 = vsel %vm2020, %v8159, %v8160
  %v8162 = vrot.slane %v8160, 4
  %v8163 = vrot.slane %v6534, 5
  %v8164 = vsel %vm2020, %v8162, %v8163
  %v8165 = vrot.slane %v7905, 5
  %v8166 = vrot.slane %v8165, 4
  %v8167 = vrot.slane %v6536, 5
  %v8168 = vsel %vm2020, %v8166, %v8167
  %v8169 = vrot.slane %v8167, 4
  %v8170 = vrot.slane %v6537, 5
  %v8171 = vsel %vm2020, %v8169, %v8170
  %v8172 = vrot.slane %v7906, 5
  %v8173 = vrot.slane %v8172, 4
  %v8174 = vrot.slane %v6539, 5
  %v8175 = vsel %vm2020, %v8173, %v8174
  %v8176 = vrot.slane %v8174, 4
  %v8177 = vrot.slane %v6540, 5
  %v8178 = vsel %vm2020, %v8176, %v8177
  %v8179 = vrot.slane %v7907, 5
  %v8180 = vrot.slane %v8179, 4
  %v8181 = vrot.slane %v6542, 5
  %v8182 = vsel %vm2020, %v8180, %v8181
  %v8183 = vrot.slane %v8181, 4
  %v8184 = vrot.slane %v6543, 5
  %v8185 = vsel %vm2020, %v8183, %v8184
  %v8186 = vrot.slane %v7908, 5
  %v8187 = vrot.slane %v8186, 4
  %v8188 = vrot.slane %v6545, 5
  %v8189 = vsel %vm2020, %v8187, %v8188
  %v8190 = vrot.slane %v8188, 4
  %v8191 = vrot.slane %v6546, 5
  %v8192 = vsel %vm2020, %v8190, %v8191
  %v8193 = vrot.slane %v7909, 5
  %v8194 = vrot.slane %v8193, 4
  %v8195 = vrot.slane %v6548, 5
  %v8196 = vsel %vm2020, %v8194, %v8195
  %v8197 = vrot.slane %v8195, 4
  %v8198 = vrot.slane %v6549, 5
  %v8199 = vsel %vm2020, %v8197, %v8198
  %v8200 = vrot.slane %v7910, 5
  %v8201 = vrot.slane %v8200, 4
  %v8202 = vrot.slane %v6551, 5
  %v8203 = vsel %vm2020, %v8201, %v8202
  %v8204 = vrot.slane %v8202, 4
  %v8205 = vrot.slane %v6552, 5
  %v8206 = vsel %vm2020, %v8204, %v8205
  %v8207 = vrot.slane %v7911, 5
  %v8208 = vrot.slane %v8207, 4
  %v8209 = vrot.slane %v6554, 5
  %v8210 = vsel %vm2020, %v8208, %v8209
  %v8211 = vrot.slane %v8209, 4
  %v8212 = vrot.slane %v6555, 5
  %v8213 = vsel %vm2020, %v8211, %v8212
  %v8214 = vrot.slane %v7912, 5
  %v8215 = vrot.slane %v8214, 4
  %v8216 = vrot.slane %v6557, 5
  %v8217 = vsel %vm2020, %v8215, %v8216
  %v8218 = vrot.slane %v8216, 4
  %v8219 = vrot.slane %v6558, 5
  %v8220 = vsel %vm2020, %v8218, %v8219
  %v8221 = vrot.slane %v7913, 5
  %v8222 = vrot.slane %v8221, 4
  %v8223 = vrot.slane %v6560, 5
  %v8224 = vsel %vm2020, %v8222, %v8223
  %v8225 = vrot.slane %v8223, 4
  %v8226 = vrot.slane %v6561, 5
  %v8227 = vsel %vm2020, %v8225, %v8226
  %v8228 = vrot.slane %v7914, 5
  %v8229 = vrot.slane %v8228, 4
  %v8230 = vrot.slane %v6563, 5
  %v8231 = vsel %vm2020, %v8229, %v8230
  %v8232 = vrot.slane %v8230, 4
  %v8233 = vrot.slane %v6564, 5
  %v8234 = vsel %vm2020, %v8232, %v8233
  %s8235 = scalar_lea.vmem %s1, 16
  %v8236 = vld [vmem:[%s8235] sm:$0x3]
  %v8237 = vunpack.c.l.b16 %v8014
  %v8238 = vunpack.c.l.b16 %v8017
  %v8239 = vunpack.c.l.b16 %v8021
  %v8240 = vunpack.c.l.b16 %v8024
  %v8241 = vunpack.c.l.b16 %v8028
  %v8242 = vunpack.c.l.b16 %v8031
  %v8243 = vunpack.c.l.b16 %v8035
  %v8244 = vunpack.c.l.b16 %v8038
  %v8245 = vunpack.c.l.b16 %v8042
  %v8246 = vunpack.c.l.b16 %v8045
  %v8247 = vunpack.c.l.b16 %v8049
  %v8248 = vunpack.c.l.b16 %v8052
  %v8249 = vunpack.c.l.b16 %v8056
  %v8250 = vunpack.c.l.b16 %v8059
  %v8251 = vunpack.c.l.b16 %v8063
  %v8252 = vunpack.c.l.b16 %v8066
  %v8253 = vunpack.c.l.b16 %v8070
  %v8254 = vunpack.c.l.b16 %v8073
  %v8255 = vunpack.c.l.b16 %v8077
  %v8256 = vunpack.c.l.b16 %v8080
  %v8257 = vunpack.c.l.b16 %v8084
  %v8258 = vunpack.c.l.b16 %v8087
  %v8259 = vunpack.c.l.b16 %v8091
  %v8260 = vunpack.c.l.b16 %v8094
  %v8261 = vunpack.c.l.b16 %v8098
  %v8262 = vunpack.c.l.b16 %v8101
  %v8263 = vunpack.c.l.b16 %v8105
  %v8264 = vunpack.c.l.b16 %v8108
  %v8265 = vunpack.c.l.b16 %v8112
  %v8266 = vunpack.c.l.b16 %v8115
  %v8267 = vunpack.c.l.b16 %v8119
  %v8268 = vunpack.c.l.b16 %v8122
  %v8269 = vunpack.c.l.b16 %v8126
  %v8270 = vunpack.c.l.b16 %v8129
  %v8271 = vunpack.c.l.b16 %v8133
  %v8272 = vunpack.c.l.b16 %v8136
  %v8273 = vunpack.c.l.b16 %v8140
  %v8274 = vunpack.c.l.b16 %v8143
  %v8275 = vunpack.c.l.b16 %v8147
  %v8276 = vunpack.c.l.b16 %v8150
  %v8277 = vunpack.c.l.b16 %v8154
  %v8278 = vunpack.c.l.b16 %v8157
  %v8279 = vunpack.c.l.b16 %v8161
  %v8280 = vunpack.c.l.b16 %v8164
  %v8281 = vunpack.c.l.b16 %v8168
  %v8282 = vunpack.c.l.b16 %v8171
  %v8283 = vunpack.c.l.b16 %v8175
  %v8284 = vunpack.c.l.b16 %v8178
  %v8285 = vunpack.c.l.b16 %v8182
  %v8286 = vunpack.c.l.b16 %v8185
  %v8287 = vunpack.c.l.b16 %v8189
  %v8288 = vunpack.c.l.b16 %v8192
  %v8289 = vunpack.c.l.b16 %v8196
  %v8290 = vunpack.c.l.b16 %v8199
  %v8291 = vunpack.c.l.b16 %v8203
  %v8292 = vunpack.c.l.b16 %v8206
  %v8293 = vunpack.c.l.b16 %v8210
  %v8294 = vunpack.c.l.b16 %v8213
  %v8295 = vunpack.c.l.b16 %v8217
  %v8296 = vunpack.c.l.b16 %v8220
  %v8297 = vunpack.c.l.b16 %v8224
  %v8298 = vunpack.c.l.b16 %v8227
  %v8299 = vunpack.c.l.b16 %v8231
  %v8300 = vunpack.c.l.b16 %v8234
  %v8301 = vpack.c.b16 %v8238, %v8237
  %v8302 = vpack.c.b16 %v8240, %v8239
  %v8303 = vpack.c.b16 %v8242, %v8241
  %v8304 = vpack.c.b16 %v8244, %v8243
  %v8305 = vpack.c.b16 %v8246, %v8245
  %v8306 = vpack.c.b16 %v8248, %v8247
  %v8307 = vpack.c.b16 %v8250, %v8249
  %v8308 = vpack.c.b16 %v8252, %v8251
  %v8309 = vpack.c.b16 %v8254, %v8253
  %v8310 = vpack.c.b16 %v8256, %v8255
  %v8311 = vpack.c.b16 %v8258, %v8257
  %v8312 = vpack.c.b16 %v8260, %v8259
  %v8313 = vpack.c.b16 %v8262, %v8261
  %v8314 = vpack.c.b16 %v8264, %v8263
  %v8315 = vpack.c.b16 %v8266, %v8265
  %v8316 = vpack.c.b16 %v8268, %v8267
  %v8317 = vpack.c.b16 %v8270, %v8269
  %v8318 = vpack.c.b16 %v8272, %v8271
  %v8319 = vpack.c.b16 %v8274, %v8273
  %v8320 = vpack.c.b16 %v8276, %v8275
  %v8321 = vpack.c.b16 %v8278, %v8277
  %v8322 = vpack.c.b16 %v8280, %v8279
  %v8323 = vpack.c.b16 %v8282, %v8281
  %v8324 = vpack.c.b16 %v8284, %v8283
  %v8325 = vpack.c.b16 %v8286, %v8285
  %v8326 = vpack.c.b16 %v8288, %v8287
  %v8327 = vpack.c.b16 %v8290, %v8289
  %v8328 = vpack.c.b16 %v8292, %v8291
  %v8329 = vpack.c.b16 %v8294, %v8293
  %v8330 = vpack.c.b16 %v8296, %v8295
  %v8331 = vpack.c.b16 %v8298, %v8297
  %v8332 = vpack.c.b16 %v8300, %v8299
  %v8334 = vsel %vm984, %v8301, 0
  %v8337 = vsel %vm984, %v8302, 0
  %v8340 = vsel %vm984, %v8303, 0
  %v8343 = vsel %vm984, %v8304, 0
  %v8346 = vsel %vm984, %v8305, 0
  %v8349 = vsel %vm984, %v8306, 0
  %v8352 = vsel %vm984, %v8307, 0
  %v8355 = vsel %vm984, %v8308, 0
  %v8358 = vsel %vm984, %v8309, 0
  %v8361 = vsel %vm984, %v8310, 0
  %v8364 = vsel %vm984, %v8311, 0
  %v8367 = vsel %vm984, %v8312, 0
  %v8370 = vsel %vm984, %v8313, 0
  %v8373 = vsel %vm984, %v8314, 0
  %v8376 = vsel %vm984, %v8315, 0
  %v8379 = vsel %vm984, %v8316, 0
  %v8382 = vsel %vm984, %v8317, 0
  %v8385 = vsel %vm984, %v8318, 0
  %v8388 = vsel %vm984, %v8319, 0
  %v8391 = vsel %vm984, %v8320, 0
  %v8394 = vsel %vm984, %v8321, 0
  %v8397 = vsel %vm984, %v8322, 0
  %v8400 = vsel %vm984, %v8323, 0
  %v8403 = vsel %vm984, %v8324, 0
  %v8406 = vsel %vm984, %v8325, 0
  %v8409 = vsel %vm984, %v8326, 0
  %v8412 = vsel %vm984, %v8327, 0
  %v8415 = vsel %vm984, %v8328, 0
  %v8418 = vsel %vm984, %v8329, 0
  %v8421 = vsel %vm984, %v8330, 0
  %v8424 = vsel %vm984, %v8331, 0
  %v8427 = vsel %vm984, %v8332, 0
  %v8430 = vsel %vm1081, %v8236, 0
  %8432 = vmatprep.subr.bf16.mxu0 0
  %8433 = vmatpush1.bf16.msra.mxu0 0
  %8434 = vmatprep.subr.bf16.mxu0 0
  %8435 = vmatpush1.bf16.msra.mxu0 0
  %8436 = vmatprep.subr.bf16.mxu0 0
  %8437 = vmatpush1.bf16.msra.mxu0 0
  %8438 = vmatprep.subr.bf16.mxu0 0
  %8439 = vmatpush1.bf16.msra.mxu0 0
  %8440 = vmatprep.subr.bf16.mxu0 0
  %8441 = vmatpush1.bf16.msra.mxu0 0
  %8442 = vmatprep.subr.bf16.mxu0 0
  %8443 = vmatpush1.bf16.msra.mxu0 0
  %8444 = vmatprep.subr.bf16.mxu0 0
  %8445 = vmatpush1.bf16.msra.mxu0 0
  %8446 = vmatprep.subr.bf16.mxu0 0
  %8447 = vmatpush1.bf16.msra.mxu0 %v8430
  %8448 = vmatprep.subr.bf16.mxu0 0
  %8449 = vmatpush2.bf16.msra.mxu0 0
  %8450 = vmatprep.subr.bf16.mxu0 0
  %8451 = vmatpush2.bf16.msra.mxu0 0
  %8452 = vmatprep.subr.bf16.mxu0 0
  %8453 = vmatpush2.bf16.msra.mxu0 0
  %8454 = vmatprep.subr.bf16.mxu0 0
  %8455 = vmatpush2.bf16.msra.mxu0 0
  %8456 = vmatprep.subr.bf16.mxu0 0
  %8457 = vmatpush2.bf16.msra.mxu0 0
  %8458 = vmatprep.subr.bf16.mxu0 0
  %8459 = vmatpush2.bf16.msra.mxu0 0
  %8460 = vmatprep.subr.bf16.mxu0 0
  %8461 = vmatpush2.bf16.msra.mxu0 0
  %8462 = vmatprep.subr.bf16.mxu0 0
  %8463 = vmatpush2.bf16.msra.mxu0 0
  %8464 = vmatprep.mubr.bf16.mxu0 0
  %8465 = vmatmul.mubr.bf16.gmra.mxu0 %v8334
  %v8466 = vpop.f32.mrf.mxu0
  %v8467 = vadd.f32 0.0, %v8466
  %v8468 = vpop.f32.mrf.mxu0
  %v8469 = vpop.f32.mrf.mxu0
  %v8470 = vadd.f32 0.0, %v8469
  %v8471 = vpop.f32.mrf.mxu0
  %8472 = vmatprep.mubr.bf16.mxu0 0
  %8473 = vmatmul.mubr.bf16.gmra.mxu0 %v8337
  %v8474 = vpop.f32.mrf.mxu0
  %v8475 = vadd.f32 0.0, %v8474
  %v8476 = vpop.f32.mrf.mxu0
  %v8477 = vpop.f32.mrf.mxu0
  %v8478 = vadd.f32 0.0, %v8477
  %v8479 = vpop.f32.mrf.mxu0
  %8480 = vmatprep.mubr.bf16.mxu0 0
  %8481 = vmatmul.mubr.bf16.gmra.mxu0 %v8340
  %v8482 = vpop.f32.mrf.mxu0
  %v8483 = vadd.f32 0.0, %v8482
  %v8484 = vpop.f32.mrf.mxu0
  %v8485 = vpop.f32.mrf.mxu0
  %v8486 = vadd.f32 0.0, %v8485
  %v8487 = vpop.f32.mrf.mxu0
  %8488 = vmatprep.mubr.bf16.mxu0 0
  %8489 = vmatmul.mubr.bf16.gmra.mxu0 %v8343
  %v8490 = vpop.f32.mrf.mxu0
  %v8491 = vadd.f32 0.0, %v8490
  %v8492 = vpop.f32.mrf.mxu0
  %v8493 = vpop.f32.mrf.mxu0
  %v8494 = vadd.f32 0.0, %v8493
  %v8495 = vpop.f32.mrf.mxu0
  %8496 = vmatprep.mubr.bf16.mxu0 0
  %8497 = vmatmul.mubr.bf16.gmra.mxu0 %v8346
  %v8498 = vpop.f32.mrf.mxu0
  %v8499 = vadd.f32 0.0, %v8498
  %v8500 = vpop.f32.mrf.mxu0
  %v8501 = vpop.f32.mrf.mxu0
  %v8502 = vadd.f32 0.0, %v8501
  %v8503 = vpop.f32.mrf.mxu0
  %8504 = vmatprep.mubr.bf16.mxu0 0
  %8505 = vmatmul.mubr.bf16.gmra.mxu0 %v8349
  %v8506 = vpop.f32.mrf.mxu0
  %v8507 = vadd.f32 0.0, %v8506
  %v8508 = vpop.f32.mrf.mxu0
  %v8509 = vpop.f32.mrf.mxu0
  %v8510 = vadd.f32 0.0, %v8509
  %v8511 = vpop.f32.mrf.mxu0
  %8512 = vmatprep.mubr.bf16.mxu0 0
  %8513 = vmatmul.mubr.bf16.gmra.mxu0 %v8352
  %v8514 = vpop.f32.mrf.mxu0
  %v8515 = vadd.f32 0.0, %v8514
  %v8516 = vpop.f32.mrf.mxu0
  %v8517 = vpop.f32.mrf.mxu0
  %v8518 = vadd.f32 0.0, %v8517
  %v8519 = vpop.f32.mrf.mxu0
  %8520 = vmatprep.mubr.bf16.mxu0 0
  %8521 = vmatmul.mubr.bf16.gmra.mxu0 %v8355
  %v8522 = vpop.f32.mrf.mxu0
  %v8523 = vadd.f32 0.0, %v8522
  %v8524 = vpop.f32.mrf.mxu0
  %v8525 = vpop.f32.mrf.mxu0
  %v8526 = vadd.f32 0.0, %v8525
  %v8527 = vpop.f32.mrf.mxu0
  %8528 = vmatprep.mubr.bf16.mxu0 0
  %8529 = vmatmul.mubr.bf16.gmra.mxu0 %v8358
  %v8530 = vpop.f32.mrf.mxu0
  %v8531 = vadd.f32 0.0, %v8530
  %v8532 = vpop.f32.mrf.mxu0
  %v8533 = vpop.f32.mrf.mxu0
  %v8534 = vadd.f32 0.0, %v8533
  %v8535 = vpop.f32.mrf.mxu0
  %8536 = vmatprep.mubr.bf16.mxu0 0
  %8537 = vmatmul.mubr.bf16.gmra.mxu0 %v8361
  %v8538 = vpop.f32.mrf.mxu0
  %v8539 = vadd.f32 0.0, %v8538
  %v8540 = vpop.f32.mrf.mxu0
  %v8541 = vpop.f32.mrf.mxu0
  %v8542 = vadd.f32 0.0, %v8541
  %v8543 = vpop.f32.mrf.mxu0
  %8544 = vmatprep.mubr.bf16.mxu0 0
  %8545 = vmatmul.mubr.bf16.gmra.mxu0 %v8364
  %v8546 = vpop.f32.mrf.mxu0
  %v8547 = vadd.f32 0.0, %v8546
  %v8548 = vpop.f32.mrf.mxu0
  %v8549 = vpop.f32.mrf.mxu0
  %v8550 = vadd.f32 0.0, %v8549
  %v8551 = vpop.f32.mrf.mxu0
  %8552 = vmatprep.mubr.bf16.mxu0 0
  %8553 = vmatmul.mubr.bf16.gmra.mxu0 %v8367
  %v8554 = vpop.f32.mrf.mxu0
  %v8555 = vadd.f32 0.0, %v8554
  %v8556 = vpop.f32.mrf.mxu0
  %v8557 = vpop.f32.mrf.mxu0
  %v8558 = vadd.f32 0.0, %v8557
  %v8559 = vpop.f32.mrf.mxu0
  %8560 = vmatprep.mubr.bf16.mxu0 0
  %8561 = vmatmul.mubr.bf16.gmra.mxu0 %v8370
  %v8562 = vpop.f32.mrf.mxu0
  %v8563 = vadd.f32 0.0, %v8562
  %v8564 = vpop.f32.mrf.mxu0
  %v8565 = vpop.f32.mrf.mxu0
  %v8566 = vadd.f32 0.0, %v8565
  %v8567 = vpop.f32.mrf.mxu0
  %8568 = vmatprep.mubr.bf16.mxu0 0
  %8569 = vmatmul.mubr.bf16.gmra.mxu0 %v8373
  %v8570 = vpop.f32.mrf.mxu0
  %v8571 = vadd.f32 0.0, %v8570
  %v8572 = vpop.f32.mrf.mxu0
  %v8573 = vpop.f32.mrf.mxu0
  %v8574 = vadd.f32 0.0, %v8573
  %v8575 = vpop.f32.mrf.mxu0
  %8576 = vmatprep.mubr.bf16.mxu0 0
  %8577 = vmatmul.mubr.bf16.gmra.mxu0 %v8376
  %v8578 = vpop.f32.mrf.mxu0
  %v8579 = vadd.f32 0.0, %v8578
  %v8580 = vpop.f32.mrf.mxu0
  %v8581 = vpop.f32.mrf.mxu0
  %v8582 = vadd.f32 0.0, %v8581
  %v8583 = vpop.f32.mrf.mxu0
  %8584 = vmatprep.mubr.bf16.mxu0 0
  %8585 = vmatmul.mubr.bf16.gmra.mxu0 %v8379
  %v8586 = vpop.f32.mrf.mxu0
  %v8587 = vadd.f32 0.0, %v8586
  %v8588 = vpop.f32.mrf.mxu0
  %v8589 = vpop.f32.mrf.mxu0
  %v8590 = vadd.f32 0.0, %v8589
  %v8591 = vpop.f32.mrf.mxu0
  %8592 = vmatprep.mubr.bf16.mxu0 0
  %8593 = vmatmul.mubr.bf16.gmra.mxu0 %v8382
  %v8594 = vpop.f32.mrf.mxu0
  %v8595 = vadd.f32 0.0, %v8594
  %v8596 = vpop.f32.mrf.mxu0
  %v8597 = vpop.f32.mrf.mxu0
  %v8598 = vadd.f32 0.0, %v8597
  %v8599 = vpop.f32.mrf.mxu0
  %8600 = vmatprep.mubr.bf16.mxu0 0
  %8601 = vmatmul.mubr.bf16.gmra.mxu0 %v8385
  %v8602 = vpop.f32.mrf.mxu0
  %v8603 = vadd.f32 0.0, %v8602
  %v8604 = vpop.f32.mrf.mxu0
  %v8605 = vpop.f32.mrf.mxu0
  %v8606 = vadd.f32 0.0, %v8605
  %v8607 = vpop.f32.mrf.mxu0
  %8608 = vmatprep.mubr.bf16.mxu0 0
  %8609 = vmatmul.mubr.bf16.gmra.mxu0 %v8388
  %v8610 = vpop.f32.mrf.mxu0
  %v8611 = vadd.f32 0.0, %v8610
  %v8612 = vpop.f32.mrf.mxu0
  %v8613 = vpop.f32.mrf.mxu0
  %v8614 = vadd.f32 0.0, %v8613
  %v8615 = vpop.f32.mrf.mxu0
  %8616 = vmatprep.mubr.bf16.mxu0 0
  %8617 = vmatmul.mubr.bf16.gmra.mxu0 %v8391
  %v8618 = vpop.f32.mrf.mxu0
  %v8619 = vadd.f32 0.0, %v8618
  %v8620 = vpop.f32.mrf.mxu0
  %v8621 = vpop.f32.mrf.mxu0
  %v8622 = vadd.f32 0.0, %v8621
  %v8623 = vpop.f32.mrf.mxu0
  %8624 = vmatprep.mubr.bf16.mxu0 0
  %8625 = vmatmul.mubr.bf16.gmra.mxu0 %v8394
  %v8626 = vpop.f32.mrf.mxu0
  %v8627 = vadd.f32 0.0, %v8626
  %v8628 = vpop.f32.mrf.mxu0
  %v8629 = vpop.f32.mrf.mxu0
  %v8630 = vadd.f32 0.0, %v8629
  %v8631 = vpop.f32.mrf.mxu0
  %8632 = vmatprep.mubr.bf16.mxu0 0
  %8633 = vmatmul.mubr.bf16.gmra.mxu0 %v8397
  %v8634 = vpop.f32.mrf.mxu0
  %v8635 = vadd.f32 0.0, %v8634
  %v8636 = vpop.f32.mrf.mxu0
  %v8637 = vpop.f32.mrf.mxu0
  %v8638 = vadd.f32 0.0, %v8637
  %v8639 = vpop.f32.mrf.mxu0
  %8640 = vmatprep.mubr.bf16.mxu0 0
  %8641 = vmatmul.mubr.bf16.gmra.mxu0 %v8400
  %v8642 = vpop.f32.mrf.mxu0
  %v8643 = vadd.f32 0.0, %v8642
  %v8644 = vpop.f32.mrf.mxu0
  %v8645 = vpop.f32.mrf.mxu0
  %v8646 = vadd.f32 0.0, %v8645
  %v8647 = vpop.f32.mrf.mxu0
  %8648 = vmatprep.mubr.bf16.mxu0 0
  %8649 = vmatmul.mubr.bf16.gmra.mxu0 %v8403
  %v8650 = vpop.f32.mrf.mxu0
  %v8651 = vadd.f32 0.0, %v8650
  %v8652 = vpop.f32.mrf.mxu0
  %v8653 = vpop.f32.mrf.mxu0
  %v8654 = vadd.f32 0.0, %v8653
  %v8655 = vpop.f32.mrf.mxu0
  %8656 = vmatprep.mubr.bf16.mxu0 0
  %8657 = vmatmul.mubr.bf16.gmra.mxu0 %v8406
  %v8658 = vpop.f32.mrf.mxu0
  %v8659 = vadd.f32 0.0, %v8658
  %v8660 = vpop.f32.mrf.mxu0
  %v8661 = vpop.f32.mrf.mxu0
  %v8662 = vadd.f32 0.0, %v8661
  %v8663 = vpop.f32.mrf.mxu0
  %8664 = vmatprep.mubr.bf16.mxu0 0
  %8665 = vmatmul.mubr.bf16.gmra.mxu0 %v8409
  %v8666 = vpop.f32.mrf.mxu0
  %v8667 = vadd.f32 0.0, %v8666
  %v8668 = vpop.f32.mrf.mxu0
  %v8669 = vpop.f32.mrf.mxu0
  %v8670 = vadd.f32 0.0, %v8669
  %v8671 = vpop.f32.mrf.mxu0
  %8672 = vmatprep.mubr.bf16.mxu0 0
  %8673 = vmatmul.mubr.bf16.gmra.mxu0 %v8412
  %v8674 = vpop.f32.mrf.mxu0
  %v8675 = vadd.f32 0.0, %v8674
  %v8676 = vpop.f32.mrf.mxu0
  %v8677 = vpop.f32.mrf.mxu0
  %v8678 = vadd.f32 0.0, %v8677
  %v8679 = vpop.f32.mrf.mxu0
  %8680 = vmatprep.mubr.bf16.mxu0 0
  %8681 = vmatmul.mubr.bf16.gmra.mxu0 %v8415
  %v8682 = vpop.f32.mrf.mxu0
  %v8683 = vadd.f32 0.0, %v8682
  %v8684 = vpop.f32.mrf.mxu0
  %v8685 = vpop.f32.mrf.mxu0
  %v8686 = vadd.f32 0.0, %v8685
  %v8687 = vpop.f32.mrf.mxu0
  %8688 = vmatprep.mubr.bf16.mxu0 0
  %8689 = vmatmul.mubr.bf16.gmra.mxu0 %v8418
  %v8690 = vpop.f32.mrf.mxu0
  %v8691 = vadd.f32 0.0, %v8690
  %v8692 = vpop.f32.mrf.mxu0
  %v8693 = vpop.f32.mrf.mxu0
  %v8694 = vadd.f32 0.0, %v8693
  %v8695 = vpop.f32.mrf.mxu0
  %8696 = vmatprep.mubr.bf16.mxu0 0
  %8697 = vmatmul.mubr.bf16.gmra.mxu0 %v8421
  %v8698 = vpop.f32.mrf.mxu0
  %v8699 = vadd.f32 0.0, %v8698
  %v8700 = vpop.f32.mrf.mxu0
  %v8701 = vpop.f32.mrf.mxu0
  %v8702 = vadd.f32 0.0, %v8701
  %v8703 = vpop.f32.mrf.mxu0
  %8704 = vmatprep.mubr.bf16.mxu0 0
  %8705 = vmatmul.mubr.bf16.gmra.mxu0 %v8424
  %v8706 = vpop.f32.mrf.mxu0
  %v8707 = vadd.f32 0.0, %v8706
  %v8708 = vpop.f32.mrf.mxu0
  %v8709 = vpop.f32.mrf.mxu0
  %v8710 = vadd.f32 0.0, %v8709
  %v8711 = vpop.f32.mrf.mxu0
  %8712 = vmatprep.mubr.bf16.mxu0 0
  %8713 = vmatmul.mubr.bf16.gmra.mxu0 %v8427
  %v8714 = vpop.f32.mrf.mxu0
  %v8715 = vadd.f32 0.0, %v8714
  %v8716 = vpop.f32.mrf.mxu0
  %v8717 = vpop.f32.mrf.mxu0
  %v8718 = vadd.f32 0.0, %v8717
  %v8719 = vpop.f32.mrf.mxu0
  %8720 = vdwg.mxu0
  %v8721 = vadd.f32 %v7819, %v8467
  %v8722 = vadd.f32 %v7820, %v8470
  %v8723 = vadd.f32 %v7821, %v8475
  %v8724 = vadd.f32 %v7822, %v8478
  %v8725 = vadd.f32 %v7823, %v8483
  %v8726 = vadd.f32 %v7824, %v8486
  %v8727 = vadd.f32 %v7825, %v8491
  %v8728 = vadd.f32 %v7826, %v8494
  %v8729 = vadd.f32 %v7827, %v8499
  %v8730 = vadd.f32 %v7828, %v8502
  %v8731 = vadd.f32 %v7829, %v8507
  %v8732 = vadd.f32 %v7830, %v8510
  %v8733 = vadd.f32 %v7831, %v8515
  %v8734 = vadd.f32 %v7832, %v8518
  %v8735 = vadd.f32 %v7833, %v8523
  %v8736 = vadd.f32 %v7834, %v8526
  %v8737 = vadd.f32 %v7835, %v8531
  %v8738 = vadd.f32 %v7836, %v8534
  %v8739 = vadd.f32 %v7837, %v8539
  %v8740 = vadd.f32 %v7838, %v8542
  %v8741 = vadd.f32 %v7839, %v8547
  %v8742 = vadd.f32 %v7840, %v8550
  %v8743 = vadd.f32 %v7841, %v8555
  %v8744 = vadd.f32 %v7842, %v8558
  %v8745 = vadd.f32 %v7843, %v8563
  %v8746 = vadd.f32 %v7844, %v8566
  %v8747 = vadd.f32 %v7845, %v8571
  %v8748 = vadd.f32 %v7846, %v8574
  %v8749 = vadd.f32 %v7847, %v8579
  %v8750 = vadd.f32 %v7848, %v8582
  %v8751 = vadd.f32 %v7849, %v8587
  %v8752 = vadd.f32 %v7850, %v8590
  %v8753 = vadd.f32 %v7851, %v8595
  %v8754 = vadd.f32 %v7852, %v8598
  %v8755 = vadd.f32 %v7853, %v8603
  %v8756 = vadd.f32 %v7854, %v8606
  %v8757 = vadd.f32 %v7855, %v8611
  %v8758 = vadd.f32 %v7856, %v8614
  %v8759 = vadd.f32 %v7857, %v8619
  %v8760 = vadd.f32 %v7858, %v8622
  %v8761 = vadd.f32 %v7859, %v8627
  %v8762 = vadd.f32 %v7860, %v8630
  %v8763 = vadd.f32 %v7861, %v8635
  %v8764 = vadd.f32 %v7862, %v8638
  %v8765 = vadd.f32 %v7863, %v8643
  %v8766 = vadd.f32 %v7864, %v8646
  %v8767 = vadd.f32 %v7865, %v8651
  %v8768 = vadd.f32 %v7866, %v8654
  %v8769 = vadd.f32 %v7867, %v8659
  %v8770 = vadd.f32 %v7868, %v8662
  %v8771 = vadd.f32 %v7869, %v8667
  %v8772 = vadd.f32 %v7870, %v8670
  %v8773 = vadd.f32 %v7871, %v8675
  %v8774 = vadd.f32 %v7872, %v8678
  %v8775 = vadd.f32 %v7873, %v8683
  %v8776 = vadd.f32 %v7874, %v8686
  %v8777 = vadd.f32 %v7875, %v8691
  %v8778 = vadd.f32 %v7876, %v8694
  %v8779 = vadd.f32 %v7877, %v8699
  %v8780 = vadd.f32 %v7878, %v8702
  %v8781 = vadd.f32 %v7879, %v8707
  %v8782 = vadd.f32 %v7880, %v8710
  %v8783 = vadd.f32 %v7881, %v8715
  %v8784 = vadd.f32 %v7882, %v8718
  %vm8785 = vcmask 261120
  %v8786 = vsel %vm8785, %v8721, 0.0
  %v8787 = vsel %vm8785, %v8722, 0.0
  %v8788 = vadd.f32 %v8786, %v8787
  %v8789 = vsel %vm8785, %v8723, 0.0
  %v8790 = vadd.f32 %v8788, %v8789
  %v8791 = vsel %vm8785, %v8724, 0.0
  %v8792 = vadd.f32 %v8790, %v8791
  %v8793 = vsel %vm8785, %v8725, 0.0
  %v8794 = vadd.f32 %v8792, %v8793
  %v8795 = vsel %vm8785, %v8726, 0.0
  %v8796 = vadd.f32 %v8794, %v8795
  %v8797 = vsel %vm8785, %v8727, 0.0
  %v8798 = vadd.f32 %v8796, %v8797
  %v8799 = vsel %vm8785, %v8728, 0.0
  %v8800 = vadd.f32 %v8798, %v8799
  %v8801 = vsel %vm8785, %v8729, 0.0
  %v8802 = vadd.f32 %v8800, %v8801
  %v8803 = vsel %vm8785, %v8730, 0.0
  %v8804 = vadd.f32 %v8802, %v8803
  %v8805 = vsel %vm8785, %v8731, 0.0
  %v8806 = vadd.f32 %v8804, %v8805
  %v8807 = vsel %vm8785, %v8732, 0.0
  %v8808 = vadd.f32 %v8806, %v8807
  %v8809 = vsel %vm8785, %v8733, 0.0
  %v8810 = vadd.f32 %v8808, %v8809
  %v8811 = vsel %vm8785, %v8734, 0.0
  %v8812 = vadd.f32 %v8810, %v8811
  %v8813 = vsel %vm8785, %v8735, 0.0
  %v8814 = vadd.f32 %v8812, %v8813
  %v8815 = vsel %vm8785, %v8736, 0.0
  %v8816 = vadd.f32 %v8814, %v8815
  %v8817 = vsel %vm8785, %v8737, 0.0
  %v8818 = vadd.f32 %v8816, %v8817
  %v8819 = vsel %vm8785, %v8738, 0.0
  %v8820 = vadd.f32 %v8818, %v8819
  %v8821 = vsel %vm8785, %v8739, 0.0
  %v8822 = vadd.f32 %v8820, %v8821
  %v8823 = vsel %vm8785, %v8740, 0.0
  %v8824 = vadd.f32 %v8822, %v8823
  %v8825 = vsel %vm8785, %v8741, 0.0
  %v8826 = vadd.f32 %v8824, %v8825
  %v8827 = vsel %vm8785, %v8742, 0.0
  %v8828 = vadd.f32 %v8826, %v8827
  %v8829 = vsel %vm8785, %v8743, 0.0
  %v8830 = vadd.f32 %v8828, %v8829
  %v8831 = vsel %vm8785, %v8744, 0.0
  %v8832 = vadd.f32 %v8830, %v8831
  %v8833 = vsel %vm8785, %v8745, 0.0
  %v8834 = vadd.f32 %v8832, %v8833
  %v8835 = vsel %vm8785, %v8746, 0.0
  %v8836 = vadd.f32 %v8834, %v8835
  %v8837 = vsel %vm8785, %v8747, 0.0
  %v8838 = vadd.f32 %v8836, %v8837
  %v8839 = vsel %vm8785, %v8748, 0.0
  %v8840 = vadd.f32 %v8838, %v8839
  %v8841 = vsel %vm8785, %v8749, 0.0
  %v8842 = vadd.f32 %v8840, %v8841
  %v8843 = vsel %vm8785, %v8750, 0.0
  %v8844 = vadd.f32 %v8842, %v8843
  %v8845 = vsel %vm8785, %v8751, 0.0
  %v8846 = vadd.f32 %v8844, %v8845
  %v8847 = vsel %vm8785, %v8752, 0.0
  %v8848 = vadd.f32 %v8846, %v8847
  %v8849 = vsel %vm8785, %v8753, 0.0
  %v8850 = vadd.f32 %v8848, %v8849
  %v8851 = vsel %vm8785, %v8754, 0.0
  %v8852 = vadd.f32 %v8850, %v8851
  %v8853 = vsel %vm8785, %v8755, 0.0
  %v8854 = vadd.f32 %v8852, %v8853
  %v8855 = vsel %vm8785, %v8756, 0.0
  %v8856 = vadd.f32 %v8854, %v8855
  %v8857 = vsel %vm8785, %v8757, 0.0
  %v8858 = vadd.f32 %v8856, %v8857
  %v8859 = vsel %vm8785, %v8758, 0.0
  %v8860 = vadd.f32 %v8858, %v8859
  %v8861 = vsel %vm8785, %v8759, 0.0
  %v8862 = vadd.f32 %v8860, %v8861
  %v8863 = vsel %vm8785, %v8760, 0.0
  %v8864 = vadd.f32 %v8862, %v8863
  %v8865 = vsel %vm8785, %v8761, 0.0
  %v8866 = vadd.f32 %v8864, %v8865
  %v8867 = vsel %vm8785, %v8762, 0.0
  %v8868 = vadd.f32 %v8866, %v8867
  %v8869 = vsel %vm8785, %v8763, 0.0
  %v8870 = vadd.f32 %v8868, %v8869
  %v8871 = vsel %vm8785, %v8764, 0.0
  %v8872 = vadd.f32 %v8870, %v8871
  %v8873 = vsel %vm8785, %v8765, 0.0
  %v8874 = vadd.f32 %v8872, %v8873
  %v8875 = vsel %vm8785, %v8766, 0.0
  %v8876 = vadd.f32 %v8874, %v8875
  %v8877 = vsel %vm8785, %v8767, 0.0
  %v8878 = vadd.f32 %v8876, %v8877
  %v8879 = vsel %vm8785, %v8768, 0.0
  %v8880 = vadd.f32 %v8878, %v8879
  %v8881 = vsel %vm8785, %v8769, 0.0
  %v8882 = vadd.f32 %v8880, %v8881
  %v8883 = vsel %vm8785, %v8770, 0.0
  %v8884 = vadd.f32 %v8882, %v8883
  %v8885 = vsel %vm8785, %v8771, 0.0
  %v8886 = vadd.f32 %v8884, %v8885
  %v8887 = vsel %vm8785, %v8772, 0.0
  %v8888 = vadd.f32 %v8886, %v8887
  %v8889 = vsel %vm8785, %v8773, 0.0
  %v8890 = vadd.f32 %v8888, %v8889
  %v8891 = vsel %vm8785, %v8774, 0.0
  %v8892 = vadd.f32 %v8890, %v8891
  %v8893 = vsel %vm8785, %v8775, 0.0
  %v8894 = vadd.f32 %v8892, %v8893
  %v8895 = vsel %vm8785, %v8776, 0.0
  %v8896 = vadd.f32 %v8894, %v8895
  %v8897 = vsel %vm8785, %v8777, 0.0
  %v8898 = vadd.f32 %v8896, %v8897
  %v8899 = vsel %vm8785, %v8778, 0.0
  %v8900 = vadd.f32 %v8898, %v8899
  %v8901 = vsel %vm8785, %v8779, 0.0
  %v8902 = vadd.f32 %v8900, %v8901
  %v8903 = vsel %vm8785, %v8780, 0.0
  %v8904 = vadd.f32 %v8902, %v8903
  %v8905 = vsel %vm8785, %v8781, 0.0
  %v8906 = vadd.f32 %v8904, %v8905
  %v8907 = vsel %vm8785, %v8782, 0.0
  %v8908 = vadd.f32 %v8906, %v8907
  %v8909 = vsel %vm8785, %v8783, 0.0
  %v8910 = vadd.f32 %v8908, %v8909
  %v8911 = vsel %vm8785, %v8784, 0.0
  %v8912 = vadd.f32 %v8910, %v8911
  %v8913 = vrot.slane %v8912, 4
  %v8914 = vadd.f32 %v8912, %v8913
  %v8915 = vrot.slane %v8914, 2
  %v8916 = vadd.f32 %v8914, %v8915
  %v8917 = vrot.slane %v8916, 1
  %v8918 = vadd.f32 %v8916, %v8917
  %v8919 = vrcp.pop 512.0
  %v8920 = vmul.f32 %v8918, %v8919
  %v8921 = vsub.f32 %v8721, %v8920
  %v8922 = vsub.f32 %v8722, %v8920
  %v8923 = vsub.f32 %v8723, %v8920
  %v8924 = vsub.f32 %v8724, %v8920
  %v8925 = vsub.f32 %v8725, %v8920
  %v8926 = vsub.f32 %v8726, %v8920
  %v8927 = vsub.f32 %v8727, %v8920
  %v8928 = vsub.f32 %v8728, %v8920
  %v8929 = vsub.f32 %v8729, %v8920
  %v8930 = vsub.f32 %v8730, %v8920
  %v8931 = vsub.f32 %v8731, %v8920
  %v8932 = vsub.f32 %v8732, %v8920
  %v8933 = vsub.f32 %v8733, %v8920
  %v8934 = vsub.f32 %v8734, %v8920
  %v8935 = vsub.f32 %v8735, %v8920
  %v8936 = vsub.f32 %v8736, %v8920
  %v8937 = vsub.f32 %v8737, %v8920
  %v8938 = vsub.f32 %v8738, %v8920
  %v8939 = vsub.f32 %v8739, %v8920
  %v8940 = vsub.f32 %v8740, %v8920
  %v8941 = vsub.f32 %v8741, %v8920
  %v8942 = vsub.f32 %v8742, %v8920
  %v8943 = vsub.f32 %v8743, %v8920
  %v8944 = vsub.f32 %v8744, %v8920
  %v8945 = vsub.f32 %v8745, %v8920
  %v8946 = vsub.f32 %v8746, %v8920
  %v8947 = vsub.f32 %v8747, %v8920
  %v8948 = vsub.f32 %v8748, %v8920
  %v8949 = vsub.f32 %v8749, %v8920
  %v8950 = vsub.f32 %v8750, %v8920
  %v8951 = vsub.f32 %v8751, %v8920
  %v8952 = vsub.f32 %v8752, %v8920
  %v8953 = vsub.f32 %v8753, %v8920
  %v8954 = vsub.f32 %v8754, %v8920
  %v8955 = vsub.f32 %v8755, %v8920
  %v8956 = vsub.f32 %v8756, %v8920
  %v8957 = vsub.f32 %v8757, %v8920
  %v8958 = vsub.f32 %v8758, %v8920
  %v8959 = vsub.f32 %v8759, %v8920
  %v8960 = vsub.f32 %v8760, %v8920
  %v8961 = vsub.f32 %v8761, %v8920
  %v8962 = vsub.f32 %v8762, %v8920
  %v8963 = vsub.f32 %v8763, %v8920
  %v8964 = vsub.f32 %v8764, %v8920
  %v8965 = vsub.f32 %v8765, %v8920
  %v8966 = vsub.f32 %v8766, %v8920
  %v8967 = vsub.f32 %v8767, %v8920
  %v8968 = vsub.f32 %v8768, %v8920
  %v8969 = vsub.f32 %v8769, %v8920
  %v8970 = vsub.f32 %v8770, %v8920
  %v8971 = vsub.f32 %v8771, %v8920
  %v8972 = vsub.f32 %v8772, %v8920
  %v8973 = vsub.f32 %v8773, %v8920
  %v8974 = vsub.f32 %v8774, %v8920
  %v8975 = vsub.f32 %v8775, %v8920
  %v8976 = vsub.f32 %v8776, %v8920
  %v8977 = vsub.f32 %v8777, %v8920
  %v8978 = vsub.f32 %v8778, %v8920
  %v8979 = vsub.f32 %v8779, %v8920
  %v8980 = vsub.f32 %v8780, %v8920
  %v8981 = vsub.f32 %v8781, %v8920
  %v8982 = vsub.f32 %v8782, %v8920
  %v8983 = vsub.f32 %v8783, %v8920
  %v8984 = vsub.f32 %v8784, %v8920
  %v8985 = vmul.f32 %v8921, %v8921
  %v8986 = vmul.f32 %v8922, %v8922
  %v8987 = vmul.f32 %v8923, %v8923
  %v8988 = vmul.f32 %v8924, %v8924
  %v8989 = vmul.f32 %v8925, %v8925
  %v8990 = vmul.f32 %v8926, %v8926
  %v8991 = vmul.f32 %v8927, %v8927
  %v8992 = vmul.f32 %v8928, %v8928
  %v8993 = vmul.f32 %v8929, %v8929
  %v8994 = vmul.f32 %v8930, %v8930
  %v8995 = vmul.f32 %v8931, %v8931
  %v8996 = vmul.f32 %v8932, %v8932
  %v8997 = vmul.f32 %v8933, %v8933
  %v8998 = vmul.f32 %v8934, %v8934
  %v8999 = vmul.f32 %v8935, %v8935
  %v9000 = vmul.f32 %v8936, %v8936
  %v9001 = vmul.f32 %v8937, %v8937
  %v9002 = vmul.f32 %v8938, %v8938
  %v9003 = vmul.f32 %v8939, %v8939
  %v9004 = vmul.f32 %v8940, %v8940
  %v9005 = vmul.f32 %v8941, %v8941
  %v9006 = vmul.f32 %v8942, %v8942
  %v9007 = vmul.f32 %v8943, %v8943
  %v9008 = vmul.f32 %v8944, %v8944
  %v9009 = vmul.f32 %v8945, %v8945
  %v9010 = vmul.f32 %v8946, %v8946
  %v9011 = vmul.f32 %v8947, %v8947
  %v9012 = vmul.f32 %v8948, %v8948
  %v9013 = vmul.f32 %v8949, %v8949
  %v9014 = vmul.f32 %v8950, %v8950
  %v9015 = vmul.f32 %v8951, %v8951
  %v9016 = vmul.f32 %v8952, %v8952
  %v9017 = vmul.f32 %v8953, %v8953
  %v9018 = vmul.f32 %v8954, %v8954
  %v9019 = vmul.f32 %v8955, %v8955
  %v9020 = vmul.f32 %v8956, %v8956
  %v9021 = vmul.f32 %v8957, %v8957
  %v9022 = vmul.f32 %v8958, %v8958
  %v9023 = vmul.f32 %v8959, %v8959
  %v9024 = vmul.f32 %v8960, %v8960
  %v9025 = vmul.f32 %v8961, %v8961
  %v9026 = vmul.f32 %v8962, %v8962
  %v9027 = vmul.f32 %v8963, %v8963
  %v9028 = vmul.f32 %v8964, %v8964
  %v9029 = vmul.f32 %v8965, %v8965
  %v9030 = vmul.f32 %v8966, %v8966
  %v9031 = vmul.f32 %v8967, %v8967
  %v9032 = vmul.f32 %v8968, %v8968
  %v9033 = vmul.f32 %v8969, %v8969
  %v9034 = vmul.f32 %v8970, %v8970
  %v9035 = vmul.f32 %v8971, %v8971
  %v9036 = vmul.f32 %v8972, %v8972
  %v9037 = vmul.f32 %v8973, %v8973
  %v9038 = vmul.f32 %v8974, %v8974
  %v9039 = vmul.f32 %v8975, %v8975
  %v9040 = vmul.f32 %v8976, %v8976
  %v9041 = vmul.f32 %v8977, %v8977
  %v9042 = vmul.f32 %v8978, %v8978
  %v9043 = vmul.f32 %v8979, %v8979
  %v9044 = vmul.f32 %v8980, %v8980
  %v9045 = vmul.f32 %v8981, %v8981
  %v9046 = vmul.f32 %v8982, %v8982
  %v9047 = vmul.f32 %v8983, %v8983
  %v9048 = vmul.f32 %v8984, %v8984
  %v9049 = vsel %vm8785, %v8985, 0.0
  %v9050 = vsel %vm8785, %v8986, 0.0
  %v9051 = vadd.f32 %v9049, %v9050
  %v9052 = vsel %vm8785, %v8987, 0.0
  %v9053 = vadd.f32 %v9051, %v9052
  %v9054 = vsel %vm8785, %v8988, 0.0
  %v9055 = vadd.f32 %v9053, %v9054
  %v9056 = vsel %vm8785, %v8989, 0.0
  %v9057 = vadd.f32 %v9055, %v9056
  %v9058 = vsel %vm8785, %v8990, 0.0
  %v9059 = vadd.f32 %v9057, %v9058
  %v9060 = vsel %vm8785, %v8991, 0.0
  %v9061 = vadd.f32 %v9059, %v9060
  %v9062 = vsel %vm8785, %v8992, 0.0
  %v9063 = vadd.f32 %v9061, %v9062
  %v9064 = vsel %vm8785, %v8993, 0.0
  %v9065 = vadd.f32 %v9063, %v9064
  %v9066 = vsel %vm8785, %v8994, 0.0
  %v9067 = vadd.f32 %v9065, %v9066
  %v9068 = vsel %vm8785, %v8995, 0.0
  %v9069 = vadd.f32 %v9067, %v9068
  %v9070 = vsel %vm8785, %v8996, 0.0
  %v9071 = vadd.f32 %v9069, %v9070
  %v9072 = vsel %vm8785, %v8997, 0.0
  %v9073 = vadd.f32 %v9071, %v9072
  %v9074 = vsel %vm8785, %v8998, 0.0
  %v9075 = vadd.f32 %v9073, %v9074
  %v9076 = vsel %vm8785, %v8999, 0.0
  %v9077 = vadd.f32 %v9075, %v9076
  %v9078 = vsel %vm8785, %v9000, 0.0
  %v9079 = vadd.f32 %v9077, %v9078
  %v9080 = vsel %vm8785, %v9001, 0.0
  %v9081 = vadd.f32 %v9079, %v9080
  %v9082 = vsel %vm8785, %v9002, 0.0
  %v9083 = vadd.f32 %v9081, %v9082
  %v9084 = vsel %vm8785, %v9003, 0.0
  %v9085 = vadd.f32 %v9083, %v9084
  %v9086 = vsel %vm8785, %v9004, 0.0
  %v9087 = vadd.f32 %v9085, %v9086
  %v9088 = vsel %vm8785, %v9005, 0.0
  %v9089 = vadd.f32 %v9087, %v9088
  %v9090 = vsel %vm8785, %v9006, 0.0
  %v9091 = vadd.f32 %v9089, %v9090
  %v9092 = vsel %vm8785, %v9007, 0.0
  %v9093 = vadd.f32 %v9091, %v9092
  %v9094 = vsel %vm8785, %v9008, 0.0
  %v9095 = vadd.f32 %v9093, %v9094
  %v9096 = vsel %vm8785, %v9009, 0.0
  %v9097 = vadd.f32 %v9095, %v9096
  %v9098 = vsel %vm8785, %v9010, 0.0
  %v9099 = vadd.f32 %v9097, %v9098
  %v9100 = vsel %vm8785, %v9011, 0.0
  %v9101 = vadd.f32 %v9099, %v9100
  %v9102 = vsel %vm8785, %v9012, 0.0
  %v9103 = vadd.f32 %v9101, %v9102
  %v9104 = vsel %vm8785, %v9013, 0.0
  %v9105 = vadd.f32 %v9103, %v9104
  %v9106 = vsel %vm8785, %v9014, 0.0
  %v9107 = vadd.f32 %v9105, %v9106
  %v9108 = vsel %vm8785, %v9015, 0.0
  %v9109 = vadd.f32 %v9107, %v9108
  %v9110 = vsel %vm8785, %v9016, 0.0
  %v9111 = vadd.f32 %v9109, %v9110
  %v9112 = vsel %vm8785, %v9017, 0.0
  %v9113 = vadd.f32 %v9111, %v9112
  %v9114 = vsel %vm8785, %v9018, 0.0
  %v9115 = vadd.f32 %v9113, %v9114
  %v9116 = vsel %vm8785, %v9019, 0.0
  %v9117 = vadd.f32 %v9115, %v9116
  %v9118 = vsel %vm8785, %v9020, 0.0
  %v9119 = vadd.f32 %v9117, %v9118
  %v9120 = vsel %vm8785, %v9021, 0.0
  %v9121 = vadd.f32 %v9119, %v9120
  %v9122 = vsel %vm8785, %v9022, 0.0
  %v9123 = vadd.f32 %v9121, %v9122
  %v9124 = vsel %vm8785, %v9023, 0.0
  %v9125 = vadd.f32 %v9123, %v9124
  %v9126 = vsel %vm8785, %v9024, 0.0
  %v9127 = vadd.f32 %v9125, %v9126
  %v9128 = vsel %vm8785, %v9025, 0.0
  %v9129 = vadd.f32 %v9127, %v9128
  %v9130 = vsel %vm8785, %v9026, 0.0
  %v9131 = vadd.f32 %v9129, %v9130
  %v9132 = vsel %vm8785, %v9027, 0.0
  %v9133 = vadd.f32 %v9131, %v9132
  %v9134 = vsel %vm8785, %v9028, 0.0
  %v9135 = vadd.f32 %v9133, %v9134
  %v9136 = vsel %vm8785, %v9029, 0.0
  %v9137 = vadd.f32 %v9135, %v9136
  %v9138 = vsel %vm8785, %v9030, 0.0
  %v9139 = vadd.f32 %v9137, %v9138
  %v9140 = vsel %vm8785, %v9031, 0.0
  %v9141 = vadd.f32 %v9139, %v9140
  %v9142 = vsel %vm8785, %v9032, 0.0
  %v9143 = vadd.f32 %v9141, %v9142
  %v9144 = vsel %vm8785, %v9033, 0.0
  %v9145 = vadd.f32 %v9143, %v9144
  %v9146 = vsel %vm8785, %v9034, 0.0
  %v9147 = vadd.f32 %v9145, %v9146
  %v9148 = vsel %vm8785, %v9035, 0.0
  %v9149 = vadd.f32 %v9147, %v9148
  %v9150 = vsel %vm8785, %v9036, 0.0
  %v9151 = vadd.f32 %v9149, %v9150
  %v9152 = vsel %vm8785, %v9037, 0.0
  %v9153 = vadd.f32 %v9151, %v9152
  %v9154 = vsel %vm8785, %v9038, 0.0
  %v9155 = vadd.f32 %v9153, %v9154
  %v9156 = vsel %vm8785, %v9039, 0.0
  %v9157 = vadd.f32 %v9155, %v9156
  %v9158 = vsel %vm8785, %v9040, 0.0
  %v9159 = vadd.f32 %v9157, %v9158
  %v9160 = vsel %vm8785, %v9041, 0.0
  %v9161 = vadd.f32 %v9159, %v9160
  %v9162 = vsel %vm8785, %v9042, 0.0
  %v9163 = vadd.f32 %v9161, %v9162
  %v9164 = vsel %vm8785, %v9043, 0.0
  %v9165 = vadd.f32 %v9163, %v9164
  %v9166 = vsel %vm8785, %v9044, 0.0
  %v9167 = vadd.f32 %v9165, %v9166
  %v9168 = vsel %vm8785, %v9045, 0.0
  %v9169 = vadd.f32 %v9167, %v9168
  %v9170 = vsel %vm8785, %v9046, 0.0
  %v9171 = vadd.f32 %v9169, %v9170
  %v9172 = vsel %vm8785, %v9047, 0.0
  %v9173 = vadd.f32 %v9171, %v9172
  %v9174 = vsel %vm8785, %v9048, 0.0
  %v9175 = vadd.f32 %v9173, %v9174
  %v9176 = vrot.slane %v9175, 4
  %v9177 = vadd.f32 %v9175, %v9176
  %v9178 = vrot.slane %v9177, 2
  %v9179 = vadd.f32 %v9177, %v9178
  %v9180 = vrot.slane %v9179, 1
  %v9181 = vadd.f32 %v9179, %v9180
  %v9182 = vmul.f32 %v9181, %v8919
  %v9183 = vadd.f32 %v9182, 1e-05
  %v9184 = vrsqrt.pop %v9183
  %v9185 = vmul.f32 %v8921, %v9184
  %v9186 = vmul.f32 %v8922, %v9184
  %v9187 = vmul.f32 %v8923, %v9184
  %v9188 = vmul.f32 %v8924, %v9184
  %v9189 = vmul.f32 %v8925, %v9184
  %v9190 = vmul.f32 %v8926, %v9184
  %v9191 = vmul.f32 %v8927, %v9184
  %v9192 = vmul.f32 %v8928, %v9184
  %v9193 = vmul.f32 %v8929, %v9184
  %v9194 = vmul.f32 %v8930, %v9184
  %v9195 = vmul.f32 %v8931, %v9184
  %v9196 = vmul.f32 %v8932, %v9184
  %v9197 = vmul.f32 %v8933, %v9184
  %v9198 = vmul.f32 %v8934, %v9184
  %v9199 = vmul.f32 %v8935, %v9184
  %v9200 = vmul.f32 %v8936, %v9184
  %v9201 = vmul.f32 %v8937, %v9184
  %v9202 = vmul.f32 %v8938, %v9184
  %v9203 = vmul.f32 %v8939, %v9184
  %v9204 = vmul.f32 %v8940, %v9184
  %v9205 = vmul.f32 %v8941, %v9184
  %v9206 = vmul.f32 %v8942, %v9184
  %v9207 = vmul.f32 %v8943, %v9184
  %v9208 = vmul.f32 %v8944, %v9184
  %v9209 = vmul.f32 %v8945, %v9184
  %v9210 = vmul.f32 %v8946, %v9184
  %v9211 = vmul.f32 %v8947, %v9184
  %v9212 = vmul.f32 %v8948, %v9184
  %v9213 = vmul.f32 %v8949, %v9184
  %v9214 = vmul.f32 %v8950, %v9184
  %v9215 = vmul.f32 %v8951, %v9184
  %v9216 = vmul.f32 %v8952, %v9184
  %v9217 = vmul.f32 %v8953, %v9184
  %v9218 = vmul.f32 %v8954, %v9184
  %v9219 = vmul.f32 %v8955, %v9184
  %v9220 = vmul.f32 %v8956, %v9184
  %v9221 = vmul.f32 %v8957, %v9184
  %v9222 = vmul.f32 %v8958, %v9184
  %v9223 = vmul.f32 %v8959, %v9184
  %v9224 = vmul.f32 %v8960, %v9184
  %v9225 = vmul.f32 %v8961, %v9184
  %v9226 = vmul.f32 %v8962, %v9184
  %v9227 = vmul.f32 %v8963, %v9184
  %v9228 = vmul.f32 %v8964, %v9184
  %v9229 = vmul.f32 %v8965, %v9184
  %v9230 = vmul.f32 %v8966, %v9184
  %v9231 = vmul.f32 %v8967, %v9184
  %v9232 = vmul.f32 %v8968, %v9184
  %v9233 = vmul.f32 %v8969, %v9184
  %v9234 = vmul.f32 %v8970, %v9184
  %v9235 = vmul.f32 %v8971, %v9184
  %v9236 = vmul.f32 %v8972, %v9184
  %v9237 = vmul.f32 %v8973, %v9184
  %v9238 = vmul.f32 %v8974, %v9184
  %v9239 = vmul.f32 %v8975, %v9184
  %v9240 = vmul.f32 %v8976, %v9184
  %v9241 = vmul.f32 %v8977, %v9184
  %v9242 = vmul.f32 %v8978, %v9184
  %v9243 = vmul.f32 %v8979, %v9184
  %v9244 = vmul.f32 %v8980, %v9184
  %v9245 = vmul.f32 %v8981, %v9184
  %v9246 = vmul.f32 %v8982, %v9184
  %v9247 = vmul.f32 %v8983, %v9184
  %v9248 = vmul.f32 %v8984, %v9184
  %v9249 = vld [vmem:[%s2] sm:$0x1]
  %v9251 = vlaneseq
  %v9252 = vshrl.u32 %v9251, 7
  %v9253 = vsub.s32 0, %v9252
  %v9254 = vrot.slane %v9249, %v9253
  %v9256 = vmul.f32 %v9185, %v9254
  %v9257 = vmul.f32 %v9186, %v9254
  %v9258 = vmul.f32 %v9187, %v9254
  %v9259 = vmul.f32 %v9188, %v9254
  %v9260 = vmul.f32 %v9189, %v9254
  %v9261 = vmul.f32 %v9190, %v9254
  %v9262 = vmul.f32 %v9191, %v9254
  %v9263 = vmul.f32 %v9192, %v9254
  %v9264 = vmul.f32 %v9193, %v9254
  %v9265 = vmul.f32 %v9194, %v9254
  %v9266 = vmul.f32 %v9195, %v9254
  %v9267 = vmul.f32 %v9196, %v9254
  %v9268 = vmul.f32 %v9197, %v9254
  %v9269 = vmul.f32 %v9198, %v9254
  %v9270 = vmul.f32 %v9199, %v9254
  %v9271 = vmul.f32 %v9200, %v9254
  %v9272 = vmul.f32 %v9201, %v9254
  %v9273 = vmul.f32 %v9202, %v9254
  %v9274 = vmul.f32 %v9203, %v9254
  %v9275 = vmul.f32 %v9204, %v9254
  %v9276 = vmul.f32 %v9205, %v9254
  %v9277 = vmul.f32 %v9206, %v9254
  %v9278 = vmul.f32 %v9207, %v9254
  %v9279 = vmul.f32 %v9208, %v9254
  %v9280 = vmul.f32 %v9209, %v9254
  %v9281 = vmul.f32 %v9210, %v9254
  %v9282 = vmul.f32 %v9211, %v9254
  %v9283 = vmul.f32 %v9212, %v9254
  %v9284 = vmul.f32 %v9213, %v9254
  %v9285 = vmul.f32 %v9214, %v9254
  %v9286 = vmul.f32 %v9215, %v9254
  %v9287 = vmul.f32 %v9216, %v9254
  %v9288 = vmul.f32 %v9217, %v9254
  %v9289 = vmul.f32 %v9218, %v9254
  %v9290 = vmul.f32 %v9219, %v9254
  %v9291 = vmul.f32 %v9220, %v9254
  %v9292 = vmul.f32 %v9221, %v9254
  %v9293 = vmul.f32 %v9222, %v9254
  %v9294 = vmul.f32 %v9223, %v9254
  %v9295 = vmul.f32 %v9224, %v9254
  %v9296 = vmul.f32 %v9225, %v9254
  %v9297 = vmul.f32 %v9226, %v9254
  %v9298 = vmul.f32 %v9227, %v9254
  %v9299 = vmul.f32 %v9228, %v9254
  %v9300 = vmul.f32 %v9229, %v9254
  %v9301 = vmul.f32 %v9230, %v9254
  %v9302 = vmul.f32 %v9231, %v9254
  %v9303 = vmul.f32 %v9232, %v9254
  %v9304 = vmul.f32 %v9233, %v9254
  %v9305 = vmul.f32 %v9234, %v9254
  %v9306 = vmul.f32 %v9235, %v9254
  %v9307 = vmul.f32 %v9236, %v9254
  %v9308 = vmul.f32 %v9237, %v9254
  %v9309 = vmul.f32 %v9238, %v9254
  %v9310 = vmul.f32 %v9239, %v9254
  %v9311 = vmul.f32 %v9240, %v9254
  %v9312 = vmul.f32 %v9241, %v9254
  %v9313 = vmul.f32 %v9242, %v9254
  %v9314 = vmul.f32 %v9243, %v9254
  %v9315 = vmul.f32 %v9244, %v9254
  %v9316 = vmul.f32 %v9245, %v9254
  %v9317 = vmul.f32 %v9246, %v9254
  %v9318 = vmul.f32 %v9247, %v9254
  %v9319 = vmul.f32 %v9248, %v9254
  %v9320 = vld [vmem:[%s3] sm:$0x1]
  %v9322 = vlaneseq
  %v9323 = vshrl.u32 %v9322, 7
  %v9324 = vsub.s32 0, %v9323
  %v9325 = vrot.slane %v9320, %v9324
  %v9327 = vadd.f32 %v9256, %v9325
  %v9328 = vadd.f32 %v9257, %v9325
  %v9329 = vadd.f32 %v9258, %v9325
  %v9330 = vadd.f32 %v9259, %v9325
  %v9331 = vadd.f32 %v9260, %v9325
  %v9332 = vadd.f32 %v9261, %v9325
  %v9333 = vadd.f32 %v9262, %v9325
  %v9334 = vadd.f32 %v9263, %v9325
  %v9335 = vadd.f32 %v9264, %v9325
  %v9336 = vadd.f32 %v9265, %v9325
  %v9337 = vadd.f32 %v9266, %v9325
  %v9338 = vadd.f32 %v9267, %v9325
  %v9339 = vadd.f32 %v9268, %v9325
  %v9340 = vadd.f32 %v9269, %v9325
  %v9341 = vadd.f32 %v9270, %v9325
  %v9342 = vadd.f32 %v9271, %v9325
  %v9343 = vadd.f32 %v9272, %v9325
  %v9344 = vadd.f32 %v9273, %v9325
  %v9345 = vadd.f32 %v9274, %v9325
  %v9346 = vadd.f32 %v9275, %v9325
  %v9347 = vadd.f32 %v9276, %v9325
  %v9348 = vadd.f32 %v9277, %v9325
  %v9349 = vadd.f32 %v9278, %v9325
  %v9350 = vadd.f32 %v9279, %v9325
  %v9351 = vadd.f32 %v9280, %v9325
  %v9352 = vadd.f32 %v9281, %v9325
  %v9353 = vadd.f32 %v9282, %v9325
  %v9354 = vadd.f32 %v9283, %v9325
  %v9355 = vadd.f32 %v9284, %v9325
  %v9356 = vadd.f32 %v9285, %v9325
  %v9357 = vadd.f32 %v9286, %v9325
  %v9358 = vadd.f32 %v9287, %v9325
  %v9359 = vadd.f32 %v9288, %v9325
  %v9360 = vadd.f32 %v9289, %v9325
  %v9361 = vadd.f32 %v9290, %v9325
  %v9362 = vadd.f32 %v9291, %v9325
  %v9363 = vadd.f32 %v9292, %v9325
  %v9364 = vadd.f32 %v9293, %v9325
  %v9365 = vadd.f32 %v9294, %v9325
  %v9366 = vadd.f32 %v9295, %v9325
  %v9367 = vadd.f32 %v9296, %v9325
  %v9368 = vadd.f32 %v9297, %v9325
  %v9369 = vadd.f32 %v9298, %v9325
  %v9370 = vadd.f32 %v9299, %v9325
  %v9371 = vadd.f32 %v9300, %v9325
  %v9372 = vadd.f32 %v9301, %v9325
  %v9373 = vadd.f32 %v9302, %v9325
  %v9374 = vadd.f32 %v9303, %v9325
  %v9375 = vadd.f32 %v9304, %v9325
  %v9376 = vadd.f32 %v9305, %v9325
  %v9377 = vadd.f32 %v9306, %v9325
  %v9378 = vadd.f32 %v9307, %v9325
  %v9379 = vadd.f32 %v9308, %v9325
  %v9380 = vadd.f32 %v9309, %v9325
  %v9381 = vadd.f32 %v9310, %v9325
  %v9382 = vadd.f32 %v9311, %v9325
  %v9383 = vadd.f32 %v9312, %v9325
  %v9384 = vadd.f32 %v9313, %v9325
  %v9385 = vadd.f32 %v9314, %v9325
  %v9386 = vadd.f32 %v9315, %v9325
  %v9387 = vadd.f32 %v9316, %v9325
  %v9388 = vadd.f32 %v9317, %v9325
  %v9389 = vadd.f32 %v9318, %v9325
  %v9390 = vadd.f32 %v9319, %v9325
  %v9391 = vmax.f32 %v9327, 0.0
  %v9392 = vmax.f32 %v9328, 0.0
  %v9393 = vmax.f32 %v9329, 0.0
  %v9394 = vmax.f32 %v9330, 0.0
  %v9395 = vmax.f32 %v9331, 0.0
  %v9396 = vmax.f32 %v9332, 0.0
  %v9397 = vmax.f32 %v9333, 0.0
  %v9398 = vmax.f32 %v9334, 0.0
  %v9399 = vmax.f32 %v9335, 0.0
  %v9400 = vmax.f32 %v9336, 0.0
  %v9401 = vmax.f32 %v9337, 0.0
  %v9402 = vmax.f32 %v9338, 0.0
  %v9403 = vmax.f32 %v9339, 0.0
  %v9404 = vmax.f32 %v9340, 0.0
  %v9405 = vmax.f32 %v9341, 0.0
  %v9406 = vmax.f32 %v9342, 0.0
  %v9407 = vmax.f32 %v9343, 0.0
  %v9408 = vmax.f32 %v9344, 0.0
  %v9409 = vmax.f32 %v9345, 0.0
  %v9410 = vmax.f32 %v9346, 0.0
  %v9411 = vmax.f32 %v9347, 0.0
  %v9412 = vmax.f32 %v9348, 0.0
  %v9413 = vmax.f32 %v9349, 0.0
  %v9414 = vmax.f32 %v9350, 0.0
  %v9415 = vmax.f32 %v9351, 0.0
  %v9416 = vmax.f32 %v9352, 0.0
  %v9417 = vmax.f32 %v9353, 0.0
  %v9418 = vmax.f32 %v9354, 0.0
  %v9419 = vmax.f32 %v9355, 0.0
  %v9420 = vmax.f32 %v9356, 0.0
  %v9421 = vmax.f32 %v9357, 0.0
  %v9422 = vmax.f32 %v9358, 0.0
  %v9423 = vmax.f32 %v9359, 0.0
  %v9424 = vmax.f32 %v9360, 0.0
  %v9425 = vmax.f32 %v9361, 0.0
  %v9426 = vmax.f32 %v9362, 0.0
  %v9427 = vmax.f32 %v9363, 0.0
  %v9428 = vmax.f32 %v9364, 0.0
  %v9429 = vmax.f32 %v9365, 0.0
  %v9430 = vmax.f32 %v9366, 0.0
  %v9431 = vmax.f32 %v9367, 0.0
  %v9432 = vmax.f32 %v9368, 0.0
  %v9433 = vmax.f32 %v9369, 0.0
  %v9434 = vmax.f32 %v9370, 0.0
  %v9435 = vmax.f32 %v9371, 0.0
  %v9436 = vmax.f32 %v9372, 0.0
  %v9437 = vmax.f32 %v9373, 0.0
  %v9438 = vmax.f32 %v9374, 0.0
  %v9439 = vmax.f32 %v9375, 0.0
  %v9440 = vmax.f32 %v9376, 0.0
  %v9441 = vmax.f32 %v9377, 0.0
  %v9442 = vmax.f32 %v9378, 0.0
  %v9443 = vmax.f32 %v9379, 0.0
  %v9444 = vmax.f32 %v9380, 0.0
  %v9445 = vmax.f32 %v9381, 0.0
  %v9446 = vmax.f32 %v9382, 0.0
  %v9447 = vmax.f32 %v9383, 0.0
  %v9448 = vmax.f32 %v9384, 0.0
  %v9449 = vmax.f32 %v9385, 0.0
  %v9450 = vmax.f32 %v9386, 0.0
  %v9451 = vmax.f32 %v9387, 0.0
  %v9452 = vmax.f32 %v9388, 0.0
  %v9453 = vmax.f32 %v9389, 0.0
  %v9454 = vmax.f32 %v9390, 0.0
  %9455 = vst.msk [vmem:[%s4] sm:$0xff] %vm8785, %v9391
  %9456 = vst.msk [vmem:[%s4 + $0x8] sm:$0xff] %vm8785, %v9392
  %9457 = vst.msk [vmem:[%s4 + $0x10] sm:$0xff] %vm8785, %v9393
  %9458 = vst.msk [vmem:[%s4 + $0x18] sm:$0xff] %vm8785, %v9394
  %9459 = vst.msk [vmem:[%s4 + $0x20] sm:$0xff] %vm8785, %v9395
  %9460 = vst.msk [vmem:[%s4 + $0x28] sm:$0xff] %vm8785, %v9396
  %9461 = vst.msk [vmem:[%s4 + $0x30] sm:$0xff] %vm8785, %v9397
  %9462 = vst.msk [vmem:[%s4 + $0x38] sm:$0xff] %vm8785, %v9398
  %9463 = vst.msk [vmem:[%s4 + $0x40] sm:$0xff] %vm8785, %v9399
  %9464 = vst.msk [vmem:[%s4 + $0x48] sm:$0xff] %vm8785, %v9400
  %9465 = vst.msk [vmem:[%s4 + $0x50] sm:$0xff] %vm8785, %v9401
  %9466 = vst.msk [vmem:[%s4 + $0x58] sm:$0xff] %vm8785, %v9402
  %9467 = vst.msk [vmem:[%s4 + $0x60] sm:$0xff] %vm8785, %v9403
  %9468 = vst.msk [vmem:[%s4 + $0x68] sm:$0xff] %vm8785, %v9404
  %9469 = vst.msk [vmem:[%s4 + $0x70] sm:$0xff] %vm8785, %v9405
  %9470 = vst.msk [vmem:[%s4 + $0x78] sm:$0xff] %vm8785, %v9406
  %9471 = vst.msk [vmem:[%s4 + $0x80] sm:$0xff] %vm8785, %v9407
  %9472 = vst.msk [vmem:[%s4 + $0x88] sm:$0xff] %vm8785, %v9408
  %9473 = vst.msk [vmem:[%s4 + $0x90] sm:$0xff] %vm8785, %v9409
  %9474 = vst.msk [vmem:[%s4 + $0x98] sm:$0xff] %vm8785, %v9410
  %9475 = vst.msk [vmem:[%s4 + $0xa0] sm:$0xff] %vm8785, %v9411
  %9476 = vst.msk [vmem:[%s4 + $0xa8] sm:$0xff] %vm8785, %v9412
  %9477 = vst.msk [vmem:[%s4 + $0xb0] sm:$0xff] %vm8785, %v9413
  %9478 = vst.msk [vmem:[%s4 + $0xb8] sm:$0xff] %vm8785, %v9414
  %9479 = vst.msk [vmem:[%s4 + $0xc0] sm:$0xff] %vm8785, %v9415
  %9480 = vst.msk [vmem:[%s4 + $0xc8] sm:$0xff] %vm8785, %v9416
  %9481 = vst.msk [vmem:[%s4 + $0xd0] sm:$0xff] %vm8785, %v9417
  %9482 = vst.msk [vmem:[%s4 + $0xd8] sm:$0xff] %vm8785, %v9418
  %9483 = vst.msk [vmem:[%s4 + $0xe0] sm:$0xff] %vm8785, %v9419
  %9484 = vst.msk [vmem:[%s4 + $0xe8] sm:$0xff] %vm8785, %v9420
  %9485 = vst.msk [vmem:[%s4 + $0xf0] sm:$0xff] %vm8785, %v9421
  %9486 = vst.msk [vmem:[%s4 + $0xf8] sm:$0xff] %vm8785, %v9422
  %9487 = vst.msk [vmem:[%s4 + $0x100] sm:$0xff] %vm8785, %v9423
  %9488 = vst.msk [vmem:[%s4 + $0x108] sm:$0xff] %vm8785, %v9424
  %9489 = vst.msk [vmem:[%s4 + $0x110] sm:$0xff] %vm8785, %v9425
  %9490 = vst.msk [vmem:[%s4 + $0x118] sm:$0xff] %vm8785, %v9426
  %9491 = vst.msk [vmem:[%s4 + $0x120] sm:$0xff] %vm8785, %v9427
  %9492 = vst.msk [vmem:[%s4 + $0x128] sm:$0xff] %vm8785, %v9428
  %9493 = vst.msk [vmem:[%s4 + $0x130] sm:$0xff] %vm8785, %v9429
  %9494 = vst.msk [vmem:[%s4 + $0x138] sm:$0xff] %vm8785, %v9430
  %9495 = vst.msk [vmem:[%s4 + $0x140] sm:$0xff] %vm8785, %v9431
  %9496 = vst.msk [vmem:[%s4 + $0x148] sm:$0xff] %vm8785, %v9432
  %9497 = vst.msk [vmem:[%s4 + $0x150] sm:$0xff] %vm8785, %v9433
  %9498 = vst.msk [vmem:[%s4 + $0x158] sm:$0xff] %vm8785, %v9434
  %9499 = vst.msk [vmem:[%s4 + $0x160] sm:$0xff] %vm8785, %v9435
  %9500 = vst.msk [vmem:[%s4 + $0x168] sm:$0xff] %vm8785, %v9436
  %9501 = vst.msk [vmem:[%s4 + $0x170] sm:$0xff] %vm8785, %v9437
  %9502 = vst.msk [vmem:[%s4 + $0x178] sm:$0xff] %vm8785, %v9438
  %9503 = vst.msk [vmem:[%s4 + $0x180] sm:$0xff] %vm8785, %v9439
  %9504 = vst.msk [vmem:[%s4 + $0x188] sm:$0xff] %vm8785, %v9440
  %9505 = vst.msk [vmem:[%s4 + $0x190] sm:$0xff] %vm8785, %v9441
  %9506 = vst.msk [vmem:[%s4 + $0x198] sm:$0xff] %vm8785, %v9442
  %9507 = vst.msk [vmem:[%s4 + $0x1a0] sm:$0xff] %vm8785, %v9443
  %9508 = vst.msk [vmem:[%s4 + $0x1a8] sm:$0xff] %vm8785, %v9444
  %9509 = vst.msk [vmem:[%s4 + $0x1b0] sm:$0xff] %vm8785, %v9445
  %9510 = vst.msk [vmem:[%s4 + $0x1b8] sm:$0xff] %vm8785, %v9446
  %9511 = vst.msk [vmem:[%s4 + $0x1c0] sm:$0xff] %vm8785, %v9447
  %9512 = vst.msk [vmem:[%s4 + $0x1c8] sm:$0xff] %vm8785, %v9448
  %9513 = vst.msk [vmem:[%s4 + $0x1d0] sm:$0xff] %vm8785, %v9449
  %9514 = vst.msk [vmem:[%s4 + $0x1d8] sm:$0xff] %vm8785, %v9450
  %9515 = vst.msk [vmem:[%s4 + $0x1e0] sm:$0xff] %vm8785, %v9451
  %9516 = vst.msk [vmem:[%s4 + $0x1e8] sm:$0xff] %vm8785, %v9452
  %9517 = vst.msk [vmem:[%s4 + $0x1f0] sm:$0xff] %vm8785, %v9453
  %9518 = vst.msk [vmem:[%s4 + $0x1f8] sm:$0xff] %vm8785, %v9454
  // Predicated region
  $region18: #{simple_resblock_sub1f1.3} parent=0 // pred_check
    _
  $region19: #{simple_resblock_sub1f1.3} parent=0 // pred_check_branch
    %9520 = sbr.rel (0) target = $region21
  $region20: #{simple_resblock_sub1f1.3} parent=0 // pred_region
    _
  $region21: #{simple_resblock_sub1f1.3} parent=0 // pred_fallthru
    _
  // Predicated region
  $region22: #{simple_resblock_sub1f1.3} parent=0 // pred_check
    _
  $region23: #{simple_resblock_sub1f1.3} parent=0 // pred_check_branch
    %9522 = sbr.rel (0) target = $region25
  $region24: #{simple_resblock_sub1f1.3} parent=0 // pred_region
    _
  $region25: #{simple_resblock_sub1f1.3} parent=0 // pred_fallthru
    _

// kernel: reverse.1
$region0: #{reverse.1}
  #allocation0 [shape = 's32[1]{0}', space=sflag, size = 0x4, scoped, tag = 'scoped memory for reverse.1']
  %s0 = inlined_call_operand.vmem [shape: f32[2,32,16,7], index: 0, kind: input, shape index: {}]
  %s1 = inlined_call_operand.vmem [shape: f32[2,32,16,7], index: 1, kind: output, shape index: {}]
  %s2 = scalar_lea.vmem %s0, 96
  %v3 = vld [vmem:[%s2] sm:$0xff]
  %4 = vst [vmem:[%s1] sm:$0xff] %v3
  %s5 = scalar_lea.vmem %s0, 208
  %v6 = vld [vmem:[%s5] sm:$0xff]
  %s7 = scalar_lea.vmem %s1, 112
  %8 = vst [vmem:[%s7] sm:$0xff] %v6
  %s9 = scalar_lea.vmem %s0, 80
  %v10 = vld [vmem:[%s9] sm:$0xff]
  %s11 = scalar_lea.vmem %s1, 16
  %12 = vst [vmem:[%s11] sm:$0xff] %v10
  %s13 = scalar_lea.vmem %s0, 192
  %v14 = vld [vmem:[%s13] sm:$0xff]
  %s15 = scalar_lea.vmem %s1, 128
  %16 = vst [vmem:[%s15] sm:$0xff] %v14
  %s17 = scalar_lea.vmem %s0, 64
  %v18 = vld [vmem:[%s17] sm:$0xff]
  %s19 = scalar_lea.vmem %s1, 32
  %20 = vst [vmem:[%s19] sm:$0xff] %v18
  %s21 = scalar_lea.vmem %s0, 176
  %v22 = vld [vmem:[%s21] sm:$0xff]
  %s23 = scalar_lea.vmem %s1, 144
  %24 = vst [vmem:[%s23] sm:$0xff] %v22
  %s25 = scalar_lea.vmem %s0, 48
  %v26 = vld [vmem:[%s25] sm:$0xff]
  %s27 = scalar_lea.vmem %s1, 48
  %28 = vst [vmem:[%s27] sm:$0xff] %v26
  %s29 = scalar_lea.vmem %s0, 160
  %v30 = vld [vmem:[%s29] sm:$0xff]
  %s31 = scalar_lea.vmem %s1, 160
  %32 = vst [vmem:[%s31] sm:$0xff] %v30
  %s33 = scalar_lea.vmem %s0, 32
  %v34 = vld [vmem:[%s33] sm:$0xff]
  %s35 = scalar_lea.vmem %s1, 64
  %36 = vst [vmem:[%s35] sm:$0xff] %v34
  %s37 = scalar_lea.vmem %s0, 144
  %v38 = vld [vmem:[%s37] sm:$0xff]
  %s39 = scalar_lea.vmem %s1, 176
  %40 = vst [vmem:[%s39] sm:$0xff] %v38
  %s41 = scalar_lea.vmem %s0, 16
  %v42 = vld [vmem:[%s41] sm:$0xff]
  %s43 = scalar_lea.vmem %s1, 80
  %44 = vst [vmem:[%s43] sm:$0xff] %v42
  %s45 = scalar_lea.vmem %s0, 128
  %v46 = vld [vmem:[%s45] sm:$0xff]
  %s47 = scalar_lea.vmem %s1, 192
  %48 = vst [vmem:[%s47] sm:$0xff] %v46
  %v49 = vld [vmem:[%s0] sm:$0xff]
  %s50 = scalar_lea.vmem %s1, 96
  %51 = vst [vmem:[%s50] sm:$0xff] %v49
  %s52 = scalar_lea.vmem %s0, 112
  %v53 = vld [vmem:[%s52] sm:$0xff]
  %s54 = scalar_lea.vmem %s1, 208
  %55 = vst [vmem:[%s54] sm:$0xff] %v53
  %s56 = scalar_lea.vmem %s0, 104
  %v57 = vld [vmem:[%s56] sm:$0xff]
  %s58 = scalar_lea.vmem %s1, 8
  %59 = vst [vmem:[%s58] sm:$0xff] %v57
  %s60 = scalar_lea.vmem %s0, 216
  %v61 = vld [vmem:[%s60] sm:$0xff]
  %s62 = scalar_lea.vmem %s1, 120
  %63 = vst [vmem:[%s62] sm:$0xff] %v61
  %s64 = scalar_lea.vmem %s0, 88
  %v65 = vld [vmem:[%s64] sm:$0xff]
  %s66 = scalar_lea.vmem %s1, 24
  %67 = vst [vmem:[%s66] sm:$0xff] %v65
  %s68 = scalar_lea.vmem %s0, 200
  %v69 = vld [vmem:[%s68] sm:$0xff]
  %s70 = scalar_lea.vmem %s1, 136
  %71 = vst [vmem:[%s70] sm:$0xff] %v69
  %s72 = scalar_lea.vmem %s0, 72
  %v73 = vld [vmem:[%s72] sm:$0xff]
  %s74 = scalar_lea.vmem %s1, 40
  %75 = vst [vmem:[%s74] sm:$0xff] %v73
  %s76 = scalar_lea.vmem %s0, 184
  %v77 = vld [vmem:[%s76] sm:$0xff]
  %s78 = scalar_lea.vmem %s1, 152
  %79 = vst [vmem:[%s78] sm:$0xff] %v77
  %s80 = scalar_lea.vmem %s0, 56
  %v81 = vld [vmem:[%s80] sm:$0xff]
  %s82 = scalar_lea.vmem %s1, 56
  %83 = vst [vmem:[%s82] sm:$0xff] %v81
  %s84 = scalar_lea.vmem %s0, 168
  %v85 = vld [vmem:[%s84] sm:$0xff]
  %s86 = scalar_lea.vmem %s1, 168
  %87 = vst [vmem:[%s86] sm:$0xff] %v85
  %s88 = scalar_lea.vmem %s0, 40
  %v89 = vld [vmem:[%s88] sm:$0xff]
  %s90 = scalar_lea.vmem %s1, 72
  %91 = vst [vmem:[%s90] sm:$0xff] %v89
  %s92 = scalar_lea.vmem %s0, 152
  %v93 = vld [vmem:[%s92] sm:$0xff]
  %s94 = scalar_lea.vmem %s1, 184
  %95 = vst [vmem:[%s94] sm:$0xff] %v93
  %s96 = scalar_lea.vmem %s0, 24
  %v97 = vld [vmem:[%s96] sm:$0xff]
  %s98 = scalar_lea.vmem %s1, 88
  %99 = vst [vmem:[%s98] sm:$0xff] %v97
  %s100 = scalar_lea.vmem %s0, 136
  %v101 = vld [vmem:[%s100] sm:$0xff]
  %s102 = scalar_lea.vmem %s1, 200
  %103 = vst [vmem:[%s102] sm:$0xff] %v101
  %s104 = scalar_lea.vmem %s0, 8
  %v105 = vld [vmem:[%s104] sm:$0xff]
  %s106 = scalar_lea.vmem %s1, 104
  %107 = vst [vmem:[%s106] sm:$0xff] %v105
  %s108 = scalar_lea.vmem %s0, 120
  %v109 = vld [vmem:[%s108] sm:$0xff]
  %s110 = scalar_lea.vmem %s1, 216
  %111 = vst [vmem:[%s110] sm:$0xff] %v109

// kernel: simple_resblock_sub1f1.5
$region0: #{simple_resblock_sub1f1.5}
  #allocation0 [shape = 'u32[]', space=smem, size = 0x4, offset = 0x4, fixed_abs, tag = 'smem constant byte address 0x4 - core index']
  #allocation1 [shape = 'u32[144,128]{1,0:T(1,128)}', space=vmem, size = 0x12000, scoped, tag = 'internal scratch']
  %s0 = inlined_call_operand.vmem [shape: f32[512,32], index: 0, kind: input, shape index: {}]
  %s1 = inlined_call_operand.vmem [shape: f32[512,32], index: 1, kind: input, shape index: {}]
  %s2 = inlined_call_operand.vmem [shape: f32[1,32], index: 2, kind: input, shape index: {}]
  %s3 = inlined_call_operand.vmem [shape: f32[1,32], index: 3, kind: input, shape index: {}]
  %s4 = inlined_call_operand.hbm [shape: f32[512,32], index: 4, kind: output, shape index: {}]
  %s5 = sld [smem:[#allocation0]]
  $region26: #{simple_resblock_sub1f1.5} parent=0
    _
  %s7 = ssub.s32 1, %s5
  %s8 = scalar_select 0, %s7, %s5
  $region1: #{simple_resblock_sub1f1.5} parent=0
    #allocation2 [shape = 'u8[262144]{0}', space=vmem, size = 0x40000, scoped, tag = 'output window, operand 0, single buffered']
    #allocation3 [shape = 's32[1]{0}', space=sflag, size = 0x4, scoped, tag = 'scoped memory for simple_resblock_sub1f1.5']
    %9 = vsyncpa [#allocation3], 0
    // Predicated region
    $region2: #{simple_resblock_sub1f1.5} parent=1 // pred_check
      _
    $region3: #{simple_resblock_sub1f1.5} parent=1 // pred_check_branch
      %11 = sbr.rel (0) target = $region5
    $region4: #{simple_resblock_sub1f1.5} parent=1 // pred_region
      _
    $region5: #{simple_resblock_sub1f1.5} parent=1 // pred_fallthru
      _
    // Predicated region
    $region6: #{simple_resblock_sub1f1.5} parent=1 // pred_check
      _
    $region7: #{simple_resblock_sub1f1.5} parent=1 // pred_check_branch
      %13 = sbr.rel (0) target = $region9
    $region8: #{simple_resblock_sub1f1.5} parent=1 // pred_region
      _
    $region9: #{simple_resblock_sub1f1.5} parent=1 // pred_fallthru
      _
    // Predicated region
    $region10: #{simple_resblock_sub1f1.5} parent=1 // pred_check
      _
    $region11: #{simple_resblock_sub1f1.5} parent=1 // pred_check_branch
      %15 = sbr.rel (0) target = $region13
    $region12: #{simple_resblock_sub1f1.5} parent=1 // pred_region
      _
    $region13: #{simple_resblock_sub1f1.5} parent=1 // pred_fallthru
      _
    // Predicated region
    $region14: #{simple_resblock_sub1f1.5} parent=1 // pred_check
      _
    $region15: #{simple_resblock_sub1f1.5} parent=1 // pred_check_branch
      %17 = sbr.rel (0) target = $region17
    $region16: #{simple_resblock_sub1f1.5} parent=1 // pred_region
      _
    $region17: #{simple_resblock_sub1f1.5} parent=1 // pred_fallthru
      _
    %v18 = vld [vmem:[%s0] sm:$0xff]
    %v19 = vld [vmem:[%s0 + $0x8] sm:$0xff]
    %v20 = vld [vmem:[%s0 + $0x10] sm:$0xff]
    %v21 = vld [vmem:[%s0 + $0x18] sm:$0xff]
    %v22 = vld [vmem:[%s0 + $0x20] sm:$0xff]
    %v23 = vld [vmem:[%s0 + $0x28] sm:$0xff]
    %v24 = vld [vmem:[%s0 + $0x30] sm:$0xff]
    %v25 = vld [vmem:[%s0 + $0x38] sm:$0xff]
    %v26 = vld [vmem:[%s0 + $0x40] sm:$0xff]
    %v27 = vld [vmem:[%s0 + $0x48] sm:$0xff]
    %v28 = vld [vmem:[%s0 + $0x50] sm:$0xff]
    %v29 = vld [vmem:[%s0 + $0x58] sm:$0xff]
    %v30 = vld [vmem:[%s0 + $0x60] sm:$0xff]
    %v31 = vld [vmem:[%s0 + $0x68] sm:$0xff]
    %v32 = vld [vmem:[%s0 + $0x70] sm:$0xff]
    %v33 = vld [vmem:[%s0 + $0x78] sm:$0xff]
    %v34 = vld [vmem:[%s0 + $0x80] sm:$0xff]
    %v35 = vld [vmem:[%s0 + $0x88] sm:$0xff]
    %v36 = vld [vmem:[%s0 + $0x90] sm:$0xff]
    %v37 = vld [vmem:[%s0 + $0x98] sm:$0xff]
    %v38 = vld [vmem:[%s0 + $0xa0] sm:$0xff]
    %v39 = vld [vmem:[%s0 + $0xa8] sm:$0xff]
    %v40 = vld [vmem:[%s0 + $0xb0] sm:$0xff]
    %v41 = vld [vmem:[%s0 + $0xb8] sm:$0xff]
    %v42 = vld [vmem:[%s0 + $0xc0] sm:$0xff]
    %v43 = vld [vmem:[%s0 + $0xc8] sm:$0xff]
    %v44 = vld [vmem:[%s0 + $0xd0] sm:$0xff]
    %v45 = vld [vmem:[%s0 + $0xd8] sm:$0xff]
    %v46 = vld [vmem:[%s0 + $0xe0] sm:$0xff]
    %v47 = vld [vmem:[%s0 + $0xe8] sm:$0xff]
    %v48 = vld [vmem:[%s0 + $0xf0] sm:$0xff]
    %v49 = vld [vmem:[%s0 + $0xf8] sm:$0xff]
    %v50 = vld [vmem:[%s0 + $0x100] sm:$0xff]
    %v51 = vld [vmem:[%s0 + $0x108] sm:$0xff]
    %v52 = vld [vmem:[%s0 + $0x110] sm:$0xff]
    %v53 = vld [vmem:[%s0 + $0x118] sm:$0xff]
    %v54 = vld [vmem:[%s0 + $0x120] sm:$0xff]
    %v55 = vld [vmem:[%s0 + $0x128] sm:$0xff]
    %v56 = vld [vmem:[%s0 + $0x130] sm:$0xff]
    %v57 = vld [vmem:[%s0 + $0x138] sm:$0xff]
    %v58 = vld [vmem:[%s0 + $0x140] sm:$0xff]
    %v59 = vld [vmem:[%s0 + $0x148] sm:$0xff]
    %v60 = vld [vmem:[%s0 + $0x150] sm:$0xff]
    %v61 = vld [vmem:[%s0 + $0x158] sm:$0xff]
    %v62 = vld [vmem:[%s0 + $0x160] sm:$0xff]
    %v63 = vld [vmem:[%s0 + $0x168] sm:$0xff]
    %v64 = vld [vmem:[%s0 + $0x170] sm:$0xff]
    %v65 = vld [vmem:[%s0 + $0x178] sm:$0xff]
    %v66 = vld [vmem:[%s0 + $0x180] sm:$0xff]
    %v67 = vld [vmem:[%s0 + $0x188] sm:$0xff]
    %v68 = vld [vmem:[%s0 + $0x190] sm:$0xff]
    %v69 = vld [vmem:[%s0 + $0x198] sm:$0xff]
    %v70 = vld [vmem:[%s0 + $0x1a0] sm:$0xff]
    %v71 = vld [vmem:[%s0 + $0x1a8] sm:$0xff]
    %v72 = vld [vmem:[%s0 + $0x1b0] sm:$0xff]
    %v73 = vld [vmem:[%s0 + $0x1b8] sm:$0xff]
    %v74 = vld [vmem:[%s0 + $0x1c0] sm:$0xff]
    %v75 = vld [vmem:[%s0 + $0x1c8] sm:$0xff]
    %v76 = vld [vmem:[%s0 + $0x1d0] sm:$0xff]
    %v77 = vld [vmem:[%s0 + $0x1d8] sm:$0xff]
    %v78 = vld [vmem:[%s0 + $0x1e0] sm:$0xff]
    %v79 = vld [vmem:[%s0 + $0x1e8] sm:$0xff]
    %v80 = vld [vmem:[%s0 + $0x1f0] sm:$0xff]
    %v81 = vld [vmem:[%s0 + $0x1f8] sm:$0xff]
    %v82 = vld [vmem:[%s1] sm:$0xff]
    %v83 = vld [vmem:[%s1 + $0x8] sm:$0xff]
    %v84 = vld [vmem:[%s1 + $0x10] sm:$0xff]
    %v85 = vld [vmem:[%s1 + $0x18] sm:$0xff]
    %v86 = vld [vmem:[%s1 + $0x20] sm:$0xff]
    %v87 = vld [vmem:[%s1 + $0x28] sm:$0xff]
    %v88 = vld [vmem:[%s1 + $0x30] sm:$0xff]
    %v89 = vld [vmem:[%s1 + $0x38] sm:$0xff]
    %v90 = vld [vmem:[%s1 + $0x40] sm:$0xff]
    %v91 = vld [vmem:[%s1 + $0x48] sm:$0xff]
    %v92 = vld [vmem:[%s1 + $0x50] sm:$0xff]
    %v93 = vld [vmem:[%s1 + $0x58] sm:$0xff]
    %v94 = vld [vmem:[%s1 + $0x60] sm:$0xff]
    %v95 = vld [vmem:[%s1 + $0x68] sm:$0xff]
    %v96 = vld [vmem:[%s1 + $0x70] sm:$0xff]
    %v97 = vld [vmem:[%s1 + $0x78] sm:$0xff]
    %v98 = vld [vmem:[%s1 + $0x80] sm:$0xff]
    %v99 = vld [vmem:[%s1 + $0x88] sm:$0xff]
    %v100 = vld [vmem:[%s1 + $0x90] sm:$0xff]
    %v101 = vld [vmem:[%s1 + $0x98] sm:$0xff]
    %v102 = vld [vmem:[%s1 + $0xa0] sm:$0xff]
    %v103 = vld [vmem:[%s1 + $0xa8] sm:$0xff]
    %v104 = vld [vmem:[%s1 + $0xb0] sm:$0xff]
    %v105 = vld [vmem:[%s1 + $0xb8] sm:$0xff]
    %v106 = vld [vmem:[%s1 + $0xc0] sm:$0xff]
    %v107 = vld [vmem:[%s1 + $0xc8] sm:$0xff]
    %v108 = vld [vmem:[%s1 + $0xd0] sm:$0xff]
    %v109 = vld [vmem:[%s1 + $0xd8] sm:$0xff]
    %v110 = vld [vmem:[%s1 + $0xe0] sm:$0xff]
    %v111 = vld [vmem:[%s1 + $0xe8] sm:$0xff]
    %v112 = vld [vmem:[%s1 + $0xf0] sm:$0xff]
    %v113 = vld [vmem:[%s1 + $0xf8] sm:$0xff]
    %v114 = vld [vmem:[%s1 + $0x100] sm:$0xff]
    %v115 = vld [vmem:[%s1 + $0x108] sm:$0xff]
    %v116 = vld [vmem:[%s1 + $0x110] sm:$0xff]
    %v117 = vld [vmem:[%s1 + $0x118] sm:$0xff]
    %v118 = vld [vmem:[%s1 + $0x120] sm:$0xff]
    %v119 = vld [vmem:[%s1 + $0x128] sm:$0xff]
    %v120 = vld [vmem:[%s1 + $0x130] sm:$0xff]
    %v121 = vld [vmem:[%s1 + $0x138] sm:$0xff]
    %v122 = vld [vmem:[%s1 + $0x140] sm:$0xff]
    %v123 = vld [vmem:[%s1 + $0x148] sm:$0xff]
    %v124 = vld [vmem:[%s1 + $0x150] sm:$0xff]
    %v125 = vld [vmem:[%s1 + $0x158] sm:$0xff]
    %v126 = vld [vmem:[%s1 + $0x160] sm:$0xff]
    %v127 = vld [vmem:[%s1 + $0x168] sm:$0xff]
    %v128 = vld [vmem:[%s1 + $0x170] sm:$0xff]
    %v129 = vld [vmem:[%s1 + $0x178] sm:$0xff]
    %v130 = vld [vmem:[%s1 + $0x180] sm:$0xff]
    %v131 = vld [vmem:[%s1 + $0x188] sm:$0xff]
    %v132 = vld [vmem:[%s1 + $0x190] sm:$0xff]
    %v133 = vld [vmem:[%s1 + $0x198] sm:$0xff]
    %v134 = vld [vmem:[%s1 + $0x1a0] sm:$0xff]
    %v135 = vld [vmem:[%s1 + $0x1a8] sm:$0xff]
    %v136 = vld [vmem:[%s1 + $0x1b0] sm:$0xff]
    %v137 = vld [vmem:[%s1 + $0x1b8] sm:$0xff]
    %v138 = vld [vmem:[%s1 + $0x1c0] sm:$0xff]
    %v139 = vld [vmem:[%s1 + $0x1c8] sm:$0xff]
    %v140 = vld [vmem:[%s1 + $0x1d0] sm:$0xff]
    %v141 = vld [vmem:[%s1 + $0x1d8] sm:$0xff]
    %v142 = vld [vmem:[%s1 + $0x1e0] sm:$0xff]
    %v143 = vld [vmem:[%s1 + $0x1e8] sm:$0xff]
    %v144 = vld [vmem:[%s1 + $0x1f0] sm:$0xff]
    %v145 = vld [vmem:[%s1 + $0x1f8] sm:$0xff]
    %v146 = vadd.f32 %v82, %v18
    %v147 = vadd.f32 %v83, %v19
    %v148 = vadd.f32 %v84, %v20
    %v149 = vadd.f32 %v85, %v21
    %v150 = vadd.f32 %v86, %v22
    %v151 = vadd.f32 %v87, %v23
    %v152 = vadd.f32 %v88, %v24
    %v153 = vadd.f32 %v89, %v25
    %v154 = vadd.f32 %v90, %v26
    %v155 = vadd.f32 %v91, %v27
    %v156 = vadd.f32 %v92, %v28
    %v157 = vadd.f32 %v93, %v29
    %v158 = vadd.f32 %v94, %v30
    %v159 = vadd.f32 %v95, %v31
    %v160 = vadd.f32 %v96, %v32
    %v161 = vadd.f32 %v97, %v33
    %v162 = vadd.f32 %v98, %v34
    %v163 = vadd.f32 %v99, %v35
    %v164 = vadd.f32 %v100, %v36
    %v165 = vadd.f32 %v101, %v37
    %v166 = vadd.f32 %v102, %v38
    %v167 = vadd.f32 %v103, %v39
    %v168 = vadd.f32 %v104, %v40
    %v169 = vadd.f32 %v105, %v41
    %v170 = vadd.f32 %v106, %v42
    %v171 = vadd.f32 %v107, %v43
    %v172 = vadd.f32 %v108, %v44
    %v173 = vadd.f32 %v109, %v45
    %v174 = vadd.f32 %v110, %v46
    %v175 = vadd.f32 %v111, %v47
    %v176 = vadd.f32 %v112, %v48
    %v177 = vadd.f32 %v113, %v49
    %v178 = vadd.f32 %v114, %v50
    %v179 = vadd.f32 %v115, %v51
    %v180 = vadd.f32 %v116, %v52
    %v181 = vadd.f32 %v117, %v53
    %v182 = vadd.f32 %v118, %v54
    %v183 = vadd.f32 %v119, %v55
    %v184 = vadd.f32 %v120, %v56
    %v185 = vadd.f32 %v121, %v57
    %v186 = vadd.f32 %v122, %v58
    %v187 = vadd.f32 %v123, %v59
    %v188 = vadd.f32 %v124, %v60
    %v189 = vadd.f32 %v125, %v61
    %v190 = vadd.f32 %v126, %v62
    %v191 = vadd.f32 %v127, %v63
    %v192 = vadd.f32 %v128, %v64
    %v193 = vadd.f32 %v129, %v65
    %v194 = vadd.f32 %v130, %v66
    %v195 = vadd.f32 %v131, %v67
    %v196 = vadd.f32 %v132, %v68
    %v197 = vadd.f32 %v133, %v69
    %v198 = vadd.f32 %v134, %v70
    %v199 = vadd.f32 %v135, %v71
    %v200 = vadd.f32 %v136, %v72
    %v201 = vadd.f32 %v137, %v73
    %v202 = vadd.f32 %v138, %v74
    %v203 = vadd.f32 %v139, %v75
    %v204 = vadd.f32 %v140, %v76
    %v205 = vadd.f32 %v141, %v77
    %v206 = vadd.f32 %v142, %v78
    %v207 = vadd.f32 %v143, %v79
    %v208 = vadd.f32 %v144, %v80
    %v209 = vadd.f32 %v145, %v81
    %vm210 = vcmask 261120
    %v211 = vsel %vm210, %v146, 0.0
    %v212 = vsel %vm210, %v147, 0.0
    %v213 = vadd.f32 %v211, %v212
    %v214 = vsel %vm210, %v148, 0.0
    %v215 = vadd.f32 %v213, %v214
    %v216 = vsel %vm210, %v149, 0.0
    %v217 = vadd.f32 %v215, %v216
    %v218 = vsel %vm210, %v150, 0.0
    %v219 = vadd.f32 %v217, %v218
    %v220 = vsel %vm210, %v151, 0.0
    %v221 = vadd.f32 %v219, %v220
    %v222 = vsel %vm210, %v152, 0.0
    %v223 = vadd.f32 %v221, %v222
    %v224 = vsel %vm210, %v153, 0.0
    %v225 = vadd.f32 %v223, %v224
    %v226 = vsel %vm210, %v154, 0.0
    %v227 = vadd.f32 %v225, %v226
    %v228 = vsel %vm210, %v155, 0.0
    %v229 = vadd.f32 %v227, %v228
    %v230 = vsel %vm210, %v156, 0.0
    %v231 = vadd.f32 %v229, %v230
    %v232 = vsel %vm210, %v157, 0.0
    %v233 = vadd.f32 %v231, %v232
    %v234 = vsel %vm210, %v158, 0.0
    %v235 = vadd.f32 %v233, %v234
    %v236 = vsel %vm210, %v159, 0.0
    %v237 = vadd.f32 %v235, %v236
    %v238 = vsel %vm210, %v160, 0.0
    %v239 = vadd.f32 %v237, %v238
    %v240 = vsel %vm210, %v161, 0.0
    %v241 = vadd.f32 %v239, %v240
    %v242 = vsel %vm210, %v162, 0.0
    %v243 = vadd.f32 %v241, %v242
    %v244 = vsel %vm210, %v163, 0.0
    %v245 = vadd.f32 %v243, %v244
    %v246 = vsel %vm210, %v164, 0.0
    %v247 = vadd.f32 %v245, %v246
    %v248 = vsel %vm210, %v165, 0.0
    %v249 = vadd.f32 %v247, %v248
    %v250 = vsel %vm210, %v166, 0.0
    %v251 = vadd.f32 %v249, %v250
    %v252 = vsel %vm210, %v167, 0.0
    %v253 = vadd.f32 %v251, %v252
    %v254 = vsel %vm210, %v168, 0.0
    %v255 = vadd.f32 %v253, %v254
    %v256 = vsel %vm210, %v169, 0.0
    %v257 = vadd.f32 %v255, %v256
    %v258 = vsel %vm210, %v170, 0.0
    %v259 = vadd.f32 %v257, %v258
    %v260 = vsel %vm210, %v171, 0.0
    %v261 = vadd.f32 %v259, %v260
    %v262 = vsel %vm210, %v172, 0.0
    %v263 = vadd.f32 %v261, %v262
    %v264 = vsel %vm210, %v173, 0.0
    %v265 = vadd.f32 %v263, %v264
    %v266 = vsel %vm210, %v174, 0.0
    %v267 = vadd.f32 %v265, %v266
    %v268 = vsel %vm210, %v175, 0.0
    %v269 = vadd.f32 %v267, %v268
    %v270 = vsel %vm210, %v176, 0.0
    %v271 = vadd.f32 %v269, %v270
    %v272 = vsel %vm210, %v177, 0.0
    %v273 = vadd.f32 %v271, %v272
    %v274 = vsel %vm210, %v178, 0.0
    %v275 = vadd.f32 %v273, %v274
    %v276 = vsel %vm210, %v179, 0.0
    %v277 = vadd.f32 %v275, %v276
    %v278 = vsel %vm210, %v180, 0.0
    %v279 = vadd.f32 %v277, %v278
    %v280 = vsel %vm210, %v181, 0.0
    %v281 = vadd.f32 %v279, %v280
    %v282 = vsel %vm210, %v182, 0.0
    %v283 = vadd.f32 %v281, %v282
    %v284 = vsel %vm210, %v183, 0.0
    %v285 = vadd.f32 %v283, %v284
    %v286 = vsel %vm210, %v184, 0.0
    %v287 = vadd.f32 %v285, %v286
    %v288 = vsel %vm210, %v185, 0.0
    %v289 = vadd.f32 %v287, %v288
    %v290 = vsel %vm210, %v186, 0.0
    %v291 = vadd.f32 %v289, %v290
    %v292 = vsel %vm210, %v187, 0.0
    %v293 = vadd.f32 %v291, %v292
    %v294 = vsel %vm210, %v188, 0.0
    %v295 = vadd.f32 %v293, %v294
    %v296 = vsel %vm210, %v189, 0.0
    %v297 = vadd.f32 %v295, %v296
    %v298 = vsel %vm210, %v190, 0.0
    %v299 = vadd.f32 %v297, %v298
    %v300 = vsel %vm210, %v191, 0.0
    %v301 = vadd.f32 %v299, %v300
    %v302 = vsel %vm210, %v192, 0.0
    %v303 = vadd.f32 %v301, %v302
    %v304 = vsel %vm210, %v193, 0.0
    %v305 = vadd.f32 %v303, %v304
    %v306 = vsel %vm210, %v194, 0.0
    %v307 = vadd.f32 %v305, %v306
    %v308 = vsel %vm210, %v195, 0.0
    %v309 = vadd.f32 %v307, %v308
    %v310 = vsel %vm210, %v196, 0.0
    %v311 = vadd.f32 %v309, %v310
    %v312 = vsel %vm210, %v197, 0.0
    %v313 = vadd.f32 %v311, %v312
    %v314 = vsel %vm210, %v198, 0.0
    %v315 = vadd.f32 %v313, %v314
    %v316 = vsel %vm210, %v199, 0.0
    %v317 = vadd.f32 %v315, %v316
    %v318 = vsel %vm210, %v200, 0.0
    %v319 = vadd.f32 %v317, %v318
    %v320 = vsel %vm210, %v201, 0.0
    %v321 = vadd.f32 %v319, %v320
    %v322 = vsel %vm210, %v202, 0.0
    %v323 = vadd.f32 %v321, %v322
    %v324 = vsel %vm210, %v203, 0.0
    %v325 = vadd.f32 %v323, %v324
    %v326 = vsel %vm210, %v204, 0.0
    %v327 = vadd.f32 %v325, %v326
    %v328 = vsel %vm210, %v205, 0.0
    %v329 = vadd.f32 %v327, %v328
    %v330 = vsel %vm210, %v206, 0.0
    %v331 = vadd.f32 %v329, %v330
    %v332 = vsel %vm210, %v207, 0.0
    %v333 = vadd.f32 %v331, %v332
    %v334 = vsel %vm210, %v208, 0.0
    %v335 = vadd.f32 %v333, %v334
    %v336 = vsel %vm210, %v209, 0.0
    %v337 = vadd.f32 %v335, %v336
    %v338 = vrot.slane %v337, 4
    %v339 = vadd.f32 %v337, %v338
    %v340 = vrot.slane %v339, 2
    %v341 = vadd.f32 %v339, %v340
    %v342 = vrot.slane %v341, 1
    %v343 = vadd.f32 %v341, %v342
    %v344 = vrcp.pop 512.0
    %v345 = vmul.f32 %v343, %v344
    %v346 = vsub.f32 %v146, %v345
    %v347 = vsub.f32 %v147, %v345
    %v348 = vsub.f32 %v148, %v345
    %v349 = vsub.f32 %v149, %v345
    %v350 = vsub.f32 %v150, %v345
    %v351 = vsub.f32 %v151, %v345
    %v352 = vsub.f32 %v152, %v345
    %v353 = vsub.f32 %v153, %v345
    %v354 = vsub.f32 %v154, %v345
    %v355 = vsub.f32 %v155, %v345
    %v356 = vsub.f32 %v156, %v345
    %v357 = vsub.f32 %v157, %v345
    %v358 = vsub.f32 %v158, %v345
    %v359 = vsub.f32 %v159, %v345
    %v360 = vsub.f32 %v160, %v345
    %v361 = vsub.f32 %v161, %v345
    %v362 = vsub.f32 %v162, %v345
    %v363 = vsub.f32 %v163, %v345
    %v364 = vsub.f32 %v164, %v345
    %v365 = vsub.f32 %v165, %v345
    %v366 = vsub.f32 %v166, %v345
    %v367 = vsub.f32 %v167, %v345
    %v368 = vsub.f32 %v168, %v345
    %v369 = vsub.f32 %v169, %v345
    %v370 = vsub.f32 %v170, %v345
    %v371 = vsub.f32 %v171, %v345
    %v372 = vsub.f32 %v172, %v345
    %v373 = vsub.f32 %v173, %v345
    %v374 = vsub.f32 %v174, %v345
    %v375 = vsub.f32 %v175, %v345
    %v376 = vsub.f32 %v176, %v345
    %v377 = vsub.f32 %v177, %v345
    %v378 = vsub.f32 %v178, %v345
    %v379 = vsub.f32 %v179, %v345
    %v380 = vsub.f32 %v180, %v345
    %v381 = vsub.f32 %v181, %v345
    %v382 = vsub.f32 %v182, %v345
    %v383 = vsub.f32 %v183, %v345
    %v384 = vsub.f32 %v184, %v345
    %v385 = vsub.f32 %v185, %v345
    %v386 = vsub.f32 %v186, %v345
    %v387 = vsub.f32 %v187, %v345
    %v388 = vsub.f32 %v188, %v345
    %v389 = vsub.f32 %v189, %v345
    %v390 = vsub.f32 %v190, %v345
    %v391 = vsub.f32 %v191, %v345
    %v392 = vsub.f32 %v192, %v345
    %v393 = vsub.f32 %v193, %v345
    %v394 = vsub.f32 %v194, %v345
    %v395 = vsub.f32 %v195, %v345
    %v396 = vsub.f32 %v196, %v345
    %v397 = vsub.f32 %v197, %v345
    %v398 = vsub.f32 %v198, %v345
    %v399 = vsub.f32 %v199, %v345
    %v400 = vsub.f32 %v200, %v345
    %v401 = vsub.f32 %v201, %v345
    %v402 = vsub.f32 %v202, %v345
    %v403 = vsub.f32 %v203, %v345
    %v404 = vsub.f32 %v204, %v345
    %v405 = vsub.f32 %v205, %v345
    %v406 = vsub.f32 %v206, %v345
    %v407 = vsub.f32 %v207, %v345
    %v408 = vsub.f32 %v208, %v345
    %v409 = vsub.f32 %v209, %v345
    %v410 = vmul.f32 %v346, %v346
    %v411 = vmul.f32 %v347, %v347
    %v412 = vmul.f32 %v348, %v348
    %v413 = vmul.f32 %v349, %v349
    %v414 = vmul.f32 %v350, %v350
    %v415 = vmul.f32 %v351, %v351
    %v416 = vmul.f32 %v352, %v352
    %v417 = vmul.f32 %v353, %v353
    %v418 = vmul.f32 %v354, %v354
    %v419 = vmul.f32 %v355, %v355
    %v420 = vmul.f32 %v356, %v356
    %v421 = vmul.f32 %v357, %v357
    %v422 = vmul.f32 %v358, %v358
    %v423 = vmul.f32 %v359, %v359
    %v424 = vmul.f32 %v360, %v360
    %v425 = vmul.f32 %v361, %v361
    %v426 = vmul.f32 %v362, %v362
    %v427 = vmul.f32 %v363, %v363
    %v428 = vmul.f32 %v364, %v364
    %v429 = vmul.f32 %v365, %v365
    %v430 = vmul.f32 %v366, %v366
    %v431 = vmul.f32 %v367, %v367
    %v432 = vmul.f32 %v368, %v368
    %v433 = vmul.f32 %v369, %v369
    %v434 = vmul.f32 %v370, %v370
    %v435 = vmul.f32 %v371, %v371
    %v436 = vmul.f32 %v372, %v372
    %v437 = vmul.f32 %v373, %v373
    %v438 = vmul.f32 %v374, %v374
    %v439 = vmul.f32 %v375, %v375
    %v440 = vmul.f32 %v376, %v376
    %v441 = vmul.f32 %v377, %v377
    %v442 = vmul.f32 %v378, %v378
    %v443 = vmul.f32 %v379, %v379
    %v444 = vmul.f32 %v380, %v380
    %v445 = vmul.f32 %v381, %v381
    %v446 = vmul.f32 %v382, %v382
    %v447 = vmul.f32 %v383, %v383
    %v448 = vmul.f32 %v384, %v384
    %v449 = vmul.f32 %v385, %v385
    %v450 = vmul.f32 %v386, %v386
    %v451 = vmul.f32 %v387, %v387
    %v452 = vmul.f32 %v388, %v388
    %v453 = vmul.f32 %v389, %v389
    %v454 = vmul.f32 %v390, %v390
    %v455 = vmul.f32 %v391, %v391
    %v456 = vmul.f32 %v392, %v392
    %v457 = vmul.f32 %v393, %v393
    %v458 = vmul.f32 %v394, %v394
    %v459 = vmul.f32 %v395, %v395
    %v460 = vmul.f32 %v396, %v396
    %v461 = vmul.f32 %v397, %v397
    %v462 = vmul.f32 %v398, %v398
    %v463 = vmul.f32 %v399, %v399
    %v464 = vmul.f32 %v400, %v400
    %v465 = vmul.f32 %v401, %v401
    %v466 = vmul.f32 %v402, %v402
    %v467 = vmul.f32 %v403, %v403
    %v468 = vmul.f32 %v404, %v404
    %v469 = vmul.f32 %v405, %v405
    %v470 = vmul.f32 %v406, %v406
    %v471 = vmul.f32 %v407, %v407
    %v472 = vmul.f32 %v408, %v408
    %v473 = vmul.f32 %v409, %v409
    %v474 = vsel %vm210, %v410, 0.0
    %v475 = vsel %vm210, %v411, 0.0
    %v476 = vadd.f32 %v474, %v475
    %v477 = vsel %vm210, %v412, 0.0
    %v478 = vadd.f32 %v476, %v477
    %v479 = vsel %vm210, %v413, 0.0
    %v480 = vadd.f32 %v478, %v479
    %v481 = vsel %vm210, %v414, 0.0
    %v482 = vadd.f32 %v480, %v481
    %v483 = vsel %vm210, %v415, 0.0
    %v484 = vadd.f32 %v482, %v483
    %v485 = vsel %vm210, %v416, 0.0
    %v486 = vadd.f32 %v484, %v485
    %v487 = vsel %vm210, %v417, 0.0
    %v488 = vadd.f32 %v486, %v487
    %v489 = vsel %vm210, %v418, 0.0
    %v490 = vadd.f32 %v488, %v489
    %v491 = vsel %vm210, %v419, 0.0
    %v492 = vadd.f32 %v490, %v491
    %v493 = vsel %vm210, %v420, 0.0
    %v494 = vadd.f32 %v492, %v493
    %v495 = vsel %vm210, %v421, 0.0
    %v496 = vadd.f32 %v494, %v495
    %v497 = vsel %vm210, %v422, 0.0
    %v498 = vadd.f32 %v496, %v497
    %v499 = vsel %vm210, %v423, 0.0
    %v500 = vadd.f32 %v498, %v499
    %v501 = vsel %vm210, %v424, 0.0
    %v502 = vadd.f32 %v500, %v501
    %v503 = vsel %vm210, %v425, 0.0
    %v504 = vadd.f32 %v502, %v503
    %v505 = vsel %vm210, %v426, 0.0
    %v506 = vadd.f32 %v504, %v505
    %v507 = vsel %vm210, %v427, 0.0
    %v508 = vadd.f32 %v506, %v507
    %v509 = vsel %vm210, %v428, 0.0
    %v510 = vadd.f32 %v508, %v509
    %v511 = vsel %vm210, %v429, 0.0
    %v512 = vadd.f32 %v510, %v511
    %v513 = vsel %vm210, %v430, 0.0
    %v514 = vadd.f32 %v512, %v513
    %v515 = vsel %vm210, %v431, 0.0
    %v516 = vadd.f32 %v514, %v515
    %v517 = vsel %vm210, %v432, 0.0
    %v518 = vadd.f32 %v516, %v517
    %v519 = vsel %vm210, %v433, 0.0
    %v520 = vadd.f32 %v518, %v519
    %v521 = vsel %vm210, %v434, 0.0
    %v522 = vadd.f32 %v520, %v521
    %v523 = vsel %vm210, %v435, 0.0
    %v524 = vadd.f32 %v522, %v523
    %v525 = vsel %vm210, %v436, 0.0
    %v526 = vadd.f32 %v524, %v525
    %v527 = vsel %vm210, %v437, 0.0
    %v528 = vadd.f32 %v526, %v527
    %v529 = vsel %vm210, %v438, 0.0
    %v530 = vadd.f32 %v528, %v529
    %v531 = vsel %vm210, %v439, 0.0
    %v532 = vadd.f32 %v530, %v531
    %v533 = vsel %vm210, %v440, 0.0
    %v534 = vadd.f32 %v532, %v533
    %v535 = vsel %vm210, %v441, 0.0
    %v536 = vadd.f32 %v534, %v535
    %v537 = vsel %vm210, %v442, 0.0
    %v538 = vadd.f32 %v536, %v537
    %v539 = vsel %vm210, %v443, 0.0
    %v540 = vadd.f32 %v538, %v539
    %v541 = vsel %vm210, %v444, 0.0
    %v542 = vadd.f32 %v540, %v541
    %v543 = vsel %vm210, %v445, 0.0
    %v544 = vadd.f32 %v542, %v543
    %v545 = vsel %vm210, %v446, 0.0
    %v546 = vadd.f32 %v544, %v545
    %v547 = vsel %vm210, %v447, 0.0
    %v548 = vadd.f32 %v546, %v547
    %v549 = vsel %vm210, %v448, 0.0
    %v550 = vadd.f32 %v548, %v549
    %v551 = vsel %vm210, %v449, 0.0
    %v552 = vadd.f32 %v550, %v551
    %v553 = vsel %vm210, %v450, 0.0
    %v554 = vadd.f32 %v552, %v553
    %v555 = vsel %vm210, %v451, 0.0
    %v556 = vadd.f32 %v554, %v555
    %v557 = vsel %vm210, %v452, 0.0
    %v558 = vadd.f32 %v556, %v557
    %v559 = vsel %vm210, %v453, 0.0
    %v560 = vadd.f32 %v558, %v559
    %v561 = vsel %vm210, %v454, 0.0
    %v562 = vadd.f32 %v560, %v561
    %v563 = vsel %vm210, %v455, 0.0
    %v564 = vadd.f32 %v562, %v563
    %v565 = vsel %vm210, %v456, 0.0
    %v566 = vadd.f32 %v564, %v565
    %v567 = vsel %vm210, %v457, 0.0
    %v568 = vadd.f32 %v566, %v567
    %v569 = vsel %vm210, %v458, 0.0
    %v570 = vadd.f32 %v568, %v569
    %v571 = vsel %vm210, %v459, 0.0
    %v572 = vadd.f32 %v570, %v571
    %v573 = vsel %vm210, %v460, 0.0
    %v574 = vadd.f32 %v572, %v573
    %v575 = vsel %vm210, %v461, 0.0
    %v576 = vadd.f32 %v574, %v575
    %v577 = vsel %vm210, %v462, 0.0
    %v578 = vadd.f32 %v576, %v577
    %v579 = vsel %vm210, %v463, 0.0
    %v580 = vadd.f32 %v578, %v579
    %v581 = vsel %vm210, %v464, 0.0
    %v582 = vadd.f32 %v580, %v581
    %v583 = vsel %vm210, %v465, 0.0
    %v584 = vadd.f32 %v582, %v583
    %v585 = vsel %vm210, %v466, 0.0
    %v586 = vadd.f32 %v584, %v585
    %v587 = vsel %vm210, %v467, 0.0
    %v588 = vadd.f32 %v586, %v587
    %v589 = vsel %vm210, %v468, 0.0
    %v590 = vadd.f32 %v588, %v589
    %v591 = vsel %vm210, %v469, 0.0
    %v592 = vadd.f32 %v590, %v591
    %v593 = vsel %vm210, %v470, 0.0
    %v594 = vadd.f32 %v592, %v593
    %v595 = vsel %vm210, %v471, 0.0
    %v596 = vadd.f32 %v594, %v595
    %v597 = vsel %vm210, %v472, 0.0
    %v598 = vadd.f32 %v596, %v597
    %v599 = vsel %vm210, %v473, 0.0
    %v600 = vadd.f32 %v598, %v599
    %v601 = vrot.slane %v600, 4
    %v602 = vadd.f32 %v600, %v601
    %v603 = vrot.slane %v602, 2
    %v604 = vadd.f32 %v602, %v603
    %v605 = vrot.slane %v604, 1
    %v606 = vadd.f32 %v604, %v605
    %v607 = vmul.f32 %v606, %v344
    %v608 = vadd.f32 %v607, 1e-05
    %v609 = vrsqrt.pop %v608
    %v610 = vmul.f32 %v346, %v609
    %v611 = vmul.f32 %v347, %v609
    %v612 = vmul.f32 %v348, %v609
    %v613 = vmul.f32 %v349, %v609
    %v614 = vmul.f32 %v350, %v609
    %v615 = vmul.f32 %v351, %v609
    %v616 = vmul.f32 %v352, %v609
    %v617 = vmul.f32 %v353, %v609
    %v618 = vmul.f32 %v354, %v609
    %v619 = vmul.f32 %v355, %v609
    %v620 = vmul.f32 %v356, %v609
    %v621 = vmul.f32 %v357, %v609
    %v622 = vmul.f32 %v358, %v609
    %v623 = vmul.f32 %v359, %v609
    %v624 = vmul.f32 %v360, %v609
    %v625 = vmul.f32 %v361, %v609
    %v626 = vmul.f32 %v362, %v609
    %v627 = vmul.f32 %v363, %v609
    %v628 = vmul.f32 %v364, %v609
    %v629 = vmul.f32 %v365, %v609
    %v630 = vmul.f32 %v366, %v609
    %v631 = vmul.f32 %v367, %v609
    %v632 = vmul.f32 %v368, %v609
    %v633 = vmul.f32 %v369, %v609
    %v634 = vmul.f32 %v370, %v609
    %v635 = vmul.f32 %v371, %v609
    %v636 = vmul.f32 %v372, %v609
    %v637 = vmul.f32 %v373, %v609
    %v638 = vmul.f32 %v374, %v609
    %v639 = vmul.f32 %v375, %v609
    %v640 = vmul.f32 %v376, %v609
    %v641 = vmul.f32 %v377, %v609
    %v642 = vmul.f32 %v378, %v609
    %v643 = vmul.f32 %v379, %v609
    %v644 = vmul.f32 %v380, %v609
    %v645 = vmul.f32 %v381, %v609
    %v646 = vmul.f32 %v382, %v609
    %v647 = vmul.f32 %v383, %v609
    %v648 = vmul.f32 %v384, %v609
    %v649 = vmul.f32 %v385, %v609
    %v650 = vmul.f32 %v386, %v609
    %v651 = vmul.f32 %v387, %v609
    %v652 = vmul.f32 %v388, %v609
    %v653 = vmul.f32 %v389, %v609
    %v654 = vmul.f32 %v390, %v609
    %v655 = vmul.f32 %v391, %v609
    %v656 = vmul.f32 %v392, %v609
    %v657 = vmul.f32 %v393, %v609
    %v658 = vmul.f32 %v394, %v609
    %v659 = vmul.f32 %v395, %v609
    %v660 = vmul.f32 %v396, %v609
    %v661 = vmul.f32 %v397, %v609
    %v662 = vmul.f32 %v398, %v609
    %v663 = vmul.f32 %v399, %v609
    %v664 = vmul.f32 %v400, %v609
    %v665 = vmul.f32 %v401, %v609
    %v666 = vmul.f32 %v402, %v609
    %v667 = vmul.f32 %v403, %v609
    %v668 = vmul.f32 %v404, %v609
    %v669 = vmul.f32 %v405, %v609
    %v670 = vmul.f32 %v406, %v609
    %v671 = vmul.f32 %v407, %v609
    %v672 = vmul.f32 %v408, %v609
    %v673 = vmul.f32 %v409, %v609
    %v674 = vld [vmem:[%s2] sm:$0x1]
    %v676 = vlaneseq
    %v677 = vshrl.u32 %v676, 7
    %v678 = vsub.s32 0, %v677
    %v679 = vrot.slane %v674, %v678
    %v681 = vmul.f32 %v610, %v679
    %v682 = vmul.f32 %v611, %v679
    %v683 = vmul.f32 %v612, %v679
    %v684 = vmul.f32 %v613, %v679
    %v685 = vmul.f32 %v614, %v679
    %v686 = vmul.f32 %v615, %v679
    %v687 = vmul.f32 %v616, %v679
    %v688 = vmul.f32 %v617, %v679
    %v689 = vmul.f32 %v618, %v679
    %v690 = vmul.f32 %v619, %v679
    %v691 = vmul.f32 %v620, %v679
    %v692 = vmul.f32 %v621, %v679
    %v693 = vmul.f32 %v622, %v679
    %v694 = vmul.f32 %v623, %v679
    %v695 = vmul.f32 %v624, %v679
    %v696 = vmul.f32 %v625, %v679
    %v697 = vmul.f32 %v626, %v679
    %v698 = vmul.f32 %v627, %v679
    %v699 = vmul.f32 %v628, %v679
    %v700 = vmul.f32 %v629, %v679
    %v701 = vmul.f32 %v630, %v679
    %v702 = vmul.f32 %v631, %v679
    %v703 = vmul.f32 %v632, %v679
    %v704 = vmul.f32 %v633, %v679
    %v705 = vmul.f32 %v634, %v679
    %v706 = vmul.f32 %v635, %v679
    %v707 = vmul.f32 %v636, %v679
    %v708 = vmul.f32 %v637, %v679
    %v709 = vmul.f32 %v638, %v679
    %v710 = vmul.f32 %v639, %v679
    %v711 = vmul.f32 %v640, %v679
    %v712 = vmul.f32 %v641, %v679
    %v713 = vmul.f32 %v642, %v679
    %v714 = vmul.f32 %v643, %v679
    %v715 = vmul.f32 %v644, %v679
    %v716 = vmul.f32 %v645, %v679
    %v717 = vmul.f32 %v646, %v679
    %v718 = vmul.f32 %v647, %v679
    %v719 = vmul.f32 %v648, %v679
    %v720 = vmul.f32 %v649, %v679
    %v721 = vmul.f32 %v650, %v679
    %v722 = vmul.f32 %v651, %v679
    %v723 = vmul.f32 %v652, %v679
    %v724 = vmul.f32 %v653, %v679
    %v725 = vmul.f32 %v654, %v679
    %v726 = vmul.f32 %v655, %v679
    %v727 = vmul.f32 %v656, %v679
    %v728 = vmul.f32 %v657, %v679
    %v729 = vmul.f32 %v658, %v679
    %v730 = vmul.f32 %v659, %v679
    %v731 = vmul.f32 %v660, %v679
    %v732 = vmul.f32 %v661, %v679
    %v733 = vmul.f32 %v662, %v679
    %v734 = vmul.f32 %v663, %v679
    %v735 = vmul.f32 %v664, %v679
    %v736 = vmul.f32 %v665, %v679
    %v737 = vmul.f32 %v666, %v679
    %v738 = vmul.f32 %v667, %v679
    %v739 = vmul.f32 %v668, %v679
    %v740 = vmul.f32 %v669, %v679
    %v741 = vmul.f32 %v670, %v679
    %v742 = vmul.f32 %v671, %v679
    %v743 = vmul.f32 %v672, %v679
    %v744 = vmul.f32 %v673, %v679
    %v745 = vld [vmem:[%s3] sm:$0x1]
    %v747 = vlaneseq
    %v748 = vshrl.u32 %v747, 7
    %v749 = vsub.s32 0, %v748
    %v750 = vrot.slane %v745, %v749
    %v752 = vadd.f32 %v681, %v750
    %v753 = vadd.f32 %v682, %v750
    %v754 = vadd.f32 %v683, %v750
    %v755 = vadd.f32 %v684, %v750
    %v756 = vadd.f32 %v685, %v750
    %v757 = vadd.f32 %v686, %v750
    %v758 = vadd.f32 %v687, %v750
    %v759 = vadd.f32 %v688, %v750
    %v760 = vadd.f32 %v689, %v750
    %v761 = vadd.f32 %v690, %v750
    %v762 = vadd.f32 %v691, %v750
    %v763 = vadd.f32 %v692, %v750
    %v764 = vadd.f32 %v693, %v750
    %v765 = vadd.f32 %v694, %v750
    %v766 = vadd.f32 %v695, %v750
    %v767 = vadd.f32 %v696, %v750
    %v768 = vadd.f32 %v697, %v750
    %v769 = vadd.f32 %v698, %v750
    %v770 = vadd.f32 %v699, %v750
    %v771 = vadd.f32 %v700, %v750
    %v772 = vadd.f32 %v701, %v750
    %v773 = vadd.f32 %v702, %v750
    %v774 = vadd.f32 %v703, %v750
    %v775 = vadd.f32 %v704, %v750
    %v776 = vadd.f32 %v705, %v750
    %v777 = vadd.f32 %v706, %v750
    %v778 = vadd.f32 %v707, %v750
    %v779 = vadd.f32 %v708, %v750
    %v780 = vadd.f32 %v709, %v750
    %v781 = vadd.f32 %v710, %v750
    %v782 = vadd.f32 %v711, %v750
    %v783 = vadd.f32 %v712, %v750
    %v784 = vadd.f32 %v713, %v750
    %v785 = vadd.f32 %v714, %v750
    %v786 = vadd.f32 %v715, %v750
    %v787 = vadd.f32 %v716, %v750
    %v788 = vadd.f32 %v717, %v750
    %v789 = vadd.f32 %v718, %v750
    %v790 = vadd.f32 %v719, %v750
    %v791 = vadd.f32 %v720, %v750
    %v792 = vadd.f32 %v721, %v750
    %v793 = vadd.f32 %v722, %v750
    %v794 = vadd.f32 %v723, %v750
    %v795 = vadd.f32 %v724, %v750
    %v796 = vadd.f32 %v725, %v750
    %v797 = vadd.f32 %v726, %v750
    %v798 = vadd.f32 %v727, %v750
    %v799 = vadd.f32 %v728, %v750
    %v800 = vadd.f32 %v729, %v750
    %v801 = vadd.f32 %v730, %v750
    %v802 = vadd.f32 %v731, %v750
    %v803 = vadd.f32 %v732, %v750
    %v804 = vadd.f32 %v733, %v750
    %v805 = vadd.f32 %v734, %v750
    %v806 = vadd.f32 %v735, %v750
    %v807 = vadd.f32 %v736, %v750
    %v808 = vadd.f32 %v737, %v750
    %v809 = vadd.f32 %v738, %v750
    %v810 = vadd.f32 %v739, %v750
    %v811 = vadd.f32 %v740, %v750
    %v812 = vadd.f32 %v741, %v750
    %v813 = vadd.f32 %v742, %v750
    %v814 = vadd.f32 %v743, %v750
    %v815 = vadd.f32 %v744, %v750
    %v816 = vadd.f32 %v18, %v752
    %v817 = vadd.f32 %v19, %v753
    %v818 = vadd.f32 %v20, %v754
    %v819 = vadd.f32 %v21, %v755
    %v820 = vadd.f32 %v22, %v756
    %v821 = vadd.f32 %v23, %v757
    %v822 = vadd.f32 %v24, %v758
    %v823 = vadd.f32 %v25, %v759
    %v824 = vadd.f32 %v26, %v760
    %v825 = vadd.f32 %v27, %v761
    %v826 = vadd.f32 %v28, %v762
    %v827 = vadd.f32 %v29, %v763
    %v828 = vadd.f32 %v30, %v764
    %v829 = vadd.f32 %v31, %v765
    %v830 = vadd.f32 %v32, %v766
    %v831 = vadd.f32 %v33, %v767
    %v832 = vadd.f32 %v34, %v768
    %v833 = vadd.f32 %v35, %v769
    %v834 = vadd.f32 %v36, %v770
    %v835 = vadd.f32 %v37, %v771
    %v836 = vadd.f32 %v38, %v772
    %v837 = vadd.f32 %v39, %v773
    %v838 = vadd.f32 %v40, %v774
    %v839 = vadd.f32 %v41, %v775
    %v840 = vadd.f32 %v42, %v776
    %v841 = vadd.f32 %v43, %v777
    %v842 = vadd.f32 %v44, %v778
    %v843 = vadd.f32 %v45, %v779
    %v844 = vadd.f32 %v46, %v780
    %v845 = vadd.f32 %v47, %v781
    %v846 = vadd.f32 %v48, %v782
    %v847 = vadd.f32 %v49, %v783
    %v848 = vadd.f32 %v50, %v784
    %v849 = vadd.f32 %v51, %v785
    %v850 = vadd.f32 %v52, %v786
    %v851 = vadd.f32 %v53, %v787
    %v852 = vadd.f32 %v54, %v788
    %v853 = vadd.f32 %v55, %v789
    %v854 = vadd.f32 %v56, %v790
    %v855 = vadd.f32 %v57, %v791
    %v856 = vadd.f32 %v58, %v792
    %v857 = vadd.f32 %v59, %v793
    %v858 = vadd.f32 %v60, %v794
    %v859 = vadd.f32 %v61, %v795
    %v860 = vadd.f32 %v62, %v796
    %v861 = vadd.f32 %v63, %v797
    %v862 = vadd.f32 %v64, %v798
    %v863 = vadd.f32 %v65, %v799
    %v864 = vadd.f32 %v66, %v800
    %v865 = vadd.f32 %v67, %v801
    %v866 = vadd.f32 %v68, %v802
    %v867 = vadd.f32 %v69, %v803
    %v868 = vadd.f32 %v70, %v804
    %v869 = vadd.f32 %v71, %v805
    %v870 = vadd.f32 %v72, %v806
    %v871 = vadd.f32 %v73, %v807
    %v872 = vadd.f32 %v74, %v808
    %v873 = vadd.f32 %v75, %v809
    %v874 = vadd.f32 %v76, %v810
    %v875 = vadd.f32 %v77, %v811
    %v876 = vadd.f32 %v78, %v812
    %v877 = vadd.f32 %v79, %v813
    %v878 = vadd.f32 %v80, %v814
    %v879 = vadd.f32 %v81, %v815
    %v880 = vmax.f32 %v816, 0.0
    %v881 = vmax.f32 %v817, 0.0
    %v882 = vmax.f32 %v818, 0.0
    %v883 = vmax.f32 %v819, 0.0
    %v884 = vmax.f32 %v820, 0.0
    %v885 = vmax.f32 %v821, 0.0
    %v886 = vmax.f32 %v822, 0.0
    %v887 = vmax.f32 %v823, 0.0
    %v888 = vmax.f32 %v824, 0.0
    %v889 = vmax.f32 %v825, 0.0
    %v890 = vmax.f32 %v826, 0.0
    %v891 = vmax.f32 %v827, 0.0
    %v892 = vmax.f32 %v828, 0.0
    %v893 = vmax.f32 %v829, 0.0
    %v894 = vmax.f32 %v830, 0.0
    %v895 = vmax.f32 %v831, 0.0
    %v896 = vmax.f32 %v832, 0.0
    %v897 = vmax.f32 %v833, 0.0
    %v898 = vmax.f32 %v834, 0.0
    %v899 = vmax.f32 %v835, 0.0
    %v900 = vmax.f32 %v836, 0.0
    %v901 = vmax.f32 %v837, 0.0
    %v902 = vmax.f32 %v838, 0.0
    %v903 = vmax.f32 %v839, 0.0
    %v904 = vmax.f32 %v840, 0.0
    %v905 = vmax.f32 %v841, 0.0
    %v906 = vmax.f32 %v842, 0.0
    %v907 = vmax.f32 %v843, 0.0
    %v908 = vmax.f32 %v844, 0.0
    %v909 = vmax.f32 %v845, 0.0
    %v910 = vmax.f32 %v846, 0.0
    %v911 = vmax.f32 %v847, 0.0
    %v912 = vmax.f32 %v848, 0.0
    %v913 = vmax.f32 %v849, 0.0
    %v914 = vmax.f32 %v850, 0.0
    %v915 = vmax.f32 %v851, 0.0
    %v916 = vmax.f32 %v852, 0.0
    %v917 = vmax.f32 %v853, 0.0
    %v918 = vmax.f32 %v854, 0.0
    %v919 = vmax.f32 %v855, 0.0
    %v920 = vmax.f32 %v856, 0.0
    %v921 = vmax.f32 %v857, 0.0
    %v922 = vmax.f32 %v858, 0.0
    %v923 = vmax.f32 %v859, 0.0
    %v924 = vmax.f32 %v860, 0.0
    %v925 = vmax.f32 %v861, 0.0
    %v926 = vmax.f32 %v862, 0.0
    %v927 = vmax.f32 %v863, 0.0
    %v928 = vmax.f32 %v864, 0.0
    %v929 = vmax.f32 %v865, 0.0
    %v930 = vmax.f32 %v866, 0.0
    %v931 = vmax.f32 %v867, 0.0
    %v932 = vmax.f32 %v868, 0.0
    %v933 = vmax.f32 %v869, 0.0
    %v934 = vmax.f32 %v870, 0.0
    %v935 = vmax.f32 %v871, 0.0
    %v936 = vmax.f32 %v872, 0.0
    %v937 = vmax.f32 %v873, 0.0
    %v938 = vmax.f32 %v874, 0.0
    %v939 = vmax.f32 %v875, 0.0
    %v940 = vmax.f32 %v876, 0.0
    %v941 = vmax.f32 %v877, 0.0
    %v942 = vmax.f32 %v878, 0.0
    %v943 = vmax.f32 %v879, 0.0
    %944 = vst.msk [vmem:[#allocation2] sm:$0xff] %vm210, %v880
    %945 = vst.msk [vmem:[#allocation2 + $0x8] sm:$0xff] %vm210, %v881
    %946 = vst.msk [vmem:[#allocation2 + $0x10] sm:$0xff] %vm210, %v882
    %947 = vst.msk [vmem:[#allocation2 + $0x18] sm:$0xff] %vm210, %v883
    %948 = vst.msk [vmem:[#allocation2 + $0x20] sm:$0xff] %vm210, %v884
    %949 = vst.msk [vmem:[#allocation2 + $0x28] sm:$0xff] %vm210, %v885
    %950 = vst.msk [vmem:[#allocation2 + $0x30] sm:$0xff] %vm210, %v886
    %951 = vst.msk [vmem:[#allocation2 + $0x38] sm:$0xff] %vm210, %v887
    %952 = vst.msk [vmem:[#allocation2 + $0x40] sm:$0xff] %vm210, %v888
    %953 = vst.msk [vmem:[#allocation2 + $0x48] sm:$0xff] %vm210, %v889
    %954 = vst.msk [vmem:[#allocation2 + $0x50] sm:$0xff] %vm210, %v890
    %955 = vst.msk [vmem:[#allocation2 + $0x58] sm:$0xff] %vm210, %v891
    %956 = vst.msk [vmem:[#allocation2 + $0x60] sm:$0xff] %vm210, %v892
    %957 = vst.msk [vmem:[#allocation2 + $0x68] sm:$0xff] %vm210, %v893
    %958 = vst.msk [vmem:[#allocation2 + $0x70] sm:$0xff] %vm210, %v894
    %959 = vst.msk [vmem:[#allocation2 + $0x78] sm:$0xff] %vm210, %v895
    %960 = vst.msk [vmem:[#allocation2 + $0x80] sm:$0xff] %vm210, %v896
    %961 = vst.msk [vmem:[#allocation2 + $0x88] sm:$0xff] %vm210, %v897
    %962 = vst.msk [vmem:[#allocation2 + $0x90] sm:$0xff] %vm210, %v898
    %963 = vst.msk [vmem:[#allocation2 + $0x98] sm:$0xff] %vm210, %v899
    %964 = vst.msk [vmem:[#allocation2 + $0xa0] sm:$0xff] %vm210, %v900
    %965 = vst.msk [vmem:[#allocation2 + $0xa8] sm:$0xff] %vm210, %v901
    %966 = vst.msk [vmem:[#allocation2 + $0xb0] sm:$0xff] %vm210, %v902
    %967 = vst.msk [vmem:[#allocation2 + $0xb8] sm:$0xff] %vm210, %v903
    %968 = vst.msk [vmem:[#allocation2 + $0xc0] sm:$0xff] %vm210, %v904
    %969 = vst.msk [vmem:[#allocation2 + $0xc8] sm:$0xff] %vm210, %v905
    %970 = vst.msk [vmem:[#allocation2 + $0xd0] sm:$0xff] %vm210, %v906
    %971 = vst.msk [vmem:[#allocation2 + $0xd8] sm:$0xff] %vm210, %v907
    %972 = vst.msk [vmem:[#allocation2 + $0xe0] sm:$0xff] %vm210, %v908
    %973 = vst.msk [vmem:[#allocation2 + $0xe8] sm:$0xff] %vm210, %v909
    %974 = vst.msk [vmem:[#allocation2 + $0xf0] sm:$0xff] %vm210, %v910
    %975 = vst.msk [vmem:[#allocation2 + $0xf8] sm:$0xff] %vm210, %v911
    %976 = vst.msk [vmem:[#allocation2 + $0x100] sm:$0xff] %vm210, %v912
    %977 = vst.msk [vmem:[#allocation2 + $0x108] sm:$0xff] %vm210, %v913
    %978 = vst.msk [vmem:[#allocation2 + $0x110] sm:$0xff] %vm210, %v914
    %979 = vst.msk [vmem:[#allocation2 + $0x118] sm:$0xff] %vm210, %v915
    %980 = vst.msk [vmem:[#allocation2 + $0x120] sm:$0xff] %vm210, %v916
    %981 = vst.msk [vmem:[#allocation2 + $0x128] sm:$0xff] %vm210, %v917
    %982 = vst.msk [vmem:[#allocation2 + $0x130] sm:$0xff] %vm210, %v918
    %983 = vst.msk [vmem:[#allocation2 + $0x138] sm:$0xff] %vm210, %v919
    %984 = vst.msk [vmem:[#allocation2 + $0x140] sm:$0xff] %vm210, %v920
    %985 = vst.msk [vmem:[#allocation2 + $0x148] sm:$0xff] %vm210, %v921
    %986 = vst.msk [vmem:[#allocation2 + $0x150] sm:$0xff] %vm210, %v922
    %987 = vst.msk [vmem:[#allocation2 + $0x158] sm:$0xff] %vm210, %v923
    %988 = vst.msk [vmem:[#allocation2 + $0x160] sm:$0xff] %vm210, %v924
    %989 = vst.msk [vmem:[#allocation2 + $0x168] sm:$0xff] %vm210, %v925
    %990 = vst.msk [vmem:[#allocation2 + $0x170] sm:$0xff] %vm210, %v926
    %991 = vst.msk [vmem:[#allocation2 + $0x178] sm:$0xff] %vm210, %v927
    %992 = vst.msk [vmem:[#allocation2 + $0x180] sm:$0xff] %vm210, %v928
    %993 = vst.msk [vmem:[#allocation2 + $0x188] sm:$0xff] %vm210, %v929
    %994 = vst.msk [vmem:[#allocation2 + $0x190] sm:$0xff] %vm210, %v930
    %995 = vst.msk [vmem:[#allocation2 + $0x198] sm:$0xff] %vm210, %v931
    %996 = vst.msk [vmem:[#allocation2 + $0x1a0] sm:$0xff] %vm210, %v932
    %997 = vst.msk [vmem:[#allocation2 + $0x1a8] sm:$0xff] %vm210, %v933
    %998 = vst.msk [vmem:[#allocation2 + $0x1b0] sm:$0xff] %vm210, %v934
    %999 = vst.msk [vmem:[#allocation2 + $0x1b8] sm:$0xff] %vm210, %v935
    %1000 = vst.msk [vmem:[#allocation2 + $0x1c0] sm:$0xff] %vm210, %v936
    %1001 = vst.msk [vmem:[#allocation2 + $0x1c8] sm:$0xff] %vm210, %v937
    %1002 = vst.msk [vmem:[#allocation2 + $0x1d0] sm:$0xff] %vm210, %v938
    %1003 = vst.msk [vmem:[#allocation2 + $0x1d8] sm:$0xff] %vm210, %v939
    %1004 = vst.msk [vmem:[#allocation2 + $0x1e0] sm:$0xff] %vm210, %v940
    %1005 = vst.msk [vmem:[#allocation2 + $0x1e8] sm:$0xff] %vm210, %v941
    %1006 = vst.msk [vmem:[#allocation2 + $0x1f0] sm:$0xff] %vm210, %v942
    %1007 = vst.msk [vmem:[#allocation2 + $0x1f8] sm:$0xff] %vm210, %v943
    // Predicated region
    $region18: #{simple_resblock_sub1f1.5} parent=1 // pred_check
      _
    $region19: #{simple_resblock_sub1f1.5} parent=1 // pred_check_branch
      %1009 = sbr.rel (0) target = $region21
    $region20: #{simple_resblock_sub1f1.5} parent=1 // pred_region
      %s1011 = ssub.s32 8192, 8192
      %1012 = vsyncadd [#allocation3], %s1011
      %s1013 = sshll.u32 [#allocation2], 4
      %s1014 = int_to_ptr.vmem [resolvable:$true] %s1013
      %1019 = dma.vmem_to_hbm [thread:$0]  %s1014, 8192, %s4, [#allocation3], 128, 128, 8
    $region21: #{simple_resblock_sub1f1.5} parent=1 // pred_fallthru
      _
    // Predicated region
    $region22: #{simple_resblock_sub1f1.5} parent=1 // pred_check
      _
    $region23: #{simple_resblock_sub1f1.5} parent=1 // pred_check_branch
      %1021 = sbr.rel (0) target = $region25
    $region24: #{simple_resblock_sub1f1.5} parent=1 // pred_region
      %1022 = dma.done [#allocation3], 8192
    $region25: #{simple_resblock_sub1f1.5} parent=1 // pred_fallthru
      _
    %1023 = vsyncpa [#allocation3], 1

</llo_original>
